<compile_context>
chip_gen: v6e
topology: v6e:2x2x1
jax: 0.10.0
libtpu: 0.0.40
codegen_flags: <defaults>
</compile_context>

<pallas_src>
import jax
import jax.numpy as jnp
from jax.experimental import pallas as pl
from jax.experimental.pallas import tpu as pltpu

CLASS_NUM = 3
INIT_F = 8                       # conv output channels
NUM_FC1 = 100
HW = 33                          # spatial size implied by num_flatten = 1089*8
NUM_FLATTEN = HW * HW * INIT_F   # 8712

PAD_HW = HW + 2                  # 35 = zero-padded spatial size (conv padding=1)
OUT_FLAT = HW * PAD_HW           # 1155: per-channel conv output, stride-35 flat layout
IN_FLAT = PAD_HW * PAD_HW        # 1225: padded input image, flattened row-major
IN_LANES = 1280                  # IN_FLAT rounded up to a lane multiple (extra cols zero)
LANES = 128                      # fc2 logits padded to a full vreg lane width
NEG_BIG = -1e30                  # "minus infinity" bias for padded logit lanes

# flat-index offset of conv tap (dh, dw) in the stride-35 layout (dh-major, like
# conv_w.reshape(8, 9))
TAP_OFFSETS = tuple(dh * PAD_HW + dw for dh in range(3) for dw in range(3))

MAX_TILE_N = 128                 # batch tile; keeps per-step VMEM well under 32 MiB


# ------------------------------ fused kernel --------------------------------

def _geno_fused_kernel(cw_ref, cb_ref, x_ref, w1_ref, b1_ref, w2_ref, b2_ref,
                       out_ref):
    """conv3x3+ReLU (VPU) -> fc1+ReLU (bf16 MXU) -> fc2 -> log_softmax, fused."""
    tn = x_ref.shape[0]

    # 9 conv taps = 9 static lane-shifted windows of the padded flat image.
    taps = [x_ref[:, off:off + OUT_FLAT] for off in TAP_OFFSETS]   # (tn, 1155) f32 each

    # fc1 accumulator; fc1 is decomposed per conv channel so the activation
    # never needs concatenation / relayout before hitting the MXU.
    hacc = jnp.zeros((tn, NUM_FC1), jnp.float32)
    for c in range(INIT_F):
        conv = taps[0] * cw_ref[c, 0]
        for t in range(1, 9):
            conv = conv + taps[t] * cw_ref[c, t]
        conv = jnp.maximum(conv + cb_ref[c], 0.0)                  # bias + ReLU (f32)
        hacc = hacc + jnp.dot(conv.astype(jnp.bfloat16), w1_ref[c],
                              preferred_element_type=jnp.float32)

    h = jnp.maximum(hacc + b1_ref[...], 0.0)                       # fc1 bias + ReLU (f32)
    # TODO(synk): nn.Dropout(0.25) is identity at inference; training-mode
    # stochastic masking/scaling (pltpu.prng_*) is not implemented here.

    z = jnp.dot(h, w2_ref[...], preferred_element_type=jnp.float32) + b2_ref[...]
    # z is (tn, 128); lanes >= CLASS_NUM carry -1e30 so full-lane reductions
    # produce the correct 3-class log_softmax.
    m = jnp.max(z, axis=-1, keepdims=True)
    zs = z - m
    lse = jnp.log(jnp.sum(jnp.exp(zs), axis=-1, keepdims=True))
    out_ref[...] = (zs - lse)[:, :CLASS_NUM]


# ------------------------------ forward (glue) ------------------------------

@jax.jit
def geno_net_forward(x, prep):
    """x: (N, 1, 33, 33) float32 -> (N, 3) log-probabilities (eval mode)."""
    n = x.shape[0]
    tile_n = min(MAX_TILE_N, ((n + 7) // 8) * 8)
    n_pad = ((n + tile_n - 1) // tile_n) * tile_n
    n_tiles = n_pad // tile_n

    # zero-pad spatially (conv padding=1), flatten row-major (stride-35), pad
    # to a lane-aligned width and a whole number of batch tiles.
    xp = jnp.pad(x[:, 0].astype(jnp.float32), ((0, 0), (1, 1), (1, 1)))   # (N, 35, 35)
    xf = xp.reshape(n, IN_FLAT)
    xf = jnp.pad(xf, ((0, n_pad - n), (0, IN_LANES - IN_FLAT)))           # (n_pad, 1280)

    smem = pl.BlockSpec(memory_space=pltpu.MemorySpace.SMEM)
    out = pl.pallas_call(
        _geno_fused_kernel,
        out_shape=jax.ShapeDtypeStruct((n_pad, CLASS_NUM), jnp.float32),
        grid=(n_tiles,),
        in_specs=[
            smem,                                                          # conv_w (8, 9)
            smem,                                                          # conv_b (8,)
            pl.BlockSpec((tile_n, IN_LANES), lambda i: (i, 0)),            # input tile
            pl.BlockSpec((INIT_F, OUT_FLAT, NUM_FC1), lambda i: (0, 0, 0)),  # fc1 w (resident)
            pl.BlockSpec((1, NUM_FC1), lambda i: (0, 0)),                  # fc1 b (resident)
            pl.BlockSpec((NUM_FC1, LANES), lambda i: (0, 0)),              # fc2 w (padded)
            pl.BlockSpec((1, LANES), lambda i: (0, 0)),                    # fc2 b (padded)
        ],
        out_specs=pl.BlockSpec((tile_n, CLASS_NUM), lambda i: (i, 0)),
        compiler_params=pltpu.CompilerParams(
            dimension_semantics=("parallel",),
            vmem_limit_bytes=32 * 1024 * 1024,
        ),
    )(prep["conv_w"], prep["conv_b"], xf,
      prep["fc1_w"], prep["fc1_b"], prep["fc2_w"], prep["fc2_b"])
    return out[:n]


# ------------------- one-time parameter preparation (no jit) ----------------

def prepare_params(params):
    """One-time weight re-layout; call once at load time, NOT per forward."""
    conv_w = params["conv_w"].reshape(INIT_F, 9).astype(jnp.float32)   # taps (dh, dw) row-major
    conv_b = params["conv_b"].astype(jnp.float32)

    # fc1_w is (100, 8712) over PyTorch's (c, h, w) flatten.  Re-lay it out as
    # (8, 1155, 100): per conv channel, rows follow the kernel's stride-35 flat
    # activation layout, with zero rows at the two pad columns of each image
    # row (so the in-kernel activation never needs reshaping).
    w1 = params["fc1_w"].reshape(NUM_FC1, INIT_F, HW, HW)
    w1 = jnp.pad(w1, ((0, 0), (0, 0), (0, 0), (0, PAD_HW - HW)))       # (100, 8, 33, 35)
    w1 = w1.reshape(NUM_FC1, INIT_F, OUT_FLAT)
    fc1_w = jnp.transpose(w1, (1, 2, 0)).astype(jnp.bfloat16)          # (8, 1155, 100)
    fc1_b = params["fc1_b"].reshape(1, NUM_FC1).astype(jnp.float32)

    # fc2 padded to a full 128-lane vreg; pad lanes get weight 0 / bias -1e30.
    fc2_w = jnp.zeros((NUM_FC1, LANES), jnp.float32).at[:, :CLASS_NUM].set(
        params["fc2_w"].T.astype(jnp.float32))
    fc2_b = jnp.full((1, LANES), NEG_BIG, jnp.float32).at[0, :CLASS_NUM].set(
        params["fc2_b"].astype(jnp.float32))

    return {"conv_w": conv_w, "conv_b": conv_b,
            "fc1_w": fc1_w, "fc1_b": fc1_b,
            "fc2_w": fc2_w, "fc2_b": fc2_b}


# --------------------------- params & reference -----------------------------

def init_params(key):
    ks = jax.random.split(key, 6)

    def u(k, shape, fan_in):
        bound = 1.0 / jnp.sqrt(float(fan_in))
        return jax.random.uniform(k, shape, jnp.float32, -bound, bound)

    return {
        "conv_w": u(ks[0], (INIT_F, 1, 3, 3), 9),                 # PyTorch OIHW layout
        "conv_b": u(ks[1], (INIT_F,), 9),
        "fc1_w": u(ks[2], (NUM_FC1, NUM_FLATTEN), NUM_FLATTEN),   # (out, in)
        "fc1_b": u(ks[3], (NUM_FC1,), NUM_FLATTEN),
        "fc2_w": u(ks[4], (CLASS_NUM, NUM_FC1), NUM_FC1),
        "fc2_b": u(ks[5], (CLASS_NUM,), NUM_FC1),
    }


def reference_forward(x, params):
    """Pure-JAX mirror of the PyTorch forward (eval mode)."""
    n = x.shape[0]
    conv = jax.lax.conv_general_dilated(
        x, params["conv_w"], window_strides=(1, 1), padding=((1, 1), (1, 1)),
        dimension_numbers=("NCHW", "OIHW", "NCHW"))
    conv = conv + params["conv_b"].reshape(1, INIT_F, 1, 1)
    a = jnp.maximum(conv, 0.0).reshape(n, NUM_FLATTEN)   # PyTorch (c,h,w) flatten
    h = jnp.maximum(a @ params["fc1_w"].T + params["fc1_b"], 0.0)
    z = h @ params["fc2_w"].T + params["fc2_b"]
    return jax.nn.log_softmax(z, axis=-1)


if __name__ == "__main__":
    key = jax.random.PRNGKey(0)
    kx, kp = jax.random.split(key)
    # input shape implied by the module: Cin=1, H=W=33 (num_flatten = 1089*8)
    x = jax.random.normal(kx, (2, 1, HW, HW), jnp.float32)
    params = init_params(kp)
    prep = prepare_params(params)          # one-time weight re-layout (outside jit)

    out = geno_net_forward(x, prep)
    out = jax.block_until_ready(out)

    ref = reference_forward(x, params)
    assert out.shape == (2, CLASS_NUM)
    # rows are valid log-probabilities
    assert jnp.allclose(jnp.sum(jnp.exp(out), axis=-1), 1.0, atol=1e-3)
    # loose tolerance: bf16 fc1 operands + default MXU f32 precision vs XLA ref
    assert jnp.allclose(out, ref, atol=5e-2, rtol=5e-2)
    print("KERNEL_OK")
</pallas_src>

<mosaic_0001>
module attributes {stable_mosaic.version = 11 : i64} {
  func.func @_geno_fused_kernel(%arg0: i32, %arg1: memref<8x9xf32, #tpu.memory_space<smem>>, %arg2: memref<8xf32, #tpu.memory_space<smem>>, %arg3: memref<8x1280xf32, #tpu.memory_space<vmem>>, %arg4: memref<8x1155x100xbf16, #tpu.memory_space<vmem>>, %arg5: memref<1x100xf32, #tpu.memory_space<vmem>>, %arg6: memref<100x128xf32, #tpu.memory_space<vmem>>, %arg7: memref<1x128xf32, #tpu.memory_space<vmem>>, %arg8: memref<8x3xf32, #tpu.memory_space<vmem>>) attributes {dimension_semantics = [#tpu.dimension_semantics<parallel>], iteration_bounds = array<i64: 1>, scalar_prefetch = 0 : i64, scratch_operands = 0 : i64, tpu.core_type = #tpu.core_type<tc>, window_params = [{transform_indices = @transform_0, window_bounds = array<i64: 8, 9>}, {transform_indices = @transform_1, window_bounds = array<i64: 8>}, {transform_indices = @transform_2, window_bounds = array<i64: 8, 1280>}, {pipeline_mode = #tpu.pipeline_mode<synchronous>, transform_indices = @transform_3, window_bounds = array<i64: 8, 1155, 100>}, {pipeline_mode = #tpu.pipeline_mode<synchronous>, transform_indices = @transform_4, window_bounds = array<i64: 1, 100>}, {pipeline_mode = #tpu.pipeline_mode<synchronous>, transform_indices = @transform_5, window_bounds = array<i64: 100, 128>}, {pipeline_mode = #tpu.pipeline_mode<synchronous>, transform_indices = @transform_6, window_bounds = array<i64: 1, 128>}, {transform_indices = @transform_7, window_bounds = array<i64: 8, 3>}]} {
    %c0 = arith.constant 0 : index
    %c0_0 = arith.constant 0 : index
    %0 = vector.load %arg3[%c0, %c0_0] : memref<8x1280xf32, #tpu.memory_space<vmem>>, vector<8x1155xf32>
    %c0_1 = arith.constant 0 : index
    %c1 = arith.constant 1 : index
    %1 = vector.load %arg3[%c0_1, %c1] : memref<8x1280xf32, #tpu.memory_space<vmem>>, vector<8x1155xf32>
    %c0_2 = arith.constant 0 : index
    %c2 = arith.constant 2 : index
    %2 = vector.load %arg3[%c0_2, %c2] : memref<8x1280xf32, #tpu.memory_space<vmem>>, vector<8x1155xf32>
    %c0_3 = arith.constant 0 : index
    %c35 = arith.constant 35 : index
    %3 = vector.load %arg3[%c0_3, %c35] : memref<8x1280xf32, #tpu.memory_space<vmem>>, vector<8x1155xf32>
    %c0_4 = arith.constant 0 : index
    %c36 = arith.constant 36 : index
    %4 = vector.load %arg3[%c0_4, %c36] : memref<8x1280xf32, #tpu.memory_space<vmem>>, vector<8x1155xf32>
    %c0_5 = arith.constant 0 : index
    %c37 = arith.constant 37 : index
    %5 = vector.load %arg3[%c0_5, %c37] : memref<8x1280xf32, #tpu.memory_space<vmem>>, vector<8x1155xf32>
    %c0_6 = arith.constant 0 : index
    %c70 = arith.constant 70 : index
    %6 = vector.load %arg3[%c0_6, %c70] : memref<8x1280xf32, #tpu.memory_space<vmem>>, vector<8x1155xf32>
    %c0_7 = arith.constant 0 : index
    %c71 = arith.constant 71 : index
    %7 = vector.load %arg3[%c0_7, %c71] : memref<8x1280xf32, #tpu.memory_space<vmem>>, vector<8x1155xf32>
    %c0_8 = arith.constant 0 : index
    %c72 = arith.constant 72 : index
    %8 = vector.load %arg3[%c0_8, %c72] : memref<8x1280xf32, #tpu.memory_space<vmem>>, vector<8x1155xf32>
    %cst = arith.constant 0.000000e+00 : f32
    %9 = vector.broadcast %cst : f32 to vector<8x100xf32>
    %c0_9 = arith.constant 0 : index
    %c0_10 = arith.constant 0 : index
    %10 = memref.load %arg1[%c0_9, %c0_10] : memref<8x9xf32, #tpu.memory_space<smem>>
    %11 = vector.broadcast %10 : f32 to vector<8x1155xf32>
    %12 = arith.mulf %0, %11 : vector<8x1155xf32>
    %c0_11 = arith.constant 0 : index
    %c1_12 = arith.constant 1 : index
    %13 = memref.load %arg1[%c0_11, %c1_12] : memref<8x9xf32, #tpu.memory_space<smem>>
    %14 = vector.broadcast %13 : f32 to vector<8x1155xf32>
    %15 = arith.mulf %1, %14 : vector<8x1155xf32>
    %16 = arith.addf %12, %15 : vector<8x1155xf32>
    %c0_13 = arith.constant 0 : index
    %c2_14 = arith.constant 2 : index
    %17 = memref.load %arg1[%c0_13, %c2_14] : memref<8x9xf32, #tpu.memory_space<smem>>
    %18 = vector.broadcast %17 : f32 to vector<8x1155xf32>
    %19 = arith.mulf %2, %18 : vector<8x1155xf32>
    %20 = arith.addf %16, %19 : vector<8x1155xf32>
    %c0_15 = arith.constant 0 : index
    %c3 = arith.constant 3 : index
    %21 = memref.load %arg1[%c0_15, %c3] : memref<8x9xf32, #tpu.memory_space<smem>>
    %22 = vector.broadcast %21 : f32 to vector<8x1155xf32>
    %23 = arith.mulf %3, %22 : vector<8x1155xf32>
    %24 = arith.addf %20, %23 : vector<8x1155xf32>
    %c0_16 = arith.constant 0 : index
    %c4 = arith.constant 4 : index
    %25 = memref.load %arg1[%c0_16, %c4] : memref<8x9xf32, #tpu.memory_space<smem>>
    %26 = vector.broadcast %25 : f32 to vector<8x1155xf32>
    %27 = arith.mulf %4, %26 : vector<8x1155xf32>
    %28 = arith.addf %24, %27 : vector<8x1155xf32>
    %c0_17 = arith.constant 0 : index
    %c5 = arith.constant 5 : index
    %29 = memref.load %arg1[%c0_17, %c5] : memref<8x9xf32, #tpu.memory_space<smem>>
    %30 = vector.broadcast %29 : f32 to vector<8x1155xf32>
    %31 = arith.mulf %5, %30 : vector<8x1155xf32>
    %32 = arith.addf %28, %31 : vector<8x1155xf32>
    %c0_18 = arith.constant 0 : index
    %c6 = arith.constant 6 : index
    %33 = memref.load %arg1[%c0_18, %c6] : memref<8x9xf32, #tpu.memory_space<smem>>
    %34 = vector.broadcast %33 : f32 to vector<8x1155xf32>
    %35 = arith.mulf %6, %34 : vector<8x1155xf32>
    %36 = arith.addf %32, %35 : vector<8x1155xf32>
    %c0_19 = arith.constant 0 : index
    %c7 = arith.constant 7 : index
    %37 = memref.load %arg1[%c0_19, %c7] : memref<8x9xf32, #tpu.memory_space<smem>>
    %38 = vector.broadcast %37 : f32 to vector<8x1155xf32>
    %39 = arith.mulf %7, %38 : vector<8x1155xf32>
    %40 = arith.addf %36, %39 : vector<8x1155xf32>
    %c0_20 = arith.constant 0 : index
    %c8 = arith.constant 8 : index
    %41 = memref.load %arg1[%c0_20, %c8] : memref<8x9xf32, #tpu.memory_space<smem>>
    %42 = vector.broadcast %41 : f32 to vector<8x1155xf32>
    %43 = arith.mulf %8, %42 : vector<8x1155xf32>
    %44 = arith.addf %40, %43 : vector<8x1155xf32>
    %c0_21 = arith.constant 0 : index
    %45 = memref.load %arg2[%c0_21] : memref<8xf32, #tpu.memory_space<smem>>
    %46 = vector.broadcast %45 : f32 to vector<8x1155xf32>
    %47 = arith.addf %44, %46 : vector<8x1155xf32>
    %cst_22 = arith.constant 0.000000e+00 : f32
    %48 = vector.broadcast %cst_22 : f32 to vector<8x1155xf32>
    %49 = arith.maximumf %47, %48 : vector<8x1155xf32>
    %50 = arith.truncf %49 : vector<8x1155xf32> to vector<8x1155xbf16>
    %c0_23 = arith.constant 0 : index
    %c0_24 = arith.constant 0 : index
    %c0_25 = arith.constant 0 : index
    %51 = vector.load %arg4[%c0_23, %c0_24, %c0_25] : memref<8x1155x100xbf16, #tpu.memory_space<vmem>>, vector<1x1155x100xbf16>
    %52 = vector.shape_cast %51 : vector<1x1155x100xbf16> to vector<1155x100xbf16>
    %cst_26 = arith.constant dense<0.000000e+00> : vector<8x100xf32>
    %53 = tpu.matmul %50, %52, %cst_26 {dimension_numbers = #tpu.dot_dimension_numbers<[1], [0], [0], [1], [0, 0, 1, 1], [], []>} : vector<8x1155xbf16>, vector<1155x100xbf16>, vector<8x100xf32> -> vector<8x100xf32>
    %54 = arith.addf %9, %53 : vector<8x100xf32>
    %c1_27 = arith.constant 1 : index
    %c0_28 = arith.constant 0 : index
    %55 = memref.load %arg1[%c1_27, %c0_28] : memref<8x9xf32, #tpu.memory_space<smem>>
    %56 = vector.broadcast %55 : f32 to vector<8x1155xf32>
    %57 = arith.mulf %0, %56 : vector<8x1155xf32>
    %c1_29 = arith.constant 1 : index
    %c1_30 = arith.constant 1 : index
    %58 = memref.load %arg1[%c1_29, %c1_30] : memref<8x9xf32, #tpu.memory_space<smem>>
    %59 = vector.broadcast %58 : f32 to vector<8x1155xf32>
    %60 = arith.mulf %1, %59 : vector<8x1155xf32>
    %61 = arith.addf %57, %60 : vector<8x1155xf32>
    %c1_31 = arith.constant 1 : index
    %c2_32 = arith.constant 2 : index
    %62 = memref.load %arg1[%c1_31, %c2_32] : memref<8x9xf32, #tpu.memory_space<smem>>
    %63 = vector.broadcast %62 : f32 to vector<8x1155xf32>
    %64 = arith.mulf %2, %63 : vector<8x1155xf32>
    %65 = arith.addf %61, %64 : vector<8x1155xf32>
    %c1_33 = arith.constant 1 : index
    %c3_34 = arith.constant 3 : index
    %66 = memref.load %arg1[%c1_33, %c3_34] : memref<8x9xf32, #tpu.memory_space<smem>>
    %67 = vector.broadcast %66 : f32 to vector<8x1155xf32>
    %68 = arith.mulf %3, %67 : vector<8x1155xf32>
    %69 = arith.addf %65, %68 : vector<8x1155xf32>
    %c1_35 = arith.constant 1 : index
    %c4_36 = arith.constant 4 : index
    %70 = memref.load %arg1[%c1_35, %c4_36] : memref<8x9xf32, #tpu.memory_space<smem>>
    %71 = vector.broadcast %70 : f32 to vector<8x1155xf32>
    %72 = arith.mulf %4, %71 : vector<8x1155xf32>
    %73 = arith.addf %69, %72 : vector<8x1155xf32>
    %c1_37 = arith.constant 1 : index
    %c5_38 = arith.constant 5 : index
    %74 = memref.load %arg1[%c1_37, %c5_38] : memref<8x9xf32, #tpu.memory_space<smem>>
    %75 = vector.broadcast %74 : f32 to vector<8x1155xf32>
    %76 = arith.mulf %5, %75 : vector<8x1155xf32>
    %77 = arith.addf %73, %76 : vector<8x1155xf32>
    %c1_39 = arith.constant 1 : index
    %c6_40 = arith.constant 6 : index
    %78 = memref.load %arg1[%c1_39, %c6_40] : memref<8x9xf32, #tpu.memory_space<smem>>
    %79 = vector.broadcast %78 : f32 to vector<8x1155xf32>
    %80 = arith.mulf %6, %79 : vector<8x1155xf32>
    %81 = arith.addf %77, %80 : vector<8x1155xf32>
    %c1_41 = arith.constant 1 : index
    %c7_42 = arith.constant 7 : index
    %82 = memref.load %arg1[%c1_41, %c7_42] : memref<8x9xf32, #tpu.memory_space<smem>>
    %83 = vector.broadcast %82 : f32 to vector<8x1155xf32>
    %84 = arith.mulf %7, %83 : vector<8x1155xf32>
    %85 = arith.addf %81, %84 : vector<8x1155xf32>
    %c1_43 = arith.constant 1 : index
    %c8_44 = arith.constant 8 : index
    %86 = memref.load %arg1[%c1_43, %c8_44] : memref<8x9xf32, #tpu.memory_space<smem>>
    %87 = vector.broadcast %86 : f32 to vector<8x1155xf32>
    %88 = arith.mulf %8, %87 : vector<8x1155xf32>
    %89 = arith.addf %85, %88 : vector<8x1155xf32>
    %c1_45 = arith.constant 1 : index
    %90 = memref.load %arg2[%c1_45] : memref<8xf32, #tpu.memory_space<smem>>
    %91 = vector.broadcast %90 : f32 to vector<8x1155xf32>
    %92 = arith.addf %89, %91 : vector<8x1155xf32>
    %cst_46 = arith.constant 0.000000e+00 : f32
    %93 = vector.broadcast %cst_46 : f32 to vector<8x1155xf32>
    %94 = arith.maximumf %92, %93 : vector<8x1155xf32>
    %95 = arith.truncf %94 : vector<8x1155xf32> to vector<8x1155xbf16>
    %c1_47 = arith.constant 1 : index
    %c0_48 = arith.constant 0 : index
    %c0_49 = arith.constant 0 : index
    %96 = vector.load %arg4[%c1_47, %c0_48, %c0_49] : memref<8x1155x100xbf16, #tpu.memory_space<vmem>>, vector<1x1155x100xbf16>
    %97 = vector.shape_cast %96 : vector<1x1155x100xbf16> to vector<1155x100xbf16>
    %cst_50 = arith.constant dense<0.000000e+00> : vector<8x100xf32>
    %98 = tpu.matmul %95, %97, %cst_50 {dimension_numbers = #tpu.dot_dimension_numbers<[1], [0], [0], [1], [0, 0, 1, 1], [], []>} : vector<8x1155xbf16>, vector<1155x100xbf16>, vector<8x100xf32> -> vector<8x100xf32>
    %99 = arith.addf %54, %98 : vector<8x100xf32>
    %c2_51 = arith.constant 2 : index
    %c0_52 = arith.constant 0 : index
    %100 = memref.load %arg1[%c2_51, %c0_52] : memref<8x9xf32, #tpu.memory_space<smem>>
    %101 = vector.broadcast %100 : f32 to vector<8x1155xf32>
    %102 = arith.mulf %0, %101 : vector<8x1155xf32>
    %c2_53 = arith.constant 2 : index
    %c1_54 = arith.constant 1 : index
    %103 = memref.load %arg1[%c2_53, %c1_54] : memref<8x9xf32, #tpu.memory_space<smem>>
    %104 = vector.broadcast %103 : f32 to vector<8x1155xf32>
    %105 = arith.mulf %1, %104 : vector<8x1155xf32>
    %106 = arith.addf %102, %105 : vector<8x1155xf32>
    %c2_55 = arith.constant 2 : index
    %c2_56 = arith.constant 2 : index
    %107 = memref.load %arg1[%c2_55, %c2_56] : memref<8x9xf32, #tpu.memory_space<smem>>
    %108 = vector.broadcast %107 : f32 to vector<8x1155xf32>
    %109 = arith.mulf %2, %108 : vector<8x1155xf32>
    %110 = arith.addf %106, %109 : vector<8x1155xf32>
    %c2_57 = arith.constant 2 : index
    %c3_58 = arith.constant 3 : index
    %111 = memref.load %arg1[%c2_57, %c3_58] : memref<8x9xf32, #tpu.memory_space<smem>>
    %112 = vector.broadcast %111 : f32 to vector<8x1155xf32>
    %113 = arith.mulf %3, %112 : vector<8x1155xf32>
    %114 = arith.addf %110, %113 : vector<8x1155xf32>
    %c2_59 = arith.constant 2 : index
    %c4_60 = arith.constant 4 : index
    %115 = memref.load %arg1[%c2_59, %c4_60] : memref<8x9xf32, #tpu.memory_space<smem>>
    %116 = vector.broadcast %115 : f32 to vector<8x1155xf32>
    %117 = arith.mulf %4, %116 : vector<8x1155xf32>
    %118 = arith.addf %114, %117 : vector<8x1155xf32>
    %c2_61 = arith.constant 2 : index
    %c5_62 = arith.constant 5 : index
    %119 = memref.load %arg1[%c2_61, %c5_62] : memref<8x9xf32, #tpu.memory_space<smem>>
    %120 = vector.broadcast %119 : f32 to vector<8x1155xf32>
    %121 = arith.mulf %5, %120 : vector<8x1155xf32>
    %122 = arith.addf %118, %121 : vector<8x1155xf32>
    %c2_63 = arith.constant 2 : index
    %c6_64 = arith.constant 6 : index
    %123 = memref.load %arg1[%c2_63, %c6_64] : memref<8x9xf32, #tpu.memory_space<smem>>
    %124 = vector.broadcast %123 : f32 to vector<8x1155xf32>
    %125 = arith.mulf %6, %124 : vector<8x1155xf32>
    %126 = arith.addf %122, %125 : vector<8x1155xf32>
    %c2_65 = arith.constant 2 : index
    %c7_66 = arith.constant 7 : index
    %127 = memref.load %arg1[%c2_65, %c7_66] : memref<8x9xf32, #tpu.memory_space<smem>>
    %128 = vector.broadcast %127 : f32 to vector<8x1155xf32>
    %129 = arith.mulf %7, %128 : vector<8x1155xf32>
    %130 = arith.addf %126, %129 : vector<8x1155xf32>
    %c2_67 = arith.constant 2 : index
    %c8_68 = arith.constant 8 : index
    %131 = memref.load %arg1[%c2_67, %c8_68] : memref<8x9xf32, #tpu.memory_space<smem>>
    %132 = vector.broadcast %131 : f32 to vector<8x1155xf32>
    %133 = arith.mulf %8, %132 : vector<8x1155xf32>
    %134 = arith.addf %130, %133 : vector<8x1155xf32>
    %c2_69 = arith.constant 2 : index
    %135 = memref.load %arg2[%c2_69] : memref<8xf32, #tpu.memory_space<smem>>
    %136 = vector.broadcast %135 : f32 to vector<8x1155xf32>
    %137 = arith.addf %134, %136 : vector<8x1155xf32>
    %cst_70 = arith.constant 0.000000e+00 : f32
    %138 = vector.broadcast %cst_70 : f32 to vector<8x1155xf32>
    %139 = arith.maximumf %137, %138 : vector<8x1155xf32>
    %140 = arith.truncf %139 : vector<8x1155xf32> to vector<8x1155xbf16>
    %c2_71 = arith.constant 2 : index
    %c0_72 = arith.constant 0 : index
    %c0_73 = arith.constant 0 : index
    %141 = vector.load %arg4[%c2_71, %c0_72, %c0_73] : memref<8x1155x100xbf16, #tpu.memory_space<vmem>>, vector<1x1155x100xbf16>
    %142 = vector.shape_cast %141 : vector<1x1155x100xbf16> to vector<1155x100xbf16>
    %cst_74 = arith.constant dense<0.000000e+00> : vector<8x100xf32>
    %143 = tpu.matmul %140, %142, %cst_74 {dimension_numbers = #tpu.dot_dimension_numbers<[1], [0], [0], [1], [0, 0, 1, 1], [], []>} : vector<8x1155xbf16>, vector<1155x100xbf16>, vector<8x100xf32> -> vector<8x100xf32>
    %144 = arith.addf %99, %143 : vector<8x100xf32>
    %c3_75 = arith.constant 3 : index
    %c0_76 = arith.constant 0 : index
    %145 = memref.load %arg1[%c3_75, %c0_76] : memref<8x9xf32, #tpu.memory_space<smem>>
    %146 = vector.broadcast %145 : f32 to vector<8x1155xf32>
    %147 = arith.mulf %0, %146 : vector<8x1155xf32>
    %c3_77 = arith.constant 3 : index
    %c1_78 = arith.constant 1 : index
    %148 = memref.load %arg1[%c3_77, %c1_78] : memref<8x9xf32, #tpu.memory_space<smem>>
    %149 = vector.broadcast %148 : f32 to vector<8x1155xf32>
    %150 = arith.mulf %1, %149 : vector<8x1155xf32>
    %151 = arith.addf %147, %150 : vector<8x1155xf32>
    %c3_79 = arith.constant 3 : index
    %c2_80 = arith.constant 2 : index
    %152 = memref.load %arg1[%c3_79, %c2_80] : memref<8x9xf32, #tpu.memory_space<smem>>
    %153 = vector.broadcast %152 : f32 to vector<8x1155xf32>
    %154 = arith.mulf %2, %153 : vector<8x1155xf32>
    %155 = arith.addf %151, %154 : vector<8x1155xf32>
    %c3_81 = arith.constant 3 : index
    %c3_82 = arith.constant 3 : index
    %156 = memref.load %arg1[%c3_81, %c3_82] : memref<8x9xf32, #tpu.memory_space<smem>>
    %157 = vector.broadcast %156 : f32 to vector<8x1155xf32>
    %158 = arith.mulf %3, %157 : vector<8x1155xf32>
    %159 = arith.addf %155, %158 : vector<8x1155xf32>
    %c3_83 = arith.constant 3 : index
    %c4_84 = arith.constant 4 : index
    %160 = memref.load %arg1[%c3_83, %c4_84] : memref<8x9xf32, #tpu.memory_space<smem>>
    %161 = vector.broadcast %160 : f32 to vector<8x1155xf32>
    %162 = arith.mulf %4, %161 : vector<8x1155xf32>
    %163 = arith.addf %159, %162 : vector<8x1155xf32>
    %c3_85 = arith.constant 3 : index
    %c5_86 = arith.constant 5 : index
    %164 = memref.load %arg1[%c3_85, %c5_86] : memref<8x9xf32, #tpu.memory_space<smem>>
    %165 = vector.broadcast %164 : f32 to vector<8x1155xf32>
    %166 = arith.mulf %5, %165 : vector<8x1155xf32>
    %167 = arith.addf %163, %166 : vector<8x1155xf32>
    %c3_87 = arith.constant 3 : index
    %c6_88 = arith.constant 6 : index
    %168 = memref.load %arg1[%c3_87, %c6_88] : memref<8x9xf32, #tpu.memory_space<smem>>
    %169 = vector.broadcast %168 : f32 to vector<8x1155xf32>
    %170 = arith.mulf %6, %169 : vector<8x1155xf32>
    %171 = arith.addf %167, %170 : vector<8x1155xf32>
    %c3_89 = arith.constant 3 : index
    %c7_90 = arith.constant 7 : index
    %172 = memref.load %arg1[%c3_89, %c7_90] : memref<8x9xf32, #tpu.memory_space<smem>>
    %173 = vector.broadcast %172 : f32 to vector<8x1155xf32>
    %174 = arith.mulf %7, %173 : vector<8x1155xf32>
    %175 = arith.addf %171, %174 : vector<8x1155xf32>
    %c3_91 = arith.constant 3 : index
    %c8_92 = arith.constant 8 : index
    %176 = memref.load %arg1[%c3_91, %c8_92] : memref<8x9xf32, #tpu.memory_space<smem>>
    %177 = vector.broadcast %176 : f32 to vector<8x1155xf32>
    %178 = arith.mulf %8, %177 : vector<8x1155xf32>
    %179 = arith.addf %175, %178 : vector<8x1155xf32>
    %c3_93 = arith.constant 3 : index
    %180 = memref.load %arg2[%c3_93] : memref<8xf32, #tpu.memory_space<smem>>
    %181 = vector.broadcast %180 : f32 to vector<8x1155xf32>
    %182 = arith.addf %179, %181 : vector<8x1155xf32>
    %cst_94 = arith.constant 0.000000e+00 : f32
    %183 = vector.broadcast %cst_94 : f32 to vector<8x1155xf32>
    %184 = arith.maximumf %182, %183 : vector<8x1155xf32>
    %185 = arith.truncf %184 : vector<8x1155xf32> to vector<8x1155xbf16>
    %c3_95 = arith.constant 3 : index
    %c0_96 = arith.constant 0 : index
    %c0_97 = arith.constant 0 : index
    %186 = vector.load %arg4[%c3_95, %c0_96, %c0_97] : memref<8x1155x100xbf16, #tpu.memory_space<vmem>>, vector<1x1155x100xbf16>
    %187 = vector.shape_cast %186 : vector<1x1155x100xbf16> to vector<1155x100xbf16>
    %cst_98 = arith.constant dense<0.000000e+00> : vector<8x100xf32>
    %188 = tpu.matmul %185, %187, %cst_98 {dimension_numbers = #tpu.dot_dimension_numbers<[1], [0], [0], [1], [0, 0, 1, 1], [], []>} : vector<8x1155xbf16>, vector<1155x100xbf16>, vector<8x100xf32> -> vector<8x100xf32>
    %189 = arith.addf %144, %188 : vector<8x100xf32>
    %c4_99 = arith.constant 4 : index
    %c0_100 = arith.constant 0 : index
    %190 = memref.load %arg1[%c4_99, %c0_100] : memref<8x9xf32, #tpu.memory_space<smem>>
    %191 = vector.broadcast %190 : f32 to vector<8x1155xf32>
    %192 = arith.mulf %0, %191 : vector<8x1155xf32>
    %c4_101 = arith.constant 4 : index
    %c1_102 = arith.constant 1 : index
    %193 = memref.load %arg1[%c4_101, %c1_102] : memref<8x9xf32, #tpu.memory_space<smem>>
    %194 = vector.broadcast %193 : f32 to vector<8x1155xf32>
    %195 = arith.mulf %1, %194 : vector<8x1155xf32>
    %196 = arith.addf %192, %195 : vector<8x1155xf32>
    %c4_103 = arith.constant 4 : index
    %c2_104 = arith.constant 2 : index
    %197 = memref.load %arg1[%c4_103, %c2_104] : memref<8x9xf32, #tpu.memory_space<smem>>
    %198 = vector.broadcast %197 : f32 to vector<8x1155xf32>
    %199 = arith.mulf %2, %198 : vector<8x1155xf32>
    %200 = arith.addf %196, %199 : vector<8x1155xf32>
    %c4_105 = arith.constant 4 : index
    %c3_106 = arith.constant 3 : index
    %201 = memref.load %arg1[%c4_105, %c3_106] : memref<8x9xf32, #tpu.memory_space<smem>>
    %202 = vector.broadcast %201 : f32 to vector<8x1155xf32>
    %203 = arith.mulf %3, %202 : vector<8x1155xf32>
    %204 = arith.addf %200, %203 : vector<8x1155xf32>
    %c4_107 = arith.constant 4 : index
    %c4_108 = arith.constant 4 : index
    %205 = memref.load %arg1[%c4_107, %c4_108] : memref<8x9xf32, #tpu.memory_space<smem>>
    %206 = vector.broadcast %205 : f32 to vector<8x1155xf32>
    %207 = arith.mulf %4, %206 : vector<8x1155xf32>
    %208 = arith.addf %204, %207 : vector<8x1155xf32>
    %c4_109 = arith.constant 4 : index
    %c5_110 = arith.constant 5 : index
    %209 = memref.load %arg1[%c4_109, %c5_110] : memref<8x9xf32, #tpu.memory_space<smem>>
    %210 = vector.broadcast %209 : f32 to vector<8x1155xf32>
    %211 = arith.mulf %5, %210 : vector<8x1155xf32>
    %212 = arith.addf %208, %211 : vector<8x1155xf32>
    %c4_111 = arith.constant 4 : index
    %c6_112 = arith.constant 6 : index
    %213 = memref.load %arg1[%c4_111, %c6_112] : memref<8x9xf32, #tpu.memory_space<smem>>
    %214 = vector.broadcast %213 : f32 to vector<8x1155xf32>
    %215 = arith.mulf %6, %214 : vector<8x1155xf32>
    %216 = arith.addf %212, %215 : vector<8x1155xf32>
    %c4_113 = arith.constant 4 : index
    %c7_114 = arith.constant 7 : index
    %217 = memref.load %arg1[%c4_113, %c7_114] : memref<8x9xf32, #tpu.memory_space<smem>>
    %218 = vector.broadcast %217 : f32 to vector<8x1155xf32>
    %219 = arith.mulf %7, %218 : vector<8x1155xf32>
    %220 = arith.addf %216, %219 : vector<8x1155xf32>
    %c4_115 = arith.constant 4 : index
    %c8_116 = arith.constant 8 : index
    %221 = memref.load %arg1[%c4_115, %c8_116] : memref<8x9xf32, #tpu.memory_space<smem>>
    %222 = vector.broadcast %221 : f32 to vector<8x1155xf32>
    %223 = arith.mulf %8, %222 : vector<8x1155xf32>
    %224 = arith.addf %220, %223 : vector<8x1155xf32>
    %c4_117 = arith.constant 4 : index
    %225 = memref.load %arg2[%c4_117] : memref<8xf32, #tpu.memory_space<smem>>
    %226 = vector.broadcast %225 : f32 to vector<8x1155xf32>
    %227 = arith.addf %224, %226 : vector<8x1155xf32>
    %cst_118 = arith.constant 0.000000e+00 : f32
    %228 = vector.broadcast %cst_118 : f32 to vector<8x1155xf32>
    %229 = arith.maximumf %227, %228 : vector<8x1155xf32>
    %230 = arith.truncf %229 : vector<8x1155xf32> to vector<8x1155xbf16>
    %c4_119 = arith.constant 4 : index
    %c0_120 = arith.constant 0 : index
    %c0_121 = arith.constant 0 : index
    %231 = vector.load %arg4[%c4_119, %c0_120, %c0_121] : memref<8x1155x100xbf16, #tpu.memory_space<vmem>>, vector<1x1155x100xbf16>
    %232 = vector.shape_cast %231 : vector<1x1155x100xbf16> to vector<1155x100xbf16>
    %cst_122 = arith.constant dense<0.000000e+00> : vector<8x100xf32>
    %233 = tpu.matmul %230, %232, %cst_122 {dimension_numbers = #tpu.dot_dimension_numbers<[1], [0], [0], [1], [0, 0, 1, 1], [], []>} : vector<8x1155xbf16>, vector<1155x100xbf16>, vector<8x100xf32> -> vector<8x100xf32>
    %234 = arith.addf %189, %233 : vector<8x100xf32>
    %c5_123 = arith.constant 5 : index
    %c0_124 = arith.constant 0 : index
    %235 = memref.load %arg1[%c5_123, %c0_124] : memref<8x9xf32, #tpu.memory_space<smem>>
    %236 = vector.broadcast %235 : f32 to vector<8x1155xf32>
    %237 = arith.mulf %0, %236 : vector<8x1155xf32>
    %c5_125 = arith.constant 5 : index
    %c1_126 = arith.constant 1 : index
    %238 = memref.load %arg1[%c5_125, %c1_126] : memref<8x9xf32, #tpu.memory_space<smem>>
    %239 = vector.broadcast %238 : f32 to vector<8x1155xf32>
    %240 = arith.mulf %1, %239 : vector<8x1155xf32>
    %241 = arith.addf %237, %240 : vector<8x1155xf32>
    %c5_127 = arith.constant 5 : index
    %c2_128 = arith.constant 2 : index
    %242 = memref.load %arg1[%c5_127, %c2_128] : memref<8x9xf32, #tpu.memory_space<smem>>
    %243 = vector.broadcast %242 : f32 to vector<8x1155xf32>
    %244 = arith.mulf %2, %243 : vector<8x1155xf32>
    %245 = arith.addf %241, %244 : vector<8x1155xf32>
    %c5_129 = arith.constant 5 : index
    %c3_130 = arith.constant 3 : index
    %246 = memref.load %arg1[%c5_129, %c3_130] : memref<8x9xf32, #tpu.memory_space<smem>>
    %247 = vector.broadcast %246 : f32 to vector<8x1155xf32>
    %248 = arith.mulf %3, %247 : vector<8x1155xf32>
    %249 = arith.addf %245, %248 : vector<8x1155xf32>
    %c5_131 = arith.constant 5 : index
    %c4_132 = arith.constant 4 : index
    %250 = memref.load %arg1[%c5_131, %c4_132] : memref<8x9xf32, #tpu.memory_space<smem>>
    %251 = vector.broadcast %250 : f32 to vector<8x1155xf32>
    %252 = arith.mulf %4, %251 : vector<8x1155xf32>
    %253 = arith.addf %249, %252 : vector<8x1155xf32>
    %c5_133 = arith.constant 5 : index
    %c5_134 = arith.constant 5 : index
    %254 = memref.load %arg1[%c5_133, %c5_134] : memref<8x9xf32, #tpu.memory_space<smem>>
    %255 = vector.broadcast %254 : f32 to vector<8x1155xf32>
    %256 = arith.mulf %5, %255 : vector<8x1155xf32>
    %257 = arith.addf %253, %256 : vector<8x1155xf32>
    %c5_135 = arith.constant 5 : index
    %c6_136 = arith.constant 6 : index
    %258 = memref.load %arg1[%c5_135, %c6_136] : memref<8x9xf32, #tpu.memory_space<smem>>
    %259 = vector.broadcast %258 : f32 to vector<8x1155xf32>
    %260 = arith.mulf %6, %259 : vector<8x1155xf32>
    %261 = arith.addf %257, %260 : vector<8x1155xf32>
    %c5_137 = arith.constant 5 : index
    %c7_138 = arith.constant 7 : index
    %262 = memref.load %arg1[%c5_137, %c7_138] : memref<8x9xf32, #tpu.memory_space<smem>>
    %263 = vector.broadcast %262 : f32 to vector<8x1155xf32>
    %264 = arith.mulf %7, %263 : vector<8x1155xf32>
    %265 = arith.addf %261, %264 : vector<8x1155xf32>
    %c5_139 = arith.constant 5 : index
    %c8_140 = arith.constant 8 : index
    %266 = memref.load %arg1[%c5_139, %c8_140] : memref<8x9xf32, #tpu.memory_space<smem>>
    %267 = vector.broadcast %266 : f32 to vector<8x1155xf32>
    %268 = arith.mulf %8, %267 : vector<8x1155xf32>
    %269 = arith.addf %265, %268 : vector<8x1155xf32>
    %c5_141 = arith.constant 5 : index
    %270 = memref.load %arg2[%c5_141] : memref<8xf32, #tpu.memory_space<smem>>
    %271 = vector.broadcast %270 : f32 to vector<8x1155xf32>
    %272 = arith.addf %269, %271 : vector<8x1155xf32>
    %cst_142 = arith.constant 0.000000e+00 : f32
    %273 = vector.broadcast %cst_142 : f32 to vector<8x1155xf32>
    %274 = arith.maximumf %272, %273 : vector<8x1155xf32>
    %275 = arith.truncf %274 : vector<8x1155xf32> to vector<8x1155xbf16>
    %c5_143 = arith.constant 5 : index
    %c0_144 = arith.constant 0 : index
    %c0_145 = arith.constant 0 : index
    %276 = vector.load %arg4[%c5_143, %c0_144, %c0_145] : memref<8x1155x100xbf16, #tpu.memory_space<vmem>>, vector<1x1155x100xbf16>
    %277 = vector.shape_cast %276 : vector<1x1155x100xbf16> to vector<1155x100xbf16>
    %cst_146 = arith.constant dense<0.000000e+00> : vector<8x100xf32>
    %278 = tpu.matmul %275, %277, %cst_146 {dimension_numbers = #tpu.dot_dimension_numbers<[1], [0], [0], [1], [0, 0, 1, 1], [], []>} : vector<8x1155xbf16>, vector<1155x100xbf16>, vector<8x100xf32> -> vector<8x100xf32>
    %279 = arith.addf %234, %278 : vector<8x100xf32>
    %c6_147 = arith.constant 6 : index
    %c0_148 = arith.constant 0 : index
    %280 = memref.load %arg1[%c6_147, %c0_148] : memref<8x9xf32, #tpu.memory_space<smem>>
    %281 = vector.broadcast %280 : f32 to vector<8x1155xf32>
    %282 = arith.mulf %0, %281 : vector<8x1155xf32>
    %c6_149 = arith.constant 6 : index
    %c1_150 = arith.constant 1 : index
    %283 = memref.load %arg1[%c6_149, %c1_150] : memref<8x9xf32, #tpu.memory_space<smem>>
    %284 = vector.broadcast %283 : f32 to vector<8x1155xf32>
    %285 = arith.mulf %1, %284 : vector<8x1155xf32>
    %286 = arith.addf %282, %285 : vector<8x1155xf32>
    %c6_151 = arith.constant 6 : index
    %c2_152 = arith.constant 2 : index
    %287 = memref.load %arg1[%c6_151, %c2_152] : memref<8x9xf32, #tpu.memory_space<smem>>
    %288 = vector.broadcast %287 : f32 to vector<8x1155xf32>
    %289 = arith.mulf %2, %288 : vector<8x1155xf32>
    %290 = arith.addf %286, %289 : vector<8x1155xf32>
    %c6_153 = arith.constant 6 : index
    %c3_154 = arith.constant 3 : index
    %291 = memref.load %arg1[%c6_153, %c3_154] : memref<8x9xf32, #tpu.memory_space<smem>>
    %292 = vector.broadcast %291 : f32 to vector<8x1155xf32>
    %293 = arith.mulf %3, %292 : vector<8x1155xf32>
    %294 = arith.addf %290, %293 : vector<8x1155xf32>
    %c6_155 = arith.constant 6 : index
    %c4_156 = arith.constant 4 : index
    %295 = memref.load %arg1[%c6_155, %c4_156] : memref<8x9xf32, #tpu.memory_space<smem>>
    %296 = vector.broadcast %295 : f32 to vector<8x1155xf32>
    %297 = arith.mulf %4, %296 : vector<8x1155xf32>
    %298 = arith.addf %294, %297 : vector<8x1155xf32>
    %c6_157 = arith.constant 6 : index
    %c5_158 = arith.constant 5 : index
    %299 = memref.load %arg1[%c6_157, %c5_158] : memref<8x9xf32, #tpu.memory_space<smem>>
    %300 = vector.broadcast %299 : f32 to vector<8x1155xf32>
    %301 = arith.mulf %5, %300 : vector<8x1155xf32>
    %302 = arith.addf %298, %301 : vector<8x1155xf32>
    %c6_159 = arith.constant 6 : index
    %c6_160 = arith.constant 6 : index
    %303 = memref.load %arg1[%c6_159, %c6_160] : memref<8x9xf32, #tpu.memory_space<smem>>
    %304 = vector.broadcast %303 : f32 to vector<8x1155xf32>
    %305 = arith.mulf %6, %304 : vector<8x1155xf32>
    %306 = arith.addf %302, %305 : vector<8x1155xf32>
    %c6_161 = arith.constant 6 : index
    %c7_162 = arith.constant 7 : index
    %307 = memref.load %arg1[%c6_161, %c7_162] : memref<8x9xf32, #tpu.memory_space<smem>>
    %308 = vector.broadcast %307 : f32 to vector<8x1155xf32>
    %309 = arith.mulf %7, %308 : vector<8x1155xf32>
    %310 = arith.addf %306, %309 : vector<8x1155xf32>
    %c6_163 = arith.constant 6 : index
    %c8_164 = arith.constant 8 : index
    %311 = memref.load %arg1[%c6_163, %c8_164] : memref<8x9xf32, #tpu.memory_space<smem>>
    %312 = vector.broadcast %311 : f32 to vector<8x1155xf32>
    %313 = arith.mulf %8, %312 : vector<8x1155xf32>
    %314 = arith.addf %310, %313 : vector<8x1155xf32>
    %c6_165 = arith.constant 6 : index
    %315 = memref.load %arg2[%c6_165] : memref<8xf32, #tpu.memory_space<smem>>
    %316 = vector.broadcast %315 : f32 to vector<8x1155xf32>
    %317 = arith.addf %314, %316 : vector<8x1155xf32>
    %cst_166 = arith.constant 0.000000e+00 : f32
    %318 = vector.broadcast %cst_166 : f32 to vector<8x1155xf32>
    %319 = arith.maximumf %317, %318 : vector<8x1155xf32>
    %320 = arith.truncf %319 : vector<8x1155xf32> to vector<8x1155xbf16>
    %c6_167 = arith.constant 6 : index
    %c0_168 = arith.constant 0 : index
    %c0_169 = arith.constant 0 : index
    %321 = vector.load %arg4[%c6_167, %c0_168, %c0_169] : memref<8x1155x100xbf16, #tpu.memory_space<vmem>>, vector<1x1155x100xbf16>
    %322 = vector.shape_cast %321 : vector<1x1155x100xbf16> to vector<1155x100xbf16>
    %cst_170 = arith.constant dense<0.000000e+00> : vector<8x100xf32>
    %323 = tpu.matmul %320, %322, %cst_170 {dimension_numbers = #tpu.dot_dimension_numbers<[1], [0], [0], [1], [0, 0, 1, 1], [], []>} : vector<8x1155xbf16>, vector<1155x100xbf16>, vector<8x100xf32> -> vector<8x100xf32>
    %324 = arith.addf %279, %323 : vector<8x100xf32>
    %c7_171 = arith.constant 7 : index
    %c0_172 = arith.constant 0 : index
    %325 = memref.load %arg1[%c7_171, %c0_172] : memref<8x9xf32, #tpu.memory_space<smem>>
    %326 = vector.broadcast %325 : f32 to vector<8x1155xf32>
    %327 = arith.mulf %0, %326 : vector<8x1155xf32>
    %c7_173 = arith.constant 7 : index
    %c1_174 = arith.constant 1 : index
    %328 = memref.load %arg1[%c7_173, %c1_174] : memref<8x9xf32, #tpu.memory_space<smem>>
    %329 = vector.broadcast %328 : f32 to vector<8x1155xf32>
    %330 = arith.mulf %1, %329 : vector<8x1155xf32>
    %331 = arith.addf %327, %330 : vector<8x1155xf32>
    %c7_175 = arith.constant 7 : index
    %c2_176 = arith.constant 2 : index
    %332 = memref.load %arg1[%c7_175, %c2_176] : memref<8x9xf32, #tpu.memory_space<smem>>
    %333 = vector.broadcast %332 : f32 to vector<8x1155xf32>
    %334 = arith.mulf %2, %333 : vector<8x1155xf32>
    %335 = arith.addf %331, %334 : vector<8x1155xf32>
    %c7_177 = arith.constant 7 : index
    %c3_178 = arith.constant 3 : index
    %336 = memref.load %arg1[%c7_177, %c3_178] : memref<8x9xf32, #tpu.memory_space<smem>>
    %337 = vector.broadcast %336 : f32 to vector<8x1155xf32>
    %338 = arith.mulf %3, %337 : vector<8x1155xf32>
    %339 = arith.addf %335, %338 : vector<8x1155xf32>
    %c7_179 = arith.constant 7 : index
    %c4_180 = arith.constant 4 : index
    %340 = memref.load %arg1[%c7_179, %c4_180] : memref<8x9xf32, #tpu.memory_space<smem>>
    %341 = vector.broadcast %340 : f32 to vector<8x1155xf32>
    %342 = arith.mulf %4, %341 : vector<8x1155xf32>
    %343 = arith.addf %339, %342 : vector<8x1155xf32>
    %c7_181 = arith.constant 7 : index
    %c5_182 = arith.constant 5 : index
    %344 = memref.load %arg1[%c7_181, %c5_182] : memref<8x9xf32, #tpu.memory_space<smem>>
    %345 = vector.broadcast %344 : f32 to vector<8x1155xf32>
    %346 = arith.mulf %5, %345 : vector<8x1155xf32>
    %347 = arith.addf %343, %346 : vector<8x1155xf32>
    %c7_183 = arith.constant 7 : index
    %c6_184 = arith.constant 6 : index
    %348 = memref.load %arg1[%c7_183, %c6_184] : memref<8x9xf32, #tpu.memory_space<smem>>
    %349 = vector.broadcast %348 : f32 to vector<8x1155xf32>
    %350 = arith.mulf %6, %349 : vector<8x1155xf32>
    %351 = arith.addf %347, %350 : vector<8x1155xf32>
    %c7_185 = arith.constant 7 : index
    %c7_186 = arith.constant 7 : index
    %352 = memref.load %arg1[%c7_185, %c7_186] : memref<8x9xf32, #tpu.memory_space<smem>>
    %353 = vector.broadcast %352 : f32 to vector<8x1155xf32>
    %354 = arith.mulf %7, %353 : vector<8x1155xf32>
    %355 = arith.addf %351, %354 : vector<8x1155xf32>
    %c7_187 = arith.constant 7 : index
    %c8_188 = arith.constant 8 : index
    %356 = memref.load %arg1[%c7_187, %c8_188] : memref<8x9xf32, #tpu.memory_space<smem>>
    %357 = vector.broadcast %356 : f32 to vector<8x1155xf32>
    %358 = arith.mulf %8, %357 : vector<8x1155xf32>
    %359 = arith.addf %355, %358 : vector<8x1155xf32>
    %c7_189 = arith.constant 7 : index
    %360 = memref.load %arg2[%c7_189] : memref<8xf32, #tpu.memory_space<smem>>
    %361 = vector.broadcast %360 : f32 to vector<8x1155xf32>
    %362 = arith.addf %359, %361 : vector<8x1155xf32>
    %cst_190 = arith.constant 0.000000e+00 : f32
    %363 = vector.broadcast %cst_190 : f32 to vector<8x1155xf32>
    %364 = arith.maximumf %362, %363 : vector<8x1155xf32>
    %365 = arith.truncf %364 : vector<8x1155xf32> to vector<8x1155xbf16>
    %c7_191 = arith.constant 7 : index
    %c0_192 = arith.constant 0 : index
    %c0_193 = arith.constant 0 : index
    %366 = vector.load %arg4[%c7_191, %c0_192, %c0_193] : memref<8x1155x100xbf16, #tpu.memory_space<vmem>>, vector<1x1155x100xbf16>
    %367 = vector.shape_cast %366 : vector<1x1155x100xbf16> to vector<1155x100xbf16>
    %cst_194 = arith.constant dense<0.000000e+00> : vector<8x100xf32>
    %368 = tpu.matmul %365, %367, %cst_194 {dimension_numbers = #tpu.dot_dimension_numbers<[1], [0], [0], [1], [0, 0, 1, 1], [], []>} : vector<8x1155xbf16>, vector<1155x100xbf16>, vector<8x100xf32> -> vector<8x100xf32>
    %369 = arith.addf %324, %368 : vector<8x100xf32>
    %c0_195 = arith.constant 0 : index
    %c0_196 = arith.constant 0 : index
    %370 = vector.load %arg5[%c0_195, %c0_196] : memref<1x100xf32, #tpu.memory_space<vmem>>, vector<1x100xf32>
    %371 = vector.broadcast %370 : vector<1x100xf32> to vector<8x100xf32>
    %372 = arith.addf %369, %371 : vector<8x100xf32>
    %cst_197 = arith.constant 0.000000e+00 : f32
    %373 = vector.broadcast %cst_197 : f32 to vector<8x100xf32>
    %374 = arith.maximumf %372, %373 : vector<8x100xf32>
    %c0_198 = arith.constant 0 : index
    %c0_199 = arith.constant 0 : index
    %375 = vector.load %arg6[%c0_198, %c0_199] : memref<100x128xf32, #tpu.memory_space<vmem>>, vector<100x128xf32>
    %cst_200 = arith.constant dense<0.000000e+00> : vector<8x128xf32>
    %376 = tpu.matmul %374, %375, %cst_200 {dimension_numbers = #tpu.dot_dimension_numbers<[1], [0], [0], [1], [0, 0, 1, 1], [], []>} : vector<8x100xf32>, vector<100x128xf32>, vector<8x128xf32> -> vector<8x128xf32>
    %c0_201 = arith.constant 0 : index
    %c0_202 = arith.constant 0 : index
    %377 = vector.load %arg7[%c0_201, %c0_202] : memref<1x128xf32, #tpu.memory_space<vmem>>, vector<1x128xf32>
    %378 = vector.broadcast %377 : vector<1x128xf32> to vector<8x128xf32>
    %379 = arith.addf %376, %378 : vector<8x128xf32>
    %cst_203 = arith.constant dense<0xFF800000> : vector<8xf32>
    %380 = vector.multi_reduction <maximumf>, %379, %cst_203 [1] : vector<8x128xf32> to vector<8xf32>
    %381 = vector.shape_cast %380 : vector<8xf32> to vector<8x1xf32>
    %382 = vector.broadcast %381 : vector<8x1xf32> to vector<8x128xf32>
    %383 = arith.subf %379, %382 : vector<8x128xf32>
    %384 = math.exp %383 : vector<8x128xf32>
    %cst_204 = arith.constant dense<0.000000e+00> : vector<8xf32>
    %385 = vector.multi_reduction <add>, %384, %cst_204 [1] : vector<8x128xf32> to vector<8xf32>
    %386 = vector.shape_cast %385 : vector<8xf32> to vector<8x1xf32>
    %387 = math.log %386 : vector<8x1xf32>
    %388 = vector.broadcast %387 : vector<8x1xf32> to vector<8x128xf32>
    %389 = arith.subf %383, %388 : vector<8x128xf32>
    %390 = vector.extract_strided_slice %389 {offsets = [0, 0], sizes = [8, 3], strides = [1, 1]} : vector<8x128xf32> to vector<8x3xf32>
    %c0_205 = arith.constant 0 : index
    %c0_206 = arith.constant 0 : index
    %391 = vector.load %arg8[%c0_205, %c0_206] : memref<8x3xf32, #tpu.memory_space<vmem>>, vector<8x3xf32>
    tpu.vector_store %arg8[%c0_205, %c0_206], %390 {strides = array<i32>} : memref<8x3xf32, #tpu.memory_space<vmem>>, vector<8x3xf32>,
    return
  }
  func.func @transform_0(%arg0: i32) -> (i32, i32) {
    %c0_i32 = arith.constant 0 : i32
    %c0_i32_0 = arith.constant 0 : i32
    %c0_i32_1 = arith.constant 0 : i32
    return %c0_i32, %c0_i32_0 : i32, i32
  }
  func.func @transform_1(%arg0: i32) -> i32 {
    %c0_i32 = arith.constant 0 : i32
    %c0_i32_0 = arith.constant 0 : i32
    return %c0_i32 : i32
  }
  func.func @transform_2(%arg0: i32) -> (i32, i32) {
    %c0_i32 = arith.constant 0 : i32
    %c0_i32_0 = arith.constant 0 : i32
    return %arg0, %c0_i32 : i32, i32
  }
  func.func @transform_3(%arg0: i32) -> (i32, i32, i32) {
    %c0_i32 = arith.constant 0 : i32
    %c0_i32_0 = arith.constant 0 : i32
    %c0_i32_1 = arith.constant 0 : i32
    %c0_i32_2 = arith.constant 0 : i32
    return %c0_i32, %c0_i32_0, %c0_i32_1 : i32, i32, i32
  }
  func.func @transform_4(%arg0: i32) -> (i32, i32) {
    %c0_i32 = arith.constant 0 : i32
    %c0_i32_0 = arith.constant 0 : i32
    %c0_i32_1 = arith.constant 0 : i32
    return %c0_i32, %c0_i32_0 : i32, i32
  }
  func.func @transform_5(%arg0: i32) -> (i32, i32) {
    %c0_i32 = arith.constant 0 : i32
    %c0_i32_0 = arith.constant 0 : i32
    %c0_i32_1 = arith.constant 0 : i32
    return %c0_i32, %c0_i32_0 : i32, i32
  }
  func.func @transform_6(%arg0: i32) -> (i32, i32) {
    %c0_i32 = arith.constant 0 : i32
    %c0_i32_0 = arith.constant 0 : i32
    %c0_i32_1 = arith.constant 0 : i32
    return %c0_i32, %c0_i32_0 : i32, i32
  }
  func.func @transform_7(%arg0: i32) -> (i32, i32) {
    %c0_i32 = arith.constant 0 : i32
    %c0_i32_0 = arith.constant 0 : i32
    return %arg0, %c0_i32 : i32, i32
  }
}

</mosaic_0001>

<llo_original>
// kernel: geno_net_forward.1
$region0: #{geno_net_forward.1}
  #allocation0 [shape = 'u32[]', space=smem, size = 0x4, offset = 0x4, fixed_abs, tag = 'smem constant byte address 0x4 - core index']
  #allocation1 [shape = 'u32[144,128]{1,0:T(1,128)}', space=vmem, size = 0x12000, scoped, tag = 'internal scratch']
  %s0 = inlined_call_operand.vmem [shape: f32[8,9], index: 0, kind: input, shape index: {}]
  %s1 = inlined_call_operand.vmem [shape: f32[8], index: 1, kind: input, shape index: {}]
  %s2 = inlined_call_operand.vmem [shape: f32[8,1280], index: 2, kind: input, shape index: {}]
  %s3 = inlined_call_operand.vmem [shape: bf16[8,1155,100], index: 3, kind: input, shape index: {}]
  %s4 = inlined_call_operand.vmem [shape: f32[1,100], index: 4, kind: input, shape index: {}]
  %s5 = inlined_call_operand.vmem [shape: f32[100,128], index: 5, kind: input, shape index: {}]
  %s6 = inlined_call_operand.vmem [shape: f32[1,128], index: 6, kind: input, shape index: {}]
  %s7 = inlined_call_operand.vmem [shape: f32[8,3], index: 7, kind: output, shape index: {}]
  %s8 = sld [smem:[#allocation0]]
  $region46: #{geno_net_forward.1} parent=0
    _
  %s10 = ssub.s32 1, %s8
  %s11 = scalar_select 0, %s10, %s8
  $region1: #{geno_net_forward.1} parent=0
    #allocation2 [shape = 'u8[4096]{0}', space=smem, size = 0x1000, scoped, tag = 'input window, operand 0, single buffered']
    #allocation3 [shape = 's32[1]{0}', space=sflag, size = 0x4, scoped, tag = 'scoped memory for geno_net_forward.1']
    #allocation4 [shape = 'u8[512]{0}', space=smem, size = 0x200, scoped, tag = 'input window, operand 1, single buffered']
    #allocation5 [shape = 's32[1]{0}', space=sflag, size = 0x4, scoped, tag = 'scoped memory for geno_net_forward.1']
    %12 = vsyncpa [#allocation3], 0
    %13 = vsyncpa [#allocation5], 0
    // Predicated region
    $region2: #{geno_net_forward.1} parent=1 // pred_check
      _
    $region3: #{geno_net_forward.1} parent=1 // pred_check_branch
      %15 = sbr.rel (0) target = $region5
    $region4: #{geno_net_forward.1} parent=1 // pred_region
      %s17 = ssub.s32 128, 128
      %18 = vsyncadd [#allocation3], %s17
      %s20 = sshll.u32 %s0, 4
      %s21 = int_to_ptr.vmem [resolvable:$true] %s20
      %23 = dma.vmem_to_smem %s21, 128, [#allocation2], [#allocation3]
    $region5: #{geno_net_forward.1} parent=1 // pred_fallthru
      _
    // Predicated region
    $region6: #{geno_net_forward.1} parent=1 // pred_check
      _
    $region7: #{geno_net_forward.1} parent=1 // pred_check_branch
      %25 = sbr.rel (0) target = $region9
    $region8: #{geno_net_forward.1} parent=1 // pred_region
      %s27 = ssub.s32 16, 16
      %28 = vsyncadd [#allocation5], %s27
      %s30 = sshll.u32 %s1, 4
      %s31 = int_to_ptr.vmem [resolvable:$true] %s30
      %33 = dma.vmem_to_smem %s31, 16, [#allocation4], [#allocation5]
    $region9: #{geno_net_forward.1} parent=1 // pred_fallthru
      _
    // Predicated region
    $region10: #{geno_net_forward.1} parent=1 // pred_check
      _
    $region11: #{geno_net_forward.1} parent=1 // pred_check_branch
      %35 = sbr.rel (0) target = $region13
    $region12: #{geno_net_forward.1} parent=1 // pred_region
      _
    $region13: #{geno_net_forward.1} parent=1 // pred_fallthru
      _
    // Predicated region
    $region14: #{geno_net_forward.1} parent=1 // pred_check
      _
    $region15: #{geno_net_forward.1} parent=1 // pred_check_branch
      %37 = sbr.rel (0) target = $region17
    $region16: #{geno_net_forward.1} parent=1 // pred_region
      _
    $region17: #{geno_net_forward.1} parent=1 // pred_fallthru
      _
    // Predicated region
    $region18: #{geno_net_forward.1} parent=1 // pred_check
      _
    $region19: #{geno_net_forward.1} parent=1 // pred_check_branch
      %39 = sbr.rel (0) target = $region21
    $region20: #{geno_net_forward.1} parent=1 // pred_region
      _
    $region21: #{geno_net_forward.1} parent=1 // pred_fallthru
      _
    // Predicated region
    $region22: #{geno_net_forward.1} parent=1 // pred_check
      _
    $region23: #{geno_net_forward.1} parent=1 // pred_check_branch
      %41 = sbr.rel (0) target = $region25
    $region24: #{geno_net_forward.1} parent=1 // pred_region
      _
    $region25: #{geno_net_forward.1} parent=1 // pred_fallthru
      _
    // Predicated region
    $region26: #{geno_net_forward.1} parent=1 // pred_check
      _
    $region27: #{geno_net_forward.1} parent=1 // pred_check_branch
      %43 = sbr.rel (0) target = $region29
    $region28: #{geno_net_forward.1} parent=1 // pred_region
      _
    $region29: #{geno_net_forward.1} parent=1 // pred_fallthru
      _
    // Predicated region
    $region30: #{geno_net_forward.1} parent=1 // pred_check
      _
    $region31: #{geno_net_forward.1} parent=1 // pred_check_branch
      %45 = sbr.rel (0) target = $region33
    $region32: #{geno_net_forward.1} parent=1 // pred_region
      %46 = dma.done [#allocation3], 128
    $region33: #{geno_net_forward.1} parent=1 // pred_fallthru
      _
    // Predicated region
    $region34: #{geno_net_forward.1} parent=1 // pred_check
      _
    $region35: #{geno_net_forward.1} parent=1 // pred_check_branch
      %48 = sbr.rel (0) target = $region37
    $region36: #{geno_net_forward.1} parent=1 // pred_region
      %49 = dma.done [#allocation5], 16
    $region37: #{geno_net_forward.1} parent=1 // pred_fallthru
      _
    %50 = sfence
    %v52 = vld [vmem:[%s2] sm:$0xff]
    %v53 = vld [vmem:[%s2 + $0x8] sm:$0xff]
    %v54 = vld [vmem:[%s2 + $0x10] sm:$0xff]
    %v55 = vld [vmem:[%s2 + $0x18] sm:$0xff]
    %v56 = vld [vmem:[%s2 + $0x20] sm:$0xff]
    %v57 = vld [vmem:[%s2 + $0x28] sm:$0xff]
    %v58 = vld [vmem:[%s2 + $0x30] sm:$0xff]
    %v59 = vld [vmem:[%s2 + $0x38] sm:$0xff]
    %v60 = vld [vmem:[%s2 + $0x40] sm:$0xff]
    %v61 = vld [vmem:[%s2 + $0x48] sm:$0xff]
    %s62 = sld [smem:[#allocation2]]
    %v63 = vstv %s62
    %v64 = vmul.f32 %v52, %v63
    %v65 = vmul.f32 %v53, %v63
    %v66 = vmul.f32 %v54, %v63
    %v67 = vmul.f32 %v55, %v63
    %v68 = vmul.f32 %v56, %v63
    %v69 = vmul.f32 %v57, %v63
    %v70 = vmul.f32 %v58, %v63
    %v71 = vmul.f32 %v59, %v63
    %v72 = vmul.f32 %v60, %v63
    %v73 = vmul.f32 %v61, %v63
    %s74 = sld [smem:[#allocation2 + $0x1]]
    %v75 = vstv %s74
    %v76 = vmul.f32 %v52, %v75
    %v77 = vmul.f32 %v53, %v75
    %v78 = vmul.f32 %v54, %v75
    %v79 = vmul.f32 %v55, %v75
    %v80 = vmul.f32 %v56, %v75
    %v81 = vmul.f32 %v57, %v75
    %v82 = vmul.f32 %v58, %v75
    %v83 = vmul.f32 %v59, %v75
    %v84 = vmul.f32 %v60, %v75
    %v85 = vmul.f32 %v61, %v75
    %96 = vrot.lane.b32.xlu0 %v76, 127
    %v97 = vpop.permute.xlu0 %96
    %98 = vrot.lane.b32.xlu0 %v77, 127
    %v99 = vpop.permute.xlu0 %98
    %100 = vrot.lane.b32.xlu0 %v78, 127
    %v101 = vpop.permute.xlu0 %100
    %102 = vrot.lane.b32.xlu0 %v79, 127
    %v103 = vpop.permute.xlu0 %102
    %104 = vrot.lane.b32.xlu0 %v80, 127
    %v105 = vpop.permute.xlu0 %104
    %106 = vrot.lane.b32.xlu0 %v81, 127
    %v107 = vpop.permute.xlu0 %106
    %108 = vrot.lane.b32.xlu0 %v82, 127
    %v109 = vpop.permute.xlu0 %108
    %110 = vrot.lane.b32.xlu0 %v83, 127
    %v111 = vpop.permute.xlu0 %110
    %112 = vrot.lane.b32.xlu0 %v84, 127
    %v113 = vpop.permute.xlu0 %112
    %114 = vrot.lane.b32.xlu0 %v85, 127
    %v115 = vpop.permute.xlu0 %114
    %vm116 = vcmask 1039360
    %v117 = vsel %vm116, %v97, %v99
    %v118 = vsel %vm116, %v99, %v101
    %v119 = vsel %vm116, %v101, %v103
    %v120 = vsel %vm116, %v103, %v105
    %v121 = vsel %vm116, %v105, %v107
    %v122 = vsel %vm116, %v107, %v109
    %v123 = vsel %vm116, %v109, %v111
    %v124 = vsel %vm116, %v111, %v113
    %v125 = vsel %vm116, %v113, %v115
    %v136 = vadd.f32 %v64, %v117
    %v137 = vadd.f32 %v65, %v118
    %v138 = vadd.f32 %v66, %v119
    %v139 = vadd.f32 %v67, %v120
    %v140 = vadd.f32 %v68, %v121
    %v141 = vadd.f32 %v69, %v122
    %v142 = vadd.f32 %v70, %v123
    %v143 = vadd.f32 %v71, %v124
    %v144 = vadd.f32 %v72, %v125
    %v145 = vadd.f32 %v73, %v115
    %s146 = sld [smem:[#allocation2 + $0x2]]
    %v147 = vstv %s146
    %v148 = vmul.f32 %v52, %v147
    %v149 = vmul.f32 %v53, %v147
    %v150 = vmul.f32 %v54, %v147
    %v151 = vmul.f32 %v55, %v147
    %v152 = vmul.f32 %v56, %v147
    %v153 = vmul.f32 %v57, %v147
    %v154 = vmul.f32 %v58, %v147
    %v155 = vmul.f32 %v59, %v147
    %v156 = vmul.f32 %v60, %v147
    %v157 = vmul.f32 %v61, %v147
    %168 = vrot.lane.b32.xlu0 %v148, 126
    %v169 = vpop.permute.xlu0 %168
    %170 = vrot.lane.b32.xlu0 %v149, 126
    %v171 = vpop.permute.xlu0 %170
    %172 = vrot.lane.b32.xlu0 %v150, 126
    %v173 = vpop.permute.xlu0 %172
    %174 = vrot.lane.b32.xlu0 %v151, 126
    %v175 = vpop.permute.xlu0 %174
    %176 = vrot.lane.b32.xlu0 %v152, 126
    %v177 = vpop.permute.xlu0 %176
    %178 = vrot.lane.b32.xlu0 %v153, 126
    %v179 = vpop.permute.xlu0 %178
    %180 = vrot.lane.b32.xlu0 %v154, 126
    %v181 = vpop.permute.xlu0 %180
    %182 = vrot.lane.b32.xlu0 %v155, 126
    %v183 = vpop.permute.xlu0 %182
    %184 = vrot.lane.b32.xlu0 %v156, 126
    %v185 = vpop.permute.xlu0 %184
    %186 = vrot.lane.b32.xlu0 %v157, 126
    %v187 = vpop.permute.xlu0 %186
    %vm188 = vcmask 1031168
    %v189 = vsel %vm188, %v169, %v171
    %v190 = vsel %vm188, %v171, %v173
    %v191 = vsel %vm188, %v173, %v175
    %v192 = vsel %vm188, %v175, %v177
    %v193 = vsel %vm188, %v177, %v179
    %v194 = vsel %vm188, %v179, %v181
    %v195 = vsel %vm188, %v181, %v183
    %v196 = vsel %vm188, %v183, %v185
    %v197 = vsel %vm188, %v185, %v187
    %v208 = vadd.f32 %v136, %v189
    %v209 = vadd.f32 %v137, %v190
    %v210 = vadd.f32 %v138, %v191
    %v211 = vadd.f32 %v139, %v192
    %v212 = vadd.f32 %v140, %v193
    %v213 = vadd.f32 %v141, %v194
    %v214 = vadd.f32 %v142, %v195
    %v215 = vadd.f32 %v143, %v196
    %v216 = vadd.f32 %v144, %v197
    %v217 = vadd.f32 %v145, %v187
    %s218 = sld [smem:[#allocation2 + $0x3]]
    %v219 = vstv %s218
    %v220 = vmul.f32 %v52, %v219
    %v221 = vmul.f32 %v53, %v219
    %v222 = vmul.f32 %v54, %v219
    %v223 = vmul.f32 %v55, %v219
    %v224 = vmul.f32 %v56, %v219
    %v225 = vmul.f32 %v57, %v219
    %v226 = vmul.f32 %v58, %v219
    %v227 = vmul.f32 %v59, %v219
    %v228 = vmul.f32 %v60, %v219
    %v229 = vmul.f32 %v61, %v219
    %240 = vrot.lane.b32.xlu0 %v220, 93
    %v241 = vpop.permute.xlu0 %240
    %242 = vrot.lane.b32.xlu0 %v221, 93
    %v243 = vpop.permute.xlu0 %242
    %244 = vrot.lane.b32.xlu0 %v222, 93
    %v245 = vpop.permute.xlu0 %244
    %246 = vrot.lane.b32.xlu0 %v223, 93
    %v247 = vpop.permute.xlu0 %246
    %248 = vrot.lane.b32.xlu0 %v224, 93
    %v249 = vpop.permute.xlu0 %248
    %250 = vrot.lane.b32.xlu0 %v225, 93
    %v251 = vpop.permute.xlu0 %250
    %252 = vrot.lane.b32.xlu0 %v226, 93
    %v253 = vpop.permute.xlu0 %252
    %254 = vrot.lane.b32.xlu0 %v227, 93
    %v255 = vpop.permute.xlu0 %254
    %256 = vrot.lane.b32.xlu0 %v228, 93
    %v257 = vpop.permute.xlu0 %256
    %258 = vrot.lane.b32.xlu0 %v229, 93
    %v259 = vpop.permute.xlu0 %258
    %vm260 = vcmask 760832
    %v261 = vsel %vm260, %v241, %v243
    %v262 = vsel %vm260, %v243, %v245
    %v263 = vsel %vm260, %v245, %v247
    %v264 = vsel %vm260, %v247, %v249
    %v265 = vsel %vm260, %v249, %v251
    %v266 = vsel %vm260, %v251, %v253
    %v267 = vsel %vm260, %v253, %v255
    %v268 = vsel %vm260, %v255, %v257
    %v269 = vsel %vm260, %v257, %v259
    %v280 = vadd.f32 %v208, %v261
    %v281 = vadd.f32 %v209, %v262
    %v282 = vadd.f32 %v210, %v263
    %v283 = vadd.f32 %v211, %v264
    %v284 = vadd.f32 %v212, %v265
    %v285 = vadd.f32 %v213, %v266
    %v286 = vadd.f32 %v214, %v267
    %v287 = vadd.f32 %v215, %v268
    %v288 = vadd.f32 %v216, %v269
    %v289 = vadd.f32 %v217, %v259
    %s290 = sld [smem:[#allocation2 + $0x4]]
    %v291 = vstv %s290
    %v292 = vmul.f32 %v52, %v291
    %v293 = vmul.f32 %v53, %v291
    %v294 = vmul.f32 %v54, %v291
    %v295 = vmul.f32 %v55, %v291
    %v296 = vmul.f32 %v56, %v291
    %v297 = vmul.f32 %v57, %v291
    %v298 = vmul.f32 %v58, %v291
    %v299 = vmul.f32 %v59, %v291
    %v300 = vmul.f32 %v60, %v291
    %v301 = vmul.f32 %v61, %v291
    %312 = vrot.lane.b32.xlu0 %v292, 92
    %v313 = vpop.permute.xlu0 %312
    %314 = vrot.lane.b32.xlu0 %v293, 92
    %v315 = vpop.permute.xlu0 %314
    %316 = vrot.lane.b32.xlu0 %v294, 92
    %v317 = vpop.permute.xlu0 %316
    %318 = vrot.lane.b32.xlu0 %v295, 92
    %v319 = vpop.permute.xlu0 %318
    %320 = vrot.lane.b32.xlu0 %v296, 92
    %v321 = vpop.permute.xlu0 %320
    %322 = vrot.lane.b32.xlu0 %v297, 92
    %v323 = vpop.permute.xlu0 %322
    %324 = vrot.lane.b32.xlu0 %v298, 92
    %v325 = vpop.permute.xlu0 %324
    %326 = vrot.lane.b32.xlu0 %v299, 92
    %v327 = vpop.permute.xlu0 %326
    %328 = vrot.lane.b32.xlu0 %v300, 92
    %v329 = vpop.permute.xlu0 %328
    %330 = vrot.lane.b32.xlu0 %v301, 92
    %v331 = vpop.permute.xlu0 %330
    %vm332 = vcmask 752640
    %v333 = vsel %vm332, %v313, %v315
    %v334 = vsel %vm332, %v315, %v317
    %v335 = vsel %vm332, %v317, %v319
    %v336 = vsel %vm332, %v319, %v321
    %v337 = vsel %vm332, %v321, %v323
    %v338 = vsel %vm332, %v323, %v325
    %v339 = vsel %vm332, %v325, %v327
    %v340 = vsel %vm332, %v327, %v329
    %v341 = vsel %vm332, %v329, %v331
    %v352 = vadd.f32 %v280, %v333
    %v353 = vadd.f32 %v281, %v334
    %v354 = vadd.f32 %v282, %v335
    %v355 = vadd.f32 %v283, %v336
    %v356 = vadd.f32 %v284, %v337
    %v357 = vadd.f32 %v285, %v338
    %v358 = vadd.f32 %v286, %v339
    %v359 = vadd.f32 %v287, %v340
    %v360 = vadd.f32 %v288, %v341
    %v361 = vadd.f32 %v289, %v331
    %s362 = sld [smem:[#allocation2 + $0x5]]
    %v363 = vstv %s362
    %v364 = vmul.f32 %v52, %v363
    %v365 = vmul.f32 %v53, %v363
    %v366 = vmul.f32 %v54, %v363
    %v367 = vmul.f32 %v55, %v363
    %v368 = vmul.f32 %v56, %v363
    %v369 = vmul.f32 %v57, %v363
    %v370 = vmul.f32 %v58, %v363
    %v371 = vmul.f32 %v59, %v363
    %v372 = vmul.f32 %v60, %v363
    %v373 = vmul.f32 %v61, %v363
    %384 = vrot.lane.b32.xlu0 %v364, 91
    %v385 = vpop.permute.xlu0 %384
    %386 = vrot.lane.b32.xlu0 %v365, 91
    %v387 = vpop.permute.xlu0 %386
    %388 = vrot.lane.b32.xlu0 %v366, 91
    %v389 = vpop.permute.xlu0 %388
    %390 = vrot.lane.b32.xlu0 %v367, 91
    %v391 = vpop.permute.xlu0 %390
    %392 = vrot.lane.b32.xlu0 %v368, 91
    %v393 = vpop.permute.xlu0 %392
    %394 = vrot.lane.b32.xlu0 %v369, 91
    %v395 = vpop.permute.xlu0 %394
    %396 = vrot.lane.b32.xlu0 %v370, 91
    %v397 = vpop.permute.xlu0 %396
    %398 = vrot.lane.b32.xlu0 %v371, 91
    %v399 = vpop.permute.xlu0 %398
    %400 = vrot.lane.b32.xlu0 %v372, 91
    %v401 = vpop.permute.xlu0 %400
    %402 = vrot.lane.b32.xlu0 %v373, 91
    %v403 = vpop.permute.xlu0 %402
    %vm404 = vcmask 744448
    %v405 = vsel %vm404, %v385, %v387
    %v406 = vsel %vm404, %v387, %v389
    %v407 = vsel %vm404, %v389, %v391
    %v408 = vsel %vm404, %v391, %v393
    %v409 = vsel %vm404, %v393, %v395
    %v410 = vsel %vm404, %v395, %v397
    %v411 = vsel %vm404, %v397, %v399
    %v412 = vsel %vm404, %v399, %v401
    %v413 = vsel %vm404, %v401, %v403
    %v424 = vadd.f32 %v352, %v405
    %v425 = vadd.f32 %v353, %v406
    %v426 = vadd.f32 %v354, %v407
    %v427 = vadd.f32 %v355, %v408
    %v428 = vadd.f32 %v356, %v409
    %v429 = vadd.f32 %v357, %v410
    %v430 = vadd.f32 %v358, %v411
    %v431 = vadd.f32 %v359, %v412
    %v432 = vadd.f32 %v360, %v413
    %v433 = vadd.f32 %v361, %v403
    %s434 = sld [smem:[#allocation2 + $0x6]]
    %v435 = vstv %s434
    %v436 = vmul.f32 %v52, %v435
    %v437 = vmul.f32 %v53, %v435
    %v438 = vmul.f32 %v54, %v435
    %v439 = vmul.f32 %v55, %v435
    %v440 = vmul.f32 %v56, %v435
    %v441 = vmul.f32 %v57, %v435
    %v442 = vmul.f32 %v58, %v435
    %v443 = vmul.f32 %v59, %v435
    %v444 = vmul.f32 %v60, %v435
    %v445 = vmul.f32 %v61, %v435
    %456 = vrot.lane.b32.xlu0 %v436, 58
    %v457 = vpop.permute.xlu0 %456
    %458 = vrot.lane.b32.xlu0 %v437, 58
    %v459 = vpop.permute.xlu0 %458
    %460 = vrot.lane.b32.xlu0 %v438, 58
    %v461 = vpop.permute.xlu0 %460
    %462 = vrot.lane.b32.xlu0 %v439, 58
    %v463 = vpop.permute.xlu0 %462
    %464 = vrot.lane.b32.xlu0 %v440, 58
    %v465 = vpop.permute.xlu0 %464
    %466 = vrot.lane.b32.xlu0 %v441, 58
    %v467 = vpop.permute.xlu0 %466
    %468 = vrot.lane.b32.xlu0 %v442, 58
    %v469 = vpop.permute.xlu0 %468
    %470 = vrot.lane.b32.xlu0 %v443, 58
    %v471 = vpop.permute.xlu0 %470
    %472 = vrot.lane.b32.xlu0 %v444, 58
    %v473 = vpop.permute.xlu0 %472
    %474 = vrot.lane.b32.xlu0 %v445, 58
    %v475 = vpop.permute.xlu0 %474
    %vm476 = vcmask 474112
    %v477 = vsel %vm476, %v457, %v459
    %v478 = vsel %vm476, %v459, %v461
    %v479 = vsel %vm476, %v461, %v463
    %v480 = vsel %vm476, %v463, %v465
    %v481 = vsel %vm476, %v465, %v467
    %v482 = vsel %vm476, %v467, %v469
    %v483 = vsel %vm476, %v469, %v471
    %v484 = vsel %vm476, %v471, %v473
    %v485 = vsel %vm476, %v473, %v475
    %v496 = vadd.f32 %v424, %v477
    %v497 = vadd.f32 %v425, %v478
    %v498 = vadd.f32 %v426, %v479
    %v499 = vadd.f32 %v427, %v480
    %v500 = vadd.f32 %v428, %v481
    %v501 = vadd.f32 %v429, %v482
    %v502 = vadd.f32 %v430, %v483
    %v503 = vadd.f32 %v431, %v484
    %v504 = vadd.f32 %v432, %v485
    %v505 = vadd.f32 %v433, %v475
    %s506 = sld [smem:[#allocation2 + $0x7]]
    %v507 = vstv %s506
    %v508 = vmul.f32 %v52, %v507
    %v509 = vmul.f32 %v53, %v507
    %v510 = vmul.f32 %v54, %v507
    %v511 = vmul.f32 %v55, %v507
    %v512 = vmul.f32 %v56, %v507
    %v513 = vmul.f32 %v57, %v507
    %v514 = vmul.f32 %v58, %v507
    %v515 = vmul.f32 %v59, %v507
    %v516 = vmul.f32 %v60, %v507
    %v517 = vmul.f32 %v61, %v507
    %528 = vrot.lane.b32.xlu0 %v508, 57
    %v529 = vpop.permute.xlu0 %528
    %530 = vrot.lane.b32.xlu0 %v509, 57
    %v531 = vpop.permute.xlu0 %530
    %532 = vrot.lane.b32.xlu0 %v510, 57
    %v533 = vpop.permute.xlu0 %532
    %534 = vrot.lane.b32.xlu0 %v511, 57
    %v535 = vpop.permute.xlu0 %534
    %536 = vrot.lane.b32.xlu0 %v512, 57
    %v537 = vpop.permute.xlu0 %536
    %538 = vrot.lane.b32.xlu0 %v513, 57
    %v539 = vpop.permute.xlu0 %538
    %540 = vrot.lane.b32.xlu0 %v514, 57
    %v541 = vpop.permute.xlu0 %540
    %542 = vrot.lane.b32.xlu0 %v515, 57
    %v543 = vpop.permute.xlu0 %542
    %544 = vrot.lane.b32.xlu0 %v516, 57
    %v545 = vpop.permute.xlu0 %544
    %546 = vrot.lane.b32.xlu0 %v517, 57
    %v547 = vpop.permute.xlu0 %546
    %vm548 = vcmask 465920
    %v549 = vsel %vm548, %v529, %v531
    %v550 = vsel %vm548, %v531, %v533
    %v551 = vsel %vm548, %v533, %v535
    %v552 = vsel %vm548, %v535, %v537
    %v553 = vsel %vm548, %v537, %v539
    %v554 = vsel %vm548, %v539, %v541
    %v555 = vsel %vm548, %v541, %v543
    %v556 = vsel %vm548, %v543, %v545
    %v557 = vsel %vm548, %v545, %v547
    %v568 = vadd.f32 %v496, %v549
    %v569 = vadd.f32 %v497, %v550
    %v570 = vadd.f32 %v498, %v551
    %v571 = vadd.f32 %v499, %v552
    %v572 = vadd.f32 %v500, %v553
    %v573 = vadd.f32 %v501, %v554
    %v574 = vadd.f32 %v502, %v555
    %v575 = vadd.f32 %v503, %v556
    %v576 = vadd.f32 %v504, %v557
    %v577 = vadd.f32 %v505, %v547
    %s578 = sld [smem:[#allocation2 + $0x8]]
    %v579 = vstv %s578
    %v580 = vmul.f32 %v52, %v579
    %v581 = vmul.f32 %v53, %v579
    %v582 = vmul.f32 %v54, %v579
    %v583 = vmul.f32 %v55, %v579
    %v584 = vmul.f32 %v56, %v579
    %v585 = vmul.f32 %v57, %v579
    %v586 = vmul.f32 %v58, %v579
    %v587 = vmul.f32 %v59, %v579
    %v588 = vmul.f32 %v60, %v579
    %v589 = vmul.f32 %v61, %v579
    %600 = vrot.lane.b32.xlu0 %v580, 56
    %v601 = vpop.permute.xlu0 %600
    %602 = vrot.lane.b32.xlu0 %v581, 56
    %v603 = vpop.permute.xlu0 %602
    %604 = vrot.lane.b32.xlu0 %v582, 56
    %v605 = vpop.permute.xlu0 %604
    %606 = vrot.lane.b32.xlu0 %v583, 56
    %v607 = vpop.permute.xlu0 %606
    %608 = vrot.lane.b32.xlu0 %v584, 56
    %v609 = vpop.permute.xlu0 %608
    %610 = vrot.lane.b32.xlu0 %v585, 56
    %v611 = vpop.permute.xlu0 %610
    %612 = vrot.lane.b32.xlu0 %v586, 56
    %v613 = vpop.permute.xlu0 %612
    %614 = vrot.lane.b32.xlu0 %v587, 56
    %v615 = vpop.permute.xlu0 %614
    %616 = vrot.lane.b32.xlu0 %v588, 56
    %v617 = vpop.permute.xlu0 %616
    %618 = vrot.lane.b32.xlu0 %v589, 56
    %v619 = vpop.permute.xlu0 %618
    %vm620 = vcmask 457728
    %v621 = vsel %vm620, %v601, %v603
    %v622 = vsel %vm620, %v603, %v605
    %v623 = vsel %vm620, %v605, %v607
    %v624 = vsel %vm620, %v607, %v609
    %v625 = vsel %vm620, %v609, %v611
    %v626 = vsel %vm620, %v611, %v613
    %v627 = vsel %vm620, %v613, %v615
    %v628 = vsel %vm620, %v615, %v617
    %v629 = vsel %vm620, %v617, %v619
    %v640 = vadd.f32 %v568, %v621
    %v641 = vadd.f32 %v569, %v622
    %v642 = vadd.f32 %v570, %v623
    %v643 = vadd.f32 %v571, %v624
    %v644 = vadd.f32 %v572, %v625
    %v645 = vadd.f32 %v573, %v626
    %v646 = vadd.f32 %v574, %v627
    %v647 = vadd.f32 %v575, %v628
    %v648 = vadd.f32 %v576, %v629
    %v649 = vadd.f32 %v577, %v619
    %s650 = sld [smem:[#allocation4]]
    %v651 = vstv %s650
    %v652 = vadd.f32 %v640, %v651
    %v653 = vadd.f32 %v641, %v651
    %v654 = vadd.f32 %v642, %v651
    %v655 = vadd.f32 %v643, %v651
    %v656 = vadd.f32 %v644, %v651
    %v657 = vadd.f32 %v645, %v651
    %v658 = vadd.f32 %v646, %v651
    %v659 = vadd.f32 %v647, %v651
    %v660 = vadd.f32 %v648, %v651
    %v661 = vadd.f32 %v649, %v651
    %v662 = vmax.f32 %v652, 0.0
    %v663 = vmax.f32 %v653, 0.0
    %v664 = vmax.f32 %v654, 0.0
    %v665 = vmax.f32 %v655, 0.0
    %v666 = vmax.f32 %v656, 0.0
    %v667 = vmax.f32 %v657, 0.0
    %v668 = vmax.f32 %v658, 0.0
    %v669 = vmax.f32 %v659, 0.0
    %v670 = vmax.f32 %v660, 0.0
    %v671 = vmax.f32 %v661, 0.0
    %v672 = vpack.c.bf16 %v662, %v662
    %v673 = vpack.c.bf16 %v663, %v663
    %v674 = vpack.c.bf16 %v664, %v664
    %v675 = vpack.c.bf16 %v665, %v665
    %v676 = vpack.c.bf16 %v666, %v666
    %v677 = vpack.c.bf16 %v667, %v667
    %v678 = vpack.c.bf16 %v668, %v668
    %v679 = vpack.c.bf16 %v669, %v669
    %v680 = vpack.c.bf16 %v670, %v670
    %v681 = vpack.c.bf16 %v671, %v671
    %v682 = vld [vmem:[%s3] sm:$0xf]
    %v683 = vld [vmem:[%s3 + $0x4] sm:$0xf]
    %v684 = vld [vmem:[%s3 + $0x8] sm:$0xf]
    %v685 = vld [vmem:[%s3 + $0xc] sm:$0xf]
    %v686 = vld [vmem:[%s3 + $0x10] sm:$0xf]
    %v687 = vld [vmem:[%s3 + $0x14] sm:$0xf]
    %v688 = vld [vmem:[%s3 + $0x18] sm:$0xf]
    %v689 = vld [vmem:[%s3 + $0x1c] sm:$0xf]
    %v690 = vld [vmem:[%s3 + $0x20] sm:$0xf]
    %v691 = vld [vmem:[%s3 + $0x24] sm:$0xf]
    %v692 = vld [vmem:[%s3 + $0x28] sm:$0xf]
    %v693 = vld [vmem:[%s3 + $0x2c] sm:$0xf]
    %v694 = vld [vmem:[%s3 + $0x30] sm:$0xf]
    %v695 = vld [vmem:[%s3 + $0x34] sm:$0xf]
    %v696 = vld [vmem:[%s3 + $0x38] sm:$0xf]
    %v697 = vld [vmem:[%s3 + $0x3c] sm:$0xf]
    %v698 = vld [vmem:[%s3 + $0x40] sm:$0xf]
    %v699 = vld [vmem:[%s3 + $0x44] sm:$0xf]
    %v700 = vld [vmem:[%s3 + $0x48] sm:$0xf]
    %v701 = vld [vmem:[%s3 + $0x4c] sm:$0xf]
    %v702 = vld [vmem:[%s3 + $0x50] sm:$0xf]
    %v703 = vld [vmem:[%s3 + $0x54] sm:$0xf]
    %v704 = vld [vmem:[%s3 + $0x58] sm:$0xf]
    %v705 = vld [vmem:[%s3 + $0x5c] sm:$0xf]
    %v706 = vld [vmem:[%s3 + $0x60] sm:$0xf]
    %v707 = vld [vmem:[%s3 + $0x64] sm:$0xf]
    %v708 = vld [vmem:[%s3 + $0x68] sm:$0xf]
    %v709 = vld [vmem:[%s3 + $0x6c] sm:$0xf]
    %v710 = vld [vmem:[%s3 + $0x70] sm:$0xf]
    %v711 = vld [vmem:[%s3 + $0x74] sm:$0xf]
    %v712 = vld [vmem:[%s3 + $0x78] sm:$0xf]
    %v713 = vld [vmem:[%s3 + $0x7c] sm:$0xf]
    %v714 = vld [vmem:[%s3 + $0x80] sm:$0xf]
    %v715 = vld [vmem:[%s3 + $0x84] sm:$0xf]
    %v716 = vld [vmem:[%s3 + $0x88] sm:$0xf]
    %v717 = vld [vmem:[%s3 + $0x8c] sm:$0xf]
    %v718 = vld [vmem:[%s3 + $0x90] sm:$0xf]
    %v719 = vld [vmem:[%s3 + $0x94] sm:$0xf]
    %v720 = vld [vmem:[%s3 + $0x98] sm:$0xf]
    %v721 = vld [vmem:[%s3 + $0x9c] sm:$0xf]
    %v722 = vld [vmem:[%s3 + $0xa0] sm:$0xf]
    %v723 = vld [vmem:[%s3 + $0xa4] sm:$0xf]
    %v724 = vld [vmem:[%s3 + $0xa8] sm:$0xf]
    %v725 = vld [vmem:[%s3 + $0xac] sm:$0xf]
    %v726 = vld [vmem:[%s3 + $0xb0] sm:$0xf]
    %v727 = vld [vmem:[%s3 + $0xb4] sm:$0xf]
    %v728 = vld [vmem:[%s3 + $0xb8] sm:$0xf]
    %v729 = vld [vmem:[%s3 + $0xbc] sm:$0xf]
    %v730 = vld [vmem:[%s3 + $0xc0] sm:$0xf]
    %v731 = vld [vmem:[%s3 + $0xc4] sm:$0xf]
    %v732 = vld [vmem:[%s3 + $0xc8] sm:$0xf]
    %v733 = vld [vmem:[%s3 + $0xcc] sm:$0xf]
    %v734 = vld [vmem:[%s3 + $0xd0] sm:$0xf]
    %v735 = vld [vmem:[%s3 + $0xd4] sm:$0xf]
    %v736 = vld [vmem:[%s3 + $0xd8] sm:$0xf]
    %v737 = vld [vmem:[%s3 + $0xdc] sm:$0xf]
    %v738 = vld [vmem:[%s3 + $0xe0] sm:$0xf]
    %v739 = vld [vmem:[%s3 + $0xe4] sm:$0xf]
    %v740 = vld [vmem:[%s3 + $0xe8] sm:$0xf]
    %v741 = vld [vmem:[%s3 + $0xec] sm:$0xf]
    %v742 = vld [vmem:[%s3 + $0xf0] sm:$0xf]
    %v743 = vld [vmem:[%s3 + $0xf4] sm:$0xf]
    %v744 = vld [vmem:[%s3 + $0xf8] sm:$0xf]
    %v745 = vld [vmem:[%s3 + $0xfc] sm:$0xf]
    %v746 = vld [vmem:[%s3 + $0x100] sm:$0xf]
    %v747 = vld [vmem:[%s3 + $0x104] sm:$0xf]
    %v748 = vld [vmem:[%s3 + $0x108] sm:$0xf]
    %v749 = vld [vmem:[%s3 + $0x10c] sm:$0xf]
    %v750 = vld [vmem:[%s3 + $0x110] sm:$0xf]
    %v751 = vld [vmem:[%s3 + $0x114] sm:$0xf]
    %v752 = vld [vmem:[%s3 + $0x118] sm:$0xf]
    %v753 = vld [vmem:[%s3 + $0x11c] sm:$0xf]
    %v754 = vld [vmem:[%s3 + $0x120] sm:$0xf]
    %v755 = vld [vmem:[%s3 + $0x124] sm:$0xf]
    %v756 = vld [vmem:[%s3 + $0x128] sm:$0xf]
    %v757 = vld [vmem:[%s3 + $0x12c] sm:$0xf]
    %v758 = vld [vmem:[%s3 + $0x130] sm:$0xf]
    %v759 = vld [vmem:[%s3 + $0x134] sm:$0xf]
    %v760 = vld [vmem:[%s3 + $0x138] sm:$0xf]
    %v761 = vld [vmem:[%s3 + $0x13c] sm:$0xf]
    %v762 = vld [vmem:[%s3 + $0x140] sm:$0xf]
    %v763 = vld [vmem:[%s3 + $0x144] sm:$0xf]
    %v764 = vld [vmem:[%s3 + $0x148] sm:$0xf]
    %v765 = vld [vmem:[%s3 + $0x14c] sm:$0xf]
    %v766 = vld [vmem:[%s3 + $0x150] sm:$0xf]
    %v767 = vld [vmem:[%s3 + $0x154] sm:$0xf]
    %v768 = vld [vmem:[%s3 + $0x158] sm:$0xf]
    %v769 = vld [vmem:[%s3 + $0x15c] sm:$0xf]
    %v770 = vld [vmem:[%s3 + $0x160] sm:$0xf]
    %v771 = vld [vmem:[%s3 + $0x164] sm:$0xf]
    %v772 = vld [vmem:[%s3 + $0x168] sm:$0xf]
    %v773 = vld [vmem:[%s3 + $0x16c] sm:$0xf]
    %v774 = vld [vmem:[%s3 + $0x170] sm:$0xf]
    %v775 = vld [vmem:[%s3 + $0x174] sm:$0xf]
    %v776 = vld [vmem:[%s3 + $0x178] sm:$0xf]
    %v777 = vld [vmem:[%s3 + $0x17c] sm:$0xf]
    %v778 = vld [vmem:[%s3 + $0x180] sm:$0xf]
    %v779 = vld [vmem:[%s3 + $0x184] sm:$0xf]
    %v780 = vld [vmem:[%s3 + $0x188] sm:$0xf]
    %v781 = vld [vmem:[%s3 + $0x18c] sm:$0xf]
    %v782 = vld [vmem:[%s3 + $0x190] sm:$0xf]
    %v783 = vld [vmem:[%s3 + $0x194] sm:$0xf]
    %v784 = vld [vmem:[%s3 + $0x198] sm:$0xf]
    %v785 = vld [vmem:[%s3 + $0x19c] sm:$0xf]
    %v786 = vld [vmem:[%s3 + $0x1a0] sm:$0xf]
    %v787 = vld [vmem:[%s3 + $0x1a4] sm:$0xf]
    %v788 = vld [vmem:[%s3 + $0x1a8] sm:$0xf]
    %v789 = vld [vmem:[%s3 + $0x1ac] sm:$0xf]
    %v790 = vld [vmem:[%s3 + $0x1b0] sm:$0xf]
    %v791 = vld [vmem:[%s3 + $0x1b4] sm:$0xf]
    %v792 = vld [vmem:[%s3 + $0x1b8] sm:$0xf]
    %v793 = vld [vmem:[%s3 + $0x1bc] sm:$0xf]
    %v794 = vld [vmem:[%s3 + $0x1c0] sm:$0xf]
    %v795 = vld [vmem:[%s3 + $0x1c4] sm:$0xf]
    %v796 = vld [vmem:[%s3 + $0x1c8] sm:$0xf]
    %v797 = vld [vmem:[%s3 + $0x1cc] sm:$0xf]
    %v798 = vld [vmem:[%s3 + $0x1d0] sm:$0xf]
    %v799 = vld [vmem:[%s3 + $0x1d4] sm:$0xf]
    %v800 = vld [vmem:[%s3 + $0x1d8] sm:$0xf]
    %v801 = vld [vmem:[%s3 + $0x1dc] sm:$0xf]
    %v802 = vld [vmem:[%s3 + $0x1e0] sm:$0xf]
    %v803 = vld [vmem:[%s3 + $0x1e4] sm:$0xf]
    %v804 = vld [vmem:[%s3 + $0x1e8] sm:$0xf]
    %v805 = vld [vmem:[%s3 + $0x1ec] sm:$0xf]
    %v806 = vld [vmem:[%s3 + $0x1f0] sm:$0xf]
    %v807 = vld [vmem:[%s3 + $0x1f4] sm:$0xf]
    %v808 = vld [vmem:[%s3 + $0x1f8] sm:$0xf]
    %v809 = vld [vmem:[%s3 + $0x1fc] sm:$0xf]
    %v810 = vld [vmem:[%s3 + $0x200] sm:$0xf]
    %v811 = vld [vmem:[%s3 + $0x204] sm:$0xf]
    %v812 = vld [vmem:[%s3 + $0x208] sm:$0xf]
    %v813 = vld [vmem:[%s3 + $0x20c] sm:$0xf]
    %v814 = vld [vmem:[%s3 + $0x210] sm:$0xf]
    %v815 = vld [vmem:[%s3 + $0x214] sm:$0xf]
    %v816 = vld [vmem:[%s3 + $0x218] sm:$0xf]
    %v817 = vld [vmem:[%s3 + $0x21c] sm:$0xf]
    %v818 = vld [vmem:[%s3 + $0x220] sm:$0xf]
    %v819 = vld [vmem:[%s3 + $0x224] sm:$0xf]
    %v820 = vld [vmem:[%s3 + $0x228] sm:$0xf]
    %v821 = vld [vmem:[%s3 + $0x22c] sm:$0xf]
    %v822 = vld [vmem:[%s3 + $0x230] sm:$0xf]
    %v823 = vld [vmem:[%s3 + $0x234] sm:$0xf]
    %v824 = vld [vmem:[%s3 + $0x238] sm:$0xf]
    %v825 = vld [vmem:[%s3 + $0x23c] sm:$0xf]
    %v826 = vld [vmem:[%s3 + $0x240] sm:$0x3]
    %s827 = sld [smem:[#allocation2 + $0x80]]
    %v828 = vstv %s827
    %v829 = vmul.f32 %v52, %v828
    %v830 = vmul.f32 %v53, %v828
    %v831 = vmul.f32 %v54, %v828
    %v832 = vmul.f32 %v55, %v828
    %v833 = vmul.f32 %v56, %v828
    %v834 = vmul.f32 %v57, %v828
    %v835 = vmul.f32 %v58, %v828
    %v836 = vmul.f32 %v59, %v828
    %v837 = vmul.f32 %v60, %v828
    %v838 = vmul.f32 %v61, %v828
    %s839 = sld [smem:[#allocation2 + $0x81]]
    %v840 = vstv %s839
    %v841 = vmul.f32 %v52, %v840
    %v842 = vmul.f32 %v53, %v840
    %v843 = vmul.f32 %v54, %v840
    %v844 = vmul.f32 %v55, %v840
    %v845 = vmul.f32 %v56, %v840
    %v846 = vmul.f32 %v57, %v840
    %v847 = vmul.f32 %v58, %v840
    %v848 = vmul.f32 %v59, %v840
    %v849 = vmul.f32 %v60, %v840
    %v850 = vmul.f32 %v61, %v840
    %861 = vrot.lane.b32.xlu0 %v841, 127
    %v862 = vpop.permute.xlu0 %861
    %863 = vrot.lane.b32.xlu0 %v842, 127
    %v864 = vpop.permute.xlu0 %863
    %865 = vrot.lane.b32.xlu0 %v843, 127
    %v866 = vpop.permute.xlu0 %865
    %867 = vrot.lane.b32.xlu0 %v844, 127
    %v868 = vpop.permute.xlu0 %867
    %869 = vrot.lane.b32.xlu0 %v845, 127
    %v870 = vpop.permute.xlu0 %869
    %871 = vrot.lane.b32.xlu0 %v846, 127
    %v872 = vpop.permute.xlu0 %871
    %873 = vrot.lane.b32.xlu0 %v847, 127
    %v874 = vpop.permute.xlu0 %873
    %875 = vrot.lane.b32.xlu0 %v848, 127
    %v876 = vpop.permute.xlu0 %875
    %877 = vrot.lane.b32.xlu0 %v849, 127
    %v878 = vpop.permute.xlu0 %877
    %879 = vrot.lane.b32.xlu0 %v850, 127
    %v880 = vpop.permute.xlu0 %879
    %v881 = vsel %vm116, %v862, %v864
    %v882 = vsel %vm116, %v864, %v866
    %v883 = vsel %vm116, %v866, %v868
    %v884 = vsel %vm116, %v868, %v870
    %v885 = vsel %vm116, %v870, %v872
    %v886 = vsel %vm116, %v872, %v874
    %v887 = vsel %vm116, %v874, %v876
    %v888 = vsel %vm116, %v876, %v878
    %v889 = vsel %vm116, %v878, %v880
    %v900 = vadd.f32 %v829, %v881
    %v901 = vadd.f32 %v830, %v882
    %v902 = vadd.f32 %v831, %v883
    %v903 = vadd.f32 %v832, %v884
    %v904 = vadd.f32 %v833, %v885
    %v905 = vadd.f32 %v834, %v886
    %v906 = vadd.f32 %v835, %v887
    %v907 = vadd.f32 %v836, %v888
    %v908 = vadd.f32 %v837, %v889
    %v909 = vadd.f32 %v838, %v880
    %s910 = sld [smem:[#allocation2 + $0x82]]
    %v911 = vstv %s910
    %v912 = vmul.f32 %v52, %v911
    %v913 = vmul.f32 %v53, %v911
    %v914 = vmul.f32 %v54, %v911
    %v915 = vmul.f32 %v55, %v911
    %v916 = vmul.f32 %v56, %v911
    %v917 = vmul.f32 %v57, %v911
    %v918 = vmul.f32 %v58, %v911
    %v919 = vmul.f32 %v59, %v911
    %v920 = vmul.f32 %v60, %v911
    %v921 = vmul.f32 %v61, %v911
    %932 = vrot.lane.b32.xlu0 %v912, 126
    %v933 = vpop.permute.xlu0 %932
    %934 = vrot.lane.b32.xlu0 %v913, 126
    %v935 = vpop.permute.xlu0 %934
    %936 = vrot.lane.b32.xlu0 %v914, 126
    %v937 = vpop.permute.xlu0 %936
    %938 = vrot.lane.b32.xlu0 %v915, 126
    %v939 = vpop.permute.xlu0 %938
    %940 = vrot.lane.b32.xlu0 %v916, 126
    %v941 = vpop.permute.xlu0 %940
    %942 = vrot.lane.b32.xlu0 %v917, 126
    %v943 = vpop.permute.xlu0 %942
    %944 = vrot.lane.b32.xlu0 %v918, 126
    %v945 = vpop.permute.xlu0 %944
    %946 = vrot.lane.b32.xlu0 %v919, 126
    %v947 = vpop.permute.xlu0 %946
    %948 = vrot.lane.b32.xlu0 %v920, 126
    %v949 = vpop.permute.xlu0 %948
    %950 = vrot.lane.b32.xlu0 %v921, 126
    %v951 = vpop.permute.xlu0 %950
    %v952 = vsel %vm188, %v933, %v935
    %v953 = vsel %vm188, %v935, %v937
    %v954 = vsel %vm188, %v937, %v939
    %v955 = vsel %vm188, %v939, %v941
    %v956 = vsel %vm188, %v941, %v943
    %v957 = vsel %vm188, %v943, %v945
    %v958 = vsel %vm188, %v945, %v947
    %v959 = vsel %vm188, %v947, %v949
    %v960 = vsel %vm188, %v949, %v951
    %v971 = vadd.f32 %v900, %v952
    %v972 = vadd.f32 %v901, %v953
    %v973 = vadd.f32 %v902, %v954
    %v974 = vadd.f32 %v903, %v955
    %v975 = vadd.f32 %v904, %v956
    %v976 = vadd.f32 %v905, %v957
    %v977 = vadd.f32 %v906, %v958
    %v978 = vadd.f32 %v907, %v959
    %v979 = vadd.f32 %v908, %v960
    %v980 = vadd.f32 %v909, %v951
    %s981 = sld [smem:[#allocation2 + $0x83]]
    %v982 = vstv %s981
    %v983 = vmul.f32 %v52, %v982
    %v984 = vmul.f32 %v53, %v982
    %v985 = vmul.f32 %v54, %v982
    %v986 = vmul.f32 %v55, %v982
    %v987 = vmul.f32 %v56, %v982
    %v988 = vmul.f32 %v57, %v982
    %v989 = vmul.f32 %v58, %v982
    %v990 = vmul.f32 %v59, %v982
    %v991 = vmul.f32 %v60, %v982
    %v992 = vmul.f32 %v61, %v982
    %1003 = vrot.lane.b32.xlu0 %v983, 93
    %v1004 = vpop.permute.xlu0 %1003
    %1005 = vrot.lane.b32.xlu0 %v984, 93
    %v1006 = vpop.permute.xlu0 %1005
    %1007 = vrot.lane.b32.xlu0 %v985, 93
    %v1008 = vpop.permute.xlu0 %1007
    %1009 = vrot.lane.b32.xlu0 %v986, 93
    %v1010 = vpop.permute.xlu0 %1009
    %1011 = vrot.lane.b32.xlu0 %v987, 93
    %v1012 = vpop.permute.xlu0 %1011
    %1013 = vrot.lane.b32.xlu0 %v988, 93
    %v1014 = vpop.permute.xlu0 %1013
    %1015 = vrot.lane.b32.xlu0 %v989, 93
    %v1016 = vpop.permute.xlu0 %1015
    %1017 = vrot.lane.b32.xlu0 %v990, 93
    %v1018 = vpop.permute.xlu0 %1017
    %1019 = vrot.lane.b32.xlu0 %v991, 93
    %v1020 = vpop.permute.xlu0 %1019
    %1021 = vrot.lane.b32.xlu0 %v992, 93
    %v1022 = vpop.permute.xlu0 %1021
    %v1023 = vsel %vm260, %v1004, %v1006
    %v1024 = vsel %vm260, %v1006, %v1008
    %v1025 = vsel %vm260, %v1008, %v1010
    %v1026 = vsel %vm260, %v1010, %v1012
    %v1027 = vsel %vm260, %v1012, %v1014
    %v1028 = vsel %vm260, %v1014, %v1016
    %v1029 = vsel %vm260, %v1016, %v1018
    %v1030 = vsel %vm260, %v1018, %v1020
    %v1031 = vsel %vm260, %v1020, %v1022
    %v1042 = vadd.f32 %v971, %v1023
    %v1043 = vadd.f32 %v972, %v1024
    %v1044 = vadd.f32 %v973, %v1025
    %v1045 = vadd.f32 %v974, %v1026
    %v1046 = vadd.f32 %v975, %v1027
    %v1047 = vadd.f32 %v976, %v1028
    %v1048 = vadd.f32 %v977, %v1029
    %v1049 = vadd.f32 %v978, %v1030
    %v1050 = vadd.f32 %v979, %v1031
    %v1051 = vadd.f32 %v980, %v1022
    %s1052 = sld [smem:[#allocation2 + $0x84]]
    %v1053 = vstv %s1052
    %v1054 = vmul.f32 %v52, %v1053
    %v1055 = vmul.f32 %v53, %v1053
    %v1056 = vmul.f32 %v54, %v1053
    %v1057 = vmul.f32 %v55, %v1053
    %v1058 = vmul.f32 %v56, %v1053
    %v1059 = vmul.f32 %v57, %v1053
    %v1060 = vmul.f32 %v58, %v1053
    %v1061 = vmul.f32 %v59, %v1053
    %v1062 = vmul.f32 %v60, %v1053
    %v1063 = vmul.f32 %v61, %v1053
    %1074 = vrot.lane.b32.xlu0 %v1054, 92
    %v1075 = vpop.permute.xlu0 %1074
    %1076 = vrot.lane.b32.xlu0 %v1055, 92
    %v1077 = vpop.permute.xlu0 %1076
    %1078 = vrot.lane.b32.xlu0 %v1056, 92
    %v1079 = vpop.permute.xlu0 %1078
    %1080 = vrot.lane.b32.xlu0 %v1057, 92
    %v1081 = vpop.permute.xlu0 %1080
    %1082 = vrot.lane.b32.xlu0 %v1058, 92
    %v1083 = vpop.permute.xlu0 %1082
    %1084 = vrot.lane.b32.xlu0 %v1059, 92
    %v1085 = vpop.permute.xlu0 %1084
    %1086 = vrot.lane.b32.xlu0 %v1060, 92
    %v1087 = vpop.permute.xlu0 %1086
    %1088 = vrot.lane.b32.xlu0 %v1061, 92
    %v1089 = vpop.permute.xlu0 %1088
    %1090 = vrot.lane.b32.xlu0 %v1062, 92
    %v1091 = vpop.permute.xlu0 %1090
    %1092 = vrot.lane.b32.xlu0 %v1063, 92
    %v1093 = vpop.permute.xlu0 %1092
    %v1094 = vsel %vm332, %v1075, %v1077
    %v1095 = vsel %vm332, %v1077, %v1079
    %v1096 = vsel %vm332, %v1079, %v1081
    %v1097 = vsel %vm332, %v1081, %v1083
    %v1098 = vsel %vm332, %v1083, %v1085
    %v1099 = vsel %vm332, %v1085, %v1087
    %v1100 = vsel %vm332, %v1087, %v1089
    %v1101 = vsel %vm332, %v1089, %v1091
    %v1102 = vsel %vm332, %v1091, %v1093
    %v1113 = vadd.f32 %v1042, %v1094
    %v1114 = vadd.f32 %v1043, %v1095
    %v1115 = vadd.f32 %v1044, %v1096
    %v1116 = vadd.f32 %v1045, %v1097
    %v1117 = vadd.f32 %v1046, %v1098
    %v1118 = vadd.f32 %v1047, %v1099
    %v1119 = vadd.f32 %v1048, %v1100
    %v1120 = vadd.f32 %v1049, %v1101
    %v1121 = vadd.f32 %v1050, %v1102
    %v1122 = vadd.f32 %v1051, %v1093
    %s1123 = sld [smem:[#allocation2 + $0x85]]
    %v1124 = vstv %s1123
    %v1125 = vmul.f32 %v52, %v1124
    %v1126 = vmul.f32 %v53, %v1124
    %v1127 = vmul.f32 %v54, %v1124
    %v1128 = vmul.f32 %v55, %v1124
    %v1129 = vmul.f32 %v56, %v1124
    %v1130 = vmul.f32 %v57, %v1124
    %v1131 = vmul.f32 %v58, %v1124
    %v1132 = vmul.f32 %v59, %v1124
    %v1133 = vmul.f32 %v60, %v1124
    %v1134 = vmul.f32 %v61, %v1124
    %1145 = vrot.lane.b32.xlu0 %v1125, 91
    %v1146 = vpop.permute.xlu0 %1145
    %1147 = vrot.lane.b32.xlu0 %v1126, 91
    %v1148 = vpop.permute.xlu0 %1147
    %1149 = vrot.lane.b32.xlu0 %v1127, 91
    %v1150 = vpop.permute.xlu0 %1149
    %1151 = vrot.lane.b32.xlu0 %v1128, 91
    %v1152 = vpop.permute.xlu0 %1151
    %1153 = vrot.lane.b32.xlu0 %v1129, 91
    %v1154 = vpop.permute.xlu0 %1153
    %1155 = vrot.lane.b32.xlu0 %v1130, 91
    %v1156 = vpop.permute.xlu0 %1155
    %1157 = vrot.lane.b32.xlu0 %v1131, 91
    %v1158 = vpop.permute.xlu0 %1157
    %1159 = vrot.lane.b32.xlu0 %v1132, 91
    %v1160 = vpop.permute.xlu0 %1159
    %1161 = vrot.lane.b32.xlu0 %v1133, 91
    %v1162 = vpop.permute.xlu0 %1161
    %1163 = vrot.lane.b32.xlu0 %v1134, 91
    %v1164 = vpop.permute.xlu0 %1163
    %v1165 = vsel %vm404, %v1146, %v1148
    %v1166 = vsel %vm404, %v1148, %v1150
    %v1167 = vsel %vm404, %v1150, %v1152
    %v1168 = vsel %vm404, %v1152, %v1154
    %v1169 = vsel %vm404, %v1154, %v1156
    %v1170 = vsel %vm404, %v1156, %v1158
    %v1171 = vsel %vm404, %v1158, %v1160
    %v1172 = vsel %vm404, %v1160, %v1162
    %v1173 = vsel %vm404, %v1162, %v1164
    %v1184 = vadd.f32 %v1113, %v1165
    %v1185 = vadd.f32 %v1114, %v1166
    %v1186 = vadd.f32 %v1115, %v1167
    %v1187 = vadd.f32 %v1116, %v1168
    %v1188 = vadd.f32 %v1117, %v1169
    %v1189 = vadd.f32 %v1118, %v1170
    %v1190 = vadd.f32 %v1119, %v1171
    %v1191 = vadd.f32 %v1120, %v1172
    %v1192 = vadd.f32 %v1121, %v1173
    %v1193 = vadd.f32 %v1122, %v1164
    %s1194 = sld [smem:[#allocation2 + $0x86]]
    %v1195 = vstv %s1194
    %v1196 = vmul.f32 %v52, %v1195
    %v1197 = vmul.f32 %v53, %v1195
    %v1198 = vmul.f32 %v54, %v1195
    %v1199 = vmul.f32 %v55, %v1195
    %v1200 = vmul.f32 %v56, %v1195
    %v1201 = vmul.f32 %v57, %v1195
    %v1202 = vmul.f32 %v58, %v1195
    %v1203 = vmul.f32 %v59, %v1195
    %v1204 = vmul.f32 %v60, %v1195
    %v1205 = vmul.f32 %v61, %v1195
    %1216 = vrot.lane.b32.xlu0 %v1196, 58
    %v1217 = vpop.permute.xlu0 %1216
    %1218 = vrot.lane.b32.xlu0 %v1197, 58
    %v1219 = vpop.permute.xlu0 %1218
    %1220 = vrot.lane.b32.xlu0 %v1198, 58
    %v1221 = vpop.permute.xlu0 %1220
    %1222 = vrot.lane.b32.xlu0 %v1199, 58
    %v1223 = vpop.permute.xlu0 %1222
    %1224 = vrot.lane.b32.xlu0 %v1200, 58
    %v1225 = vpop.permute.xlu0 %1224
    %1226 = vrot.lane.b32.xlu0 %v1201, 58
    %v1227 = vpop.permute.xlu0 %1226
    %1228 = vrot.lane.b32.xlu0 %v1202, 58
    %v1229 = vpop.permute.xlu0 %1228
    %1230 = vrot.lane.b32.xlu0 %v1203, 58
    %v1231 = vpop.permute.xlu0 %1230
    %1232 = vrot.lane.b32.xlu0 %v1204, 58
    %v1233 = vpop.permute.xlu0 %1232
    %1234 = vrot.lane.b32.xlu0 %v1205, 58
    %v1235 = vpop.permute.xlu0 %1234
    %v1236 = vsel %vm476, %v1217, %v1219
    %v1237 = vsel %vm476, %v1219, %v1221
    %v1238 = vsel %vm476, %v1221, %v1223
    %v1239 = vsel %vm476, %v1223, %v1225
    %v1240 = vsel %vm476, %v1225, %v1227
    %v1241 = vsel %vm476, %v1227, %v1229
    %v1242 = vsel %vm476, %v1229, %v1231
    %v1243 = vsel %vm476, %v1231, %v1233
    %v1244 = vsel %vm476, %v1233, %v1235
    %v1255 = vadd.f32 %v1184, %v1236
    %v1256 = vadd.f32 %v1185, %v1237
    %v1257 = vadd.f32 %v1186, %v1238
    %v1258 = vadd.f32 %v1187, %v1239
    %v1259 = vadd.f32 %v1188, %v1240
    %v1260 = vadd.f32 %v1189, %v1241
    %v1261 = vadd.f32 %v1190, %v1242
    %v1262 = vadd.f32 %v1191, %v1243
    %v1263 = vadd.f32 %v1192, %v1244
    %v1264 = vadd.f32 %v1193, %v1235
    %s1265 = sld [smem:[#allocation2 + $0x87]]
    %v1266 = vstv %s1265
    %v1267 = vmul.f32 %v52, %v1266
    %v1268 = vmul.f32 %v53, %v1266
    %v1269 = vmul.f32 %v54, %v1266
    %v1270 = vmul.f32 %v55, %v1266
    %v1271 = vmul.f32 %v56, %v1266
    %v1272 = vmul.f32 %v57, %v1266
    %v1273 = vmul.f32 %v58, %v1266
    %v1274 = vmul.f32 %v59, %v1266
    %v1275 = vmul.f32 %v60, %v1266
    %v1276 = vmul.f32 %v61, %v1266
    %1287 = vrot.lane.b32.xlu0 %v1267, 57
    %v1288 = vpop.permute.xlu0 %1287
    %1289 = vrot.lane.b32.xlu0 %v1268, 57
    %v1290 = vpop.permute.xlu0 %1289
    %1291 = vrot.lane.b32.xlu0 %v1269, 57
    %v1292 = vpop.permute.xlu0 %1291
    %1293 = vrot.lane.b32.xlu0 %v1270, 57
    %v1294 = vpop.permute.xlu0 %1293
    %1295 = vrot.lane.b32.xlu0 %v1271, 57
    %v1296 = vpop.permute.xlu0 %1295
    %1297 = vrot.lane.b32.xlu0 %v1272, 57
    %v1298 = vpop.permute.xlu0 %1297
    %1299 = vrot.lane.b32.xlu0 %v1273, 57
    %v1300 = vpop.permute.xlu0 %1299
    %1301 = vrot.lane.b32.xlu0 %v1274, 57
    %v1302 = vpop.permute.xlu0 %1301
    %1303 = vrot.lane.b32.xlu0 %v1275, 57
    %v1304 = vpop.permute.xlu0 %1303
    %1305 = vrot.lane.b32.xlu0 %v1276, 57
    %v1306 = vpop.permute.xlu0 %1305
    %v1307 = vsel %vm548, %v1288, %v1290
    %v1308 = vsel %vm548, %v1290, %v1292
    %v1309 = vsel %vm548, %v1292, %v1294
    %v1310 = vsel %vm548, %v1294, %v1296
    %v1311 = vsel %vm548, %v1296, %v1298
    %v1312 = vsel %vm548, %v1298, %v1300
    %v1313 = vsel %vm548, %v1300, %v1302
    %v1314 = vsel %vm548, %v1302, %v1304
    %v1315 = vsel %vm548, %v1304, %v1306
    %v1326 = vadd.f32 %v1255, %v1307
    %v1327 = vadd.f32 %v1256, %v1308
    %v1328 = vadd.f32 %v1257, %v1309
    %v1329 = vadd.f32 %v1258, %v1310
    %v1330 = vadd.f32 %v1259, %v1311
    %v1331 = vadd.f32 %v1260, %v1312
    %v1332 = vadd.f32 %v1261, %v1313
    %v1333 = vadd.f32 %v1262, %v1314
    %v1334 = vadd.f32 %v1263, %v1315
    %v1335 = vadd.f32 %v1264, %v1306
    %s1336 = sld [smem:[#allocation2 + $0x88]]
    %v1337 = vstv %s1336
    %v1338 = vmul.f32 %v52, %v1337
    %v1339 = vmul.f32 %v53, %v1337
    %v1340 = vmul.f32 %v54, %v1337
    %v1341 = vmul.f32 %v55, %v1337
    %v1342 = vmul.f32 %v56, %v1337
    %v1343 = vmul.f32 %v57, %v1337
    %v1344 = vmul.f32 %v58, %v1337
    %v1345 = vmul.f32 %v59, %v1337
    %v1346 = vmul.f32 %v60, %v1337
    %v1347 = vmul.f32 %v61, %v1337
    %1358 = vrot.lane.b32.xlu0 %v1338, 56
    %v1359 = vpop.permute.xlu0 %1358
    %1360 = vrot.lane.b32.xlu0 %v1339, 56
    %v1361 = vpop.permute.xlu0 %1360
    %1362 = vrot.lane.b32.xlu0 %v1340, 56
    %v1363 = vpop.permute.xlu0 %1362
    %1364 = vrot.lane.b32.xlu0 %v1341, 56
    %v1365 = vpop.permute.xlu0 %1364
    %1366 = vrot.lane.b32.xlu0 %v1342, 56
    %v1367 = vpop.permute.xlu0 %1366
    %1368 = vrot.lane.b32.xlu0 %v1343, 56
    %v1369 = vpop.permute.xlu0 %1368
    %1370 = vrot.lane.b32.xlu0 %v1344, 56
    %v1371 = vpop.permute.xlu0 %1370
    %1372 = vrot.lane.b32.xlu0 %v1345, 56
    %v1373 = vpop.permute.xlu0 %1372
    %1374 = vrot.lane.b32.xlu0 %v1346, 56
    %v1375 = vpop.permute.xlu0 %1374
    %1376 = vrot.lane.b32.xlu0 %v1347, 56
    %v1377 = vpop.permute.xlu0 %1376
    %v1378 = vsel %vm620, %v1359, %v1361
    %v1379 = vsel %vm620, %v1361, %v1363
    %v1380 = vsel %vm620, %v1363, %v1365
    %v1381 = vsel %vm620, %v1365, %v1367
    %v1382 = vsel %vm620, %v1367, %v1369
    %v1383 = vsel %vm620, %v1369, %v1371
    %v1384 = vsel %vm620, %v1371, %v1373
    %v1385 = vsel %vm620, %v1373, %v1375
    %v1386 = vsel %vm620, %v1375, %v1377
    %v1397 = vadd.f32 %v1326, %v1378
    %v1398 = vadd.f32 %v1327, %v1379
    %v1399 = vadd.f32 %v1328, %v1380
    %v1400 = vadd.f32 %v1329, %v1381
    %v1401 = vadd.f32 %v1330, %v1382
    %v1402 = vadd.f32 %v1331, %v1383
    %v1403 = vadd.f32 %v1332, %v1384
    %v1404 = vadd.f32 %v1333, %v1385
    %v1405 = vadd.f32 %v1334, %v1386
    %v1406 = vadd.f32 %v1335, %v1377
    %s1407 = sld [smem:[#allocation4 + $0x1]]
    %v1408 = vstv %s1407
    %v1409 = vadd.f32 %v1397, %v1408
    %v1410 = vadd.f32 %v1398, %v1408
    %v1411 = vadd.f32 %v1399, %v1408
    %v1412 = vadd.f32 %v1400, %v1408
    %v1413 = vadd.f32 %v1401, %v1408
    %v1414 = vadd.f32 %v1402, %v1408
    %v1415 = vadd.f32 %v1403, %v1408
    %v1416 = vadd.f32 %v1404, %v1408
    %v1417 = vadd.f32 %v1405, %v1408
    %v1418 = vadd.f32 %v1406, %v1408
    %v1419 = vmax.f32 %v1409, 0.0
    %v1420 = vmax.f32 %v1410, 0.0
    %v1421 = vmax.f32 %v1411, 0.0
    %v1422 = vmax.f32 %v1412, 0.0
    %v1423 = vmax.f32 %v1413, 0.0
    %v1424 = vmax.f32 %v1414, 0.0
    %v1425 = vmax.f32 %v1415, 0.0
    %v1426 = vmax.f32 %v1416, 0.0
    %v1427 = vmax.f32 %v1417, 0.0
    %v1428 = vmax.f32 %v1418, 0.0
    %v1429 = vpack.c.bf16 %v1419, %v1419
    %v1430 = vpack.c.bf16 %v1420, %v1420
    %v1431 = vpack.c.bf16 %v1421, %v1421
    %v1432 = vpack.c.bf16 %v1422, %v1422
    %v1433 = vpack.c.bf16 %v1423, %v1423
    %v1434 = vpack.c.bf16 %v1424, %v1424
    %v1435 = vpack.c.bf16 %v1425, %v1425
    %v1436 = vpack.c.bf16 %v1426, %v1426
    %v1437 = vpack.c.bf16 %v1427, %v1427
    %v1438 = vpack.c.bf16 %v1428, %v1428
    %s1439 = scalar_lea.vmem %s3, 580
    %v1440 = vld [vmem:[%s1439] sm:$0xf]
    %v1441 = vld [vmem:[%s1439 + $0x4] sm:$0xf]
    %v1442 = vld [vmem:[%s1439 + $0x8] sm:$0xf]
    %v1443 = vld [vmem:[%s1439 + $0xc] sm:$0xf]
    %v1444 = vld [vmem:[%s1439 + $0x10] sm:$0xf]
    %v1445 = vld [vmem:[%s1439 + $0x14] sm:$0xf]
    %v1446 = vld [vmem:[%s1439 + $0x18] sm:$0xf]
    %v1447 = vld [vmem:[%s1439 + $0x1c] sm:$0xf]
    %v1448 = vld [vmem:[%s1439 + $0x20] sm:$0xf]
    %v1449 = vld [vmem:[%s1439 + $0x24] sm:$0xf]
    %v1450 = vld [vmem:[%s1439 + $0x28] sm:$0xf]
    %v1451 = vld [vmem:[%s1439 + $0x2c] sm:$0xf]
    %v1452 = vld [vmem:[%s1439 + $0x30] sm:$0xf]
    %v1453 = vld [vmem:[%s1439 + $0x34] sm:$0xf]
    %v1454 = vld [vmem:[%s1439 + $0x38] sm:$0xf]
    %v1455 = vld [vmem:[%s1439 + $0x3c] sm:$0xf]
    %v1456 = vld [vmem:[%s1439 + $0x40] sm:$0xf]
    %v1457 = vld [vmem:[%s1439 + $0x44] sm:$0xf]
    %v1458 = vld [vmem:[%s1439 + $0x48] sm:$0xf]
    %v1459 = vld [vmem:[%s1439 + $0x4c] sm:$0xf]
    %v1460 = vld [vmem:[%s1439 + $0x50] sm:$0xf]
    %v1461 = vld [vmem:[%s1439 + $0x54] sm:$0xf]
    %v1462 = vld [vmem:[%s1439 + $0x58] sm:$0xf]
    %v1463 = vld [vmem:[%s1439 + $0x5c] sm:$0xf]
    %v1464 = vld [vmem:[%s1439 + $0x60] sm:$0xf]
    %v1465 = vld [vmem:[%s1439 + $0x64] sm:$0xf]
    %v1466 = vld [vmem:[%s1439 + $0x68] sm:$0xf]
    %v1467 = vld [vmem:[%s1439 + $0x6c] sm:$0xf]
    %v1468 = vld [vmem:[%s1439 + $0x70] sm:$0xf]
    %v1469 = vld [vmem:[%s1439 + $0x74] sm:$0xf]
    %v1470 = vld [vmem:[%s1439 + $0x78] sm:$0xf]
    %v1471 = vld [vmem:[%s1439 + $0x7c] sm:$0xf]
    %v1472 = vld [vmem:[%s1439 + $0x80] sm:$0xf]
    %v1473 = vld [vmem:[%s1439 + $0x84] sm:$0xf]
    %v1474 = vld [vmem:[%s1439 + $0x88] sm:$0xf]
    %v1475 = vld [vmem:[%s1439 + $0x8c] sm:$0xf]
    %v1476 = vld [vmem:[%s1439 + $0x90] sm:$0xf]
    %v1477 = vld [vmem:[%s1439 + $0x94] sm:$0xf]
    %v1478 = vld [vmem:[%s1439 + $0x98] sm:$0xf]
    %v1479 = vld [vmem:[%s1439 + $0x9c] sm:$0xf]
    %v1480 = vld [vmem:[%s1439 + $0xa0] sm:$0xf]
    %v1481 = vld [vmem:[%s1439 + $0xa4] sm:$0xf]
    %v1482 = vld [vmem:[%s1439 + $0xa8] sm:$0xf]
    %v1483 = vld [vmem:[%s1439 + $0xac] sm:$0xf]
    %v1484 = vld [vmem:[%s1439 + $0xb0] sm:$0xf]
    %v1485 = vld [vmem:[%s1439 + $0xb4] sm:$0xf]
    %v1486 = vld [vmem:[%s1439 + $0xb8] sm:$0xf]
    %v1487 = vld [vmem:[%s1439 + $0xbc] sm:$0xf]
    %v1488 = vld [vmem:[%s1439 + $0xc0] sm:$0xf]
    %v1489 = vld [vmem:[%s1439 + $0xc4] sm:$0xf]
    %v1490 = vld [vmem:[%s1439 + $0xc8] sm:$0xf]
    %v1491 = vld [vmem:[%s1439 + $0xcc] sm:$0xf]
    %v1492 = vld [vmem:[%s1439 + $0xd0] sm:$0xf]
    %v1493 = vld [vmem:[%s1439 + $0xd4] sm:$0xf]
    %v1494 = vld [vmem:[%s1439 + $0xd8] sm:$0xf]
    %v1495 = vld [vmem:[%s1439 + $0xdc] sm:$0xf]
    %v1496 = vld [vmem:[%s1439 + $0xe0] sm:$0xf]
    %v1497 = vld [vmem:[%s1439 + $0xe4] sm:$0xf]
    %v1498 = vld [vmem:[%s1439 + $0xe8] sm:$0xf]
    %v1499 = vld [vmem:[%s1439 + $0xec] sm:$0xf]
    %v1500 = vld [vmem:[%s1439 + $0xf0] sm:$0xf]
    %v1501 = vld [vmem:[%s1439 + $0xf4] sm:$0xf]
    %v1502 = vld [vmem:[%s1439 + $0xf8] sm:$0xf]
    %v1503 = vld [vmem:[%s1439 + $0xfc] sm:$0xf]
    %v1504 = vld [vmem:[%s1439 + $0x100] sm:$0xf]
    %v1505 = vld [vmem:[%s1439 + $0x104] sm:$0xf]
    %v1506 = vld [vmem:[%s1439 + $0x108] sm:$0xf]
    %v1507 = vld [vmem:[%s1439 + $0x10c] sm:$0xf]
    %v1508 = vld [vmem:[%s1439 + $0x110] sm:$0xf]
    %v1509 = vld [vmem:[%s1439 + $0x114] sm:$0xf]
    %v1510 = vld [vmem:[%s1439 + $0x118] sm:$0xf]
    %v1511 = vld [vmem:[%s1439 + $0x11c] sm:$0xf]
    %v1512 = vld [vmem:[%s1439 + $0x120] sm:$0xf]
    %v1513 = vld [vmem:[%s1439 + $0x124] sm:$0xf]
    %v1514 = vld [vmem:[%s1439 + $0x128] sm:$0xf]
    %v1515 = vld [vmem:[%s1439 + $0x12c] sm:$0xf]
    %v1516 = vld [vmem:[%s1439 + $0x130] sm:$0xf]
    %v1517 = vld [vmem:[%s1439 + $0x134] sm:$0xf]
    %v1518 = vld [vmem:[%s1439 + $0x138] sm:$0xf]
    %v1519 = vld [vmem:[%s1439 + $0x13c] sm:$0xf]
    %v1520 = vld [vmem:[%s1439 + $0x140] sm:$0xf]
    %v1521 = vld [vmem:[%s1439 + $0x144] sm:$0xf]
    %v1522 = vld [vmem:[%s1439 + $0x148] sm:$0xf]
    %v1523 = vld [vmem:[%s1439 + $0x14c] sm:$0xf]
    %v1524 = vld [vmem:[%s1439 + $0x150] sm:$0xf]
    %v1525 = vld [vmem:[%s1439 + $0x154] sm:$0xf]
    %v1526 = vld [vmem:[%s1439 + $0x158] sm:$0xf]
    %v1527 = vld [vmem:[%s1439 + $0x15c] sm:$0xf]
    %v1528 = vld [vmem:[%s1439 + $0x160] sm:$0xf]
    %v1529 = vld [vmem:[%s1439 + $0x164] sm:$0xf]
    %v1530 = vld [vmem:[%s1439 + $0x168] sm:$0xf]
    %v1531 = vld [vmem:[%s1439 + $0x16c] sm:$0xf]
    %v1532 = vld [vmem:[%s1439 + $0x170] sm:$0xf]
    %v1533 = vld [vmem:[%s1439 + $0x174] sm:$0xf]
    %v1534 = vld [vmem:[%s1439 + $0x178] sm:$0xf]
    %v1535 = vld [vmem:[%s1439 + $0x17c] sm:$0xf]
    %v1536 = vld [vmem:[%s1439 + $0x180] sm:$0xf]
    %v1537 = vld [vmem:[%s1439 + $0x184] sm:$0xf]
    %v1538 = vld [vmem:[%s1439 + $0x188] sm:$0xf]
    %v1539 = vld [vmem:[%s1439 + $0x18c] sm:$0xf]
    %v1540 = vld [vmem:[%s1439 + $0x190] sm:$0xf]
    %v1541 = vld [vmem:[%s1439 + $0x194] sm:$0xf]
    %v1542 = vld [vmem:[%s1439 + $0x198] sm:$0xf]
    %v1543 = vld [vmem:[%s1439 + $0x19c] sm:$0xf]
    %v1544 = vld [vmem:[%s1439 + $0x1a0] sm:$0xf]
    %v1545 = vld [vmem:[%s1439 + $0x1a4] sm:$0xf]
    %v1546 = vld [vmem:[%s1439 + $0x1a8] sm:$0xf]
    %v1547 = vld [vmem:[%s1439 + $0x1ac] sm:$0xf]
    %v1548 = vld [vmem:[%s1439 + $0x1b0] sm:$0xf]
    %v1549 = vld [vmem:[%s1439 + $0x1b4] sm:$0xf]
    %v1550 = vld [vmem:[%s1439 + $0x1b8] sm:$0xf]
    %v1551 = vld [vmem:[%s1439 + $0x1bc] sm:$0xf]
    %v1552 = vld [vmem:[%s1439 + $0x1c0] sm:$0xf]
    %v1553 = vld [vmem:[%s1439 + $0x1c4] sm:$0xf]
    %v1554 = vld [vmem:[%s1439 + $0x1c8] sm:$0xf]
    %v1555 = vld [vmem:[%s1439 + $0x1cc] sm:$0xf]
    %v1556 = vld [vmem:[%s1439 + $0x1d0] sm:$0xf]
    %v1557 = vld [vmem:[%s1439 + $0x1d4] sm:$0xf]
    %v1558 = vld [vmem:[%s1439 + $0x1d8] sm:$0xf]
    %v1559 = vld [vmem:[%s1439 + $0x1dc] sm:$0xf]
    %v1560 = vld [vmem:[%s1439 + $0x1e0] sm:$0xf]
    %v1561 = vld [vmem:[%s1439 + $0x1e4] sm:$0xf]
    %v1562 = vld [vmem:[%s1439 + $0x1e8] sm:$0xf]
    %v1563 = vld [vmem:[%s1439 + $0x1ec] sm:$0xf]
    %v1564 = vld [vmem:[%s1439 + $0x1f0] sm:$0xf]
    %v1565 = vld [vmem:[%s1439 + $0x1f4] sm:$0xf]
    %v1566 = vld [vmem:[%s1439 + $0x1f8] sm:$0xf]
    %v1567 = vld [vmem:[%s1439 + $0x1fc] sm:$0xf]
    %v1568 = vld [vmem:[%s1439 + $0x200] sm:$0xf]
    %v1569 = vld [vmem:[%s1439 + $0x204] sm:$0xf]
    %v1570 = vld [vmem:[%s1439 + $0x208] sm:$0xf]
    %v1571 = vld [vmem:[%s1439 + $0x20c] sm:$0xf]
    %v1572 = vld [vmem:[%s1439 + $0x210] sm:$0xf]
    %v1573 = vld [vmem:[%s1439 + $0x214] sm:$0xf]
    %v1574 = vld [vmem:[%s1439 + $0x218] sm:$0xf]
    %v1575 = vld [vmem:[%s1439 + $0x21c] sm:$0xf]
    %v1576 = vld [vmem:[%s1439 + $0x220] sm:$0xf]
    %v1577 = vld [vmem:[%s1439 + $0x224] sm:$0xf]
    %v1578 = vld [vmem:[%s1439 + $0x228] sm:$0xf]
    %v1579 = vld [vmem:[%s1439 + $0x22c] sm:$0xf]
    %v1580 = vld [vmem:[%s1439 + $0x230] sm:$0xf]
    %v1581 = vld [vmem:[%s1439 + $0x234] sm:$0xf]
    %v1582 = vld [vmem:[%s1439 + $0x238] sm:$0xf]
    %v1583 = vld [vmem:[%s1439 + $0x23c] sm:$0xf]
    %v1584 = vld [vmem:[%s1439 + $0x240] sm:$0x3]
    %v1730 = vunpack.c.l.b16 %v1440
    %v1731 = vunpack.c.l.b16 %v1441
    %v1732 = vunpack.c.l.b16 %v1442
    %v1733 = vunpack.c.l.b16 %v1443
    %v1734 = vunpack.c.l.b16 %v1444
    %v1735 = vunpack.c.l.b16 %v1445
    %v1736 = vunpack.c.l.b16 %v1446
    %v1737 = vunpack.c.l.b16 %v1447
    %v1738 = vunpack.c.l.b16 %v1448
    %v1739 = vunpack.c.l.b16 %v1449
    %v1740 = vunpack.c.l.b16 %v1450
    %v1741 = vunpack.c.l.b16 %v1451
    %v1742 = vunpack.c.l.b16 %v1452
    %v1743 = vunpack.c.l.b16 %v1453
    %v1744 = vunpack.c.l.b16 %v1454
    %v1745 = vunpack.c.l.b16 %v1455
    %v1746 = vunpack.c.l.b16 %v1456
    %v1747 = vunpack.c.l.b16 %v1457
    %v1748 = vunpack.c.l.b16 %v1458
    %v1749 = vunpack.c.l.b16 %v1459
    %v1750 = vunpack.c.l.b16 %v1460
    %v1751 = vunpack.c.l.b16 %v1461
    %v1752 = vunpack.c.l.b16 %v1462
    %v1753 = vunpack.c.l.b16 %v1463
    %v1754 = vunpack.c.l.b16 %v1464
    %v1755 = vunpack.c.l.b16 %v1465
    %v1756 = vunpack.c.l.b16 %v1466
    %v1757 = vunpack.c.l.b16 %v1467
    %v1758 = vunpack.c.l.b16 %v1468
    %v1759 = vunpack.c.l.b16 %v1469
    %v1760 = vunpack.c.l.b16 %v1470
    %v1761 = vunpack.c.l.b16 %v1471
    %v1762 = vunpack.c.l.b16 %v1472
    %v1763 = vunpack.c.l.b16 %v1473
    %v1764 = vunpack.c.l.b16 %v1474
    %v1765 = vunpack.c.l.b16 %v1475
    %v1766 = vunpack.c.l.b16 %v1476
    %v1767 = vunpack.c.l.b16 %v1477
    %v1768 = vunpack.c.l.b16 %v1478
    %v1769 = vunpack.c.l.b16 %v1479
    %v1770 = vunpack.c.l.b16 %v1480
    %v1771 = vunpack.c.l.b16 %v1481
    %v1772 = vunpack.c.l.b16 %v1482
    %v1773 = vunpack.c.l.b16 %v1483
    %v1774 = vunpack.c.l.b16 %v1484
    %v1775 = vunpack.c.l.b16 %v1485
    %v1776 = vunpack.c.l.b16 %v1486
    %v1777 = vunpack.c.l.b16 %v1487
    %v1778 = vunpack.c.l.b16 %v1488
    %v1779 = vunpack.c.l.b16 %v1489
    %v1780 = vunpack.c.l.b16 %v1490
    %v1781 = vunpack.c.l.b16 %v1491
    %v1782 = vunpack.c.l.b16 %v1492
    %v1783 = vunpack.c.l.b16 %v1493
    %v1784 = vunpack.c.l.b16 %v1494
    %v1785 = vunpack.c.l.b16 %v1495
    %v1786 = vunpack.c.l.b16 %v1496
    %v1787 = vunpack.c.l.b16 %v1497
    %v1788 = vunpack.c.l.b16 %v1498
    %v1789 = vunpack.c.l.b16 %v1499
    %v1790 = vunpack.c.l.b16 %v1500
    %v1791 = vunpack.c.l.b16 %v1501
    %v1792 = vunpack.c.l.b16 %v1502
    %v1793 = vunpack.c.l.b16 %v1503
    %v1794 = vunpack.c.l.b16 %v1504
    %v1795 = vunpack.c.l.b16 %v1505
    %v1796 = vunpack.c.l.b16 %v1506
    %v1797 = vunpack.c.l.b16 %v1507
    %v1798 = vunpack.c.l.b16 %v1508
    %v1799 = vunpack.c.l.b16 %v1509
    %v1800 = vunpack.c.l.b16 %v1510
    %v1801 = vunpack.c.l.b16 %v1511
    %v1802 = vunpack.c.l.b16 %v1512
    %v1803 = vunpack.c.l.b16 %v1513
    %v1804 = vunpack.c.l.b16 %v1514
    %v1805 = vunpack.c.l.b16 %v1515
    %v1806 = vunpack.c.l.b16 %v1516
    %v1807 = vunpack.c.l.b16 %v1517
    %v1808 = vunpack.c.l.b16 %v1518
    %v1809 = vunpack.c.l.b16 %v1519
    %v1810 = vunpack.c.l.b16 %v1520
    %v1811 = vunpack.c.l.b16 %v1521
    %v1812 = vunpack.c.l.b16 %v1522
    %v1813 = vunpack.c.l.b16 %v1523
    %v1814 = vunpack.c.l.b16 %v1524
    %v1815 = vunpack.c.l.b16 %v1525
    %v1816 = vunpack.c.l.b16 %v1526
    %v1817 = vunpack.c.l.b16 %v1527
    %v1818 = vunpack.c.l.b16 %v1528
    %v1819 = vunpack.c.l.b16 %v1529
    %v1820 = vunpack.c.l.b16 %v1530
    %v1821 = vunpack.c.l.b16 %v1531
    %v1822 = vunpack.c.l.b16 %v1532
    %v1823 = vunpack.c.l.b16 %v1533
    %v1824 = vunpack.c.l.b16 %v1534
    %v1825 = vunpack.c.l.b16 %v1535
    %v1826 = vunpack.c.l.b16 %v1536
    %v1827 = vunpack.c.l.b16 %v1537
    %v1828 = vunpack.c.l.b16 %v1538
    %v1829 = vunpack.c.l.b16 %v1539
    %v1830 = vunpack.c.l.b16 %v1540
    %v1831 = vunpack.c.l.b16 %v1541
    %v1832 = vunpack.c.l.b16 %v1542
    %v1833 = vunpack.c.l.b16 %v1543
    %v1834 = vunpack.c.l.b16 %v1544
    %v1835 = vunpack.c.l.b16 %v1545
    %v1836 = vunpack.c.l.b16 %v1546
    %v1837 = vunpack.c.l.b16 %v1547
    %v1838 = vunpack.c.l.b16 %v1548
    %v1839 = vunpack.c.l.b16 %v1549
    %v1840 = vunpack.c.l.b16 %v1550
    %v1841 = vunpack.c.l.b16 %v1551
    %v1842 = vunpack.c.l.b16 %v1552
    %v1843 = vunpack.c.l.b16 %v1553
    %v1844 = vunpack.c.l.b16 %v1554
    %v1845 = vunpack.c.l.b16 %v1555
    %v1846 = vunpack.c.l.b16 %v1556
    %v1847 = vunpack.c.l.b16 %v1557
    %v1848 = vunpack.c.l.b16 %v1558
    %v1849 = vunpack.c.l.b16 %v1559
    %v1850 = vunpack.c.l.b16 %v1560
    %v1851 = vunpack.c.l.b16 %v1561
    %v1852 = vunpack.c.l.b16 %v1562
    %v1853 = vunpack.c.l.b16 %v1563
    %v1854 = vunpack.c.l.b16 %v1564
    %v1855 = vunpack.c.l.b16 %v1565
    %v1856 = vunpack.c.l.b16 %v1566
    %v1857 = vunpack.c.l.b16 %v1567
    %v1858 = vunpack.c.l.b16 %v1568
    %v1859 = vunpack.c.l.b16 %v1569
    %v1860 = vunpack.c.l.b16 %v1570
    %v1861 = vunpack.c.l.b16 %v1571
    %v1862 = vunpack.c.l.b16 %v1572
    %v1863 = vunpack.c.l.b16 %v1573
    %v1864 = vunpack.c.l.b16 %v1574
    %v1865 = vunpack.c.l.b16 %v1575
    %v1866 = vunpack.c.l.b16 %v1576
    %v1867 = vunpack.c.l.b16 %v1577
    %v1868 = vunpack.c.l.b16 %v1578
    %v1869 = vunpack.c.l.b16 %v1579
    %v1870 = vunpack.c.l.b16 %v1580
    %v1871 = vunpack.c.l.b16 %v1581
    %v1872 = vunpack.c.l.b16 %v1582
    %v1873 = vunpack.c.l.b16 %v1583
    %v1874 = vunpack.c.l.b16 %v1584
    %v1875 = vpack.c.b16 %v1731, %v1730
    %v1876 = vpack.c.b16 %v1733, %v1732
    %v1877 = vpack.c.b16 %v1735, %v1734
    %v1878 = vpack.c.b16 %v1737, %v1736
    %v1879 = vpack.c.b16 %v1739, %v1738
    %v1880 = vpack.c.b16 %v1741, %v1740
    %v1881 = vpack.c.b16 %v1743, %v1742
    %v1882 = vpack.c.b16 %v1745, %v1744
    %v1883 = vpack.c.b16 %v1747, %v1746
    %v1884 = vpack.c.b16 %v1749, %v1748
    %v1885 = vpack.c.b16 %v1751, %v1750
    %v1886 = vpack.c.b16 %v1753, %v1752
    %v1887 = vpack.c.b16 %v1755, %v1754
    %v1888 = vpack.c.b16 %v1757, %v1756
    %v1889 = vpack.c.b16 %v1759, %v1758
    %v1890 = vpack.c.b16 %v1761, %v1760
    %v1891 = vpack.c.b16 %v1763, %v1762
    %v1892 = vpack.c.b16 %v1765, %v1764
    %v1893 = vpack.c.b16 %v1767, %v1766
    %v1894 = vpack.c.b16 %v1769, %v1768
    %v1895 = vpack.c.b16 %v1771, %v1770
    %v1896 = vpack.c.b16 %v1773, %v1772
    %v1897 = vpack.c.b16 %v1775, %v1774
    %v1898 = vpack.c.b16 %v1777, %v1776
    %v1899 = vpack.c.b16 %v1779, %v1778
    %v1900 = vpack.c.b16 %v1781, %v1780
    %v1901 = vpack.c.b16 %v1783, %v1782
    %v1902 = vpack.c.b16 %v1785, %v1784
    %v1903 = vpack.c.b16 %v1787, %v1786
    %v1904 = vpack.c.b16 %v1789, %v1788
    %v1905 = vpack.c.b16 %v1791, %v1790
    %v1906 = vpack.c.b16 %v1793, %v1792
    %v1907 = vpack.c.b16 %v1795, %v1794
    %v1908 = vpack.c.b16 %v1797, %v1796
    %v1909 = vpack.c.b16 %v1799, %v1798
    %v1910 = vpack.c.b16 %v1801, %v1800
    %v1911 = vpack.c.b16 %v1803, %v1802
    %v1912 = vpack.c.b16 %v1805, %v1804
    %v1913 = vpack.c.b16 %v1807, %v1806
    %v1914 = vpack.c.b16 %v1809, %v1808
    %v1915 = vpack.c.b16 %v1811, %v1810
    %v1916 = vpack.c.b16 %v1813, %v1812
    %v1917 = vpack.c.b16 %v1815, %v1814
    %v1918 = vpack.c.b16 %v1817, %v1816
    %v1919 = vpack.c.b16 %v1819, %v1818
    %v1920 = vpack.c.b16 %v1821, %v1820
    %v1921 = vpack.c.b16 %v1823, %v1822
    %v1922 = vpack.c.b16 %v1825, %v1824
    %v1923 = vpack.c.b16 %v1827, %v1826
    %v1924 = vpack.c.b16 %v1829, %v1828
    %v1925 = vpack.c.b16 %v1831, %v1830
    %v1926 = vpack.c.b16 %v1833, %v1832
    %v1927 = vpack.c.b16 %v1835, %v1834
    %v1928 = vpack.c.b16 %v1837, %v1836
    %v1929 = vpack.c.b16 %v1839, %v1838
    %v1930 = vpack.c.b16 %v1841, %v1840
    %v1931 = vpack.c.b16 %v1843, %v1842
    %v1932 = vpack.c.b16 %v1845, %v1844
    %v1933 = vpack.c.b16 %v1847, %v1846
    %v1934 = vpack.c.b16 %v1849, %v1848
    %v1935 = vpack.c.b16 %v1851, %v1850
    %v1936 = vpack.c.b16 %v1853, %v1852
    %v1937 = vpack.c.b16 %v1855, %v1854
    %v1938 = vpack.c.b16 %v1857, %v1856
    %v1939 = vpack.c.b16 %v1859, %v1858
    %v1940 = vpack.c.b16 %v1861, %v1860
    %v1941 = vpack.c.b16 %v1863, %v1862
    %v1942 = vpack.c.b16 %v1865, %v1864
    %v1943 = vpack.c.b16 %v1867, %v1866
    %v1944 = vpack.c.b16 %v1869, %v1868
    %v1945 = vpack.c.b16 %v1871, %v1870
    %v1946 = vpack.c.b16 %v1873, %v1872
    %v1947 = vpack.c.b16 %v1874, %v1874
    %vm2020 = vcmask 23552
    %v2022 = vsel %vm2020, %v1438, 0
    %vm2024 = vcmask 1040384
    %vm2025 = vcmask 1041408
    %v2026 = vsel %vm2024, 4294967295, 65535
    %v2027 = vsel %vm2025, %v2026, 0
    %v2029 = vand.u32 %v1947, %v2027
    %2031 = vmatprep.subr.bf16.mxu0 0
    %2032 = vmatpush1.bf16.msra.mxu0 %v1882
    %2033 = vmatprep.subr.bf16.mxu0 0
    %2034 = vmatpush1.bf16.msra.mxu0 %v1881
    %2035 = vmatprep.subr.bf16.mxu0 0
    %2036 = vmatpush1.bf16.msra.mxu0 %v1880
    %2037 = vmatprep.subr.bf16.mxu0 0
    %2038 = vmatpush1.bf16.msra.mxu0 %v1879
    %2039 = vmatprep.subr.bf16.mxu0 0
    %2040 = vmatpush1.bf16.msra.mxu0 %v1878
    %2041 = vmatprep.subr.bf16.mxu0 0
    %2042 = vmatpush1.bf16.msra.mxu0 %v1877
    %2043 = vmatprep.subr.bf16.mxu0 0
    %2044 = vmatpush1.bf16.msra.mxu0 %v1876
    %2045 = vmatprep.subr.bf16.mxu0 0
    %2046 = vmatpush1.bf16.msra.mxu0 %v1875
    %2047 = vmatprep.subr.bf16.mxu0 0
    %2048 = vmatpush2.bf16.msra.mxu0 %v1890
    %2049 = vmatprep.subr.bf16.mxu0 0
    %2050 = vmatpush2.bf16.msra.mxu0 %v1889
    %2051 = vmatprep.subr.bf16.mxu0 0
    %2052 = vmatpush2.bf16.msra.mxu0 %v1888
    %2053 = vmatprep.subr.bf16.mxu0 0
    %2054 = vmatpush2.bf16.msra.mxu0 %v1887
    %2055 = vmatprep.subr.bf16.mxu0 0
    %2056 = vmatpush2.bf16.msra.mxu0 %v1886
    %2057 = vmatprep.subr.bf16.mxu0 0
    %2058 = vmatpush2.bf16.msra.mxu0 %v1885
    %2059 = vmatprep.subr.bf16.mxu0 0
    %2060 = vmatpush2.bf16.msra.mxu0 %v1884
    %2061 = vmatprep.subr.bf16.mxu0 0
    %2062 = vmatpush2.bf16.msra.mxu0 %v1883
    %2063 = vmatprep.mubr.bf16.mxu0 %v1430
    %2064 = vmatmul.mubr.bf16.gmra.mxu0 %v1429
    %v2065 = vpop.f32.mrf.mxu0
    %v2066 = vadd.f32 0.0, %v2065
    %v2067 = vpop.f32.mrf.mxu0
    %v2068 = vpop.f32.mrf.mxu0
    %v2069 = vpop.f32.mrf.mxu0
    %2070 = vdwg.mxu0
    %2071 = vmatprep.subr.bf16.mxu0 0
    %2072 = vmatpush1.bf16.msra.mxu0 %v1898
    %2073 = vmatprep.subr.bf16.mxu0 0
    %2074 = vmatpush1.bf16.msra.mxu0 %v1897
    %2075 = vmatprep.subr.bf16.mxu0 0
    %2076 = vmatpush1.bf16.msra.mxu0 %v1896
    %2077 = vmatprep.subr.bf16.mxu0 0
    %2078 = vmatpush1.bf16.msra.mxu0 %v1895
    %2079 = vmatprep.subr.bf16.mxu0 0
    %2080 = vmatpush1.bf16.msra.mxu0 %v1894
    %2081 = vmatprep.subr.bf16.mxu0 0
    %2082 = vmatpush1.bf16.msra.mxu0 %v1893
    %2083 = vmatprep.subr.bf16.mxu0 0
    %2084 = vmatpush1.bf16.msra.mxu0 %v1892
    %2085 = vmatprep.subr.bf16.mxu0 0
    %2086 = vmatpush1.bf16.msra.mxu0 %v1891
    %2087 = vmatprep.subr.bf16.mxu0 0
    %2088 = vmatpush2.bf16.msra.mxu0 %v1906
    %2089 = vmatprep.subr.bf16.mxu0 0
    %2090 = vmatpush2.bf16.msra.mxu0 %v1905
    %2091 = vmatprep.subr.bf16.mxu0 0
    %2092 = vmatpush2.bf16.msra.mxu0 %v1904
    %2093 = vmatprep.subr.bf16.mxu0 0
    %2094 = vmatpush2.bf16.msra.mxu0 %v1903
    %2095 = vmatprep.subr.bf16.mxu0 0
    %2096 = vmatpush2.bf16.msra.mxu0 %v1902
    %2097 = vmatprep.subr.bf16.mxu0 0
    %2098 = vmatpush2.bf16.msra.mxu0 %v1901
    %2099 = vmatprep.subr.bf16.mxu0 0
    %2100 = vmatpush2.bf16.msra.mxu0 %v1900
    %2101 = vmatprep.subr.bf16.mxu0 0
    %2102 = vmatpush2.bf16.msra.mxu0 %v1899
    %2103 = vmatprep.mubr.bf16.mxu0 %v1432
    %2104 = vmatmul.mubr.bf16.gmra.mxu0 %v1431
    %v2105 = vpop.f32.mrf.mxu0
    %v2106 = vadd.f32 %v2066, %v2105
    %v2107 = vpop.f32.mrf.mxu0
    %v2108 = vpop.f32.mrf.mxu0
    %v2109 = vpop.f32.mrf.mxu0
    %2110 = vdwg.mxu0
    %2111 = vmatprep.subr.bf16.mxu0 0
    %2112 = vmatpush1.bf16.msra.mxu0 %v1914
    %2113 = vmatprep.subr.bf16.mxu0 0
    %2114 = vmatpush1.bf16.msra.mxu0 %v1913
    %2115 = vmatprep.subr.bf16.mxu0 0
    %2116 = vmatpush1.bf16.msra.mxu0 %v1912
    %2117 = vmatprep.subr.bf16.mxu0 0
    %2118 = vmatpush1.bf16.msra.mxu0 %v1911
    %2119 = vmatprep.subr.bf16.mxu0 0
    %2120 = vmatpush1.bf16.msra.mxu0 %v1910
    %2121 = vmatprep.subr.bf16.mxu0 0
    %2122 = vmatpush1.bf16.msra.mxu0 %v1909
    %2123 = vmatprep.subr.bf16.mxu0 0
    %2124 = vmatpush1.bf16.msra.mxu0 %v1908
    %2125 = vmatprep.subr.bf16.mxu0 0
    %2126 = vmatpush1.bf16.msra.mxu0 %v1907
    %2127 = vmatprep.subr.bf16.mxu0 0
    %2128 = vmatpush2.bf16.msra.mxu0 %v1922
    %2129 = vmatprep.subr.bf16.mxu0 0
    %2130 = vmatpush2.bf16.msra.mxu0 %v1921
    %2131 = vmatprep.subr.bf16.mxu0 0
    %2132 = vmatpush2.bf16.msra.mxu0 %v1920
    %2133 = vmatprep.subr.bf16.mxu0 0
    %2134 = vmatpush2.bf16.msra.mxu0 %v1919
    %2135 = vmatprep.subr.bf16.mxu0 0
    %2136 = vmatpush2.bf16.msra.mxu0 %v1918
    %2137 = vmatprep.subr.bf16.mxu0 0
    %2138 = vmatpush2.bf16.msra.mxu0 %v1917
    %2139 = vmatprep.subr.bf16.mxu0 0
    %2140 = vmatpush2.bf16.msra.mxu0 %v1916
    %2141 = vmatprep.subr.bf16.mxu0 0
    %2142 = vmatpush2.bf16.msra.mxu0 %v1915
    %2143 = vmatprep.mubr.bf16.mxu0 %v1434
    %2144 = vmatmul.mubr.bf16.gmra.mxu0 %v1433
    %v2145 = vpop.f32.mrf.mxu0
    %v2146 = vadd.f32 %v2106, %v2145
    %v2147 = vpop.f32.mrf.mxu0
    %v2148 = vpop.f32.mrf.mxu0
    %v2149 = vpop.f32.mrf.mxu0
    %2150 = vdwg.mxu0
    %2151 = vmatprep.subr.bf16.mxu0 0
    %2152 = vmatpush1.bf16.msra.mxu0 %v1930
    %2153 = vmatprep.subr.bf16.mxu0 0
    %2154 = vmatpush1.bf16.msra.mxu0 %v1929
    %2155 = vmatprep.subr.bf16.mxu0 0
    %2156 = vmatpush1.bf16.msra.mxu0 %v1928
    %2157 = vmatprep.subr.bf16.mxu0 0
    %2158 = vmatpush1.bf16.msra.mxu0 %v1927
    %2159 = vmatprep.subr.bf16.mxu0 0
    %2160 = vmatpush1.bf16.msra.mxu0 %v1926
    %2161 = vmatprep.subr.bf16.mxu0 0
    %2162 = vmatpush1.bf16.msra.mxu0 %v1925
    %2163 = vmatprep.subr.bf16.mxu0 0
    %2164 = vmatpush1.bf16.msra.mxu0 %v1924
    %2165 = vmatprep.subr.bf16.mxu0 0
    %2166 = vmatpush1.bf16.msra.mxu0 %v1923
    %2167 = vmatprep.subr.bf16.mxu0 0
    %2168 = vmatpush2.bf16.msra.mxu0 %v1938
    %2169 = vmatprep.subr.bf16.mxu0 0
    %2170 = vmatpush2.bf16.msra.mxu0 %v1937
    %2171 = vmatprep.subr.bf16.mxu0 0
    %2172 = vmatpush2.bf16.msra.mxu0 %v1936
    %2173 = vmatprep.subr.bf16.mxu0 0
    %2174 = vmatpush2.bf16.msra.mxu0 %v1935
    %2175 = vmatprep.subr.bf16.mxu0 0
    %2176 = vmatpush2.bf16.msra.mxu0 %v1934
    %2177 = vmatprep.subr.bf16.mxu0 0
    %2178 = vmatpush2.bf16.msra.mxu0 %v1933
    %2179 = vmatprep.subr.bf16.mxu0 0
    %2180 = vmatpush2.bf16.msra.mxu0 %v1932
    %2181 = vmatprep.subr.bf16.mxu0 0
    %2182 = vmatpush2.bf16.msra.mxu0 %v1931
    %2183 = vmatprep.mubr.bf16.mxu0 %v1436
    %2184 = vmatmul.mubr.bf16.gmra.mxu0 %v1435
    %v2185 = vpop.f32.mrf.mxu0
    %v2186 = vadd.f32 %v2146, %v2185
    %v2187 = vpop.f32.mrf.mxu0
    %v2188 = vpop.f32.mrf.mxu0
    %v2189 = vpop.f32.mrf.mxu0
    %2190 = vdwg.mxu0
    %2191 = vmatprep.subr.bf16.mxu0 0
    %2192 = vmatpush1.bf16.msra.mxu0 %v1946
    %2193 = vmatprep.subr.bf16.mxu0 0
    %2194 = vmatpush1.bf16.msra.mxu0 %v1945
    %2195 = vmatprep.subr.bf16.mxu0 0
    %2196 = vmatpush1.bf16.msra.mxu0 %v1944
    %2197 = vmatprep.subr.bf16.mxu0 0
    %2198 = vmatpush1.bf16.msra.mxu0 %v1943
    %2199 = vmatprep.subr.bf16.mxu0 0
    %2200 = vmatpush1.bf16.msra.mxu0 %v1942
    %2201 = vmatprep.subr.bf16.mxu0 0
    %2202 = vmatpush1.bf16.msra.mxu0 %v1941
    %2203 = vmatprep.subr.bf16.mxu0 0
    %2204 = vmatpush1.bf16.msra.mxu0 %v1940
    %2205 = vmatprep.subr.bf16.mxu0 0
    %2206 = vmatpush1.bf16.msra.mxu0 %v1939
    %2207 = vmatprep.subr.bf16.mxu0 0
    %2208 = vmatpush2.bf16.msra.mxu0 0
    %2209 = vmatprep.subr.bf16.mxu0 0
    %2210 = vmatpush2.bf16.msra.mxu0 0
    %2211 = vmatprep.subr.bf16.mxu0 0
    %2212 = vmatpush2.bf16.msra.mxu0 0
    %2213 = vmatprep.subr.bf16.mxu0 0
    %2214 = vmatpush2.bf16.msra.mxu0 0
    %2215 = vmatprep.subr.bf16.mxu0 0
    %2216 = vmatpush2.bf16.msra.mxu0 0
    %2217 = vmatprep.subr.bf16.mxu0 0
    %2218 = vmatpush2.bf16.msra.mxu0 0
    %2219 = vmatprep.subr.bf16.mxu0 0
    %2220 = vmatpush2.bf16.msra.mxu0 0
    %2221 = vmatprep.subr.bf16.mxu0 0
    %2222 = vmatpush2.bf16.msra.mxu0 %v2029
    %2223 = vmatprep.mubr.bf16.mxu0 %v2022
    %2224 = vmatmul.mubr.bf16.gmra.mxu0 %v1437
    %v2225 = vpop.f32.mrf.mxu0
    %v2226 = vadd.f32 %v2186, %v2225
    %v2227 = vpop.f32.mrf.mxu0
    %v2228 = vpop.f32.mrf.mxu0
    %v2229 = vpop.f32.mrf.mxu0
    %2230 = vdwg.mxu0
    %v2376 = vunpack.c.l.b16 %v682
    %v2377 = vunpack.c.l.b16 %v683
    %v2378 = vunpack.c.l.b16 %v684
    %v2379 = vunpack.c.l.b16 %v685
    %v2380 = vunpack.c.l.b16 %v686
    %v2381 = vunpack.c.l.b16 %v687
    %v2382 = vunpack.c.l.b16 %v688
    %v2383 = vunpack.c.l.b16 %v689
    %v2384 = vunpack.c.l.b16 %v690
    %v2385 = vunpack.c.l.b16 %v691
    %v2386 = vunpack.c.l.b16 %v692
    %v2387 = vunpack.c.l.b16 %v693
    %v2388 = vunpack.c.l.b16 %v694
    %v2389 = vunpack.c.l.b16 %v695
    %v2390 = vunpack.c.l.b16 %v696
    %v2391 = vunpack.c.l.b16 %v697
    %v2392 = vunpack.c.l.b16 %v698
    %v2393 = vunpack.c.l.b16 %v699
    %v2394 = vunpack.c.l.b16 %v700
    %v2395 = vunpack.c.l.b16 %v701
    %v2396 = vunpack.c.l.b16 %v702
    %v2397 = vunpack.c.l.b16 %v703
    %v2398 = vunpack.c.l.b16 %v704
    %v2399 = vunpack.c.l.b16 %v705
    %v2400 = vunpack.c.l.b16 %v706
    %v2401 = vunpack.c.l.b16 %v707
    %v2402 = vunpack.c.l.b16 %v708
    %v2403 = vunpack.c.l.b16 %v709
    %v2404 = vunpack.c.l.b16 %v710
    %v2405 = vunpack.c.l.b16 %v711
    %v2406 = vunpack.c.l.b16 %v712
    %v2407 = vunpack.c.l.b16 %v713
    %v2408 = vunpack.c.l.b16 %v714
    %v2409 = vunpack.c.l.b16 %v715
    %v2410 = vunpack.c.l.b16 %v716
    %v2411 = vunpack.c.l.b16 %v717
    %v2412 = vunpack.c.l.b16 %v718
    %v2413 = vunpack.c.l.b16 %v719
    %v2414 = vunpack.c.l.b16 %v720
    %v2415 = vunpack.c.l.b16 %v721
    %v2416 = vunpack.c.l.b16 %v722
    %v2417 = vunpack.c.l.b16 %v723
    %v2418 = vunpack.c.l.b16 %v724
    %v2419 = vunpack.c.l.b16 %v725
    %v2420 = vunpack.c.l.b16 %v726
    %v2421 = vunpack.c.l.b16 %v727
    %v2422 = vunpack.c.l.b16 %v728
    %v2423 = vunpack.c.l.b16 %v729
    %v2424 = vunpack.c.l.b16 %v730
    %v2425 = vunpack.c.l.b16 %v731
    %v2426 = vunpack.c.l.b16 %v732
    %v2427 = vunpack.c.l.b16 %v733
    %v2428 = vunpack.c.l.b16 %v734
    %v2429 = vunpack.c.l.b16 %v735
    %v2430 = vunpack.c.l.b16 %v736
    %v2431 = vunpack.c.l.b16 %v737
    %v2432 = vunpack.c.l.b16 %v738
    %v2433 = vunpack.c.l.b16 %v739
    %v2434 = vunpack.c.l.b16 %v740
    %v2435 = vunpack.c.l.b16 %v741
    %v2436 = vunpack.c.l.b16 %v742
    %v2437 = vunpack.c.l.b16 %v743
    %v2438 = vunpack.c.l.b16 %v744
    %v2439 = vunpack.c.l.b16 %v745
    %v2440 = vunpack.c.l.b16 %v746
    %v2441 = vunpack.c.l.b16 %v747
    %v2442 = vunpack.c.l.b16 %v748
    %v2443 = vunpack.c.l.b16 %v749
    %v2444 = vunpack.c.l.b16 %v750
    %v2445 = vunpack.c.l.b16 %v751
    %v2446 = vunpack.c.l.b16 %v752
    %v2447 = vunpack.c.l.b16 %v753
    %v2448 = vunpack.c.l.b16 %v754
    %v2449 = vunpack.c.l.b16 %v755
    %v2450 = vunpack.c.l.b16 %v756
    %v2451 = vunpack.c.l.b16 %v757
    %v2452 = vunpack.c.l.b16 %v758
    %v2453 = vunpack.c.l.b16 %v759
    %v2454 = vunpack.c.l.b16 %v760
    %v2455 = vunpack.c.l.b16 %v761
    %v2456 = vunpack.c.l.b16 %v762
    %v2457 = vunpack.c.l.b16 %v763
    %v2458 = vunpack.c.l.b16 %v764
    %v2459 = vunpack.c.l.b16 %v765
    %v2460 = vunpack.c.l.b16 %v766
    %v2461 = vunpack.c.l.b16 %v767
    %v2462 = vunpack.c.l.b16 %v768
    %v2463 = vunpack.c.l.b16 %v769
    %v2464 = vunpack.c.l.b16 %v770
    %v2465 = vunpack.c.l.b16 %v771
    %v2466 = vunpack.c.l.b16 %v772
    %v2467 = vunpack.c.l.b16 %v773
    %v2468 = vunpack.c.l.b16 %v774
    %v2469 = vunpack.c.l.b16 %v775
    %v2470 = vunpack.c.l.b16 %v776
    %v2471 = vunpack.c.l.b16 %v777
    %v2472 = vunpack.c.l.b16 %v778
    %v2473 = vunpack.c.l.b16 %v779
    %v2474 = vunpack.c.l.b16 %v780
    %v2475 = vunpack.c.l.b16 %v781
    %v2476 = vunpack.c.l.b16 %v782
    %v2477 = vunpack.c.l.b16 %v783
    %v2478 = vunpack.c.l.b16 %v784
    %v2479 = vunpack.c.l.b16 %v785
    %v2480 = vunpack.c.l.b16 %v786
    %v2481 = vunpack.c.l.b16 %v787
    %v2482 = vunpack.c.l.b16 %v788
    %v2483 = vunpack.c.l.b16 %v789
    %v2484 = vunpack.c.l.b16 %v790
    %v2485 = vunpack.c.l.b16 %v791
    %v2486 = vunpack.c.l.b16 %v792
    %v2487 = vunpack.c.l.b16 %v793
    %v2488 = vunpack.c.l.b16 %v794
    %v2489 = vunpack.c.l.b16 %v795
    %v2490 = vunpack.c.l.b16 %v796
    %v2491 = vunpack.c.l.b16 %v797
    %v2492 = vunpack.c.l.b16 %v798
    %v2493 = vunpack.c.l.b16 %v799
    %v2494 = vunpack.c.l.b16 %v800
    %v2495 = vunpack.c.l.b16 %v801
    %v2496 = vunpack.c.l.b16 %v802
    %v2497 = vunpack.c.l.b16 %v803
    %v2498 = vunpack.c.l.b16 %v804
    %v2499 = vunpack.c.l.b16 %v805
    %v2500 = vunpack.c.l.b16 %v806
    %v2501 = vunpack.c.l.b16 %v807
    %v2502 = vunpack.c.l.b16 %v808
    %v2503 = vunpack.c.l.b16 %v809
    %v2504 = vunpack.c.l.b16 %v810
    %v2505 = vunpack.c.l.b16 %v811
    %v2506 = vunpack.c.l.b16 %v812
    %v2507 = vunpack.c.l.b16 %v813
    %v2508 = vunpack.c.l.b16 %v814
    %v2509 = vunpack.c.l.b16 %v815
    %v2510 = vunpack.c.l.b16 %v816
    %v2511 = vunpack.c.l.b16 %v817
    %v2512 = vunpack.c.l.b16 %v818
    %v2513 = vunpack.c.l.b16 %v819
    %v2514 = vunpack.c.l.b16 %v820
    %v2515 = vunpack.c.l.b16 %v821
    %v2516 = vunpack.c.l.b16 %v822
    %v2517 = vunpack.c.l.b16 %v823
    %v2518 = vunpack.c.l.b16 %v824
    %v2519 = vunpack.c.l.b16 %v825
    %v2520 = vunpack.c.l.b16 %v826
    %v2521 = vpack.c.b16 %v2377, %v2376
    %v2522 = vpack.c.b16 %v2379, %v2378
    %v2523 = vpack.c.b16 %v2381, %v2380
    %v2524 = vpack.c.b16 %v2383, %v2382
    %v2525 = vpack.c.b16 %v2385, %v2384
    %v2526 = vpack.c.b16 %v2387, %v2386
    %v2527 = vpack.c.b16 %v2389, %v2388
    %v2528 = vpack.c.b16 %v2391, %v2390
    %v2529 = vpack.c.b16 %v2393, %v2392
    %v2530 = vpack.c.b16 %v2395, %v2394
    %v2531 = vpack.c.b16 %v2397, %v2396
    %v2532 = vpack.c.b16 %v2399, %v2398
    %v2533 = vpack.c.b16 %v2401, %v2400
    %v2534 = vpack.c.b16 %v2403, %v2402
    %v2535 = vpack.c.b16 %v2405, %v2404
    %v2536 = vpack.c.b16 %v2407, %v2406
    %v2537 = vpack.c.b16 %v2409, %v2408
    %v2538 = vpack.c.b16 %v2411, %v2410
    %v2539 = vpack.c.b16 %v2413, %v2412
    %v2540 = vpack.c.b16 %v2415, %v2414
    %v2541 = vpack.c.b16 %v2417, %v2416
    %v2542 = vpack.c.b16 %v2419, %v2418
    %v2543 = vpack.c.b16 %v2421, %v2420
    %v2544 = vpack.c.b16 %v2423, %v2422
    %v2545 = vpack.c.b16 %v2425, %v2424
    %v2546 = vpack.c.b16 %v2427, %v2426
    %v2547 = vpack.c.b16 %v2429, %v2428
    %v2548 = vpack.c.b16 %v2431, %v2430
    %v2549 = vpack.c.b16 %v2433, %v2432
    %v2550 = vpack.c.b16 %v2435, %v2434
    %v2551 = vpack.c.b16 %v2437, %v2436
    %v2552 = vpack.c.b16 %v2439, %v2438
    %v2553 = vpack.c.b16 %v2441, %v2440
    %v2554 = vpack.c.b16 %v2443, %v2442
    %v2555 = vpack.c.b16 %v2445, %v2444
    %v2556 = vpack.c.b16 %v2447, %v2446
    %v2557 = vpack.c.b16 %v2449, %v2448
    %v2558 = vpack.c.b16 %v2451, %v2450
    %v2559 = vpack.c.b16 %v2453, %v2452
    %v2560 = vpack.c.b16 %v2455, %v2454
    %v2561 = vpack.c.b16 %v2457, %v2456
    %v2562 = vpack.c.b16 %v2459, %v2458
    %v2563 = vpack.c.b16 %v2461, %v2460
    %v2564 = vpack.c.b16 %v2463, %v2462
    %v2565 = vpack.c.b16 %v2465, %v2464
    %v2566 = vpack.c.b16 %v2467, %v2466
    %v2567 = vpack.c.b16 %v2469, %v2468
    %v2568 = vpack.c.b16 %v2471, %v2470
    %v2569 = vpack.c.b16 %v2473, %v2472
    %v2570 = vpack.c.b16 %v2475, %v2474
    %v2571 = vpack.c.b16 %v2477, %v2476
    %v2572 = vpack.c.b16 %v2479, %v2478
    %v2573 = vpack.c.b16 %v2481, %v2480
    %v2574 = vpack.c.b16 %v2483, %v2482
    %v2575 = vpack.c.b16 %v2485, %v2484
    %v2576 = vpack.c.b16 %v2487, %v2486
    %v2577 = vpack.c.b16 %v2489, %v2488
    %v2578 = vpack.c.b16 %v2491, %v2490
    %v2579 = vpack.c.b16 %v2493, %v2492
    %v2580 = vpack.c.b16 %v2495, %v2494
    %v2581 = vpack.c.b16 %v2497, %v2496
    %v2582 = vpack.c.b16 %v2499, %v2498
    %v2583 = vpack.c.b16 %v2501, %v2500
    %v2584 = vpack.c.b16 %v2503, %v2502
    %v2585 = vpack.c.b16 %v2505, %v2504
    %v2586 = vpack.c.b16 %v2507, %v2506
    %v2587 = vpack.c.b16 %v2509, %v2508
    %v2588 = vpack.c.b16 %v2511, %v2510
    %v2589 = vpack.c.b16 %v2513, %v2512
    %v2590 = vpack.c.b16 %v2515, %v2514
    %v2591 = vpack.c.b16 %v2517, %v2516
    %v2592 = vpack.c.b16 %v2519, %v2518
    %v2593 = vpack.c.b16 %v2520, %v2520
    %v2667 = vsel %vm2020, %v681, 0
    %v2670 = vand.u32 %v2593, %v2027
    %2672 = vmatprep.subr.bf16.mxu0 0
    %2673 = vmatpush1.bf16.msra.mxu0 %v2528
    %2674 = vmatprep.subr.bf16.mxu0 0
    %2675 = vmatpush1.bf16.msra.mxu0 %v2527
    %2676 = vmatprep.subr.bf16.mxu0 0
    %2677 = vmatpush1.bf16.msra.mxu0 %v2526
    %2678 = vmatprep.subr.bf16.mxu0 0
    %2679 = vmatpush1.bf16.msra.mxu0 %v2525
    %2680 = vmatprep.subr.bf16.mxu0 0
    %2681 = vmatpush1.bf16.msra.mxu0 %v2524
    %2682 = vmatprep.subr.bf16.mxu0 0
    %2683 = vmatpush1.bf16.msra.mxu0 %v2523
    %2684 = vmatprep.subr.bf16.mxu0 0
    %2685 = vmatpush1.bf16.msra.mxu0 %v2522
    %2686 = vmatprep.subr.bf16.mxu0 0
    %2687 = vmatpush1.bf16.msra.mxu0 %v2521
    %2688 = vmatprep.subr.bf16.mxu0 0
    %2689 = vmatpush2.bf16.msra.mxu0 %v2536
    %2690 = vmatprep.subr.bf16.mxu0 0
    %2691 = vmatpush2.bf16.msra.mxu0 %v2535
    %2692 = vmatprep.subr.bf16.mxu0 0
    %2693 = vmatpush2.bf16.msra.mxu0 %v2534
    %2694 = vmatprep.subr.bf16.mxu0 0
    %2695 = vmatpush2.bf16.msra.mxu0 %v2533
    %2696 = vmatprep.subr.bf16.mxu0 0
    %2697 = vmatpush2.bf16.msra.mxu0 %v2532
    %2698 = vmatprep.subr.bf16.mxu0 0
    %2699 = vmatpush2.bf16.msra.mxu0 %v2531
    %2700 = vmatprep.subr.bf16.mxu0 0
    %2701 = vmatpush2.bf16.msra.mxu0 %v2530
    %2702 = vmatprep.subr.bf16.mxu0 0
    %2703 = vmatpush2.bf16.msra.mxu0 %v2529
    %2704 = vmatprep.mubr.bf16.mxu0 %v673
    %2705 = vmatmul.mubr.bf16.gmra.mxu0 %v672
    %v2706 = vpop.f32.mrf.mxu0
    %v2707 = vadd.f32 %v2226, %v2706
    %v2708 = vpop.f32.mrf.mxu0
    %v2709 = vpop.f32.mrf.mxu0
    %v2710 = vpop.f32.mrf.mxu0
    %2711 = vdwg.mxu0
    %2712 = vmatprep.subr.bf16.mxu0 0
    %2713 = vmatpush1.bf16.msra.mxu0 %v2544
    %2714 = vmatprep.subr.bf16.mxu0 0
    %2715 = vmatpush1.bf16.msra.mxu0 %v2543
    %2716 = vmatprep.subr.bf16.mxu0 0
    %2717 = vmatpush1.bf16.msra.mxu0 %v2542
    %2718 = vmatprep.subr.bf16.mxu0 0
    %2719 = vmatpush1.bf16.msra.mxu0 %v2541
    %2720 = vmatprep.subr.bf16.mxu0 0
    %2721 = vmatpush1.bf16.msra.mxu0 %v2540
    %2722 = vmatprep.subr.bf16.mxu0 0
    %2723 = vmatpush1.bf16.msra.mxu0 %v2539
    %2724 = vmatprep.subr.bf16.mxu0 0
    %2725 = vmatpush1.bf16.msra.mxu0 %v2538
    %2726 = vmatprep.subr.bf16.mxu0 0
    %2727 = vmatpush1.bf16.msra.mxu0 %v2537
    %2728 = vmatprep.subr.bf16.mxu0 0
    %2729 = vmatpush2.bf16.msra.mxu0 %v2552
    %2730 = vmatprep.subr.bf16.mxu0 0
    %2731 = vmatpush2.bf16.msra.mxu0 %v2551
    %2732 = vmatprep.subr.bf16.mxu0 0
    %2733 = vmatpush2.bf16.msra.mxu0 %v2550
    %2734 = vmatprep.subr.bf16.mxu0 0
    %2735 = vmatpush2.bf16.msra.mxu0 %v2549
    %2736 = vmatprep.subr.bf16.mxu0 0
    %2737 = vmatpush2.bf16.msra.mxu0 %v2548
    %2738 = vmatprep.subr.bf16.mxu0 0
    %2739 = vmatpush2.bf16.msra.mxu0 %v2547
    %2740 = vmatprep.subr.bf16.mxu0 0
    %2741 = vmatpush2.bf16.msra.mxu0 %v2546
    %2742 = vmatprep.subr.bf16.mxu0 0
    %2743 = vmatpush2.bf16.msra.mxu0 %v2545
    %2744 = vmatprep.mubr.bf16.mxu0 %v675
    %2745 = vmatmul.mubr.bf16.gmra.mxu0 %v674
    %v2746 = vpop.f32.mrf.mxu0
    %v2747 = vadd.f32 %v2707, %v2746
    %v2748 = vpop.f32.mrf.mxu0
    %v2749 = vpop.f32.mrf.mxu0
    %v2750 = vpop.f32.mrf.mxu0
    %2751 = vdwg.mxu0
    %2752 = vmatprep.subr.bf16.mxu0 0
    %2753 = vmatpush1.bf16.msra.mxu0 %v2560
    %2754 = vmatprep.subr.bf16.mxu0 0
    %2755 = vmatpush1.bf16.msra.mxu0 %v2559
    %2756 = vmatprep.subr.bf16.mxu0 0
    %2757 = vmatpush1.bf16.msra.mxu0 %v2558
    %2758 = vmatprep.subr.bf16.mxu0 0
    %2759 = vmatpush1.bf16.msra.mxu0 %v2557
    %2760 = vmatprep.subr.bf16.mxu0 0
    %2761 = vmatpush1.bf16.msra.mxu0 %v2556
    %2762 = vmatprep.subr.bf16.mxu0 0
    %2763 = vmatpush1.bf16.msra.mxu0 %v2555
    %2764 = vmatprep.subr.bf16.mxu0 0
    %2765 = vmatpush1.bf16.msra.mxu0 %v2554
    %2766 = vmatprep.subr.bf16.mxu0 0
    %2767 = vmatpush1.bf16.msra.mxu0 %v2553
    %2768 = vmatprep.subr.bf16.mxu0 0
    %2769 = vmatpush2.bf16.msra.mxu0 %v2568
    %2770 = vmatprep.subr.bf16.mxu0 0
    %2771 = vmatpush2.bf16.msra.mxu0 %v2567
    %2772 = vmatprep.subr.bf16.mxu0 0
    %2773 = vmatpush2.bf16.msra.mxu0 %v2566
    %2774 = vmatprep.subr.bf16.mxu0 0
    %2775 = vmatpush2.bf16.msra.mxu0 %v2565
    %2776 = vmatprep.subr.bf16.mxu0 0
    %2777 = vmatpush2.bf16.msra.mxu0 %v2564
    %2778 = vmatprep.subr.bf16.mxu0 0
    %2779 = vmatpush2.bf16.msra.mxu0 %v2563
    %2780 = vmatprep.subr.bf16.mxu0 0
    %2781 = vmatpush2.bf16.msra.mxu0 %v2562
    %2782 = vmatprep.subr.bf16.mxu0 0
    %2783 = vmatpush2.bf16.msra.mxu0 %v2561
    %2784 = vmatprep.mubr.bf16.mxu0 %v677
    %2785 = vmatmul.mubr.bf16.gmra.mxu0 %v676
    %v2786 = vpop.f32.mrf.mxu0
    %v2787 = vadd.f32 %v2747, %v2786
    %v2788 = vpop.f32.mrf.mxu0
    %v2789 = vpop.f32.mrf.mxu0
    %v2790 = vpop.f32.mrf.mxu0
    %2791 = vdwg.mxu0
    %2792 = vmatprep.subr.bf16.mxu0 0
    %2793 = vmatpush1.bf16.msra.mxu0 %v2576
    %2794 = vmatprep.subr.bf16.mxu0 0
    %2795 = vmatpush1.bf16.msra.mxu0 %v2575
    %2796 = vmatprep.subr.bf16.mxu0 0
    %2797 = vmatpush1.bf16.msra.mxu0 %v2574
    %2798 = vmatprep.subr.bf16.mxu0 0
    %2799 = vmatpush1.bf16.msra.mxu0 %v2573
    %2800 = vmatprep.subr.bf16.mxu0 0
    %2801 = vmatpush1.bf16.msra.mxu0 %v2572
    %2802 = vmatprep.subr.bf16.mxu0 0
    %2803 = vmatpush1.bf16.msra.mxu0 %v2571
    %2804 = vmatprep.subr.bf16.mxu0 0
    %2805 = vmatpush1.bf16.msra.mxu0 %v2570
    %2806 = vmatprep.subr.bf16.mxu0 0
    %2807 = vmatpush1.bf16.msra.mxu0 %v2569
    %2808 = vmatprep.subr.bf16.mxu0 0
    %2809 = vmatpush2.bf16.msra.mxu0 %v2584
    %2810 = vmatprep.subr.bf16.mxu0 0
    %2811 = vmatpush2.bf16.msra.mxu0 %v2583
    %2812 = vmatprep.subr.bf16.mxu0 0
    %2813 = vmatpush2.bf16.msra.mxu0 %v2582
    %2814 = vmatprep.subr.bf16.mxu0 0
    %2815 = vmatpush2.bf16.msra.mxu0 %v2581
    %2816 = vmatprep.subr.bf16.mxu0 0
    %2817 = vmatpush2.bf16.msra.mxu0 %v2580
    %2818 = vmatprep.subr.bf16.mxu0 0
    %2819 = vmatpush2.bf16.msra.mxu0 %v2579
    %2820 = vmatprep.subr.bf16.mxu0 0
    %2821 = vmatpush2.bf16.msra.mxu0 %v2578
    %2822 = vmatprep.subr.bf16.mxu0 0
    %2823 = vmatpush2.bf16.msra.mxu0 %v2577
    %2824 = vmatprep.mubr.bf16.mxu0 %v679
    %2825 = vmatmul.mubr.bf16.gmra.mxu0 %v678
    %v2826 = vpop.f32.mrf.mxu0
    %v2827 = vadd.f32 %v2787, %v2826
    %v2828 = vpop.f32.mrf.mxu0
    %v2829 = vpop.f32.mrf.mxu0
    %v2830 = vpop.f32.mrf.mxu0
    %2831 = vdwg.mxu0
    %2832 = vmatprep.subr.bf16.mxu0 0
    %2833 = vmatpush1.bf16.msra.mxu0 %v2592
    %2834 = vmatprep.subr.bf16.mxu0 0
    %2835 = vmatpush1.bf16.msra.mxu0 %v2591
    %2836 = vmatprep.subr.bf16.mxu0 0
    %2837 = vmatpush1.bf16.msra.mxu0 %v2590
    %2838 = vmatprep.subr.bf16.mxu0 0
    %2839 = vmatpush1.bf16.msra.mxu0 %v2589
    %2840 = vmatprep.subr.bf16.mxu0 0
    %2841 = vmatpush1.bf16.msra.mxu0 %v2588
    %2842 = vmatprep.subr.bf16.mxu0 0
    %2843 = vmatpush1.bf16.msra.mxu0 %v2587
    %2844 = vmatprep.subr.bf16.mxu0 0
    %2845 = vmatpush1.bf16.msra.mxu0 %v2586
    %2846 = vmatprep.subr.bf16.mxu0 0
    %2847 = vmatpush1.bf16.msra.mxu0 %v2585
    %2848 = vmatprep.subr.bf16.mxu0 0
    %2849 = vmatpush2.bf16.msra.mxu0 0
    %2850 = vmatprep.subr.bf16.mxu0 0
    %2851 = vmatpush2.bf16.msra.mxu0 0
    %2852 = vmatprep.subr.bf16.mxu0 0
    %2853 = vmatpush2.bf16.msra.mxu0 0
    %2854 = vmatprep.subr.bf16.mxu0 0
    %2855 = vmatpush2.bf16.msra.mxu0 0
    %2856 = vmatprep.subr.bf16.mxu0 0
    %2857 = vmatpush2.bf16.msra.mxu0 0
    %2858 = vmatprep.subr.bf16.mxu0 0
    %2859 = vmatpush2.bf16.msra.mxu0 0
    %2860 = vmatprep.subr.bf16.mxu0 0
    %2861 = vmatpush2.bf16.msra.mxu0 0
    %2862 = vmatprep.subr.bf16.mxu0 0
    %2863 = vmatpush2.bf16.msra.mxu0 %v2670
    %2864 = vmatprep.mubr.bf16.mxu0 %v2667
    %2865 = vmatmul.mubr.bf16.gmra.mxu0 %v680
    %v2866 = vpop.f32.mrf.mxu0
    %v2867 = vadd.f32 %v2827, %v2866
    %v2868 = vpop.f32.mrf.mxu0
    %v2869 = vpop.f32.mrf.mxu0
    %v2870 = vpop.f32.mrf.mxu0
    %2871 = vdwg.mxu0
    %s2872 = sld [smem:[#allocation2 + $0x100]]
    %v2873 = vstv %s2872
    %v2874 = vmul.f32 %v52, %v2873
    %v2875 = vmul.f32 %v53, %v2873
    %v2876 = vmul.f32 %v54, %v2873
    %v2877 = vmul.f32 %v55, %v2873
    %v2878 = vmul.f32 %v56, %v2873
    %v2879 = vmul.f32 %v57, %v2873
    %v2880 = vmul.f32 %v58, %v2873
    %v2881 = vmul.f32 %v59, %v2873
    %v2882 = vmul.f32 %v60, %v2873
    %v2883 = vmul.f32 %v61, %v2873
    %s2884 = sld [smem:[#allocation2 + $0x101]]
    %v2885 = vstv %s2884
    %v2886 = vmul.f32 %v52, %v2885
    %v2887 = vmul.f32 %v53, %v2885
    %v2888 = vmul.f32 %v54, %v2885
    %v2889 = vmul.f32 %v55, %v2885
    %v2890 = vmul.f32 %v56, %v2885
    %v2891 = vmul.f32 %v57, %v2885
    %v2892 = vmul.f32 %v58, %v2885
    %v2893 = vmul.f32 %v59, %v2885
    %v2894 = vmul.f32 %v60, %v2885
    %v2895 = vmul.f32 %v61, %v2885
    %2906 = vrot.lane.b32.xlu0 %v2886, 127
    %v2907 = vpop.permute.xlu0 %2906
    %2908 = vrot.lane.b32.xlu0 %v2887, 127
    %v2909 = vpop.permute.xlu0 %2908
    %2910 = vrot.lane.b32.xlu0 %v2888, 127
    %v2911 = vpop.permute.xlu0 %2910
    %2912 = vrot.lane.b32.xlu0 %v2889, 127
    %v2913 = vpop.permute.xlu0 %2912
    %2914 = vrot.lane.b32.xlu0 %v2890, 127
    %v2915 = vpop.permute.xlu0 %2914
    %2916 = vrot.lane.b32.xlu0 %v2891, 127
    %v2917 = vpop.permute.xlu0 %2916
    %2918 = vrot.lane.b32.xlu0 %v2892, 127
    %v2919 = vpop.permute.xlu0 %2918
    %2920 = vrot.lane.b32.xlu0 %v2893, 127
    %v2921 = vpop.permute.xlu0 %2920
    %2922 = vrot.lane.b32.xlu0 %v2894, 127
    %v2923 = vpop.permute.xlu0 %2922
    %2924 = vrot.lane.b32.xlu0 %v2895, 127
    %v2925 = vpop.permute.xlu0 %2924
    %v2926 = vsel %vm116, %v2907, %v2909
    %v2927 = vsel %vm116, %v2909, %v2911
    %v2928 = vsel %vm116, %v2911, %v2913
    %v2929 = vsel %vm116, %v2913, %v2915
    %v2930 = vsel %vm116, %v2915, %v2917
    %v2931 = vsel %vm116, %v2917, %v2919
    %v2932 = vsel %vm116, %v2919, %v2921
    %v2933 = vsel %vm116, %v2921, %v2923
    %v2934 = vsel %vm116, %v2923, %v2925
    %v2945 = vadd.f32 %v2874, %v2926
    %v2946 = vadd.f32 %v2875, %v2927
    %v2947 = vadd.f32 %v2876, %v2928
    %v2948 = vadd.f32 %v2877, %v2929
    %v2949 = vadd.f32 %v2878, %v2930
    %v2950 = vadd.f32 %v2879, %v2931
    %v2951 = vadd.f32 %v2880, %v2932
    %v2952 = vadd.f32 %v2881, %v2933
    %v2953 = vadd.f32 %v2882, %v2934
    %v2954 = vadd.f32 %v2883, %v2925
    %s2955 = sld [smem:[#allocation2 + $0x102]]
    %v2956 = vstv %s2955
    %v2957 = vmul.f32 %v52, %v2956
    %v2958 = vmul.f32 %v53, %v2956
    %v2959 = vmul.f32 %v54, %v2956
    %v2960 = vmul.f32 %v55, %v2956
    %v2961 = vmul.f32 %v56, %v2956
    %v2962 = vmul.f32 %v57, %v2956
    %v2963 = vmul.f32 %v58, %v2956
    %v2964 = vmul.f32 %v59, %v2956
    %v2965 = vmul.f32 %v60, %v2956
    %v2966 = vmul.f32 %v61, %v2956
    %2977 = vrot.lane.b32.xlu0 %v2957, 126
    %v2978 = vpop.permute.xlu0 %2977
    %2979 = vrot.lane.b32.xlu0 %v2958, 126
    %v2980 = vpop.permute.xlu0 %2979
    %2981 = vrot.lane.b32.xlu0 %v2959, 126
    %v2982 = vpop.permute.xlu0 %2981
    %2983 = vrot.lane.b32.xlu0 %v2960, 126
    %v2984 = vpop.permute.xlu0 %2983
    %2985 = vrot.lane.b32.xlu0 %v2961, 126
    %v2986 = vpop.permute.xlu0 %2985
    %2987 = vrot.lane.b32.xlu0 %v2962, 126
    %v2988 = vpop.permute.xlu0 %2987
    %2989 = vrot.lane.b32.xlu0 %v2963, 126
    %v2990 = vpop.permute.xlu0 %2989
    %2991 = vrot.lane.b32.xlu0 %v2964, 126
    %v2992 = vpop.permute.xlu0 %2991
    %2993 = vrot.lane.b32.xlu0 %v2965, 126
    %v2994 = vpop.permute.xlu0 %2993
    %2995 = vrot.lane.b32.xlu0 %v2966, 126
    %v2996 = vpop.permute.xlu0 %2995
    %v2997 = vsel %vm188, %v2978, %v2980
    %v2998 = vsel %vm188, %v2980, %v2982
    %v2999 = vsel %vm188, %v2982, %v2984
    %v3000 = vsel %vm188, %v2984, %v2986
    %v3001 = vsel %vm188, %v2986, %v2988
    %v3002 = vsel %vm188, %v2988, %v2990
    %v3003 = vsel %vm188, %v2990, %v2992
    %v3004 = vsel %vm188, %v2992, %v2994
    %v3005 = vsel %vm188, %v2994, %v2996
    %v3016 = vadd.f32 %v2945, %v2997
    %v3017 = vadd.f32 %v2946, %v2998
    %v3018 = vadd.f32 %v2947, %v2999
    %v3019 = vadd.f32 %v2948, %v3000
    %v3020 = vadd.f32 %v2949, %v3001
    %v3021 = vadd.f32 %v2950, %v3002
    %v3022 = vadd.f32 %v2951, %v3003
    %v3023 = vadd.f32 %v2952, %v3004
    %v3024 = vadd.f32 %v2953, %v3005
    %v3025 = vadd.f32 %v2954, %v2996
    %s3026 = sld [smem:[#allocation2 + $0x103]]
    %v3027 = vstv %s3026
    %v3028 = vmul.f32 %v52, %v3027
    %v3029 = vmul.f32 %v53, %v3027
    %v3030 = vmul.f32 %v54, %v3027
    %v3031 = vmul.f32 %v55, %v3027
    %v3032 = vmul.f32 %v56, %v3027
    %v3033 = vmul.f32 %v57, %v3027
    %v3034 = vmul.f32 %v58, %v3027
    %v3035 = vmul.f32 %v59, %v3027
    %v3036 = vmul.f32 %v60, %v3027
    %v3037 = vmul.f32 %v61, %v3027
    %3048 = vrot.lane.b32.xlu0 %v3028, 93
    %v3049 = vpop.permute.xlu0 %3048
    %3050 = vrot.lane.b32.xlu0 %v3029, 93
    %v3051 = vpop.permute.xlu0 %3050
    %3052 = vrot.lane.b32.xlu0 %v3030, 93
    %v3053 = vpop.permute.xlu0 %3052
    %3054 = vrot.lane.b32.xlu0 %v3031, 93
    %v3055 = vpop.permute.xlu0 %3054
    %3056 = vrot.lane.b32.xlu0 %v3032, 93
    %v3057 = vpop.permute.xlu0 %3056
    %3058 = vrot.lane.b32.xlu0 %v3033, 93
    %v3059 = vpop.permute.xlu0 %3058
    %3060 = vrot.lane.b32.xlu0 %v3034, 93
    %v3061 = vpop.permute.xlu0 %3060
    %3062 = vrot.lane.b32.xlu0 %v3035, 93
    %v3063 = vpop.permute.xlu0 %3062
    %3064 = vrot.lane.b32.xlu0 %v3036, 93
    %v3065 = vpop.permute.xlu0 %3064
    %3066 = vrot.lane.b32.xlu0 %v3037, 93
    %v3067 = vpop.permute.xlu0 %3066
    %v3068 = vsel %vm260, %v3049, %v3051
    %v3069 = vsel %vm260, %v3051, %v3053
    %v3070 = vsel %vm260, %v3053, %v3055
    %v3071 = vsel %vm260, %v3055, %v3057
    %v3072 = vsel %vm260, %v3057, %v3059
    %v3073 = vsel %vm260, %v3059, %v3061
    %v3074 = vsel %vm260, %v3061, %v3063
    %v3075 = vsel %vm260, %v3063, %v3065
    %v3076 = vsel %vm260, %v3065, %v3067
    %v3087 = vadd.f32 %v3016, %v3068
    %v3088 = vadd.f32 %v3017, %v3069
    %v3089 = vadd.f32 %v3018, %v3070
    %v3090 = vadd.f32 %v3019, %v3071
    %v3091 = vadd.f32 %v3020, %v3072
    %v3092 = vadd.f32 %v3021, %v3073
    %v3093 = vadd.f32 %v3022, %v3074
    %v3094 = vadd.f32 %v3023, %v3075
    %v3095 = vadd.f32 %v3024, %v3076
    %v3096 = vadd.f32 %v3025, %v3067
    %s3097 = sld [smem:[#allocation2 + $0x104]]
    %v3098 = vstv %s3097
    %v3099 = vmul.f32 %v52, %v3098
    %v3100 = vmul.f32 %v53, %v3098
    %v3101 = vmul.f32 %v54, %v3098
    %v3102 = vmul.f32 %v55, %v3098
    %v3103 = vmul.f32 %v56, %v3098
    %v3104 = vmul.f32 %v57, %v3098
    %v3105 = vmul.f32 %v58, %v3098
    %v3106 = vmul.f32 %v59, %v3098
    %v3107 = vmul.f32 %v60, %v3098
    %v3108 = vmul.f32 %v61, %v3098
    %3119 = vrot.lane.b32.xlu0 %v3099, 92
    %v3120 = vpop.permute.xlu0 %3119
    %3121 = vrot.lane.b32.xlu0 %v3100, 92
    %v3122 = vpop.permute.xlu0 %3121
    %3123 = vrot.lane.b32.xlu0 %v3101, 92
    %v3124 = vpop.permute.xlu0 %3123
    %3125 = vrot.lane.b32.xlu0 %v3102, 92
    %v3126 = vpop.permute.xlu0 %3125
    %3127 = vrot.lane.b32.xlu0 %v3103, 92
    %v3128 = vpop.permute.xlu0 %3127
    %3129 = vrot.lane.b32.xlu0 %v3104, 92
    %v3130 = vpop.permute.xlu0 %3129
    %3131 = vrot.lane.b32.xlu0 %v3105, 92
    %v3132 = vpop.permute.xlu0 %3131
    %3133 = vrot.lane.b32.xlu0 %v3106, 92
    %v3134 = vpop.permute.xlu0 %3133
    %3135 = vrot.lane.b32.xlu0 %v3107, 92
    %v3136 = vpop.permute.xlu0 %3135
    %3137 = vrot.lane.b32.xlu0 %v3108, 92
    %v3138 = vpop.permute.xlu0 %3137
    %v3139 = vsel %vm332, %v3120, %v3122
    %v3140 = vsel %vm332, %v3122, %v3124
    %v3141 = vsel %vm332, %v3124, %v3126
    %v3142 = vsel %vm332, %v3126, %v3128
    %v3143 = vsel %vm332, %v3128, %v3130
    %v3144 = vsel %vm332, %v3130, %v3132
    %v3145 = vsel %vm332, %v3132, %v3134
    %v3146 = vsel %vm332, %v3134, %v3136
    %v3147 = vsel %vm332, %v3136, %v3138
    %v3158 = vadd.f32 %v3087, %v3139
    %v3159 = vadd.f32 %v3088, %v3140
    %v3160 = vadd.f32 %v3089, %v3141
    %v3161 = vadd.f32 %v3090, %v3142
    %v3162 = vadd.f32 %v3091, %v3143
    %v3163 = vadd.f32 %v3092, %v3144
    %v3164 = vadd.f32 %v3093, %v3145
    %v3165 = vadd.f32 %v3094, %v3146
    %v3166 = vadd.f32 %v3095, %v3147
    %v3167 = vadd.f32 %v3096, %v3138
    %s3168 = sld [smem:[#allocation2 + $0x105]]
    %v3169 = vstv %s3168
    %v3170 = vmul.f32 %v52, %v3169
    %v3171 = vmul.f32 %v53, %v3169
    %v3172 = vmul.f32 %v54, %v3169
    %v3173 = vmul.f32 %v55, %v3169
    %v3174 = vmul.f32 %v56, %v3169
    %v3175 = vmul.f32 %v57, %v3169
    %v3176 = vmul.f32 %v58, %v3169
    %v3177 = vmul.f32 %v59, %v3169
    %v3178 = vmul.f32 %v60, %v3169
    %v3179 = vmul.f32 %v61, %v3169
    %3190 = vrot.lane.b32.xlu0 %v3170, 91
    %v3191 = vpop.permute.xlu0 %3190
    %3192 = vrot.lane.b32.xlu0 %v3171, 91
    %v3193 = vpop.permute.xlu0 %3192
    %3194 = vrot.lane.b32.xlu0 %v3172, 91
    %v3195 = vpop.permute.xlu0 %3194
    %3196 = vrot.lane.b32.xlu0 %v3173, 91
    %v3197 = vpop.permute.xlu0 %3196
    %3198 = vrot.lane.b32.xlu0 %v3174, 91
    %v3199 = vpop.permute.xlu0 %3198
    %3200 = vrot.lane.b32.xlu0 %v3175, 91
    %v3201 = vpop.permute.xlu0 %3200
    %3202 = vrot.lane.b32.xlu0 %v3176, 91
    %v3203 = vpop.permute.xlu0 %3202
    %3204 = vrot.lane.b32.xlu0 %v3177, 91
    %v3205 = vpop.permute.xlu0 %3204
    %3206 = vrot.lane.b32.xlu0 %v3178, 91
    %v3207 = vpop.permute.xlu0 %3206
    %3208 = vrot.lane.b32.xlu0 %v3179, 91
    %v3209 = vpop.permute.xlu0 %3208
    %v3210 = vsel %vm404, %v3191, %v3193
    %v3211 = vsel %vm404, %v3193, %v3195
    %v3212 = vsel %vm404, %v3195, %v3197
    %v3213 = vsel %vm404, %v3197, %v3199
    %v3214 = vsel %vm404, %v3199, %v3201
    %v3215 = vsel %vm404, %v3201, %v3203
    %v3216 = vsel %vm404, %v3203, %v3205
    %v3217 = vsel %vm404, %v3205, %v3207
    %v3218 = vsel %vm404, %v3207, %v3209
    %v3229 = vadd.f32 %v3158, %v3210
    %v3230 = vadd.f32 %v3159, %v3211
    %v3231 = vadd.f32 %v3160, %v3212
    %v3232 = vadd.f32 %v3161, %v3213
    %v3233 = vadd.f32 %v3162, %v3214
    %v3234 = vadd.f32 %v3163, %v3215
    %v3235 = vadd.f32 %v3164, %v3216
    %v3236 = vadd.f32 %v3165, %v3217
    %v3237 = vadd.f32 %v3166, %v3218
    %v3238 = vadd.f32 %v3167, %v3209
    %s3239 = sld [smem:[#allocation2 + $0x106]]
    %v3240 = vstv %s3239
    %v3241 = vmul.f32 %v52, %v3240
    %v3242 = vmul.f32 %v53, %v3240
    %v3243 = vmul.f32 %v54, %v3240
    %v3244 = vmul.f32 %v55, %v3240
    %v3245 = vmul.f32 %v56, %v3240
    %v3246 = vmul.f32 %v57, %v3240
    %v3247 = vmul.f32 %v58, %v3240
    %v3248 = vmul.f32 %v59, %v3240
    %v3249 = vmul.f32 %v60, %v3240
    %v3250 = vmul.f32 %v61, %v3240
    %3261 = vrot.lane.b32.xlu0 %v3241, 58
    %v3262 = vpop.permute.xlu0 %3261
    %3263 = vrot.lane.b32.xlu0 %v3242, 58
    %v3264 = vpop.permute.xlu0 %3263
    %3265 = vrot.lane.b32.xlu0 %v3243, 58
    %v3266 = vpop.permute.xlu0 %3265
    %3267 = vrot.lane.b32.xlu0 %v3244, 58
    %v3268 = vpop.permute.xlu0 %3267
    %3269 = vrot.lane.b32.xlu0 %v3245, 58
    %v3270 = vpop.permute.xlu0 %3269
    %3271 = vrot.lane.b32.xlu0 %v3246, 58
    %v3272 = vpop.permute.xlu0 %3271
    %3273 = vrot.lane.b32.xlu0 %v3247, 58
    %v3274 = vpop.permute.xlu0 %3273
    %3275 = vrot.lane.b32.xlu0 %v3248, 58
    %v3276 = vpop.permute.xlu0 %3275
    %3277 = vrot.lane.b32.xlu0 %v3249, 58
    %v3278 = vpop.permute.xlu0 %3277
    %3279 = vrot.lane.b32.xlu0 %v3250, 58
    %v3280 = vpop.permute.xlu0 %3279
    %v3281 = vsel %vm476, %v3262, %v3264
    %v3282 = vsel %vm476, %v3264, %v3266
    %v3283 = vsel %vm476, %v3266, %v3268
    %v3284 = vsel %vm476, %v3268, %v3270
    %v3285 = vsel %vm476, %v3270, %v3272
    %v3286 = vsel %vm476, %v3272, %v3274
    %v3287 = vsel %vm476, %v3274, %v3276
    %v3288 = vsel %vm476, %v3276, %v3278
    %v3289 = vsel %vm476, %v3278, %v3280
    %v3300 = vadd.f32 %v3229, %v3281
    %v3301 = vadd.f32 %v3230, %v3282
    %v3302 = vadd.f32 %v3231, %v3283
    %v3303 = vadd.f32 %v3232, %v3284
    %v3304 = vadd.f32 %v3233, %v3285
    %v3305 = vadd.f32 %v3234, %v3286
    %v3306 = vadd.f32 %v3235, %v3287
    %v3307 = vadd.f32 %v3236, %v3288
    %v3308 = vadd.f32 %v3237, %v3289
    %v3309 = vadd.f32 %v3238, %v3280
    %s3310 = sld [smem:[#allocation2 + $0x107]]
    %v3311 = vstv %s3310
    %v3312 = vmul.f32 %v52, %v3311
    %v3313 = vmul.f32 %v53, %v3311
    %v3314 = vmul.f32 %v54, %v3311
    %v3315 = vmul.f32 %v55, %v3311
    %v3316 = vmul.f32 %v56, %v3311
    %v3317 = vmul.f32 %v57, %v3311
    %v3318 = vmul.f32 %v58, %v3311
    %v3319 = vmul.f32 %v59, %v3311
    %v3320 = vmul.f32 %v60, %v3311
    %v3321 = vmul.f32 %v61, %v3311
    %3332 = vrot.lane.b32.xlu0 %v3312, 57
    %v3333 = vpop.permute.xlu0 %3332
    %3334 = vrot.lane.b32.xlu0 %v3313, 57
    %v3335 = vpop.permute.xlu0 %3334
    %3336 = vrot.lane.b32.xlu0 %v3314, 57
    %v3337 = vpop.permute.xlu0 %3336
    %3338 = vrot.lane.b32.xlu0 %v3315, 57
    %v3339 = vpop.permute.xlu0 %3338
    %3340 = vrot.lane.b32.xlu0 %v3316, 57
    %v3341 = vpop.permute.xlu0 %3340
    %3342 = vrot.lane.b32.xlu0 %v3317, 57
    %v3343 = vpop.permute.xlu0 %3342
    %3344 = vrot.lane.b32.xlu0 %v3318, 57
    %v3345 = vpop.permute.xlu0 %3344
    %3346 = vrot.lane.b32.xlu0 %v3319, 57
    %v3347 = vpop.permute.xlu0 %3346
    %3348 = vrot.lane.b32.xlu0 %v3320, 57
    %v3349 = vpop.permute.xlu0 %3348
    %3350 = vrot.lane.b32.xlu0 %v3321, 57
    %v3351 = vpop.permute.xlu0 %3350
    %v3352 = vsel %vm548, %v3333, %v3335
    %v3353 = vsel %vm548, %v3335, %v3337
    %v3354 = vsel %vm548, %v3337, %v3339
    %v3355 = vsel %vm548, %v3339, %v3341
    %v3356 = vsel %vm548, %v3341, %v3343
    %v3357 = vsel %vm548, %v3343, %v3345
    %v3358 = vsel %vm548, %v3345, %v3347
    %v3359 = vsel %vm548, %v3347, %v3349
    %v3360 = vsel %vm548, %v3349, %v3351
    %v3371 = vadd.f32 %v3300, %v3352
    %v3372 = vadd.f32 %v3301, %v3353
    %v3373 = vadd.f32 %v3302, %v3354
    %v3374 = vadd.f32 %v3303, %v3355
    %v3375 = vadd.f32 %v3304, %v3356
    %v3376 = vadd.f32 %v3305, %v3357
    %v3377 = vadd.f32 %v3306, %v3358
    %v3378 = vadd.f32 %v3307, %v3359
    %v3379 = vadd.f32 %v3308, %v3360
    %v3380 = vadd.f32 %v3309, %v3351
    %s3381 = sld [smem:[#allocation2 + $0x108]]
    %v3382 = vstv %s3381
    %v3383 = vmul.f32 %v52, %v3382
    %v3384 = vmul.f32 %v53, %v3382
    %v3385 = vmul.f32 %v54, %v3382
    %v3386 = vmul.f32 %v55, %v3382
    %v3387 = vmul.f32 %v56, %v3382
    %v3388 = vmul.f32 %v57, %v3382
    %v3389 = vmul.f32 %v58, %v3382
    %v3390 = vmul.f32 %v59, %v3382
    %v3391 = vmul.f32 %v60, %v3382
    %v3392 = vmul.f32 %v61, %v3382
    %3403 = vrot.lane.b32.xlu0 %v3383, 56
    %v3404 = vpop.permute.xlu0 %3403
    %3405 = vrot.lane.b32.xlu0 %v3384, 56
    %v3406 = vpop.permute.xlu0 %3405
    %3407 = vrot.lane.b32.xlu0 %v3385, 56
    %v3408 = vpop.permute.xlu0 %3407
    %3409 = vrot.lane.b32.xlu0 %v3386, 56
    %v3410 = vpop.permute.xlu0 %3409
    %3411 = vrot.lane.b32.xlu0 %v3387, 56
    %v3412 = vpop.permute.xlu0 %3411
    %3413 = vrot.lane.b32.xlu0 %v3388, 56
    %v3414 = vpop.permute.xlu0 %3413
    %3415 = vrot.lane.b32.xlu0 %v3389, 56
    %v3416 = vpop.permute.xlu0 %3415
    %3417 = vrot.lane.b32.xlu0 %v3390, 56
    %v3418 = vpop.permute.xlu0 %3417
    %3419 = vrot.lane.b32.xlu0 %v3391, 56
    %v3420 = vpop.permute.xlu0 %3419
    %3421 = vrot.lane.b32.xlu0 %v3392, 56
    %v3422 = vpop.permute.xlu0 %3421
    %v3423 = vsel %vm620, %v3404, %v3406
    %v3424 = vsel %vm620, %v3406, %v3408
    %v3425 = vsel %vm620, %v3408, %v3410
    %v3426 = vsel %vm620, %v3410, %v3412
    %v3427 = vsel %vm620, %v3412, %v3414
    %v3428 = vsel %vm620, %v3414, %v3416
    %v3429 = vsel %vm620, %v3416, %v3418
    %v3430 = vsel %vm620, %v3418, %v3420
    %v3431 = vsel %vm620, %v3420, %v3422
    %v3442 = vadd.f32 %v3371, %v3423
    %v3443 = vadd.f32 %v3372, %v3424
    %v3444 = vadd.f32 %v3373, %v3425
    %v3445 = vadd.f32 %v3374, %v3426
    %v3446 = vadd.f32 %v3375, %v3427
    %v3447 = vadd.f32 %v3376, %v3428
    %v3448 = vadd.f32 %v3377, %v3429
    %v3449 = vadd.f32 %v3378, %v3430
    %v3450 = vadd.f32 %v3379, %v3431
    %v3451 = vadd.f32 %v3380, %v3422
    %s3452 = sld [smem:[#allocation4 + $0x2]]
    %v3453 = vstv %s3452
    %v3454 = vadd.f32 %v3442, %v3453
    %v3455 = vadd.f32 %v3443, %v3453
    %v3456 = vadd.f32 %v3444, %v3453
    %v3457 = vadd.f32 %v3445, %v3453
    %v3458 = vadd.f32 %v3446, %v3453
    %v3459 = vadd.f32 %v3447, %v3453
    %v3460 = vadd.f32 %v3448, %v3453
    %v3461 = vadd.f32 %v3449, %v3453
    %v3462 = vadd.f32 %v3450, %v3453
    %v3463 = vadd.f32 %v3451, %v3453
    %v3464 = vmax.f32 %v3454, 0.0
    %v3465 = vmax.f32 %v3455, 0.0
    %v3466 = vmax.f32 %v3456, 0.0
    %v3467 = vmax.f32 %v3457, 0.0
    %v3468 = vmax.f32 %v3458, 0.0
    %v3469 = vmax.f32 %v3459, 0.0
    %v3470 = vmax.f32 %v3460, 0.0
    %v3471 = vmax.f32 %v3461, 0.0
    %v3472 = vmax.f32 %v3462, 0.0
    %v3473 = vmax.f32 %v3463, 0.0
    %v3474 = vpack.c.bf16 %v3464, %v3464
    %v3475 = vpack.c.bf16 %v3465, %v3465
    %v3476 = vpack.c.bf16 %v3466, %v3466
    %v3477 = vpack.c.bf16 %v3467, %v3467
    %v3478 = vpack.c.bf16 %v3468, %v3468
    %v3479 = vpack.c.bf16 %v3469, %v3469
    %v3480 = vpack.c.bf16 %v3470, %v3470
    %v3481 = vpack.c.bf16 %v3471, %v3471
    %v3482 = vpack.c.bf16 %v3472, %v3472
    %v3483 = vpack.c.bf16 %v3473, %v3473
    %s3484 = scalar_lea.vmem %s3, 1160
    %v3485 = vld [vmem:[%s3484] sm:$0xf]
    %v3486 = vld [vmem:[%s3484 + $0x4] sm:$0xf]
    %v3487 = vld [vmem:[%s3484 + $0x8] sm:$0xf]
    %v3488 = vld [vmem:[%s3484 + $0xc] sm:$0xf]
    %v3489 = vld [vmem:[%s3484 + $0x10] sm:$0xf]
    %v3490 = vld [vmem:[%s3484 + $0x14] sm:$0xf]
    %v3491 = vld [vmem:[%s3484 + $0x18] sm:$0xf]
    %v3492 = vld [vmem:[%s3484 + $0x1c] sm:$0xf]
    %v3493 = vld [vmem:[%s3484 + $0x20] sm:$0xf]
    %v3494 = vld [vmem:[%s3484 + $0x24] sm:$0xf]
    %v3495 = vld [vmem:[%s3484 + $0x28] sm:$0xf]
    %v3496 = vld [vmem:[%s3484 + $0x2c] sm:$0xf]
    %v3497 = vld [vmem:[%s3484 + $0x30] sm:$0xf]
    %v3498 = vld [vmem:[%s3484 + $0x34] sm:$0xf]
    %v3499 = vld [vmem:[%s3484 + $0x38] sm:$0xf]
    %v3500 = vld [vmem:[%s3484 + $0x3c] sm:$0xf]
    %v3501 = vld [vmem:[%s3484 + $0x40] sm:$0xf]
    %v3502 = vld [vmem:[%s3484 + $0x44] sm:$0xf]
    %v3503 = vld [vmem:[%s3484 + $0x48] sm:$0xf]
    %v3504 = vld [vmem:[%s3484 + $0x4c] sm:$0xf]
    %v3505 = vld [vmem:[%s3484 + $0x50] sm:$0xf]
    %v3506 = vld [vmem:[%s3484 + $0x54] sm:$0xf]
    %v3507 = vld [vmem:[%s3484 + $0x58] sm:$0xf]
    %v3508 = vld [vmem:[%s3484 + $0x5c] sm:$0xf]
    %v3509 = vld [vmem:[%s3484 + $0x60] sm:$0xf]
    %v3510 = vld [vmem:[%s3484 + $0x64] sm:$0xf]
    %v3511 = vld [vmem:[%s3484 + $0x68] sm:$0xf]
    %v3512 = vld [vmem:[%s3484 + $0x6c] sm:$0xf]
    %v3513 = vld [vmem:[%s3484 + $0x70] sm:$0xf]
    %v3514 = vld [vmem:[%s3484 + $0x74] sm:$0xf]
    %v3515 = vld [vmem:[%s3484 + $0x78] sm:$0xf]
    %v3516 = vld [vmem:[%s3484 + $0x7c] sm:$0xf]
    %v3517 = vld [vmem:[%s3484 + $0x80] sm:$0xf]
    %v3518 = vld [vmem:[%s3484 + $0x84] sm:$0xf]
    %v3519 = vld [vmem:[%s3484 + $0x88] sm:$0xf]
    %v3520 = vld [vmem:[%s3484 + $0x8c] sm:$0xf]
    %v3521 = vld [vmem:[%s3484 + $0x90] sm:$0xf]
    %v3522 = vld [vmem:[%s3484 + $0x94] sm:$0xf]
    %v3523 = vld [vmem:[%s3484 + $0x98] sm:$0xf]
    %v3524 = vld [vmem:[%s3484 + $0x9c] sm:$0xf]
    %v3525 = vld [vmem:[%s3484 + $0xa0] sm:$0xf]
    %v3526 = vld [vmem:[%s3484 + $0xa4] sm:$0xf]
    %v3527 = vld [vmem:[%s3484 + $0xa8] sm:$0xf]
    %v3528 = vld [vmem:[%s3484 + $0xac] sm:$0xf]
    %v3529 = vld [vmem:[%s3484 + $0xb0] sm:$0xf]
    %v3530 = vld [vmem:[%s3484 + $0xb4] sm:$0xf]
    %v3531 = vld [vmem:[%s3484 + $0xb8] sm:$0xf]
    %v3532 = vld [vmem:[%s3484 + $0xbc] sm:$0xf]
    %v3533 = vld [vmem:[%s3484 + $0xc0] sm:$0xf]
    %v3534 = vld [vmem:[%s3484 + $0xc4] sm:$0xf]
    %v3535 = vld [vmem:[%s3484 + $0xc8] sm:$0xf]
    %v3536 = vld [vmem:[%s3484 + $0xcc] sm:$0xf]
    %v3537 = vld [vmem:[%s3484 + $0xd0] sm:$0xf]
    %v3538 = vld [vmem:[%s3484 + $0xd4] sm:$0xf]
    %v3539 = vld [vmem:[%s3484 + $0xd8] sm:$0xf]
    %v3540 = vld [vmem:[%s3484 + $0xdc] sm:$0xf]
    %v3541 = vld [vmem:[%s3484 + $0xe0] sm:$0xf]
    %v3542 = vld [vmem:[%s3484 + $0xe4] sm:$0xf]
    %v3543 = vld [vmem:[%s3484 + $0xe8] sm:$0xf]
    %v3544 = vld [vmem:[%s3484 + $0xec] sm:$0xf]
    %v3545 = vld [vmem:[%s3484 + $0xf0] sm:$0xf]
    %v3546 = vld [vmem:[%s3484 + $0xf4] sm:$0xf]
    %v3547 = vld [vmem:[%s3484 + $0xf8] sm:$0xf]
    %v3548 = vld [vmem:[%s3484 + $0xfc] sm:$0xf]
    %v3549 = vld [vmem:[%s3484 + $0x100] sm:$0xf]
    %v3550 = vld [vmem:[%s3484 + $0x104] sm:$0xf]
    %v3551 = vld [vmem:[%s3484 + $0x108] sm:$0xf]
    %v3552 = vld [vmem:[%s3484 + $0x10c] sm:$0xf]
    %v3553 = vld [vmem:[%s3484 + $0x110] sm:$0xf]
    %v3554 = vld [vmem:[%s3484 + $0x114] sm:$0xf]
    %v3555 = vld [vmem:[%s3484 + $0x118] sm:$0xf]
    %v3556 = vld [vmem:[%s3484 + $0x11c] sm:$0xf]
    %v3557 = vld [vmem:[%s3484 + $0x120] sm:$0xf]
    %v3558 = vld [vmem:[%s3484 + $0x124] sm:$0xf]
    %v3559 = vld [vmem:[%s3484 + $0x128] sm:$0xf]
    %v3560 = vld [vmem:[%s3484 + $0x12c] sm:$0xf]
    %v3561 = vld [vmem:[%s3484 + $0x130] sm:$0xf]
    %v3562 = vld [vmem:[%s3484 + $0x134] sm:$0xf]
    %v3563 = vld [vmem:[%s3484 + $0x138] sm:$0xf]
    %v3564 = vld [vmem:[%s3484 + $0x13c] sm:$0xf]
    %v3565 = vld [vmem:[%s3484 + $0x140] sm:$0xf]
    %v3566 = vld [vmem:[%s3484 + $0x144] sm:$0xf]
    %v3567 = vld [vmem:[%s3484 + $0x148] sm:$0xf]
    %v3568 = vld [vmem:[%s3484 + $0x14c] sm:$0xf]
    %v3569 = vld [vmem:[%s3484 + $0x150] sm:$0xf]
    %v3570 = vld [vmem:[%s3484 + $0x154] sm:$0xf]
    %v3571 = vld [vmem:[%s3484 + $0x158] sm:$0xf]
    %v3572 = vld [vmem:[%s3484 + $0x15c] sm:$0xf]
    %v3573 = vld [vmem:[%s3484 + $0x160] sm:$0xf]
    %v3574 = vld [vmem:[%s3484 + $0x164] sm:$0xf]
    %v3575 = vld [vmem:[%s3484 + $0x168] sm:$0xf]
    %v3576 = vld [vmem:[%s3484 + $0x16c] sm:$0xf]
    %v3577 = vld [vmem:[%s3484 + $0x170] sm:$0xf]
    %v3578 = vld [vmem:[%s3484 + $0x174] sm:$0xf]
    %v3579 = vld [vmem:[%s3484 + $0x178] sm:$0xf]
    %v3580 = vld [vmem:[%s3484 + $0x17c] sm:$0xf]
    %v3581 = vld [vmem:[%s3484 + $0x180] sm:$0xf]
    %v3582 = vld [vmem:[%s3484 + $0x184] sm:$0xf]
    %v3583 = vld [vmem:[%s3484 + $0x188] sm:$0xf]
    %v3584 = vld [vmem:[%s3484 + $0x18c] sm:$0xf]
    %v3585 = vld [vmem:[%s3484 + $0x190] sm:$0xf]
    %v3586 = vld [vmem:[%s3484 + $0x194] sm:$0xf]
    %v3587 = vld [vmem:[%s3484 + $0x198] sm:$0xf]
    %v3588 = vld [vmem:[%s3484 + $0x19c] sm:$0xf]
    %v3589 = vld [vmem:[%s3484 + $0x1a0] sm:$0xf]
    %v3590 = vld [vmem:[%s3484 + $0x1a4] sm:$0xf]
    %v3591 = vld [vmem:[%s3484 + $0x1a8] sm:$0xf]
    %v3592 = vld [vmem:[%s3484 + $0x1ac] sm:$0xf]
    %v3593 = vld [vmem:[%s3484 + $0x1b0] sm:$0xf]
    %v3594 = vld [vmem:[%s3484 + $0x1b4] sm:$0xf]
    %v3595 = vld [vmem:[%s3484 + $0x1b8] sm:$0xf]
    %v3596 = vld [vmem:[%s3484 + $0x1bc] sm:$0xf]
    %v3597 = vld [vmem:[%s3484 + $0x1c0] sm:$0xf]
    %v3598 = vld [vmem:[%s3484 + $0x1c4] sm:$0xf]
    %v3599 = vld [vmem:[%s3484 + $0x1c8] sm:$0xf]
    %v3600 = vld [vmem:[%s3484 + $0x1cc] sm:$0xf]
    %v3601 = vld [vmem:[%s3484 + $0x1d0] sm:$0xf]
    %v3602 = vld [vmem:[%s3484 + $0x1d4] sm:$0xf]
    %v3603 = vld [vmem:[%s3484 + $0x1d8] sm:$0xf]
    %v3604 = vld [vmem:[%s3484 + $0x1dc] sm:$0xf]
    %v3605 = vld [vmem:[%s3484 + $0x1e0] sm:$0xf]
    %v3606 = vld [vmem:[%s3484 + $0x1e4] sm:$0xf]
    %v3607 = vld [vmem:[%s3484 + $0x1e8] sm:$0xf]
    %v3608 = vld [vmem:[%s3484 + $0x1ec] sm:$0xf]
    %v3609 = vld [vmem:[%s3484 + $0x1f0] sm:$0xf]
    %v3610 = vld [vmem:[%s3484 + $0x1f4] sm:$0xf]
    %v3611 = vld [vmem:[%s3484 + $0x1f8] sm:$0xf]
    %v3612 = vld [vmem:[%s3484 + $0x1fc] sm:$0xf]
    %v3613 = vld [vmem:[%s3484 + $0x200] sm:$0xf]
    %v3614 = vld [vmem:[%s3484 + $0x204] sm:$0xf]
    %v3615 = vld [vmem:[%s3484 + $0x208] sm:$0xf]
    %v3616 = vld [vmem:[%s3484 + $0x20c] sm:$0xf]
    %v3617 = vld [vmem:[%s3484 + $0x210] sm:$0xf]
    %v3618 = vld [vmem:[%s3484 + $0x214] sm:$0xf]
    %v3619 = vld [vmem:[%s3484 + $0x218] sm:$0xf]
    %v3620 = vld [vmem:[%s3484 + $0x21c] sm:$0xf]
    %v3621 = vld [vmem:[%s3484 + $0x220] sm:$0xf]
    %v3622 = vld [vmem:[%s3484 + $0x224] sm:$0xf]
    %v3623 = vld [vmem:[%s3484 + $0x228] sm:$0xf]
    %v3624 = vld [vmem:[%s3484 + $0x22c] sm:$0xf]
    %v3625 = vld [vmem:[%s3484 + $0x230] sm:$0xf]
    %v3626 = vld [vmem:[%s3484 + $0x234] sm:$0xf]
    %v3627 = vld [vmem:[%s3484 + $0x238] sm:$0xf]
    %v3628 = vld [vmem:[%s3484 + $0x23c] sm:$0xf]
    %v3629 = vld [vmem:[%s3484 + $0x240] sm:$0x3]
    %v3775 = vunpack.c.l.b16 %v3485
    %v3776 = vunpack.c.l.b16 %v3486
    %v3777 = vunpack.c.l.b16 %v3487
    %v3778 = vunpack.c.l.b16 %v3488
    %v3779 = vunpack.c.l.b16 %v3489
    %v3780 = vunpack.c.l.b16 %v3490
    %v3781 = vunpack.c.l.b16 %v3491
    %v3782 = vunpack.c.l.b16 %v3492
    %v3783 = vunpack.c.l.b16 %v3493
    %v3784 = vunpack.c.l.b16 %v3494
    %v3785 = vunpack.c.l.b16 %v3495
    %v3786 = vunpack.c.l.b16 %v3496
    %v3787 = vunpack.c.l.b16 %v3497
    %v3788 = vunpack.c.l.b16 %v3498
    %v3789 = vunpack.c.l.b16 %v3499
    %v3790 = vunpack.c.l.b16 %v3500
    %v3791 = vunpack.c.l.b16 %v3501
    %v3792 = vunpack.c.l.b16 %v3502
    %v3793 = vunpack.c.l.b16 %v3503
    %v3794 = vunpack.c.l.b16 %v3504
    %v3795 = vunpack.c.l.b16 %v3505
    %v3796 = vunpack.c.l.b16 %v3506
    %v3797 = vunpack.c.l.b16 %v3507
    %v3798 = vunpack.c.l.b16 %v3508
    %v3799 = vunpack.c.l.b16 %v3509
    %v3800 = vunpack.c.l.b16 %v3510
    %v3801 = vunpack.c.l.b16 %v3511
    %v3802 = vunpack.c.l.b16 %v3512
    %v3803 = vunpack.c.l.b16 %v3513
    %v3804 = vunpack.c.l.b16 %v3514
    %v3805 = vunpack.c.l.b16 %v3515
    %v3806 = vunpack.c.l.b16 %v3516
    %v3807 = vunpack.c.l.b16 %v3517
    %v3808 = vunpack.c.l.b16 %v3518
    %v3809 = vunpack.c.l.b16 %v3519
    %v3810 = vunpack.c.l.b16 %v3520
    %v3811 = vunpack.c.l.b16 %v3521
    %v3812 = vunpack.c.l.b16 %v3522
    %v3813 = vunpack.c.l.b16 %v3523
    %v3814 = vunpack.c.l.b16 %v3524
    %v3815 = vunpack.c.l.b16 %v3525
    %v3816 = vunpack.c.l.b16 %v3526
    %v3817 = vunpack.c.l.b16 %v3527
    %v3818 = vunpack.c.l.b16 %v3528
    %v3819 = vunpack.c.l.b16 %v3529
    %v3820 = vunpack.c.l.b16 %v3530
    %v3821 = vunpack.c.l.b16 %v3531
    %v3822 = vunpack.c.l.b16 %v3532
    %v3823 = vunpack.c.l.b16 %v3533
    %v3824 = vunpack.c.l.b16 %v3534
    %v3825 = vunpack.c.l.b16 %v3535
    %v3826 = vunpack.c.l.b16 %v3536
    %v3827 = vunpack.c.l.b16 %v3537
    %v3828 = vunpack.c.l.b16 %v3538
    %v3829 = vunpack.c.l.b16 %v3539
    %v3830 = vunpack.c.l.b16 %v3540
    %v3831 = vunpack.c.l.b16 %v3541
    %v3832 = vunpack.c.l.b16 %v3542
    %v3833 = vunpack.c.l.b16 %v3543
    %v3834 = vunpack.c.l.b16 %v3544
    %v3835 = vunpack.c.l.b16 %v3545
    %v3836 = vunpack.c.l.b16 %v3546
    %v3837 = vunpack.c.l.b16 %v3547
    %v3838 = vunpack.c.l.b16 %v3548
    %v3839 = vunpack.c.l.b16 %v3549
    %v3840 = vunpack.c.l.b16 %v3550
    %v3841 = vunpack.c.l.b16 %v3551
    %v3842 = vunpack.c.l.b16 %v3552
    %v3843 = vunpack.c.l.b16 %v3553
    %v3844 = vunpack.c.l.b16 %v3554
    %v3845 = vunpack.c.l.b16 %v3555
    %v3846 = vunpack.c.l.b16 %v3556
    %v3847 = vunpack.c.l.b16 %v3557
    %v3848 = vunpack.c.l.b16 %v3558
    %v3849 = vunpack.c.l.b16 %v3559
    %v3850 = vunpack.c.l.b16 %v3560
    %v3851 = vunpack.c.l.b16 %v3561
    %v3852 = vunpack.c.l.b16 %v3562
    %v3853 = vunpack.c.l.b16 %v3563
    %v3854 = vunpack.c.l.b16 %v3564
    %v3855 = vunpack.c.l.b16 %v3565
    %v3856 = vunpack.c.l.b16 %v3566
    %v3857 = vunpack.c.l.b16 %v3567
    %v3858 = vunpack.c.l.b16 %v3568
    %v3859 = vunpack.c.l.b16 %v3569
    %v3860 = vunpack.c.l.b16 %v3570
    %v3861 = vunpack.c.l.b16 %v3571
    %v3862 = vunpack.c.l.b16 %v3572
    %v3863 = vunpack.c.l.b16 %v3573
    %v3864 = vunpack.c.l.b16 %v3574
    %v3865 = vunpack.c.l.b16 %v3575
    %v3866 = vunpack.c.l.b16 %v3576
    %v3867 = vunpack.c.l.b16 %v3577
    %v3868 = vunpack.c.l.b16 %v3578
    %v3869 = vunpack.c.l.b16 %v3579
    %v3870 = vunpack.c.l.b16 %v3580
    %v3871 = vunpack.c.l.b16 %v3581
    %v3872 = vunpack.c.l.b16 %v3582
    %v3873 = vunpack.c.l.b16 %v3583
    %v3874 = vunpack.c.l.b16 %v3584
    %v3875 = vunpack.c.l.b16 %v3585
    %v3876 = vunpack.c.l.b16 %v3586
    %v3877 = vunpack.c.l.b16 %v3587
    %v3878 = vunpack.c.l.b16 %v3588
    %v3879 = vunpack.c.l.b16 %v3589
    %v3880 = vunpack.c.l.b16 %v3590
    %v3881 = vunpack.c.l.b16 %v3591
    %v3882 = vunpack.c.l.b16 %v3592
    %v3883 = vunpack.c.l.b16 %v3593
    %v3884 = vunpack.c.l.b16 %v3594
    %v3885 = vunpack.c.l.b16 %v3595
    %v3886 = vunpack.c.l.b16 %v3596
    %v3887 = vunpack.c.l.b16 %v3597
    %v3888 = vunpack.c.l.b16 %v3598
    %v3889 = vunpack.c.l.b16 %v3599
    %v3890 = vunpack.c.l.b16 %v3600
    %v3891 = vunpack.c.l.b16 %v3601
    %v3892 = vunpack.c.l.b16 %v3602
    %v3893 = vunpack.c.l.b16 %v3603
    %v3894 = vunpack.c.l.b16 %v3604
    %v3895 = vunpack.c.l.b16 %v3605
    %v3896 = vunpack.c.l.b16 %v3606
    %v3897 = vunpack.c.l.b16 %v3607
    %v3898 = vunpack.c.l.b16 %v3608
    %v3899 = vunpack.c.l.b16 %v3609
    %v3900 = vunpack.c.l.b16 %v3610
    %v3901 = vunpack.c.l.b16 %v3611
    %v3902 = vunpack.c.l.b16 %v3612
    %v3903 = vunpack.c.l.b16 %v3613
    %v3904 = vunpack.c.l.b16 %v3614
    %v3905 = vunpack.c.l.b16 %v3615
    %v3906 = vunpack.c.l.b16 %v3616
    %v3907 = vunpack.c.l.b16 %v3617
    %v3908 = vunpack.c.l.b16 %v3618
    %v3909 = vunpack.c.l.b16 %v3619
    %v3910 = vunpack.c.l.b16 %v3620
    %v3911 = vunpack.c.l.b16 %v3621
    %v3912 = vunpack.c.l.b16 %v3622
    %v3913 = vunpack.c.l.b16 %v3623
    %v3914 = vunpack.c.l.b16 %v3624
    %v3915 = vunpack.c.l.b16 %v3625
    %v3916 = vunpack.c.l.b16 %v3626
    %v3917 = vunpack.c.l.b16 %v3627
    %v3918 = vunpack.c.l.b16 %v3628
    %v3919 = vunpack.c.l.b16 %v3629
    %v3920 = vpack.c.b16 %v3776, %v3775
    %v3921 = vpack.c.b16 %v3778, %v3777
    %v3922 = vpack.c.b16 %v3780, %v3779
    %v3923 = vpack.c.b16 %v3782, %v3781
    %v3924 = vpack.c.b16 %v3784, %v3783
    %v3925 = vpack.c.b16 %v3786, %v3785
    %v3926 = vpack.c.b16 %v3788, %v3787
    %v3927 = vpack.c.b16 %v3790, %v3789
    %v3928 = vpack.c.b16 %v3792, %v3791
    %v3929 = vpack.c.b16 %v3794, %v3793
    %v3930 = vpack.c.b16 %v3796, %v3795
    %v3931 = vpack.c.b16 %v3798, %v3797
    %v3932 = vpack.c.b16 %v3800, %v3799
    %v3933 = vpack.c.b16 %v3802, %v3801
    %v3934 = vpack.c.b16 %v3804, %v3803
    %v3935 = vpack.c.b16 %v3806, %v3805
    %v3936 = vpack.c.b16 %v3808, %v3807
    %v3937 = vpack.c.b16 %v3810, %v3809
    %v3938 = vpack.c.b16 %v3812, %v3811
    %v3939 = vpack.c.b16 %v3814, %v3813
    %v3940 = vpack.c.b16 %v3816, %v3815
    %v3941 = vpack.c.b16 %v3818, %v3817
    %v3942 = vpack.c.b16 %v3820, %v3819
    %v3943 = vpack.c.b16 %v3822, %v3821
    %v3944 = vpack.c.b16 %v3824, %v3823
    %v3945 = vpack.c.b16 %v3826, %v3825
    %v3946 = vpack.c.b16 %v3828, %v3827
    %v3947 = vpack.c.b16 %v3830, %v3829
    %v3948 = vpack.c.b16 %v3832, %v3831
    %v3949 = vpack.c.b16 %v3834, %v3833
    %v3950 = vpack.c.b16 %v3836, %v3835
    %v3951 = vpack.c.b16 %v3838, %v3837
    %v3952 = vpack.c.b16 %v3840, %v3839
    %v3953 = vpack.c.b16 %v3842, %v3841
    %v3954 = vpack.c.b16 %v3844, %v3843
    %v3955 = vpack.c.b16 %v3846, %v3845
    %v3956 = vpack.c.b16 %v3848, %v3847
    %v3957 = vpack.c.b16 %v3850, %v3849
    %v3958 = vpack.c.b16 %v3852, %v3851
    %v3959 = vpack.c.b16 %v3854, %v3853
    %v3960 = vpack.c.b16 %v3856, %v3855
    %v3961 = vpack.c.b16 %v3858, %v3857
    %v3962 = vpack.c.b16 %v3860, %v3859
    %v3963 = vpack.c.b16 %v3862, %v3861
    %v3964 = vpack.c.b16 %v3864, %v3863
    %v3965 = vpack.c.b16 %v3866, %v3865
    %v3966 = vpack.c.b16 %v3868, %v3867
    %v3967 = vpack.c.b16 %v3870, %v3869
    %v3968 = vpack.c.b16 %v3872, %v3871
    %v3969 = vpack.c.b16 %v3874, %v3873
    %v3970 = vpack.c.b16 %v3876, %v3875
    %v3971 = vpack.c.b16 %v3878, %v3877
    %v3972 = vpack.c.b16 %v3880, %v3879
    %v3973 = vpack.c.b16 %v3882, %v3881
    %v3974 = vpack.c.b16 %v3884, %v3883
    %v3975 = vpack.c.b16 %v3886, %v3885
    %v3976 = vpack.c.b16 %v3888, %v3887
    %v3977 = vpack.c.b16 %v3890, %v3889
    %v3978 = vpack.c.b16 %v3892, %v3891
    %v3979 = vpack.c.b16 %v3894, %v3893
    %v3980 = vpack.c.b16 %v3896, %v3895
    %v3981 = vpack.c.b16 %v3898, %v3897
    %v3982 = vpack.c.b16 %v3900, %v3899
    %v3983 = vpack.c.b16 %v3902, %v3901
    %v3984 = vpack.c.b16 %v3904, %v3903
    %v3985 = vpack.c.b16 %v3906, %v3905
    %v3986 = vpack.c.b16 %v3908, %v3907
    %v3987 = vpack.c.b16 %v3910, %v3909
    %v3988 = vpack.c.b16 %v3912, %v3911
    %v3989 = vpack.c.b16 %v3914, %v3913
    %v3990 = vpack.c.b16 %v3916, %v3915
    %v3991 = vpack.c.b16 %v3918, %v3917
    %v3992 = vpack.c.b16 %v3919, %v3919
    %v4066 = vsel %vm2020, %v3483, 0
    %v4069 = vand.u32 %v3992, %v2027
    %4071 = vmatprep.subr.bf16.mxu0 0
    %4072 = vmatpush1.bf16.msra.mxu0 %v3927
    %4073 = vmatprep.subr.bf16.mxu0 0
    %4074 = vmatpush1.bf16.msra.mxu0 %v3926
    %4075 = vmatprep.subr.bf16.mxu0 0
    %4076 = vmatpush1.bf16.msra.mxu0 %v3925
    %4077 = vmatprep.subr.bf16.mxu0 0
    %4078 = vmatpush1.bf16.msra.mxu0 %v3924
    %4079 = vmatprep.subr.bf16.mxu0 0
    %4080 = vmatpush1.bf16.msra.mxu0 %v3923
    %4081 = vmatprep.subr.bf16.mxu0 0
    %4082 = vmatpush1.bf16.msra.mxu0 %v3922
    %4083 = vmatprep.subr.bf16.mxu0 0
    %4084 = vmatpush1.bf16.msra.mxu0 %v3921
    %4085 = vmatprep.subr.bf16.mxu0 0
    %4086 = vmatpush1.bf16.msra.mxu0 %v3920
    %4087 = vmatprep.subr.bf16.mxu0 0
    %4088 = vmatpush2.bf16.msra.mxu0 %v3935
    %4089 = vmatprep.subr.bf16.mxu0 0
    %4090 = vmatpush2.bf16.msra.mxu0 %v3934
    %4091 = vmatprep.subr.bf16.mxu0 0
    %4092 = vmatpush2.bf16.msra.mxu0 %v3933
    %4093 = vmatprep.subr.bf16.mxu0 0
    %4094 = vmatpush2.bf16.msra.mxu0 %v3932
    %4095 = vmatprep.subr.bf16.mxu0 0
    %4096 = vmatpush2.bf16.msra.mxu0 %v3931
    %4097 = vmatprep.subr.bf16.mxu0 0
    %4098 = vmatpush2.bf16.msra.mxu0 %v3930
    %4099 = vmatprep.subr.bf16.mxu0 0
    %4100 = vmatpush2.bf16.msra.mxu0 %v3929
    %4101 = vmatprep.subr.bf16.mxu0 0
    %4102 = vmatpush2.bf16.msra.mxu0 %v3928
    %4103 = vmatprep.mubr.bf16.mxu0 %v3475
    %4104 = vmatmul.mubr.bf16.gmra.mxu0 %v3474
    %v4105 = vpop.f32.mrf.mxu0
    %v4106 = vadd.f32 0.0, %v4105
    %v4107 = vpop.f32.mrf.mxu0
    %v4108 = vpop.f32.mrf.mxu0
    %v4109 = vpop.f32.mrf.mxu0
    %4110 = vdwg.mxu0
    %4111 = vmatprep.subr.bf16.mxu0 0
    %4112 = vmatpush1.bf16.msra.mxu0 %v3943
    %4113 = vmatprep.subr.bf16.mxu0 0
    %4114 = vmatpush1.bf16.msra.mxu0 %v3942
    %4115 = vmatprep.subr.bf16.mxu0 0
    %4116 = vmatpush1.bf16.msra.mxu0 %v3941
    %4117 = vmatprep.subr.bf16.mxu0 0
    %4118 = vmatpush1.bf16.msra.mxu0 %v3940
    %4119 = vmatprep.subr.bf16.mxu0 0
    %4120 = vmatpush1.bf16.msra.mxu0 %v3939
    %4121 = vmatprep.subr.bf16.mxu0 0
    %4122 = vmatpush1.bf16.msra.mxu0 %v3938
    %4123 = vmatprep.subr.bf16.mxu0 0
    %4124 = vmatpush1.bf16.msra.mxu0 %v3937
    %4125 = vmatprep.subr.bf16.mxu0 0
    %4126 = vmatpush1.bf16.msra.mxu0 %v3936
    %4127 = vmatprep.subr.bf16.mxu0 0
    %4128 = vmatpush2.bf16.msra.mxu0 %v3951
    %4129 = vmatprep.subr.bf16.mxu0 0
    %4130 = vmatpush2.bf16.msra.mxu0 %v3950
    %4131 = vmatprep.subr.bf16.mxu0 0
    %4132 = vmatpush2.bf16.msra.mxu0 %v3949
    %4133 = vmatprep.subr.bf16.mxu0 0
    %4134 = vmatpush2.bf16.msra.mxu0 %v3948
    %4135 = vmatprep.subr.bf16.mxu0 0
    %4136 = vmatpush2.bf16.msra.mxu0 %v3947
    %4137 = vmatprep.subr.bf16.mxu0 0
    %4138 = vmatpush2.bf16.msra.mxu0 %v3946
    %4139 = vmatprep.subr.bf16.mxu0 0
    %4140 = vmatpush2.bf16.msra.mxu0 %v3945
    %4141 = vmatprep.subr.bf16.mxu0 0
    %4142 = vmatpush2.bf16.msra.mxu0 %v3944
    %4143 = vmatprep.mubr.bf16.mxu0 %v3477
    %4144 = vmatmul.mubr.bf16.gmra.mxu0 %v3476
    %v4145 = vpop.f32.mrf.mxu0
    %v4146 = vadd.f32 %v4106, %v4145
    %v4147 = vpop.f32.mrf.mxu0
    %v4148 = vpop.f32.mrf.mxu0
    %v4149 = vpop.f32.mrf.mxu0
    %4150 = vdwg.mxu0
    %4151 = vmatprep.subr.bf16.mxu0 0
    %4152 = vmatpush1.bf16.msra.mxu0 %v3959
    %4153 = vmatprep.subr.bf16.mxu0 0
    %4154 = vmatpush1.bf16.msra.mxu0 %v3958
    %4155 = vmatprep.subr.bf16.mxu0 0
    %4156 = vmatpush1.bf16.msra.mxu0 %v3957
    %4157 = vmatprep.subr.bf16.mxu0 0
    %4158 = vmatpush1.bf16.msra.mxu0 %v3956
    %4159 = vmatprep.subr.bf16.mxu0 0
    %4160 = vmatpush1.bf16.msra.mxu0 %v3955
    %4161 = vmatprep.subr.bf16.mxu0 0
    %4162 = vmatpush1.bf16.msra.mxu0 %v3954
    %4163 = vmatprep.subr.bf16.mxu0 0
    %4164 = vmatpush1.bf16.msra.mxu0 %v3953
    %4165 = vmatprep.subr.bf16.mxu0 0
    %4166 = vmatpush1.bf16.msra.mxu0 %v3952
    %4167 = vmatprep.subr.bf16.mxu0 0
    %4168 = vmatpush2.bf16.msra.mxu0 %v3967
    %4169 = vmatprep.subr.bf16.mxu0 0
    %4170 = vmatpush2.bf16.msra.mxu0 %v3966
    %4171 = vmatprep.subr.bf16.mxu0 0
    %4172 = vmatpush2.bf16.msra.mxu0 %v3965
    %4173 = vmatprep.subr.bf16.mxu0 0
    %4174 = vmatpush2.bf16.msra.mxu0 %v3964
    %4175 = vmatprep.subr.bf16.mxu0 0
    %4176 = vmatpush2.bf16.msra.mxu0 %v3963
    %4177 = vmatprep.subr.bf16.mxu0 0
    %4178 = vmatpush2.bf16.msra.mxu0 %v3962
    %4179 = vmatprep.subr.bf16.mxu0 0
    %4180 = vmatpush2.bf16.msra.mxu0 %v3961
    %4181 = vmatprep.subr.bf16.mxu0 0
    %4182 = vmatpush2.bf16.msra.mxu0 %v3960
    %4183 = vmatprep.mubr.bf16.mxu0 %v3479
    %4184 = vmatmul.mubr.bf16.gmra.mxu0 %v3478
    %v4185 = vpop.f32.mrf.mxu0
    %v4186 = vadd.f32 %v4146, %v4185
    %v4187 = vpop.f32.mrf.mxu0
    %v4188 = vpop.f32.mrf.mxu0
    %v4189 = vpop.f32.mrf.mxu0
    %4190 = vdwg.mxu0
    %4191 = vmatprep.subr.bf16.mxu0 0
    %4192 = vmatpush1.bf16.msra.mxu0 %v3975
    %4193 = vmatprep.subr.bf16.mxu0 0
    %4194 = vmatpush1.bf16.msra.mxu0 %v3974
    %4195 = vmatprep.subr.bf16.mxu0 0
    %4196 = vmatpush1.bf16.msra.mxu0 %v3973
    %4197 = vmatprep.subr.bf16.mxu0 0
    %4198 = vmatpush1.bf16.msra.mxu0 %v3972
    %4199 = vmatprep.subr.bf16.mxu0 0
    %4200 = vmatpush1.bf16.msra.mxu0 %v3971
    %4201 = vmatprep.subr.bf16.mxu0 0
    %4202 = vmatpush1.bf16.msra.mxu0 %v3970
    %4203 = vmatprep.subr.bf16.mxu0 0
    %4204 = vmatpush1.bf16.msra.mxu0 %v3969
    %4205 = vmatprep.subr.bf16.mxu0 0
    %4206 = vmatpush1.bf16.msra.mxu0 %v3968
    %4207 = vmatprep.subr.bf16.mxu0 0
    %4208 = vmatpush2.bf16.msra.mxu0 %v3983
    %4209 = vmatprep.subr.bf16.mxu0 0
    %4210 = vmatpush2.bf16.msra.mxu0 %v3982
    %4211 = vmatprep.subr.bf16.mxu0 0
    %4212 = vmatpush2.bf16.msra.mxu0 %v3981
    %4213 = vmatprep.subr.bf16.mxu0 0
    %4214 = vmatpush2.bf16.msra.mxu0 %v3980
    %4215 = vmatprep.subr.bf16.mxu0 0
    %4216 = vmatpush2.bf16.msra.mxu0 %v3979
    %4217 = vmatprep.subr.bf16.mxu0 0
    %4218 = vmatpush2.bf16.msra.mxu0 %v3978
    %4219 = vmatprep.subr.bf16.mxu0 0
    %4220 = vmatpush2.bf16.msra.mxu0 %v3977
    %4221 = vmatprep.subr.bf16.mxu0 0
    %4222 = vmatpush2.bf16.msra.mxu0 %v3976
    %4223 = vmatprep.mubr.bf16.mxu0 %v3481
    %4224 = vmatmul.mubr.bf16.gmra.mxu0 %v3480
    %v4225 = vpop.f32.mrf.mxu0
    %v4226 = vadd.f32 %v4186, %v4225
    %v4227 = vpop.f32.mrf.mxu0
    %v4228 = vpop.f32.mrf.mxu0
    %v4229 = vpop.f32.mrf.mxu0
    %4230 = vdwg.mxu0
    %4231 = vmatprep.subr.bf16.mxu0 0
    %4232 = vmatpush1.bf16.msra.mxu0 %v3991
    %4233 = vmatprep.subr.bf16.mxu0 0
    %4234 = vmatpush1.bf16.msra.mxu0 %v3990
    %4235 = vmatprep.subr.bf16.mxu0 0
    %4236 = vmatpush1.bf16.msra.mxu0 %v3989
    %4237 = vmatprep.subr.bf16.mxu0 0
    %4238 = vmatpush1.bf16.msra.mxu0 %v3988
    %4239 = vmatprep.subr.bf16.mxu0 0
    %4240 = vmatpush1.bf16.msra.mxu0 %v3987
    %4241 = vmatprep.subr.bf16.mxu0 0
    %4242 = vmatpush1.bf16.msra.mxu0 %v3986
    %4243 = vmatprep.subr.bf16.mxu0 0
    %4244 = vmatpush1.bf16.msra.mxu0 %v3985
    %4245 = vmatprep.subr.bf16.mxu0 0
    %4246 = vmatpush1.bf16.msra.mxu0 %v3984
    %4247 = vmatprep.subr.bf16.mxu0 0
    %4248 = vmatpush2.bf16.msra.mxu0 0
    %4249 = vmatprep.subr.bf16.mxu0 0
    %4250 = vmatpush2.bf16.msra.mxu0 0
    %4251 = vmatprep.subr.bf16.mxu0 0
    %4252 = vmatpush2.bf16.msra.mxu0 0
    %4253 = vmatprep.subr.bf16.mxu0 0
    %4254 = vmatpush2.bf16.msra.mxu0 0
    %4255 = vmatprep.subr.bf16.mxu0 0
    %4256 = vmatpush2.bf16.msra.mxu0 0
    %4257 = vmatprep.subr.bf16.mxu0 0
    %4258 = vmatpush2.bf16.msra.mxu0 0
    %4259 = vmatprep.subr.bf16.mxu0 0
    %4260 = vmatpush2.bf16.msra.mxu0 0
    %4261 = vmatprep.subr.bf16.mxu0 0
    %4262 = vmatpush2.bf16.msra.mxu0 %v4069
    %4263 = vmatprep.mubr.bf16.mxu0 %v4066
    %4264 = vmatmul.mubr.bf16.gmra.mxu0 %v3482
    %v4265 = vpop.f32.mrf.mxu0
    %v4266 = vadd.f32 %v4226, %v4265
    %v4267 = vpop.f32.mrf.mxu0
    %v4268 = vpop.f32.mrf.mxu0
    %v4269 = vpop.f32.mrf.mxu0
    %4270 = vdwg.mxu0
    %v4271 = vadd.f32 %v2867, %v4266
    %s4272 = sld [smem:[#allocation2 + $0x180]]
    %v4273 = vstv %s4272
    %v4274 = vmul.f32 %v52, %v4273
    %v4275 = vmul.f32 %v53, %v4273
    %v4276 = vmul.f32 %v54, %v4273
    %v4277 = vmul.f32 %v55, %v4273
    %v4278 = vmul.f32 %v56, %v4273
    %v4279 = vmul.f32 %v57, %v4273
    %v4280 = vmul.f32 %v58, %v4273
    %v4281 = vmul.f32 %v59, %v4273
    %v4282 = vmul.f32 %v60, %v4273
    %v4283 = vmul.f32 %v61, %v4273
    %s4284 = sld [smem:[#allocation2 + $0x181]]
    %v4285 = vstv %s4284
    %v4286 = vmul.f32 %v52, %v4285
    %v4287 = vmul.f32 %v53, %v4285
    %v4288 = vmul.f32 %v54, %v4285
    %v4289 = vmul.f32 %v55, %v4285
    %v4290 = vmul.f32 %v56, %v4285
    %v4291 = vmul.f32 %v57, %v4285
    %v4292 = vmul.f32 %v58, %v4285
    %v4293 = vmul.f32 %v59, %v4285
    %v4294 = vmul.f32 %v60, %v4285
    %v4295 = vmul.f32 %v61, %v4285
    %4306 = vrot.lane.b32.xlu0 %v4286, 127
    %v4307 = vpop.permute.xlu0 %4306
    %4308 = vrot.lane.b32.xlu0 %v4287, 127
    %v4309 = vpop.permute.xlu0 %4308
    %4310 = vrot.lane.b32.xlu0 %v4288, 127
    %v4311 = vpop.permute.xlu0 %4310
    %4312 = vrot.lane.b32.xlu0 %v4289, 127
    %v4313 = vpop.permute.xlu0 %4312
    %4314 = vrot.lane.b32.xlu0 %v4290, 127
    %v4315 = vpop.permute.xlu0 %4314
    %4316 = vrot.lane.b32.xlu0 %v4291, 127
    %v4317 = vpop.permute.xlu0 %4316
    %4318 = vrot.lane.b32.xlu0 %v4292, 127
    %v4319 = vpop.permute.xlu0 %4318
    %4320 = vrot.lane.b32.xlu0 %v4293, 127
    %v4321 = vpop.permute.xlu0 %4320
    %4322 = vrot.lane.b32.xlu0 %v4294, 127
    %v4323 = vpop.permute.xlu0 %4322
    %4324 = vrot.lane.b32.xlu0 %v4295, 127
    %v4325 = vpop.permute.xlu0 %4324
    %v4326 = vsel %vm116, %v4307, %v4309
    %v4327 = vsel %vm116, %v4309, %v4311
    %v4328 = vsel %vm116, %v4311, %v4313
    %v4329 = vsel %vm116, %v4313, %v4315
    %v4330 = vsel %vm116, %v4315, %v4317
    %v4331 = vsel %vm116, %v4317, %v4319
    %v4332 = vsel %vm116, %v4319, %v4321
    %v4333 = vsel %vm116, %v4321, %v4323
    %v4334 = vsel %vm116, %v4323, %v4325
    %v4345 = vadd.f32 %v4274, %v4326
    %v4346 = vadd.f32 %v4275, %v4327
    %v4347 = vadd.f32 %v4276, %v4328
    %v4348 = vadd.f32 %v4277, %v4329
    %v4349 = vadd.f32 %v4278, %v4330
    %v4350 = vadd.f32 %v4279, %v4331
    %v4351 = vadd.f32 %v4280, %v4332
    %v4352 = vadd.f32 %v4281, %v4333
    %v4353 = vadd.f32 %v4282, %v4334
    %v4354 = vadd.f32 %v4283, %v4325
    %s4355 = sld [smem:[#allocation2 + $0x182]]
    %v4356 = vstv %s4355
    %v4357 = vmul.f32 %v52, %v4356
    %v4358 = vmul.f32 %v53, %v4356
    %v4359 = vmul.f32 %v54, %v4356
    %v4360 = vmul.f32 %v55, %v4356
    %v4361 = vmul.f32 %v56, %v4356
    %v4362 = vmul.f32 %v57, %v4356
    %v4363 = vmul.f32 %v58, %v4356
    %v4364 = vmul.f32 %v59, %v4356
    %v4365 = vmul.f32 %v60, %v4356
    %v4366 = vmul.f32 %v61, %v4356
    %4377 = vrot.lane.b32.xlu0 %v4357, 126
    %v4378 = vpop.permute.xlu0 %4377
    %4379 = vrot.lane.b32.xlu0 %v4358, 126
    %v4380 = vpop.permute.xlu0 %4379
    %4381 = vrot.lane.b32.xlu0 %v4359, 126
    %v4382 = vpop.permute.xlu0 %4381
    %4383 = vrot.lane.b32.xlu0 %v4360, 126
    %v4384 = vpop.permute.xlu0 %4383
    %4385 = vrot.lane.b32.xlu0 %v4361, 126
    %v4386 = vpop.permute.xlu0 %4385
    %4387 = vrot.lane.b32.xlu0 %v4362, 126
    %v4388 = vpop.permute.xlu0 %4387
    %4389 = vrot.lane.b32.xlu0 %v4363, 126
    %v4390 = vpop.permute.xlu0 %4389
    %4391 = vrot.lane.b32.xlu0 %v4364, 126
    %v4392 = vpop.permute.xlu0 %4391
    %4393 = vrot.lane.b32.xlu0 %v4365, 126
    %v4394 = vpop.permute.xlu0 %4393
    %4395 = vrot.lane.b32.xlu0 %v4366, 126
    %v4396 = vpop.permute.xlu0 %4395
    %v4397 = vsel %vm188, %v4378, %v4380
    %v4398 = vsel %vm188, %v4380, %v4382
    %v4399 = vsel %vm188, %v4382, %v4384
    %v4400 = vsel %vm188, %v4384, %v4386
    %v4401 = vsel %vm188, %v4386, %v4388
    %v4402 = vsel %vm188, %v4388, %v4390
    %v4403 = vsel %vm188, %v4390, %v4392
    %v4404 = vsel %vm188, %v4392, %v4394
    %v4405 = vsel %vm188, %v4394, %v4396
    %v4416 = vadd.f32 %v4345, %v4397
    %v4417 = vadd.f32 %v4346, %v4398
    %v4418 = vadd.f32 %v4347, %v4399
    %v4419 = vadd.f32 %v4348, %v4400
    %v4420 = vadd.f32 %v4349, %v4401
    %v4421 = vadd.f32 %v4350, %v4402
    %v4422 = vadd.f32 %v4351, %v4403
    %v4423 = vadd.f32 %v4352, %v4404
    %v4424 = vadd.f32 %v4353, %v4405
    %v4425 = vadd.f32 %v4354, %v4396
    %s4426 = sld [smem:[#allocation2 + $0x183]]
    %v4427 = vstv %s4426
    %v4428 = vmul.f32 %v52, %v4427
    %v4429 = vmul.f32 %v53, %v4427
    %v4430 = vmul.f32 %v54, %v4427
    %v4431 = vmul.f32 %v55, %v4427
    %v4432 = vmul.f32 %v56, %v4427
    %v4433 = vmul.f32 %v57, %v4427
    %v4434 = vmul.f32 %v58, %v4427
    %v4435 = vmul.f32 %v59, %v4427
    %v4436 = vmul.f32 %v60, %v4427
    %v4437 = vmul.f32 %v61, %v4427
    %4448 = vrot.lane.b32.xlu0 %v4428, 93
    %v4449 = vpop.permute.xlu0 %4448
    %4450 = vrot.lane.b32.xlu0 %v4429, 93
    %v4451 = vpop.permute.xlu0 %4450
    %4452 = vrot.lane.b32.xlu0 %v4430, 93
    %v4453 = vpop.permute.xlu0 %4452
    %4454 = vrot.lane.b32.xlu0 %v4431, 93
    %v4455 = vpop.permute.xlu0 %4454
    %4456 = vrot.lane.b32.xlu0 %v4432, 93
    %v4457 = vpop.permute.xlu0 %4456
    %4458 = vrot.lane.b32.xlu0 %v4433, 93
    %v4459 = vpop.permute.xlu0 %4458
    %4460 = vrot.lane.b32.xlu0 %v4434, 93
    %v4461 = vpop.permute.xlu0 %4460
    %4462 = vrot.lane.b32.xlu0 %v4435, 93
    %v4463 = vpop.permute.xlu0 %4462
    %4464 = vrot.lane.b32.xlu0 %v4436, 93
    %v4465 = vpop.permute.xlu0 %4464
    %4466 = vrot.lane.b32.xlu0 %v4437, 93
    %v4467 = vpop.permute.xlu0 %4466
    %v4468 = vsel %vm260, %v4449, %v4451
    %v4469 = vsel %vm260, %v4451, %v4453
    %v4470 = vsel %vm260, %v4453, %v4455
    %v4471 = vsel %vm260, %v4455, %v4457
    %v4472 = vsel %vm260, %v4457, %v4459
    %v4473 = vsel %vm260, %v4459, %v4461
    %v4474 = vsel %vm260, %v4461, %v4463
    %v4475 = vsel %vm260, %v4463, %v4465
    %v4476 = vsel %vm260, %v4465, %v4467
    %v4487 = vadd.f32 %v4416, %v4468
    %v4488 = vadd.f32 %v4417, %v4469
    %v4489 = vadd.f32 %v4418, %v4470
    %v4490 = vadd.f32 %v4419, %v4471
    %v4491 = vadd.f32 %v4420, %v4472
    %v4492 = vadd.f32 %v4421, %v4473
    %v4493 = vadd.f32 %v4422, %v4474
    %v4494 = vadd.f32 %v4423, %v4475
    %v4495 = vadd.f32 %v4424, %v4476
    %v4496 = vadd.f32 %v4425, %v4467
    %s4497 = sld [smem:[#allocation2 + $0x184]]
    %v4498 = vstv %s4497
    %v4499 = vmul.f32 %v52, %v4498
    %v4500 = vmul.f32 %v53, %v4498
    %v4501 = vmul.f32 %v54, %v4498
    %v4502 = vmul.f32 %v55, %v4498
    %v4503 = vmul.f32 %v56, %v4498
    %v4504 = vmul.f32 %v57, %v4498
    %v4505 = vmul.f32 %v58, %v4498
    %v4506 = vmul.f32 %v59, %v4498
    %v4507 = vmul.f32 %v60, %v4498
    %v4508 = vmul.f32 %v61, %v4498
    %4519 = vrot.lane.b32.xlu0 %v4499, 92
    %v4520 = vpop.permute.xlu0 %4519
    %4521 = vrot.lane.b32.xlu0 %v4500, 92
    %v4522 = vpop.permute.xlu0 %4521
    %4523 = vrot.lane.b32.xlu0 %v4501, 92
    %v4524 = vpop.permute.xlu0 %4523
    %4525 = vrot.lane.b32.xlu0 %v4502, 92
    %v4526 = vpop.permute.xlu0 %4525
    %4527 = vrot.lane.b32.xlu0 %v4503, 92
    %v4528 = vpop.permute.xlu0 %4527
    %4529 = vrot.lane.b32.xlu0 %v4504, 92
    %v4530 = vpop.permute.xlu0 %4529
    %4531 = vrot.lane.b32.xlu0 %v4505, 92
    %v4532 = vpop.permute.xlu0 %4531
    %4533 = vrot.lane.b32.xlu0 %v4506, 92
    %v4534 = vpop.permute.xlu0 %4533
    %4535 = vrot.lane.b32.xlu0 %v4507, 92
    %v4536 = vpop.permute.xlu0 %4535
    %4537 = vrot.lane.b32.xlu0 %v4508, 92
    %v4538 = vpop.permute.xlu0 %4537
    %v4539 = vsel %vm332, %v4520, %v4522
    %v4540 = vsel %vm332, %v4522, %v4524
    %v4541 = vsel %vm332, %v4524, %v4526
    %v4542 = vsel %vm332, %v4526, %v4528
    %v4543 = vsel %vm332, %v4528, %v4530
    %v4544 = vsel %vm332, %v4530, %v4532
    %v4545 = vsel %vm332, %v4532, %v4534
    %v4546 = vsel %vm332, %v4534, %v4536
    %v4547 = vsel %vm332, %v4536, %v4538
    %v4558 = vadd.f32 %v4487, %v4539
    %v4559 = vadd.f32 %v4488, %v4540
    %v4560 = vadd.f32 %v4489, %v4541
    %v4561 = vadd.f32 %v4490, %v4542
    %v4562 = vadd.f32 %v4491, %v4543
    %v4563 = vadd.f32 %v4492, %v4544
    %v4564 = vadd.f32 %v4493, %v4545
    %v4565 = vadd.f32 %v4494, %v4546
    %v4566 = vadd.f32 %v4495, %v4547
    %v4567 = vadd.f32 %v4496, %v4538
    %s4568 = sld [smem:[#allocation2 + $0x185]]
    %v4569 = vstv %s4568
    %v4570 = vmul.f32 %v52, %v4569
    %v4571 = vmul.f32 %v53, %v4569
    %v4572 = vmul.f32 %v54, %v4569
    %v4573 = vmul.f32 %v55, %v4569
    %v4574 = vmul.f32 %v56, %v4569
    %v4575 = vmul.f32 %v57, %v4569
    %v4576 = vmul.f32 %v58, %v4569
    %v4577 = vmul.f32 %v59, %v4569
    %v4578 = vmul.f32 %v60, %v4569
    %v4579 = vmul.f32 %v61, %v4569
    %4590 = vrot.lane.b32.xlu0 %v4570, 91
    %v4591 = vpop.permute.xlu0 %4590
    %4592 = vrot.lane.b32.xlu0 %v4571, 91
    %v4593 = vpop.permute.xlu0 %4592
    %4594 = vrot.lane.b32.xlu0 %v4572, 91
    %v4595 = vpop.permute.xlu0 %4594
    %4596 = vrot.lane.b32.xlu0 %v4573, 91
    %v4597 = vpop.permute.xlu0 %4596
    %4598 = vrot.lane.b32.xlu0 %v4574, 91
    %v4599 = vpop.permute.xlu0 %4598
    %4600 = vrot.lane.b32.xlu0 %v4575, 91
    %v4601 = vpop.permute.xlu0 %4600
    %4602 = vrot.lane.b32.xlu0 %v4576, 91
    %v4603 = vpop.permute.xlu0 %4602
    %4604 = vrot.lane.b32.xlu0 %v4577, 91
    %v4605 = vpop.permute.xlu0 %4604
    %4606 = vrot.lane.b32.xlu0 %v4578, 91
    %v4607 = vpop.permute.xlu0 %4606
    %4608 = vrot.lane.b32.xlu0 %v4579, 91
    %v4609 = vpop.permute.xlu0 %4608
    %v4610 = vsel %vm404, %v4591, %v4593
    %v4611 = vsel %vm404, %v4593, %v4595
    %v4612 = vsel %vm404, %v4595, %v4597
    %v4613 = vsel %vm404, %v4597, %v4599
    %v4614 = vsel %vm404, %v4599, %v4601
    %v4615 = vsel %vm404, %v4601, %v4603
    %v4616 = vsel %vm404, %v4603, %v4605
    %v4617 = vsel %vm404, %v4605, %v4607
    %v4618 = vsel %vm404, %v4607, %v4609
    %v4629 = vadd.f32 %v4558, %v4610
    %v4630 = vadd.f32 %v4559, %v4611
    %v4631 = vadd.f32 %v4560, %v4612
    %v4632 = vadd.f32 %v4561, %v4613
    %v4633 = vadd.f32 %v4562, %v4614
    %v4634 = vadd.f32 %v4563, %v4615
    %v4635 = vadd.f32 %v4564, %v4616
    %v4636 = vadd.f32 %v4565, %v4617
    %v4637 = vadd.f32 %v4566, %v4618
    %v4638 = vadd.f32 %v4567, %v4609
    %s4639 = sld [smem:[#allocation2 + $0x186]]
    %v4640 = vstv %s4639
    %v4641 = vmul.f32 %v52, %v4640
    %v4642 = vmul.f32 %v53, %v4640
    %v4643 = vmul.f32 %v54, %v4640
    %v4644 = vmul.f32 %v55, %v4640
    %v4645 = vmul.f32 %v56, %v4640
    %v4646 = vmul.f32 %v57, %v4640
    %v4647 = vmul.f32 %v58, %v4640
    %v4648 = vmul.f32 %v59, %v4640
    %v4649 = vmul.f32 %v60, %v4640
    %v4650 = vmul.f32 %v61, %v4640
    %4661 = vrot.lane.b32.xlu0 %v4641, 58
    %v4662 = vpop.permute.xlu0 %4661
    %4663 = vrot.lane.b32.xlu0 %v4642, 58
    %v4664 = vpop.permute.xlu0 %4663
    %4665 = vrot.lane.b32.xlu0 %v4643, 58
    %v4666 = vpop.permute.xlu0 %4665
    %4667 = vrot.lane.b32.xlu0 %v4644, 58
    %v4668 = vpop.permute.xlu0 %4667
    %4669 = vrot.lane.b32.xlu0 %v4645, 58
    %v4670 = vpop.permute.xlu0 %4669
    %4671 = vrot.lane.b32.xlu0 %v4646, 58
    %v4672 = vpop.permute.xlu0 %4671
    %4673 = vrot.lane.b32.xlu0 %v4647, 58
    %v4674 = vpop.permute.xlu0 %4673
    %4675 = vrot.lane.b32.xlu0 %v4648, 58
    %v4676 = vpop.permute.xlu0 %4675
    %4677 = vrot.lane.b32.xlu0 %v4649, 58
    %v4678 = vpop.permute.xlu0 %4677
    %4679 = vrot.lane.b32.xlu0 %v4650, 58
    %v4680 = vpop.permute.xlu0 %4679
    %v4681 = vsel %vm476, %v4662, %v4664
    %v4682 = vsel %vm476, %v4664, %v4666
    %v4683 = vsel %vm476, %v4666, %v4668
    %v4684 = vsel %vm476, %v4668, %v4670
    %v4685 = vsel %vm476, %v4670, %v4672
    %v4686 = vsel %vm476, %v4672, %v4674
    %v4687 = vsel %vm476, %v4674, %v4676
    %v4688 = vsel %vm476, %v4676, %v4678
    %v4689 = vsel %vm476, %v4678, %v4680
    %v4700 = vadd.f32 %v4629, %v4681
    %v4701 = vadd.f32 %v4630, %v4682
    %v4702 = vadd.f32 %v4631, %v4683
    %v4703 = vadd.f32 %v4632, %v4684
    %v4704 = vadd.f32 %v4633, %v4685
    %v4705 = vadd.f32 %v4634, %v4686
    %v4706 = vadd.f32 %v4635, %v4687
    %v4707 = vadd.f32 %v4636, %v4688
    %v4708 = vadd.f32 %v4637, %v4689
    %v4709 = vadd.f32 %v4638, %v4680
    %s4710 = sld [smem:[#allocation2 + $0x187]]
    %v4711 = vstv %s4710
    %v4712 = vmul.f32 %v52, %v4711
    %v4713 = vmul.f32 %v53, %v4711
    %v4714 = vmul.f32 %v54, %v4711
    %v4715 = vmul.f32 %v55, %v4711
    %v4716 = vmul.f32 %v56, %v4711
    %v4717 = vmul.f32 %v57, %v4711
    %v4718 = vmul.f32 %v58, %v4711
    %v4719 = vmul.f32 %v59, %v4711
    %v4720 = vmul.f32 %v60, %v4711
    %v4721 = vmul.f32 %v61, %v4711
    %4732 = vrot.lane.b32.xlu0 %v4712, 57
    %v4733 = vpop.permute.xlu0 %4732
    %4734 = vrot.lane.b32.xlu0 %v4713, 57
    %v4735 = vpop.permute.xlu0 %4734
    %4736 = vrot.lane.b32.xlu0 %v4714, 57
    %v4737 = vpop.permute.xlu0 %4736
    %4738 = vrot.lane.b32.xlu0 %v4715, 57
    %v4739 = vpop.permute.xlu0 %4738
    %4740 = vrot.lane.b32.xlu0 %v4716, 57
    %v4741 = vpop.permute.xlu0 %4740
    %4742 = vrot.lane.b32.xlu0 %v4717, 57
    %v4743 = vpop.permute.xlu0 %4742
    %4744 = vrot.lane.b32.xlu0 %v4718, 57
    %v4745 = vpop.permute.xlu0 %4744
    %4746 = vrot.lane.b32.xlu0 %v4719, 57
    %v4747 = vpop.permute.xlu0 %4746
    %4748 = vrot.lane.b32.xlu0 %v4720, 57
    %v4749 = vpop.permute.xlu0 %4748
    %4750 = vrot.lane.b32.xlu0 %v4721, 57
    %v4751 = vpop.permute.xlu0 %4750
    %v4752 = vsel %vm548, %v4733, %v4735
    %v4753 = vsel %vm548, %v4735, %v4737
    %v4754 = vsel %vm548, %v4737, %v4739
    %v4755 = vsel %vm548, %v4739, %v4741
    %v4756 = vsel %vm548, %v4741, %v4743
    %v4757 = vsel %vm548, %v4743, %v4745
    %v4758 = vsel %vm548, %v4745, %v4747
    %v4759 = vsel %vm548, %v4747, %v4749
    %v4760 = vsel %vm548, %v4749, %v4751
    %v4771 = vadd.f32 %v4700, %v4752
    %v4772 = vadd.f32 %v4701, %v4753
    %v4773 = vadd.f32 %v4702, %v4754
    %v4774 = vadd.f32 %v4703, %v4755
    %v4775 = vadd.f32 %v4704, %v4756
    %v4776 = vadd.f32 %v4705, %v4757
    %v4777 = vadd.f32 %v4706, %v4758
    %v4778 = vadd.f32 %v4707, %v4759
    %v4779 = vadd.f32 %v4708, %v4760
    %v4780 = vadd.f32 %v4709, %v4751
    %s4781 = sld [smem:[#allocation2 + $0x188]]
    %v4782 = vstv %s4781
    %v4783 = vmul.f32 %v52, %v4782
    %v4784 = vmul.f32 %v53, %v4782
    %v4785 = vmul.f32 %v54, %v4782
    %v4786 = vmul.f32 %v55, %v4782
    %v4787 = vmul.f32 %v56, %v4782
    %v4788 = vmul.f32 %v57, %v4782
    %v4789 = vmul.f32 %v58, %v4782
    %v4790 = vmul.f32 %v59, %v4782
    %v4791 = vmul.f32 %v60, %v4782
    %v4792 = vmul.f32 %v61, %v4782
    %4803 = vrot.lane.b32.xlu0 %v4783, 56
    %v4804 = vpop.permute.xlu0 %4803
    %4805 = vrot.lane.b32.xlu0 %v4784, 56
    %v4806 = vpop.permute.xlu0 %4805
    %4807 = vrot.lane.b32.xlu0 %v4785, 56
    %v4808 = vpop.permute.xlu0 %4807
    %4809 = vrot.lane.b32.xlu0 %v4786, 56
    %v4810 = vpop.permute.xlu0 %4809
    %4811 = vrot.lane.b32.xlu0 %v4787, 56
    %v4812 = vpop.permute.xlu0 %4811
    %4813 = vrot.lane.b32.xlu0 %v4788, 56
    %v4814 = vpop.permute.xlu0 %4813
    %4815 = vrot.lane.b32.xlu0 %v4789, 56
    %v4816 = vpop.permute.xlu0 %4815
    %4817 = vrot.lane.b32.xlu0 %v4790, 56
    %v4818 = vpop.permute.xlu0 %4817
    %4819 = vrot.lane.b32.xlu0 %v4791, 56
    %v4820 = vpop.permute.xlu0 %4819
    %4821 = vrot.lane.b32.xlu0 %v4792, 56
    %v4822 = vpop.permute.xlu0 %4821
    %v4823 = vsel %vm620, %v4804, %v4806
    %v4824 = vsel %vm620, %v4806, %v4808
    %v4825 = vsel %vm620, %v4808, %v4810
    %v4826 = vsel %vm620, %v4810, %v4812
    %v4827 = vsel %vm620, %v4812, %v4814
    %v4828 = vsel %vm620, %v4814, %v4816
    %v4829 = vsel %vm620, %v4816, %v4818
    %v4830 = vsel %vm620, %v4818, %v4820
    %v4831 = vsel %vm620, %v4820, %v4822
    %v4842 = vadd.f32 %v4771, %v4823
    %v4843 = vadd.f32 %v4772, %v4824
    %v4844 = vadd.f32 %v4773, %v4825
    %v4845 = vadd.f32 %v4774, %v4826
    %v4846 = vadd.f32 %v4775, %v4827
    %v4847 = vadd.f32 %v4776, %v4828
    %v4848 = vadd.f32 %v4777, %v4829
    %v4849 = vadd.f32 %v4778, %v4830
    %v4850 = vadd.f32 %v4779, %v4831
    %v4851 = vadd.f32 %v4780, %v4822
    %s4852 = sld [smem:[#allocation4 + $0x3]]
    %v4853 = vstv %s4852
    %v4854 = vadd.f32 %v4842, %v4853
    %v4855 = vadd.f32 %v4843, %v4853
    %v4856 = vadd.f32 %v4844, %v4853
    %v4857 = vadd.f32 %v4845, %v4853
    %v4858 = vadd.f32 %v4846, %v4853
    %v4859 = vadd.f32 %v4847, %v4853
    %v4860 = vadd.f32 %v4848, %v4853
    %v4861 = vadd.f32 %v4849, %v4853
    %v4862 = vadd.f32 %v4850, %v4853
    %v4863 = vadd.f32 %v4851, %v4853
    %v4864 = vmax.f32 %v4854, 0.0
    %v4865 = vmax.f32 %v4855, 0.0
    %v4866 = vmax.f32 %v4856, 0.0
    %v4867 = vmax.f32 %v4857, 0.0
    %v4868 = vmax.f32 %v4858, 0.0
    %v4869 = vmax.f32 %v4859, 0.0
    %v4870 = vmax.f32 %v4860, 0.0
    %v4871 = vmax.f32 %v4861, 0.0
    %v4872 = vmax.f32 %v4862, 0.0
    %v4873 = vmax.f32 %v4863, 0.0
    %v4874 = vpack.c.bf16 %v4864, %v4864
    %v4875 = vpack.c.bf16 %v4865, %v4865
    %v4876 = vpack.c.bf16 %v4866, %v4866
    %v4877 = vpack.c.bf16 %v4867, %v4867
    %v4878 = vpack.c.bf16 %v4868, %v4868
    %v4879 = vpack.c.bf16 %v4869, %v4869
    %v4880 = vpack.c.bf16 %v4870, %v4870
    %v4881 = vpack.c.bf16 %v4871, %v4871
    %v4882 = vpack.c.bf16 %v4872, %v4872
    %v4883 = vpack.c.bf16 %v4873, %v4873
    %s4884 = scalar_lea.vmem %s3, 1740
    %v4885 = vld [vmem:[%s4884] sm:$0xf]
    %v4886 = vld [vmem:[%s4884 + $0x4] sm:$0xf]
    %v4887 = vld [vmem:[%s4884 + $0x8] sm:$0xf]
    %v4888 = vld [vmem:[%s4884 + $0xc] sm:$0xf]
    %v4889 = vld [vmem:[%s4884 + $0x10] sm:$0xf]
    %v4890 = vld [vmem:[%s4884 + $0x14] sm:$0xf]
    %v4891 = vld [vmem:[%s4884 + $0x18] sm:$0xf]
    %v4892 = vld [vmem:[%s4884 + $0x1c] sm:$0xf]
    %v4893 = vld [vmem:[%s4884 + $0x20] sm:$0xf]
    %v4894 = vld [vmem:[%s4884 + $0x24] sm:$0xf]
    %v4895 = vld [vmem:[%s4884 + $0x28] sm:$0xf]
    %v4896 = vld [vmem:[%s4884 + $0x2c] sm:$0xf]
    %v4897 = vld [vmem:[%s4884 + $0x30] sm:$0xf]
    %v4898 = vld [vmem:[%s4884 + $0x34] sm:$0xf]
    %v4899 = vld [vmem:[%s4884 + $0x38] sm:$0xf]
    %v4900 = vld [vmem:[%s4884 + $0x3c] sm:$0xf]
    %v4901 = vld [vmem:[%s4884 + $0x40] sm:$0xf]
    %v4902 = vld [vmem:[%s4884 + $0x44] sm:$0xf]
    %v4903 = vld [vmem:[%s4884 + $0x48] sm:$0xf]
    %v4904 = vld [vmem:[%s4884 + $0x4c] sm:$0xf]
    %v4905 = vld [vmem:[%s4884 + $0x50] sm:$0xf]
    %v4906 = vld [vmem:[%s4884 + $0x54] sm:$0xf]
    %v4907 = vld [vmem:[%s4884 + $0x58] sm:$0xf]
    %v4908 = vld [vmem:[%s4884 + $0x5c] sm:$0xf]
    %v4909 = vld [vmem:[%s4884 + $0x60] sm:$0xf]
    %v4910 = vld [vmem:[%s4884 + $0x64] sm:$0xf]
    %v4911 = vld [vmem:[%s4884 + $0x68] sm:$0xf]
    %v4912 = vld [vmem:[%s4884 + $0x6c] sm:$0xf]
    %v4913 = vld [vmem:[%s4884 + $0x70] sm:$0xf]
    %v4914 = vld [vmem:[%s4884 + $0x74] sm:$0xf]
    %v4915 = vld [vmem:[%s4884 + $0x78] sm:$0xf]
    %v4916 = vld [vmem:[%s4884 + $0x7c] sm:$0xf]
    %v4917 = vld [vmem:[%s4884 + $0x80] sm:$0xf]
    %v4918 = vld [vmem:[%s4884 + $0x84] sm:$0xf]
    %v4919 = vld [vmem:[%s4884 + $0x88] sm:$0xf]
    %v4920 = vld [vmem:[%s4884 + $0x8c] sm:$0xf]
    %v4921 = vld [vmem:[%s4884 + $0x90] sm:$0xf]
    %v4922 = vld [vmem:[%s4884 + $0x94] sm:$0xf]
    %v4923 = vld [vmem:[%s4884 + $0x98] sm:$0xf]
    %v4924 = vld [vmem:[%s4884 + $0x9c] sm:$0xf]
    %v4925 = vld [vmem:[%s4884 + $0xa0] sm:$0xf]
    %v4926 = vld [vmem:[%s4884 + $0xa4] sm:$0xf]
    %v4927 = vld [vmem:[%s4884 + $0xa8] sm:$0xf]
    %v4928 = vld [vmem:[%s4884 + $0xac] sm:$0xf]
    %v4929 = vld [vmem:[%s4884 + $0xb0] sm:$0xf]
    %v4930 = vld [vmem:[%s4884 + $0xb4] sm:$0xf]
    %v4931 = vld [vmem:[%s4884 + $0xb8] sm:$0xf]
    %v4932 = vld [vmem:[%s4884 + $0xbc] sm:$0xf]
    %v4933 = vld [vmem:[%s4884 + $0xc0] sm:$0xf]
    %v4934 = vld [vmem:[%s4884 + $0xc4] sm:$0xf]
    %v4935 = vld [vmem:[%s4884 + $0xc8] sm:$0xf]
    %v4936 = vld [vmem:[%s4884 + $0xcc] sm:$0xf]
    %v4937 = vld [vmem:[%s4884 + $0xd0] sm:$0xf]
    %v4938 = vld [vmem:[%s4884 + $0xd4] sm:$0xf]
    %v4939 = vld [vmem:[%s4884 + $0xd8] sm:$0xf]
    %v4940 = vld [vmem:[%s4884 + $0xdc] sm:$0xf]
    %v4941 = vld [vmem:[%s4884 + $0xe0] sm:$0xf]
    %v4942 = vld [vmem:[%s4884 + $0xe4] sm:$0xf]
    %v4943 = vld [vmem:[%s4884 + $0xe8] sm:$0xf]
    %v4944 = vld [vmem:[%s4884 + $0xec] sm:$0xf]
    %v4945 = vld [vmem:[%s4884 + $0xf0] sm:$0xf]
    %v4946 = vld [vmem:[%s4884 + $0xf4] sm:$0xf]
    %v4947 = vld [vmem:[%s4884 + $0xf8] sm:$0xf]
    %v4948 = vld [vmem:[%s4884 + $0xfc] sm:$0xf]
    %v4949 = vld [vmem:[%s4884 + $0x100] sm:$0xf]
    %v4950 = vld [vmem:[%s4884 + $0x104] sm:$0xf]
    %v4951 = vld [vmem:[%s4884 + $0x108] sm:$0xf]
    %v4952 = vld [vmem:[%s4884 + $0x10c] sm:$0xf]
    %v4953 = vld [vmem:[%s4884 + $0x110] sm:$0xf]
    %v4954 = vld [vmem:[%s4884 + $0x114] sm:$0xf]
    %v4955 = vld [vmem:[%s4884 + $0x118] sm:$0xf]
    %v4956 = vld [vmem:[%s4884 + $0x11c] sm:$0xf]
    %v4957 = vld [vmem:[%s4884 + $0x120] sm:$0xf]
    %v4958 = vld [vmem:[%s4884 + $0x124] sm:$0xf]
    %v4959 = vld [vmem:[%s4884 + $0x128] sm:$0xf]
    %v4960 = vld [vmem:[%s4884 + $0x12c] sm:$0xf]
    %v4961 = vld [vmem:[%s4884 + $0x130] sm:$0xf]
    %v4962 = vld [vmem:[%s4884 + $0x134] sm:$0xf]
    %v4963 = vld [vmem:[%s4884 + $0x138] sm:$0xf]
    %v4964 = vld [vmem:[%s4884 + $0x13c] sm:$0xf]
    %v4965 = vld [vmem:[%s4884 + $0x140] sm:$0xf]
    %v4966 = vld [vmem:[%s4884 + $0x144] sm:$0xf]
    %v4967 = vld [vmem:[%s4884 + $0x148] sm:$0xf]
    %v4968 = vld [vmem:[%s4884 + $0x14c] sm:$0xf]
    %v4969 = vld [vmem:[%s4884 + $0x150] sm:$0xf]
    %v4970 = vld [vmem:[%s4884 + $0x154] sm:$0xf]
    %v4971 = vld [vmem:[%s4884 + $0x158] sm:$0xf]
    %v4972 = vld [vmem:[%s4884 + $0x15c] sm:$0xf]
    %v4973 = vld [vmem:[%s4884 + $0x160] sm:$0xf]
    %v4974 = vld [vmem:[%s4884 + $0x164] sm:$0xf]
    %v4975 = vld [vmem:[%s4884 + $0x168] sm:$0xf]
    %v4976 = vld [vmem:[%s4884 + $0x16c] sm:$0xf]
    %v4977 = vld [vmem:[%s4884 + $0x170] sm:$0xf]
    %v4978 = vld [vmem:[%s4884 + $0x174] sm:$0xf]
    %v4979 = vld [vmem:[%s4884 + $0x178] sm:$0xf]
    %v4980 = vld [vmem:[%s4884 + $0x17c] sm:$0xf]
    %v4981 = vld [vmem:[%s4884 + $0x180] sm:$0xf]
    %v4982 = vld [vmem:[%s4884 + $0x184] sm:$0xf]
    %v4983 = vld [vmem:[%s4884 + $0x188] sm:$0xf]
    %v4984 = vld [vmem:[%s4884 + $0x18c] sm:$0xf]
    %v4985 = vld [vmem:[%s4884 + $0x190] sm:$0xf]
    %v4986 = vld [vmem:[%s4884 + $0x194] sm:$0xf]
    %v4987 = vld [vmem:[%s4884 + $0x198] sm:$0xf]
    %v4988 = vld [vmem:[%s4884 + $0x19c] sm:$0xf]
    %v4989 = vld [vmem:[%s4884 + $0x1a0] sm:$0xf]
    %v4990 = vld [vmem:[%s4884 + $0x1a4] sm:$0xf]
    %v4991 = vld [vmem:[%s4884 + $0x1a8] sm:$0xf]
    %v4992 = vld [vmem:[%s4884 + $0x1ac] sm:$0xf]
    %v4993 = vld [vmem:[%s4884 + $0x1b0] sm:$0xf]
    %v4994 = vld [vmem:[%s4884 + $0x1b4] sm:$0xf]
    %v4995 = vld [vmem:[%s4884 + $0x1b8] sm:$0xf]
    %v4996 = vld [vmem:[%s4884 + $0x1bc] sm:$0xf]
    %v4997 = vld [vmem:[%s4884 + $0x1c0] sm:$0xf]
    %v4998 = vld [vmem:[%s4884 + $0x1c4] sm:$0xf]
    %v4999 = vld [vmem:[%s4884 + $0x1c8] sm:$0xf]
    %v5000 = vld [vmem:[%s4884 + $0x1cc] sm:$0xf]
    %v5001 = vld [vmem:[%s4884 + $0x1d0] sm:$0xf]
    %v5002 = vld [vmem:[%s4884 + $0x1d4] sm:$0xf]
    %v5003 = vld [vmem:[%s4884 + $0x1d8] sm:$0xf]
    %v5004 = vld [vmem:[%s4884 + $0x1dc] sm:$0xf]
    %v5005 = vld [vmem:[%s4884 + $0x1e0] sm:$0xf]
    %v5006 = vld [vmem:[%s4884 + $0x1e4] sm:$0xf]
    %v5007 = vld [vmem:[%s4884 + $0x1e8] sm:$0xf]
    %v5008 = vld [vmem:[%s4884 + $0x1ec] sm:$0xf]
    %v5009 = vld [vmem:[%s4884 + $0x1f0] sm:$0xf]
    %v5010 = vld [vmem:[%s4884 + $0x1f4] sm:$0xf]
    %v5011 = vld [vmem:[%s4884 + $0x1f8] sm:$0xf]
    %v5012 = vld [vmem:[%s4884 + $0x1fc] sm:$0xf]
    %v5013 = vld [vmem:[%s4884 + $0x200] sm:$0xf]
    %v5014 = vld [vmem:[%s4884 + $0x204] sm:$0xf]
    %v5015 = vld [vmem:[%s4884 + $0x208] sm:$0xf]
    %v5016 = vld [vmem:[%s4884 + $0x20c] sm:$0xf]
    %v5017 = vld [vmem:[%s4884 + $0x210] sm:$0xf]
    %v5018 = vld [vmem:[%s4884 + $0x214] sm:$0xf]
    %v5019 = vld [vmem:[%s4884 + $0x218] sm:$0xf]
    %v5020 = vld [vmem:[%s4884 + $0x21c] sm:$0xf]
    %v5021 = vld [vmem:[%s4884 + $0x220] sm:$0xf]
    %v5022 = vld [vmem:[%s4884 + $0x224] sm:$0xf]
    %v5023 = vld [vmem:[%s4884 + $0x228] sm:$0xf]
    %v5024 = vld [vmem:[%s4884 + $0x22c] sm:$0xf]
    %v5025 = vld [vmem:[%s4884 + $0x230] sm:$0xf]
    %v5026 = vld [vmem:[%s4884 + $0x234] sm:$0xf]
    %v5027 = vld [vmem:[%s4884 + $0x238] sm:$0xf]
    %v5028 = vld [vmem:[%s4884 + $0x23c] sm:$0xf]
    %v5029 = vld [vmem:[%s4884 + $0x240] sm:$0x3]
    %v5175 = vunpack.c.l.b16 %v4885
    %v5176 = vunpack.c.l.b16 %v4886
    %v5177 = vunpack.c.l.b16 %v4887
    %v5178 = vunpack.c.l.b16 %v4888
    %v5179 = vunpack.c.l.b16 %v4889
    %v5180 = vunpack.c.l.b16 %v4890
    %v5181 = vunpack.c.l.b16 %v4891
    %v5182 = vunpack.c.l.b16 %v4892
    %v5183 = vunpack.c.l.b16 %v4893
    %v5184 = vunpack.c.l.b16 %v4894
    %v5185 = vunpack.c.l.b16 %v4895
    %v5186 = vunpack.c.l.b16 %v4896
    %v5187 = vunpack.c.l.b16 %v4897
    %v5188 = vunpack.c.l.b16 %v4898
    %v5189 = vunpack.c.l.b16 %v4899
    %v5190 = vunpack.c.l.b16 %v4900
    %v5191 = vunpack.c.l.b16 %v4901
    %v5192 = vunpack.c.l.b16 %v4902
    %v5193 = vunpack.c.l.b16 %v4903
    %v5194 = vunpack.c.l.b16 %v4904
    %v5195 = vunpack.c.l.b16 %v4905
    %v5196 = vunpack.c.l.b16 %v4906
    %v5197 = vunpack.c.l.b16 %v4907
    %v5198 = vunpack.c.l.b16 %v4908
    %v5199 = vunpack.c.l.b16 %v4909
    %v5200 = vunpack.c.l.b16 %v4910
    %v5201 = vunpack.c.l.b16 %v4911
    %v5202 = vunpack.c.l.b16 %v4912
    %v5203 = vunpack.c.l.b16 %v4913
    %v5204 = vunpack.c.l.b16 %v4914
    %v5205 = vunpack.c.l.b16 %v4915
    %v5206 = vunpack.c.l.b16 %v4916
    %v5207 = vunpack.c.l.b16 %v4917
    %v5208 = vunpack.c.l.b16 %v4918
    %v5209 = vunpack.c.l.b16 %v4919
    %v5210 = vunpack.c.l.b16 %v4920
    %v5211 = vunpack.c.l.b16 %v4921
    %v5212 = vunpack.c.l.b16 %v4922
    %v5213 = vunpack.c.l.b16 %v4923
    %v5214 = vunpack.c.l.b16 %v4924
    %v5215 = vunpack.c.l.b16 %v4925
    %v5216 = vunpack.c.l.b16 %v4926
    %v5217 = vunpack.c.l.b16 %v4927
    %v5218 = vunpack.c.l.b16 %v4928
    %v5219 = vunpack.c.l.b16 %v4929
    %v5220 = vunpack.c.l.b16 %v4930
    %v5221 = vunpack.c.l.b16 %v4931
    %v5222 = vunpack.c.l.b16 %v4932
    %v5223 = vunpack.c.l.b16 %v4933
    %v5224 = vunpack.c.l.b16 %v4934
    %v5225 = vunpack.c.l.b16 %v4935
    %v5226 = vunpack.c.l.b16 %v4936
    %v5227 = vunpack.c.l.b16 %v4937
    %v5228 = vunpack.c.l.b16 %v4938
    %v5229 = vunpack.c.l.b16 %v4939
    %v5230 = vunpack.c.l.b16 %v4940
    %v5231 = vunpack.c.l.b16 %v4941
    %v5232 = vunpack.c.l.b16 %v4942
    %v5233 = vunpack.c.l.b16 %v4943
    %v5234 = vunpack.c.l.b16 %v4944
    %v5235 = vunpack.c.l.b16 %v4945
    %v5236 = vunpack.c.l.b16 %v4946
    %v5237 = vunpack.c.l.b16 %v4947
    %v5238 = vunpack.c.l.b16 %v4948
    %v5239 = vunpack.c.l.b16 %v4949
    %v5240 = vunpack.c.l.b16 %v4950
    %v5241 = vunpack.c.l.b16 %v4951
    %v5242 = vunpack.c.l.b16 %v4952
    %v5243 = vunpack.c.l.b16 %v4953
    %v5244 = vunpack.c.l.b16 %v4954
    %v5245 = vunpack.c.l.b16 %v4955
    %v5246 = vunpack.c.l.b16 %v4956
    %v5247 = vunpack.c.l.b16 %v4957
    %v5248 = vunpack.c.l.b16 %v4958
    %v5249 = vunpack.c.l.b16 %v4959
    %v5250 = vunpack.c.l.b16 %v4960
    %v5251 = vunpack.c.l.b16 %v4961
    %v5252 = vunpack.c.l.b16 %v4962
    %v5253 = vunpack.c.l.b16 %v4963
    %v5254 = vunpack.c.l.b16 %v4964
    %v5255 = vunpack.c.l.b16 %v4965
    %v5256 = vunpack.c.l.b16 %v4966
    %v5257 = vunpack.c.l.b16 %v4967
    %v5258 = vunpack.c.l.b16 %v4968
    %v5259 = vunpack.c.l.b16 %v4969
    %v5260 = vunpack.c.l.b16 %v4970
    %v5261 = vunpack.c.l.b16 %v4971
    %v5262 = vunpack.c.l.b16 %v4972
    %v5263 = vunpack.c.l.b16 %v4973
    %v5264 = vunpack.c.l.b16 %v4974
    %v5265 = vunpack.c.l.b16 %v4975
    %v5266 = vunpack.c.l.b16 %v4976
    %v5267 = vunpack.c.l.b16 %v4977
    %v5268 = vunpack.c.l.b16 %v4978
    %v5269 = vunpack.c.l.b16 %v4979
    %v5270 = vunpack.c.l.b16 %v4980
    %v5271 = vunpack.c.l.b16 %v4981
    %v5272 = vunpack.c.l.b16 %v4982
    %v5273 = vunpack.c.l.b16 %v4983
    %v5274 = vunpack.c.l.b16 %v4984
    %v5275 = vunpack.c.l.b16 %v4985
    %v5276 = vunpack.c.l.b16 %v4986
    %v5277 = vunpack.c.l.b16 %v4987
    %v5278 = vunpack.c.l.b16 %v4988
    %v5279 = vunpack.c.l.b16 %v4989
    %v5280 = vunpack.c.l.b16 %v4990
    %v5281 = vunpack.c.l.b16 %v4991
    %v5282 = vunpack.c.l.b16 %v4992
    %v5283 = vunpack.c.l.b16 %v4993
    %v5284 = vunpack.c.l.b16 %v4994
    %v5285 = vunpack.c.l.b16 %v4995
    %v5286 = vunpack.c.l.b16 %v4996
    %v5287 = vunpack.c.l.b16 %v4997
    %v5288 = vunpack.c.l.b16 %v4998
    %v5289 = vunpack.c.l.b16 %v4999
    %v5290 = vunpack.c.l.b16 %v5000
    %v5291 = vunpack.c.l.b16 %v5001
    %v5292 = vunpack.c.l.b16 %v5002
    %v5293 = vunpack.c.l.b16 %v5003
    %v5294 = vunpack.c.l.b16 %v5004
    %v5295 = vunpack.c.l.b16 %v5005
    %v5296 = vunpack.c.l.b16 %v5006
    %v5297 = vunpack.c.l.b16 %v5007
    %v5298 = vunpack.c.l.b16 %v5008
    %v5299 = vunpack.c.l.b16 %v5009
    %v5300 = vunpack.c.l.b16 %v5010
    %v5301 = vunpack.c.l.b16 %v5011
    %v5302 = vunpack.c.l.b16 %v5012
    %v5303 = vunpack.c.l.b16 %v5013
    %v5304 = vunpack.c.l.b16 %v5014
    %v5305 = vunpack.c.l.b16 %v5015
    %v5306 = vunpack.c.l.b16 %v5016
    %v5307 = vunpack.c.l.b16 %v5017
    %v5308 = vunpack.c.l.b16 %v5018
    %v5309 = vunpack.c.l.b16 %v5019
    %v5310 = vunpack.c.l.b16 %v5020
    %v5311 = vunpack.c.l.b16 %v5021
    %v5312 = vunpack.c.l.b16 %v5022
    %v5313 = vunpack.c.l.b16 %v5023
    %v5314 = vunpack.c.l.b16 %v5024
    %v5315 = vunpack.c.l.b16 %v5025
    %v5316 = vunpack.c.l.b16 %v5026
    %v5317 = vunpack.c.l.b16 %v5027
    %v5318 = vunpack.c.l.b16 %v5028
    %v5319 = vunpack.c.l.b16 %v5029
    %v5320 = vpack.c.b16 %v5176, %v5175
    %v5321 = vpack.c.b16 %v5178, %v5177
    %v5322 = vpack.c.b16 %v5180, %v5179
    %v5323 = vpack.c.b16 %v5182, %v5181
    %v5324 = vpack.c.b16 %v5184, %v5183
    %v5325 = vpack.c.b16 %v5186, %v5185
    %v5326 = vpack.c.b16 %v5188, %v5187
    %v5327 = vpack.c.b16 %v5190, %v5189
    %v5328 = vpack.c.b16 %v5192, %v5191
    %v5329 = vpack.c.b16 %v5194, %v5193
    %v5330 = vpack.c.b16 %v5196, %v5195
    %v5331 = vpack.c.b16 %v5198, %v5197
    %v5332 = vpack.c.b16 %v5200, %v5199
    %v5333 = vpack.c.b16 %v5202, %v5201
    %v5334 = vpack.c.b16 %v5204, %v5203
    %v5335 = vpack.c.b16 %v5206, %v5205
    %v5336 = vpack.c.b16 %v5208, %v5207
    %v5337 = vpack.c.b16 %v5210, %v5209
    %v5338 = vpack.c.b16 %v5212, %v5211
    %v5339 = vpack.c.b16 %v5214, %v5213
    %v5340 = vpack.c.b16 %v5216, %v5215
    %v5341 = vpack.c.b16 %v5218, %v5217
    %v5342 = vpack.c.b16 %v5220, %v5219
    %v5343 = vpack.c.b16 %v5222, %v5221
    %v5344 = vpack.c.b16 %v5224, %v5223
    %v5345 = vpack.c.b16 %v5226, %v5225
    %v5346 = vpack.c.b16 %v5228, %v5227
    %v5347 = vpack.c.b16 %v5230, %v5229
    %v5348 = vpack.c.b16 %v5232, %v5231
    %v5349 = vpack.c.b16 %v5234, %v5233
    %v5350 = vpack.c.b16 %v5236, %v5235
    %v5351 = vpack.c.b16 %v5238, %v5237
    %v5352 = vpack.c.b16 %v5240, %v5239
    %v5353 = vpack.c.b16 %v5242, %v5241
    %v5354 = vpack.c.b16 %v5244, %v5243
    %v5355 = vpack.c.b16 %v5246, %v5245
    %v5356 = vpack.c.b16 %v5248, %v5247
    %v5357 = vpack.c.b16 %v5250, %v5249
    %v5358 = vpack.c.b16 %v5252, %v5251
    %v5359 = vpack.c.b16 %v5254, %v5253
    %v5360 = vpack.c.b16 %v5256, %v5255
    %v5361 = vpack.c.b16 %v5258, %v5257
    %v5362 = vpack.c.b16 %v5260, %v5259
    %v5363 = vpack.c.b16 %v5262, %v5261
    %v5364 = vpack.c.b16 %v5264, %v5263
    %v5365 = vpack.c.b16 %v5266, %v5265
    %v5366 = vpack.c.b16 %v5268, %v5267
    %v5367 = vpack.c.b16 %v5270, %v5269
    %v5368 = vpack.c.b16 %v5272, %v5271
    %v5369 = vpack.c.b16 %v5274, %v5273
    %v5370 = vpack.c.b16 %v5276, %v5275
    %v5371 = vpack.c.b16 %v5278, %v5277
    %v5372 = vpack.c.b16 %v5280, %v5279
    %v5373 = vpack.c.b16 %v5282, %v5281
    %v5374 = vpack.c.b16 %v5284, %v5283
    %v5375 = vpack.c.b16 %v5286, %v5285
    %v5376 = vpack.c.b16 %v5288, %v5287
    %v5377 = vpack.c.b16 %v5290, %v5289
    %v5378 = vpack.c.b16 %v5292, %v5291
    %v5379 = vpack.c.b16 %v5294, %v5293
    %v5380 = vpack.c.b16 %v5296, %v5295
    %v5381 = vpack.c.b16 %v5298, %v5297
    %v5382 = vpack.c.b16 %v5300, %v5299
    %v5383 = vpack.c.b16 %v5302, %v5301
    %v5384 = vpack.c.b16 %v5304, %v5303
    %v5385 = vpack.c.b16 %v5306, %v5305
    %v5386 = vpack.c.b16 %v5308, %v5307
    %v5387 = vpack.c.b16 %v5310, %v5309
    %v5388 = vpack.c.b16 %v5312, %v5311
    %v5389 = vpack.c.b16 %v5314, %v5313
    %v5390 = vpack.c.b16 %v5316, %v5315
    %v5391 = vpack.c.b16 %v5318, %v5317
    %v5392 = vpack.c.b16 %v5319, %v5319
    %v5466 = vsel %vm2020, %v4883, 0
    %v5469 = vand.u32 %v5392, %v2027
    %5471 = vmatprep.subr.bf16.mxu0 0
    %5472 = vmatpush1.bf16.msra.mxu0 %v5327
    %5473 = vmatprep.subr.bf16.mxu0 0
    %5474 = vmatpush1.bf16.msra.mxu0 %v5326
    %5475 = vmatprep.subr.bf16.mxu0 0
    %5476 = vmatpush1.bf16.msra.mxu0 %v5325
    %5477 = vmatprep.subr.bf16.mxu0 0
    %5478 = vmatpush1.bf16.msra.mxu0 %v5324
    %5479 = vmatprep.subr.bf16.mxu0 0
    %5480 = vmatpush1.bf16.msra.mxu0 %v5323
    %5481 = vmatprep.subr.bf16.mxu0 0
    %5482 = vmatpush1.bf16.msra.mxu0 %v5322
    %5483 = vmatprep.subr.bf16.mxu0 0
    %5484 = vmatpush1.bf16.msra.mxu0 %v5321
    %5485 = vmatprep.subr.bf16.mxu0 0
    %5486 = vmatpush1.bf16.msra.mxu0 %v5320
    %5487 = vmatprep.subr.bf16.mxu0 0
    %5488 = vmatpush2.bf16.msra.mxu0 %v5335
    %5489 = vmatprep.subr.bf16.mxu0 0
    %5490 = vmatpush2.bf16.msra.mxu0 %v5334
    %5491 = vmatprep.subr.bf16.mxu0 0
    %5492 = vmatpush2.bf16.msra.mxu0 %v5333
    %5493 = vmatprep.subr.bf16.mxu0 0
    %5494 = vmatpush2.bf16.msra.mxu0 %v5332
    %5495 = vmatprep.subr.bf16.mxu0 0
    %5496 = vmatpush2.bf16.msra.mxu0 %v5331
    %5497 = vmatprep.subr.bf16.mxu0 0
    %5498 = vmatpush2.bf16.msra.mxu0 %v5330
    %5499 = vmatprep.subr.bf16.mxu0 0
    %5500 = vmatpush2.bf16.msra.mxu0 %v5329
    %5501 = vmatprep.subr.bf16.mxu0 0
    %5502 = vmatpush2.bf16.msra.mxu0 %v5328
    %5503 = vmatprep.mubr.bf16.mxu0 %v4875
    %5504 = vmatmul.mubr.bf16.gmra.mxu0 %v4874
    %v5505 = vpop.f32.mrf.mxu0
    %v5506 = vadd.f32 0.0, %v5505
    %v5507 = vpop.f32.mrf.mxu0
    %v5508 = vpop.f32.mrf.mxu0
    %v5509 = vpop.f32.mrf.mxu0
    %5510 = vdwg.mxu0
    %5511 = vmatprep.subr.bf16.mxu0 0
    %5512 = vmatpush1.bf16.msra.mxu0 %v5343
    %5513 = vmatprep.subr.bf16.mxu0 0
    %5514 = vmatpush1.bf16.msra.mxu0 %v5342
    %5515 = vmatprep.subr.bf16.mxu0 0
    %5516 = vmatpush1.bf16.msra.mxu0 %v5341
    %5517 = vmatprep.subr.bf16.mxu0 0
    %5518 = vmatpush1.bf16.msra.mxu0 %v5340
    %5519 = vmatprep.subr.bf16.mxu0 0
    %5520 = vmatpush1.bf16.msra.mxu0 %v5339
    %5521 = vmatprep.subr.bf16.mxu0 0
    %5522 = vmatpush1.bf16.msra.mxu0 %v5338
    %5523 = vmatprep.subr.bf16.mxu0 0
    %5524 = vmatpush1.bf16.msra.mxu0 %v5337
    %5525 = vmatprep.subr.bf16.mxu0 0
    %5526 = vmatpush1.bf16.msra.mxu0 %v5336
    %5527 = vmatprep.subr.bf16.mxu0 0
    %5528 = vmatpush2.bf16.msra.mxu0 %v5351
    %5529 = vmatprep.subr.bf16.mxu0 0
    %5530 = vmatpush2.bf16.msra.mxu0 %v5350
    %5531 = vmatprep.subr.bf16.mxu0 0
    %5532 = vmatpush2.bf16.msra.mxu0 %v5349
    %5533 = vmatprep.subr.bf16.mxu0 0
    %5534 = vmatpush2.bf16.msra.mxu0 %v5348
    %5535 = vmatprep.subr.bf16.mxu0 0
    %5536 = vmatpush2.bf16.msra.mxu0 %v5347
    %5537 = vmatprep.subr.bf16.mxu0 0
    %5538 = vmatpush2.bf16.msra.mxu0 %v5346
    %5539 = vmatprep.subr.bf16.mxu0 0
    %5540 = vmatpush2.bf16.msra.mxu0 %v5345
    %5541 = vmatprep.subr.bf16.mxu0 0
    %5542 = vmatpush2.bf16.msra.mxu0 %v5344
    %5543 = vmatprep.mubr.bf16.mxu0 %v4877
    %5544 = vmatmul.mubr.bf16.gmra.mxu0 %v4876
    %v5545 = vpop.f32.mrf.mxu0
    %v5546 = vadd.f32 %v5506, %v5545
    %v5547 = vpop.f32.mrf.mxu0
    %v5548 = vpop.f32.mrf.mxu0
    %v5549 = vpop.f32.mrf.mxu0
    %5550 = vdwg.mxu0
    %5551 = vmatprep.subr.bf16.mxu0 0
    %5552 = vmatpush1.bf16.msra.mxu0 %v5359
    %5553 = vmatprep.subr.bf16.mxu0 0
    %5554 = vmatpush1.bf16.msra.mxu0 %v5358
    %5555 = vmatprep.subr.bf16.mxu0 0
    %5556 = vmatpush1.bf16.msra.mxu0 %v5357
    %5557 = vmatprep.subr.bf16.mxu0 0
    %5558 = vmatpush1.bf16.msra.mxu0 %v5356
    %5559 = vmatprep.subr.bf16.mxu0 0
    %5560 = vmatpush1.bf16.msra.mxu0 %v5355
    %5561 = vmatprep.subr.bf16.mxu0 0
    %5562 = vmatpush1.bf16.msra.mxu0 %v5354
    %5563 = vmatprep.subr.bf16.mxu0 0
    %5564 = vmatpush1.bf16.msra.mxu0 %v5353
    %5565 = vmatprep.subr.bf16.mxu0 0
    %5566 = vmatpush1.bf16.msra.mxu0 %v5352
    %5567 = vmatprep.subr.bf16.mxu0 0
    %5568 = vmatpush2.bf16.msra.mxu0 %v5367
    %5569 = vmatprep.subr.bf16.mxu0 0
    %5570 = vmatpush2.bf16.msra.mxu0 %v5366
    %5571 = vmatprep.subr.bf16.mxu0 0
    %5572 = vmatpush2.bf16.msra.mxu0 %v5365
    %5573 = vmatprep.subr.bf16.mxu0 0
    %5574 = vmatpush2.bf16.msra.mxu0 %v5364
    %5575 = vmatprep.subr.bf16.mxu0 0
    %5576 = vmatpush2.bf16.msra.mxu0 %v5363
    %5577 = vmatprep.subr.bf16.mxu0 0
    %5578 = vmatpush2.bf16.msra.mxu0 %v5362
    %5579 = vmatprep.subr.bf16.mxu0 0
    %5580 = vmatpush2.bf16.msra.mxu0 %v5361
    %5581 = vmatprep.subr.bf16.mxu0 0
    %5582 = vmatpush2.bf16.msra.mxu0 %v5360
    %5583 = vmatprep.mubr.bf16.mxu0 %v4879
    %5584 = vmatmul.mubr.bf16.gmra.mxu0 %v4878
    %v5585 = vpop.f32.mrf.mxu0
    %v5586 = vadd.f32 %v5546, %v5585
    %v5587 = vpop.f32.mrf.mxu0
    %v5588 = vpop.f32.mrf.mxu0
    %v5589 = vpop.f32.mrf.mxu0
    %5590 = vdwg.mxu0
    %5591 = vmatprep.subr.bf16.mxu0 0
    %5592 = vmatpush1.bf16.msra.mxu0 %v5375
    %5593 = vmatprep.subr.bf16.mxu0 0
    %5594 = vmatpush1.bf16.msra.mxu0 %v5374
    %5595 = vmatprep.subr.bf16.mxu0 0
    %5596 = vmatpush1.bf16.msra.mxu0 %v5373
    %5597 = vmatprep.subr.bf16.mxu0 0
    %5598 = vmatpush1.bf16.msra.mxu0 %v5372
    %5599 = vmatprep.subr.bf16.mxu0 0
    %5600 = vmatpush1.bf16.msra.mxu0 %v5371
    %5601 = vmatprep.subr.bf16.mxu0 0
    %5602 = vmatpush1.bf16.msra.mxu0 %v5370
    %5603 = vmatprep.subr.bf16.mxu0 0
    %5604 = vmatpush1.bf16.msra.mxu0 %v5369
    %5605 = vmatprep.subr.bf16.mxu0 0
    %5606 = vmatpush1.bf16.msra.mxu0 %v5368
    %5607 = vmatprep.subr.bf16.mxu0 0
    %5608 = vmatpush2.bf16.msra.mxu0 %v5383
    %5609 = vmatprep.subr.bf16.mxu0 0
    %5610 = vmatpush2.bf16.msra.mxu0 %v5382
    %5611 = vmatprep.subr.bf16.mxu0 0
    %5612 = vmatpush2.bf16.msra.mxu0 %v5381
    %5613 = vmatprep.subr.bf16.mxu0 0
    %5614 = vmatpush2.bf16.msra.mxu0 %v5380
    %5615 = vmatprep.subr.bf16.mxu0 0
    %5616 = vmatpush2.bf16.msra.mxu0 %v5379
    %5617 = vmatprep.subr.bf16.mxu0 0
    %5618 = vmatpush2.bf16.msra.mxu0 %v5378
    %5619 = vmatprep.subr.bf16.mxu0 0
    %5620 = vmatpush2.bf16.msra.mxu0 %v5377
    %5621 = vmatprep.subr.bf16.mxu0 0
    %5622 = vmatpush2.bf16.msra.mxu0 %v5376
    %5623 = vmatprep.mubr.bf16.mxu0 %v4881
    %5624 = vmatmul.mubr.bf16.gmra.mxu0 %v4880
    %v5625 = vpop.f32.mrf.mxu0
    %v5626 = vadd.f32 %v5586, %v5625
    %v5627 = vpop.f32.mrf.mxu0
    %v5628 = vpop.f32.mrf.mxu0
    %v5629 = vpop.f32.mrf.mxu0
    %5630 = vdwg.mxu0
    %5631 = vmatprep.subr.bf16.mxu0 0
    %5632 = vmatpush1.bf16.msra.mxu0 %v5391
    %5633 = vmatprep.subr.bf16.mxu0 0
    %5634 = vmatpush1.bf16.msra.mxu0 %v5390
    %5635 = vmatprep.subr.bf16.mxu0 0
    %5636 = vmatpush1.bf16.msra.mxu0 %v5389
    %5637 = vmatprep.subr.bf16.mxu0 0
    %5638 = vmatpush1.bf16.msra.mxu0 %v5388
    %5639 = vmatprep.subr.bf16.mxu0 0
    %5640 = vmatpush1.bf16.msra.mxu0 %v5387
    %5641 = vmatprep.subr.bf16.mxu0 0
    %5642 = vmatpush1.bf16.msra.mxu0 %v5386
    %5643 = vmatprep.subr.bf16.mxu0 0
    %5644 = vmatpush1.bf16.msra.mxu0 %v5385
    %5645 = vmatprep.subr.bf16.mxu0 0
    %5646 = vmatpush1.bf16.msra.mxu0 %v5384
    %5647 = vmatprep.subr.bf16.mxu0 0
    %5648 = vmatpush2.bf16.msra.mxu0 0
    %5649 = vmatprep.subr.bf16.mxu0 0
    %5650 = vmatpush2.bf16.msra.mxu0 0
    %5651 = vmatprep.subr.bf16.mxu0 0
    %5652 = vmatpush2.bf16.msra.mxu0 0
    %5653 = vmatprep.subr.bf16.mxu0 0
    %5654 = vmatpush2.bf16.msra.mxu0 0
    %5655 = vmatprep.subr.bf16.mxu0 0
    %5656 = vmatpush2.bf16.msra.mxu0 0
    %5657 = vmatprep.subr.bf16.mxu0 0
    %5658 = vmatpush2.bf16.msra.mxu0 0
    %5659 = vmatprep.subr.bf16.mxu0 0
    %5660 = vmatpush2.bf16.msra.mxu0 0
    %5661 = vmatprep.subr.bf16.mxu0 0
    %5662 = vmatpush2.bf16.msra.mxu0 %v5469
    %5663 = vmatprep.mubr.bf16.mxu0 %v5466
    %5664 = vmatmul.mubr.bf16.gmra.mxu0 %v4882
    %v5665 = vpop.f32.mrf.mxu0
    %v5666 = vadd.f32 %v5626, %v5665
    %v5667 = vpop.f32.mrf.mxu0
    %v5668 = vpop.f32.mrf.mxu0
    %v5669 = vpop.f32.mrf.mxu0
    %5670 = vdwg.mxu0
    %v5671 = vadd.f32 %v4271, %v5666
    %s5672 = sld [smem:[#allocation2 + $0x200]]
    %v5673 = vstv %s5672
    %v5674 = vmul.f32 %v52, %v5673
    %v5675 = vmul.f32 %v53, %v5673
    %v5676 = vmul.f32 %v54, %v5673
    %v5677 = vmul.f32 %v55, %v5673
    %v5678 = vmul.f32 %v56, %v5673
    %v5679 = vmul.f32 %v57, %v5673
    %v5680 = vmul.f32 %v58, %v5673
    %v5681 = vmul.f32 %v59, %v5673
    %v5682 = vmul.f32 %v60, %v5673
    %v5683 = vmul.f32 %v61, %v5673
    %s5684 = sld [smem:[#allocation2 + $0x201]]
    %v5685 = vstv %s5684
    %v5686 = vmul.f32 %v52, %v5685
    %v5687 = vmul.f32 %v53, %v5685
    %v5688 = vmul.f32 %v54, %v5685
    %v5689 = vmul.f32 %v55, %v5685
    %v5690 = vmul.f32 %v56, %v5685
    %v5691 = vmul.f32 %v57, %v5685
    %v5692 = vmul.f32 %v58, %v5685
    %v5693 = vmul.f32 %v59, %v5685
    %v5694 = vmul.f32 %v60, %v5685
    %v5695 = vmul.f32 %v61, %v5685
    %5706 = vrot.lane.b32.xlu0 %v5686, 127
    %v5707 = vpop.permute.xlu0 %5706
    %5708 = vrot.lane.b32.xlu0 %v5687, 127
    %v5709 = vpop.permute.xlu0 %5708
    %5710 = vrot.lane.b32.xlu0 %v5688, 127
    %v5711 = vpop.permute.xlu0 %5710
    %5712 = vrot.lane.b32.xlu0 %v5689, 127
    %v5713 = vpop.permute.xlu0 %5712
    %5714 = vrot.lane.b32.xlu0 %v5690, 127
    %v5715 = vpop.permute.xlu0 %5714
    %5716 = vrot.lane.b32.xlu0 %v5691, 127
    %v5717 = vpop.permute.xlu0 %5716
    %5718 = vrot.lane.b32.xlu0 %v5692, 127
    %v5719 = vpop.permute.xlu0 %5718
    %5720 = vrot.lane.b32.xlu0 %v5693, 127
    %v5721 = vpop.permute.xlu0 %5720
    %5722 = vrot.lane.b32.xlu0 %v5694, 127
    %v5723 = vpop.permute.xlu0 %5722
    %5724 = vrot.lane.b32.xlu0 %v5695, 127
    %v5725 = vpop.permute.xlu0 %5724
    %v5726 = vsel %vm116, %v5707, %v5709
    %v5727 = vsel %vm116, %v5709, %v5711
    %v5728 = vsel %vm116, %v5711, %v5713
    %v5729 = vsel %vm116, %v5713, %v5715
    %v5730 = vsel %vm116, %v5715, %v5717
    %v5731 = vsel %vm116, %v5717, %v5719
    %v5732 = vsel %vm116, %v5719, %v5721
    %v5733 = vsel %vm116, %v5721, %v5723
    %v5734 = vsel %vm116, %v5723, %v5725
    %v5745 = vadd.f32 %v5674, %v5726
    %v5746 = vadd.f32 %v5675, %v5727
    %v5747 = vadd.f32 %v5676, %v5728
    %v5748 = vadd.f32 %v5677, %v5729
    %v5749 = vadd.f32 %v5678, %v5730
    %v5750 = vadd.f32 %v5679, %v5731
    %v5751 = vadd.f32 %v5680, %v5732
    %v5752 = vadd.f32 %v5681, %v5733
    %v5753 = vadd.f32 %v5682, %v5734
    %v5754 = vadd.f32 %v5683, %v5725
    %s5755 = sld [smem:[#allocation2 + $0x202]]
    %v5756 = vstv %s5755
    %v5757 = vmul.f32 %v52, %v5756
    %v5758 = vmul.f32 %v53, %v5756
    %v5759 = vmul.f32 %v54, %v5756
    %v5760 = vmul.f32 %v55, %v5756
    %v5761 = vmul.f32 %v56, %v5756
    %v5762 = vmul.f32 %v57, %v5756
    %v5763 = vmul.f32 %v58, %v5756
    %v5764 = vmul.f32 %v59, %v5756
    %v5765 = vmul.f32 %v60, %v5756
    %v5766 = vmul.f32 %v61, %v5756
    %5777 = vrot.lane.b32.xlu0 %v5757, 126
    %v5778 = vpop.permute.xlu0 %5777
    %5779 = vrot.lane.b32.xlu0 %v5758, 126
    %v5780 = vpop.permute.xlu0 %5779
    %5781 = vrot.lane.b32.xlu0 %v5759, 126
    %v5782 = vpop.permute.xlu0 %5781
    %5783 = vrot.lane.b32.xlu0 %v5760, 126
    %v5784 = vpop.permute.xlu0 %5783
    %5785 = vrot.lane.b32.xlu0 %v5761, 126
    %v5786 = vpop.permute.xlu0 %5785
    %5787 = vrot.lane.b32.xlu0 %v5762, 126
    %v5788 = vpop.permute.xlu0 %5787
    %5789 = vrot.lane.b32.xlu0 %v5763, 126
    %v5790 = vpop.permute.xlu0 %5789
    %5791 = vrot.lane.b32.xlu0 %v5764, 126
    %v5792 = vpop.permute.xlu0 %5791
    %5793 = vrot.lane.b32.xlu0 %v5765, 126
    %v5794 = vpop.permute.xlu0 %5793
    %5795 = vrot.lane.b32.xlu0 %v5766, 126
    %v5796 = vpop.permute.xlu0 %5795
    %v5797 = vsel %vm188, %v5778, %v5780
    %v5798 = vsel %vm188, %v5780, %v5782
    %v5799 = vsel %vm188, %v5782, %v5784
    %v5800 = vsel %vm188, %v5784, %v5786
    %v5801 = vsel %vm188, %v5786, %v5788
    %v5802 = vsel %vm188, %v5788, %v5790
    %v5803 = vsel %vm188, %v5790, %v5792
    %v5804 = vsel %vm188, %v5792, %v5794
    %v5805 = vsel %vm188, %v5794, %v5796
    %v5816 = vadd.f32 %v5745, %v5797
    %v5817 = vadd.f32 %v5746, %v5798
    %v5818 = vadd.f32 %v5747, %v5799
    %v5819 = vadd.f32 %v5748, %v5800
    %v5820 = vadd.f32 %v5749, %v5801
    %v5821 = vadd.f32 %v5750, %v5802
    %v5822 = vadd.f32 %v5751, %v5803
    %v5823 = vadd.f32 %v5752, %v5804
    %v5824 = vadd.f32 %v5753, %v5805
    %v5825 = vadd.f32 %v5754, %v5796
    %s5826 = sld [smem:[#allocation2 + $0x203]]
    %v5827 = vstv %s5826
    %v5828 = vmul.f32 %v52, %v5827
    %v5829 = vmul.f32 %v53, %v5827
    %v5830 = vmul.f32 %v54, %v5827
    %v5831 = vmul.f32 %v55, %v5827
    %v5832 = vmul.f32 %v56, %v5827
    %v5833 = vmul.f32 %v57, %v5827
    %v5834 = vmul.f32 %v58, %v5827
    %v5835 = vmul.f32 %v59, %v5827
    %v5836 = vmul.f32 %v60, %v5827
    %v5837 = vmul.f32 %v61, %v5827
    %5848 = vrot.lane.b32.xlu0 %v5828, 93
    %v5849 = vpop.permute.xlu0 %5848
    %5850 = vrot.lane.b32.xlu0 %v5829, 93
    %v5851 = vpop.permute.xlu0 %5850
    %5852 = vrot.lane.b32.xlu0 %v5830, 93
    %v5853 = vpop.permute.xlu0 %5852
    %5854 = vrot.lane.b32.xlu0 %v5831, 93
    %v5855 = vpop.permute.xlu0 %5854
    %5856 = vrot.lane.b32.xlu0 %v5832, 93
    %v5857 = vpop.permute.xlu0 %5856
    %5858 = vrot.lane.b32.xlu0 %v5833, 93
    %v5859 = vpop.permute.xlu0 %5858
    %5860 = vrot.lane.b32.xlu0 %v5834, 93
    %v5861 = vpop.permute.xlu0 %5860
    %5862 = vrot.lane.b32.xlu0 %v5835, 93
    %v5863 = vpop.permute.xlu0 %5862
    %5864 = vrot.lane.b32.xlu0 %v5836, 93
    %v5865 = vpop.permute.xlu0 %5864
    %5866 = vrot.lane.b32.xlu0 %v5837, 93
    %v5867 = vpop.permute.xlu0 %5866
    %v5868 = vsel %vm260, %v5849, %v5851
    %v5869 = vsel %vm260, %v5851, %v5853
    %v5870 = vsel %vm260, %v5853, %v5855
    %v5871 = vsel %vm260, %v5855, %v5857
    %v5872 = vsel %vm260, %v5857, %v5859
    %v5873 = vsel %vm260, %v5859, %v5861
    %v5874 = vsel %vm260, %v5861, %v5863
    %v5875 = vsel %vm260, %v5863, %v5865
    %v5876 = vsel %vm260, %v5865, %v5867
    %v5887 = vadd.f32 %v5816, %v5868
    %v5888 = vadd.f32 %v5817, %v5869
    %v5889 = vadd.f32 %v5818, %v5870
    %v5890 = vadd.f32 %v5819, %v5871
    %v5891 = vadd.f32 %v5820, %v5872
    %v5892 = vadd.f32 %v5821, %v5873
    %v5893 = vadd.f32 %v5822, %v5874
    %v5894 = vadd.f32 %v5823, %v5875
    %v5895 = vadd.f32 %v5824, %v5876
    %v5896 = vadd.f32 %v5825, %v5867
    %s5897 = sld [smem:[#allocation2 + $0x204]]
    %v5898 = vstv %s5897
    %v5899 = vmul.f32 %v52, %v5898
    %v5900 = vmul.f32 %v53, %v5898
    %v5901 = vmul.f32 %v54, %v5898
    %v5902 = vmul.f32 %v55, %v5898
    %v5903 = vmul.f32 %v56, %v5898
    %v5904 = vmul.f32 %v57, %v5898
    %v5905 = vmul.f32 %v58, %v5898
    %v5906 = vmul.f32 %v59, %v5898
    %v5907 = vmul.f32 %v60, %v5898
    %v5908 = vmul.f32 %v61, %v5898
    %5919 = vrot.lane.b32.xlu0 %v5899, 92
    %v5920 = vpop.permute.xlu0 %5919
    %5921 = vrot.lane.b32.xlu0 %v5900, 92
    %v5922 = vpop.permute.xlu0 %5921
    %5923 = vrot.lane.b32.xlu0 %v5901, 92
    %v5924 = vpop.permute.xlu0 %5923
    %5925 = vrot.lane.b32.xlu0 %v5902, 92
    %v5926 = vpop.permute.xlu0 %5925
    %5927 = vrot.lane.b32.xlu0 %v5903, 92
    %v5928 = vpop.permute.xlu0 %5927
    %5929 = vrot.lane.b32.xlu0 %v5904, 92
    %v5930 = vpop.permute.xlu0 %5929
    %5931 = vrot.lane.b32.xlu0 %v5905, 92
    %v5932 = vpop.permute.xlu0 %5931
    %5933 = vrot.lane.b32.xlu0 %v5906, 92
    %v5934 = vpop.permute.xlu0 %5933
    %5935 = vrot.lane.b32.xlu0 %v5907, 92
    %v5936 = vpop.permute.xlu0 %5935
    %5937 = vrot.lane.b32.xlu0 %v5908, 92
    %v5938 = vpop.permute.xlu0 %5937
    %v5939 = vsel %vm332, %v5920, %v5922
    %v5940 = vsel %vm332, %v5922, %v5924
    %v5941 = vsel %vm332, %v5924, %v5926
    %v5942 = vsel %vm332, %v5926, %v5928
    %v5943 = vsel %vm332, %v5928, %v5930
    %v5944 = vsel %vm332, %v5930, %v5932
    %v5945 = vsel %vm332, %v5932, %v5934
    %v5946 = vsel %vm332, %v5934, %v5936
    %v5947 = vsel %vm332, %v5936, %v5938
    %v5958 = vadd.f32 %v5887, %v5939
    %v5959 = vadd.f32 %v5888, %v5940
    %v5960 = vadd.f32 %v5889, %v5941
    %v5961 = vadd.f32 %v5890, %v5942
    %v5962 = vadd.f32 %v5891, %v5943
    %v5963 = vadd.f32 %v5892, %v5944
    %v5964 = vadd.f32 %v5893, %v5945
    %v5965 = vadd.f32 %v5894, %v5946
    %v5966 = vadd.f32 %v5895, %v5947
    %v5967 = vadd.f32 %v5896, %v5938
    %s5968 = sld [smem:[#allocation2 + $0x205]]
    %v5969 = vstv %s5968
    %v5970 = vmul.f32 %v52, %v5969
    %v5971 = vmul.f32 %v53, %v5969
    %v5972 = vmul.f32 %v54, %v5969
    %v5973 = vmul.f32 %v55, %v5969
    %v5974 = vmul.f32 %v56, %v5969
    %v5975 = vmul.f32 %v57, %v5969
    %v5976 = vmul.f32 %v58, %v5969
    %v5977 = vmul.f32 %v59, %v5969
    %v5978 = vmul.f32 %v60, %v5969
    %v5979 = vmul.f32 %v61, %v5969
    %5990 = vrot.lane.b32.xlu0 %v5970, 91
    %v5991 = vpop.permute.xlu0 %5990
    %5992 = vrot.lane.b32.xlu0 %v5971, 91
    %v5993 = vpop.permute.xlu0 %5992
    %5994 = vrot.lane.b32.xlu0 %v5972, 91
    %v5995 = vpop.permute.xlu0 %5994
    %5996 = vrot.lane.b32.xlu0 %v5973, 91
    %v5997 = vpop.permute.xlu0 %5996
    %5998 = vrot.lane.b32.xlu0 %v5974, 91
    %v5999 = vpop.permute.xlu0 %5998
    %6000 = vrot.lane.b32.xlu0 %v5975, 91
    %v6001 = vpop.permute.xlu0 %6000
    %6002 = vrot.lane.b32.xlu0 %v5976, 91
    %v6003 = vpop.permute.xlu0 %6002
    %6004 = vrot.lane.b32.xlu0 %v5977, 91
    %v6005 = vpop.permute.xlu0 %6004
    %6006 = vrot.lane.b32.xlu0 %v5978, 91
    %v6007 = vpop.permute.xlu0 %6006
    %6008 = vrot.lane.b32.xlu0 %v5979, 91
    %v6009 = vpop.permute.xlu0 %6008
    %v6010 = vsel %vm404, %v5991, %v5993
    %v6011 = vsel %vm404, %v5993, %v5995
    %v6012 = vsel %vm404, %v5995, %v5997
    %v6013 = vsel %vm404, %v5997, %v5999
    %v6014 = vsel %vm404, %v5999, %v6001
    %v6015 = vsel %vm404, %v6001, %v6003
    %v6016 = vsel %vm404, %v6003, %v6005
    %v6017 = vsel %vm404, %v6005, %v6007
    %v6018 = vsel %vm404, %v6007, %v6009
    %v6029 = vadd.f32 %v5958, %v6010
    %v6030 = vadd.f32 %v5959, %v6011
    %v6031 = vadd.f32 %v5960, %v6012
    %v6032 = vadd.f32 %v5961, %v6013
    %v6033 = vadd.f32 %v5962, %v6014
    %v6034 = vadd.f32 %v5963, %v6015
    %v6035 = vadd.f32 %v5964, %v6016
    %v6036 = vadd.f32 %v5965, %v6017
    %v6037 = vadd.f32 %v5966, %v6018
    %v6038 = vadd.f32 %v5967, %v6009
    %s6039 = sld [smem:[#allocation2 + $0x206]]
    %v6040 = vstv %s6039
    %v6041 = vmul.f32 %v52, %v6040
    %v6042 = vmul.f32 %v53, %v6040
    %v6043 = vmul.f32 %v54, %v6040
    %v6044 = vmul.f32 %v55, %v6040
    %v6045 = vmul.f32 %v56, %v6040
    %v6046 = vmul.f32 %v57, %v6040
    %v6047 = vmul.f32 %v58, %v6040
    %v6048 = vmul.f32 %v59, %v6040
    %v6049 = vmul.f32 %v60, %v6040
    %v6050 = vmul.f32 %v61, %v6040
    %6061 = vrot.lane.b32.xlu0 %v6041, 58
    %v6062 = vpop.permute.xlu0 %6061
    %6063 = vrot.lane.b32.xlu0 %v6042, 58
    %v6064 = vpop.permute.xlu0 %6063
    %6065 = vrot.lane.b32.xlu0 %v6043, 58
    %v6066 = vpop.permute.xlu0 %6065
    %6067 = vrot.lane.b32.xlu0 %v6044, 58
    %v6068 = vpop.permute.xlu0 %6067
    %6069 = vrot.lane.b32.xlu0 %v6045, 58
    %v6070 = vpop.permute.xlu0 %6069
    %6071 = vrot.lane.b32.xlu0 %v6046, 58
    %v6072 = vpop.permute.xlu0 %6071
    %6073 = vrot.lane.b32.xlu0 %v6047, 58
    %v6074 = vpop.permute.xlu0 %6073
    %6075 = vrot.lane.b32.xlu0 %v6048, 58
    %v6076 = vpop.permute.xlu0 %6075
    %6077 = vrot.lane.b32.xlu0 %v6049, 58
    %v6078 = vpop.permute.xlu0 %6077
    %6079 = vrot.lane.b32.xlu0 %v6050, 58
    %v6080 = vpop.permute.xlu0 %6079
    %v6081 = vsel %vm476, %v6062, %v6064
    %v6082 = vsel %vm476, %v6064, %v6066
    %v6083 = vsel %vm476, %v6066, %v6068
    %v6084 = vsel %vm476, %v6068, %v6070
    %v6085 = vsel %vm476, %v6070, %v6072
    %v6086 = vsel %vm476, %v6072, %v6074
    %v6087 = vsel %vm476, %v6074, %v6076
    %v6088 = vsel %vm476, %v6076, %v6078
    %v6089 = vsel %vm476, %v6078, %v6080
    %v6100 = vadd.f32 %v6029, %v6081
    %v6101 = vadd.f32 %v6030, %v6082
    %v6102 = vadd.f32 %v6031, %v6083
    %v6103 = vadd.f32 %v6032, %v6084
    %v6104 = vadd.f32 %v6033, %v6085
    %v6105 = vadd.f32 %v6034, %v6086
    %v6106 = vadd.f32 %v6035, %v6087
    %v6107 = vadd.f32 %v6036, %v6088
    %v6108 = vadd.f32 %v6037, %v6089
    %v6109 = vadd.f32 %v6038, %v6080
    %s6110 = sld [smem:[#allocation2 + $0x207]]
    %v6111 = vstv %s6110
    %v6112 = vmul.f32 %v52, %v6111
    %v6113 = vmul.f32 %v53, %v6111
    %v6114 = vmul.f32 %v54, %v6111
    %v6115 = vmul.f32 %v55, %v6111
    %v6116 = vmul.f32 %v56, %v6111
    %v6117 = vmul.f32 %v57, %v6111
    %v6118 = vmul.f32 %v58, %v6111
    %v6119 = vmul.f32 %v59, %v6111
    %v6120 = vmul.f32 %v60, %v6111
    %v6121 = vmul.f32 %v61, %v6111
    %6132 = vrot.lane.b32.xlu0 %v6112, 57
    %v6133 = vpop.permute.xlu0 %6132
    %6134 = vrot.lane.b32.xlu0 %v6113, 57
    %v6135 = vpop.permute.xlu0 %6134
    %6136 = vrot.lane.b32.xlu0 %v6114, 57
    %v6137 = vpop.permute.xlu0 %6136
    %6138 = vrot.lane.b32.xlu0 %v6115, 57
    %v6139 = vpop.permute.xlu0 %6138
    %6140 = vrot.lane.b32.xlu0 %v6116, 57
    %v6141 = vpop.permute.xlu0 %6140
    %6142 = vrot.lane.b32.xlu0 %v6117, 57
    %v6143 = vpop.permute.xlu0 %6142
    %6144 = vrot.lane.b32.xlu0 %v6118, 57
    %v6145 = vpop.permute.xlu0 %6144
    %6146 = vrot.lane.b32.xlu0 %v6119, 57
    %v6147 = vpop.permute.xlu0 %6146
    %6148 = vrot.lane.b32.xlu0 %v6120, 57
    %v6149 = vpop.permute.xlu0 %6148
    %6150 = vrot.lane.b32.xlu0 %v6121, 57
    %v6151 = vpop.permute.xlu0 %6150
    %v6152 = vsel %vm548, %v6133, %v6135
    %v6153 = vsel %vm548, %v6135, %v6137
    %v6154 = vsel %vm548, %v6137, %v6139
    %v6155 = vsel %vm548, %v6139, %v6141
    %v6156 = vsel %vm548, %v6141, %v6143
    %v6157 = vsel %vm548, %v6143, %v6145
    %v6158 = vsel %vm548, %v6145, %v6147
    %v6159 = vsel %vm548, %v6147, %v6149
    %v6160 = vsel %vm548, %v6149, %v6151
    %v6171 = vadd.f32 %v6100, %v6152
    %v6172 = vadd.f32 %v6101, %v6153
    %v6173 = vadd.f32 %v6102, %v6154
    %v6174 = vadd.f32 %v6103, %v6155
    %v6175 = vadd.f32 %v6104, %v6156
    %v6176 = vadd.f32 %v6105, %v6157
    %v6177 = vadd.f32 %v6106, %v6158
    %v6178 = vadd.f32 %v6107, %v6159
    %v6179 = vadd.f32 %v6108, %v6160
    %v6180 = vadd.f32 %v6109, %v6151
    %s6181 = sld [smem:[#allocation2 + $0x208]]
    %v6182 = vstv %s6181
    %v6183 = vmul.f32 %v52, %v6182
    %v6184 = vmul.f32 %v53, %v6182
    %v6185 = vmul.f32 %v54, %v6182
    %v6186 = vmul.f32 %v55, %v6182
    %v6187 = vmul.f32 %v56, %v6182
    %v6188 = vmul.f32 %v57, %v6182
    %v6189 = vmul.f32 %v58, %v6182
    %v6190 = vmul.f32 %v59, %v6182
    %v6191 = vmul.f32 %v60, %v6182
    %v6192 = vmul.f32 %v61, %v6182
    %6203 = vrot.lane.b32.xlu0 %v6183, 56
    %v6204 = vpop.permute.xlu0 %6203
    %6205 = vrot.lane.b32.xlu0 %v6184, 56
    %v6206 = vpop.permute.xlu0 %6205
    %6207 = vrot.lane.b32.xlu0 %v6185, 56
    %v6208 = vpop.permute.xlu0 %6207
    %6209 = vrot.lane.b32.xlu0 %v6186, 56
    %v6210 = vpop.permute.xlu0 %6209
    %6211 = vrot.lane.b32.xlu0 %v6187, 56
    %v6212 = vpop.permute.xlu0 %6211
    %6213 = vrot.lane.b32.xlu0 %v6188, 56
    %v6214 = vpop.permute.xlu0 %6213
    %6215 = vrot.lane.b32.xlu0 %v6189, 56
    %v6216 = vpop.permute.xlu0 %6215
    %6217 = vrot.lane.b32.xlu0 %v6190, 56
    %v6218 = vpop.permute.xlu0 %6217
    %6219 = vrot.lane.b32.xlu0 %v6191, 56
    %v6220 = vpop.permute.xlu0 %6219
    %6221 = vrot.lane.b32.xlu0 %v6192, 56
    %v6222 = vpop.permute.xlu0 %6221
    %v6223 = vsel %vm620, %v6204, %v6206
    %v6224 = vsel %vm620, %v6206, %v6208
    %v6225 = vsel %vm620, %v6208, %v6210
    %v6226 = vsel %vm620, %v6210, %v6212
    %v6227 = vsel %vm620, %v6212, %v6214
    %v6228 = vsel %vm620, %v6214, %v6216
    %v6229 = vsel %vm620, %v6216, %v6218
    %v6230 = vsel %vm620, %v6218, %v6220
    %v6231 = vsel %vm620, %v6220, %v6222
    %v6242 = vadd.f32 %v6171, %v6223
    %v6243 = vadd.f32 %v6172, %v6224
    %v6244 = vadd.f32 %v6173, %v6225
    %v6245 = vadd.f32 %v6174, %v6226
    %v6246 = vadd.f32 %v6175, %v6227
    %v6247 = vadd.f32 %v6176, %v6228
    %v6248 = vadd.f32 %v6177, %v6229
    %v6249 = vadd.f32 %v6178, %v6230
    %v6250 = vadd.f32 %v6179, %v6231
    %v6251 = vadd.f32 %v6180, %v6222
    %s6252 = sld [smem:[#allocation4 + $0x4]]
    %v6253 = vstv %s6252
    %v6254 = vadd.f32 %v6242, %v6253
    %v6255 = vadd.f32 %v6243, %v6253
    %v6256 = vadd.f32 %v6244, %v6253
    %v6257 = vadd.f32 %v6245, %v6253
    %v6258 = vadd.f32 %v6246, %v6253
    %v6259 = vadd.f32 %v6247, %v6253
    %v6260 = vadd.f32 %v6248, %v6253
    %v6261 = vadd.f32 %v6249, %v6253
    %v6262 = vadd.f32 %v6250, %v6253
    %v6263 = vadd.f32 %v6251, %v6253
    %v6264 = vmax.f32 %v6254, 0.0
    %v6265 = vmax.f32 %v6255, 0.0
    %v6266 = vmax.f32 %v6256, 0.0
    %v6267 = vmax.f32 %v6257, 0.0
    %v6268 = vmax.f32 %v6258, 0.0
    %v6269 = vmax.f32 %v6259, 0.0
    %v6270 = vmax.f32 %v6260, 0.0
    %v6271 = vmax.f32 %v6261, 0.0
    %v6272 = vmax.f32 %v6262, 0.0
    %v6273 = vmax.f32 %v6263, 0.0
    %v6274 = vpack.c.bf16 %v6264, %v6264
    %v6275 = vpack.c.bf16 %v6265, %v6265
    %v6276 = vpack.c.bf16 %v6266, %v6266
    %v6277 = vpack.c.bf16 %v6267, %v6267
    %v6278 = vpack.c.bf16 %v6268, %v6268
    %v6279 = vpack.c.bf16 %v6269, %v6269
    %v6280 = vpack.c.bf16 %v6270, %v6270
    %v6281 = vpack.c.bf16 %v6271, %v6271
    %v6282 = vpack.c.bf16 %v6272, %v6272
    %v6283 = vpack.c.bf16 %v6273, %v6273
    %s6284 = scalar_lea.vmem %s3, 2320
    %v6285 = vld [vmem:[%s6284] sm:$0xf]
    %v6286 = vld [vmem:[%s6284 + $0x4] sm:$0xf]
    %v6287 = vld [vmem:[%s6284 + $0x8] sm:$0xf]
    %v6288 = vld [vmem:[%s6284 + $0xc] sm:$0xf]
    %v6289 = vld [vmem:[%s6284 + $0x10] sm:$0xf]
    %v6290 = vld [vmem:[%s6284 + $0x14] sm:$0xf]
    %v6291 = vld [vmem:[%s6284 + $0x18] sm:$0xf]
    %v6292 = vld [vmem:[%s6284 + $0x1c] sm:$0xf]
    %v6293 = vld [vmem:[%s6284 + $0x20] sm:$0xf]
    %v6294 = vld [vmem:[%s6284 + $0x24] sm:$0xf]
    %v6295 = vld [vmem:[%s6284 + $0x28] sm:$0xf]
    %v6296 = vld [vmem:[%s6284 + $0x2c] sm:$0xf]
    %v6297 = vld [vmem:[%s6284 + $0x30] sm:$0xf]
    %v6298 = vld [vmem:[%s6284 + $0x34] sm:$0xf]
    %v6299 = vld [vmem:[%s6284 + $0x38] sm:$0xf]
    %v6300 = vld [vmem:[%s6284 + $0x3c] sm:$0xf]
    %v6301 = vld [vmem:[%s6284 + $0x40] sm:$0xf]
    %v6302 = vld [vmem:[%s6284 + $0x44] sm:$0xf]
    %v6303 = vld [vmem:[%s6284 + $0x48] sm:$0xf]
    %v6304 = vld [vmem:[%s6284 + $0x4c] sm:$0xf]
    %v6305 = vld [vmem:[%s6284 + $0x50] sm:$0xf]
    %v6306 = vld [vmem:[%s6284 + $0x54] sm:$0xf]
    %v6307 = vld [vmem:[%s6284 + $0x58] sm:$0xf]
    %v6308 = vld [vmem:[%s6284 + $0x5c] sm:$0xf]
    %v6309 = vld [vmem:[%s6284 + $0x60] sm:$0xf]
    %v6310 = vld [vmem:[%s6284 + $0x64] sm:$0xf]
    %v6311 = vld [vmem:[%s6284 + $0x68] sm:$0xf]
    %v6312 = vld [vmem:[%s6284 + $0x6c] sm:$0xf]
    %v6313 = vld [vmem:[%s6284 + $0x70] sm:$0xf]
    %v6314 = vld [vmem:[%s6284 + $0x74] sm:$0xf]
    %v6315 = vld [vmem:[%s6284 + $0x78] sm:$0xf]
    %v6316 = vld [vmem:[%s6284 + $0x7c] sm:$0xf]
    %v6317 = vld [vmem:[%s6284 + $0x80] sm:$0xf]
    %v6318 = vld [vmem:[%s6284 + $0x84] sm:$0xf]
    %v6319 = vld [vmem:[%s6284 + $0x88] sm:$0xf]
    %v6320 = vld [vmem:[%s6284 + $0x8c] sm:$0xf]
    %v6321 = vld [vmem:[%s6284 + $0x90] sm:$0xf]
    %v6322 = vld [vmem:[%s6284 + $0x94] sm:$0xf]
    %v6323 = vld [vmem:[%s6284 + $0x98] sm:$0xf]
    %v6324 = vld [vmem:[%s6284 + $0x9c] sm:$0xf]
    %v6325 = vld [vmem:[%s6284 + $0xa0] sm:$0xf]
    %v6326 = vld [vmem:[%s6284 + $0xa4] sm:$0xf]
    %v6327 = vld [vmem:[%s6284 + $0xa8] sm:$0xf]
    %v6328 = vld [vmem:[%s6284 + $0xac] sm:$0xf]
    %v6329 = vld [vmem:[%s6284 + $0xb0] sm:$0xf]
    %v6330 = vld [vmem:[%s6284 + $0xb4] sm:$0xf]
    %v6331 = vld [vmem:[%s6284 + $0xb8] sm:$0xf]
    %v6332 = vld [vmem:[%s6284 + $0xbc] sm:$0xf]
    %v6333 = vld [vmem:[%s6284 + $0xc0] sm:$0xf]
    %v6334 = vld [vmem:[%s6284 + $0xc4] sm:$0xf]
    %v6335 = vld [vmem:[%s6284 + $0xc8] sm:$0xf]
    %v6336 = vld [vmem:[%s6284 + $0xcc] sm:$0xf]
    %v6337 = vld [vmem:[%s6284 + $0xd0] sm:$0xf]
    %v6338 = vld [vmem:[%s6284 + $0xd4] sm:$0xf]
    %v6339 = vld [vmem:[%s6284 + $0xd8] sm:$0xf]
    %v6340 = vld [vmem:[%s6284 + $0xdc] sm:$0xf]
    %v6341 = vld [vmem:[%s6284 + $0xe0] sm:$0xf]
    %v6342 = vld [vmem:[%s6284 + $0xe4] sm:$0xf]
    %v6343 = vld [vmem:[%s6284 + $0xe8] sm:$0xf]
    %v6344 = vld [vmem:[%s6284 + $0xec] sm:$0xf]
    %v6345 = vld [vmem:[%s6284 + $0xf0] sm:$0xf]
    %v6346 = vld [vmem:[%s6284 + $0xf4] sm:$0xf]
    %v6347 = vld [vmem:[%s6284 + $0xf8] sm:$0xf]
    %v6348 = vld [vmem:[%s6284 + $0xfc] sm:$0xf]
    %v6349 = vld [vmem:[%s6284 + $0x100] sm:$0xf]
    %v6350 = vld [vmem:[%s6284 + $0x104] sm:$0xf]
    %v6351 = vld [vmem:[%s6284 + $0x108] sm:$0xf]
    %v6352 = vld [vmem:[%s6284 + $0x10c] sm:$0xf]
    %v6353 = vld [vmem:[%s6284 + $0x110] sm:$0xf]
    %v6354 = vld [vmem:[%s6284 + $0x114] sm:$0xf]
    %v6355 = vld [vmem:[%s6284 + $0x118] sm:$0xf]
    %v6356 = vld [vmem:[%s6284 + $0x11c] sm:$0xf]
    %v6357 = vld [vmem:[%s6284 + $0x120] sm:$0xf]
    %v6358 = vld [vmem:[%s6284 + $0x124] sm:$0xf]
    %v6359 = vld [vmem:[%s6284 + $0x128] sm:$0xf]
    %v6360 = vld [vmem:[%s6284 + $0x12c] sm:$0xf]
    %v6361 = vld [vmem:[%s6284 + $0x130] sm:$0xf]
    %v6362 = vld [vmem:[%s6284 + $0x134] sm:$0xf]
    %v6363 = vld [vmem:[%s6284 + $0x138] sm:$0xf]
    %v6364 = vld [vmem:[%s6284 + $0x13c] sm:$0xf]
    %v6365 = vld [vmem:[%s6284 + $0x140] sm:$0xf]
    %v6366 = vld [vmem:[%s6284 + $0x144] sm:$0xf]
    %v6367 = vld [vmem:[%s6284 + $0x148] sm:$0xf]
    %v6368 = vld [vmem:[%s6284 + $0x14c] sm:$0xf]
    %v6369 = vld [vmem:[%s6284 + $0x150] sm:$0xf]
    %v6370 = vld [vmem:[%s6284 + $0x154] sm:$0xf]
    %v6371 = vld [vmem:[%s6284 + $0x158] sm:$0xf]
    %v6372 = vld [vmem:[%s6284 + $0x15c] sm:$0xf]
    %v6373 = vld [vmem:[%s6284 + $0x160] sm:$0xf]
    %v6374 = vld [vmem:[%s6284 + $0x164] sm:$0xf]
    %v6375 = vld [vmem:[%s6284 + $0x168] sm:$0xf]
    %v6376 = vld [vmem:[%s6284 + $0x16c] sm:$0xf]
    %v6377 = vld [vmem:[%s6284 + $0x170] sm:$0xf]
    %v6378 = vld [vmem:[%s6284 + $0x174] sm:$0xf]
    %v6379 = vld [vmem:[%s6284 + $0x178] sm:$0xf]
    %v6380 = vld [vmem:[%s6284 + $0x17c] sm:$0xf]
    %v6381 = vld [vmem:[%s6284 + $0x180] sm:$0xf]
    %v6382 = vld [vmem:[%s6284 + $0x184] sm:$0xf]
    %v6383 = vld [vmem:[%s6284 + $0x188] sm:$0xf]
    %v6384 = vld [vmem:[%s6284 + $0x18c] sm:$0xf]
    %v6385 = vld [vmem:[%s6284 + $0x190] sm:$0xf]
    %v6386 = vld [vmem:[%s6284 + $0x194] sm:$0xf]
    %v6387 = vld [vmem:[%s6284 + $0x198] sm:$0xf]
    %v6388 = vld [vmem:[%s6284 + $0x19c] sm:$0xf]
    %v6389 = vld [vmem:[%s6284 + $0x1a0] sm:$0xf]
    %v6390 = vld [vmem:[%s6284 + $0x1a4] sm:$0xf]
    %v6391 = vld [vmem:[%s6284 + $0x1a8] sm:$0xf]
    %v6392 = vld [vmem:[%s6284 + $0x1ac] sm:$0xf]
    %v6393 = vld [vmem:[%s6284 + $0x1b0] sm:$0xf]
    %v6394 = vld [vmem:[%s6284 + $0x1b4] sm:$0xf]
    %v6395 = vld [vmem:[%s6284 + $0x1b8] sm:$0xf]
    %v6396 = vld [vmem:[%s6284 + $0x1bc] sm:$0xf]
    %v6397 = vld [vmem:[%s6284 + $0x1c0] sm:$0xf]
    %v6398 = vld [vmem:[%s6284 + $0x1c4] sm:$0xf]
    %v6399 = vld [vmem:[%s6284 + $0x1c8] sm:$0xf]
    %v6400 = vld [vmem:[%s6284 + $0x1cc] sm:$0xf]
    %v6401 = vld [vmem:[%s6284 + $0x1d0] sm:$0xf]
    %v6402 = vld [vmem:[%s6284 + $0x1d4] sm:$0xf]
    %v6403 = vld [vmem:[%s6284 + $0x1d8] sm:$0xf]
    %v6404 = vld [vmem:[%s6284 + $0x1dc] sm:$0xf]
    %v6405 = vld [vmem:[%s6284 + $0x1e0] sm:$0xf]
    %v6406 = vld [vmem:[%s6284 + $0x1e4] sm:$0xf]
    %v6407 = vld [vmem:[%s6284 + $0x1e8] sm:$0xf]
    %v6408 = vld [vmem:[%s6284 + $0x1ec] sm:$0xf]
    %v6409 = vld [vmem:[%s6284 + $0x1f0] sm:$0xf]
    %v6410 = vld [vmem:[%s6284 + $0x1f4] sm:$0xf]
    %v6411 = vld [vmem:[%s6284 + $0x1f8] sm:$0xf]
    %v6412 = vld [vmem:[%s6284 + $0x1fc] sm:$0xf]
    %v6413 = vld [vmem:[%s6284 + $0x200] sm:$0xf]
    %v6414 = vld [vmem:[%s6284 + $0x204] sm:$0xf]
    %v6415 = vld [vmem:[%s6284 + $0x208] sm:$0xf]
    %v6416 = vld [vmem:[%s6284 + $0x20c] sm:$0xf]
    %v6417 = vld [vmem:[%s6284 + $0x210] sm:$0xf]
    %v6418 = vld [vmem:[%s6284 + $0x214] sm:$0xf]
    %v6419 = vld [vmem:[%s6284 + $0x218] sm:$0xf]
    %v6420 = vld [vmem:[%s6284 + $0x21c] sm:$0xf]
    %v6421 = vld [vmem:[%s6284 + $0x220] sm:$0xf]
    %v6422 = vld [vmem:[%s6284 + $0x224] sm:$0xf]
    %v6423 = vld [vmem:[%s6284 + $0x228] sm:$0xf]
    %v6424 = vld [vmem:[%s6284 + $0x22c] sm:$0xf]
    %v6425 = vld [vmem:[%s6284 + $0x230] sm:$0xf]
    %v6426 = vld [vmem:[%s6284 + $0x234] sm:$0xf]
    %v6427 = vld [vmem:[%s6284 + $0x238] sm:$0xf]
    %v6428 = vld [vmem:[%s6284 + $0x23c] sm:$0xf]
    %v6429 = vld [vmem:[%s6284 + $0x240] sm:$0x3]
    %v6575 = vunpack.c.l.b16 %v6285
    %v6576 = vunpack.c.l.b16 %v6286
    %v6577 = vunpack.c.l.b16 %v6287
    %v6578 = vunpack.c.l.b16 %v6288
    %v6579 = vunpack.c.l.b16 %v6289
    %v6580 = vunpack.c.l.b16 %v6290
    %v6581 = vunpack.c.l.b16 %v6291
    %v6582 = vunpack.c.l.b16 %v6292
    %v6583 = vunpack.c.l.b16 %v6293
    %v6584 = vunpack.c.l.b16 %v6294
    %v6585 = vunpack.c.l.b16 %v6295
    %v6586 = vunpack.c.l.b16 %v6296
    %v6587 = vunpack.c.l.b16 %v6297
    %v6588 = vunpack.c.l.b16 %v6298
    %v6589 = vunpack.c.l.b16 %v6299
    %v6590 = vunpack.c.l.b16 %v6300
    %v6591 = vunpack.c.l.b16 %v6301
    %v6592 = vunpack.c.l.b16 %v6302
    %v6593 = vunpack.c.l.b16 %v6303
    %v6594 = vunpack.c.l.b16 %v6304
    %v6595 = vunpack.c.l.b16 %v6305
    %v6596 = vunpack.c.l.b16 %v6306
    %v6597 = vunpack.c.l.b16 %v6307
    %v6598 = vunpack.c.l.b16 %v6308
    %v6599 = vunpack.c.l.b16 %v6309
    %v6600 = vunpack.c.l.b16 %v6310
    %v6601 = vunpack.c.l.b16 %v6311
    %v6602 = vunpack.c.l.b16 %v6312
    %v6603 = vunpack.c.l.b16 %v6313
    %v6604 = vunpack.c.l.b16 %v6314
    %v6605 = vunpack.c.l.b16 %v6315
    %v6606 = vunpack.c.l.b16 %v6316
    %v6607 = vunpack.c.l.b16 %v6317
    %v6608 = vunpack.c.l.b16 %v6318
    %v6609 = vunpack.c.l.b16 %v6319
    %v6610 = vunpack.c.l.b16 %v6320
    %v6611 = vunpack.c.l.b16 %v6321
    %v6612 = vunpack.c.l.b16 %v6322
    %v6613 = vunpack.c.l.b16 %v6323
    %v6614 = vunpack.c.l.b16 %v6324
    %v6615 = vunpack.c.l.b16 %v6325
    %v6616 = vunpack.c.l.b16 %v6326
    %v6617 = vunpack.c.l.b16 %v6327
    %v6618 = vunpack.c.l.b16 %v6328
    %v6619 = vunpack.c.l.b16 %v6329
    %v6620 = vunpack.c.l.b16 %v6330
    %v6621 = vunpack.c.l.b16 %v6331
    %v6622 = vunpack.c.l.b16 %v6332
    %v6623 = vunpack.c.l.b16 %v6333
    %v6624 = vunpack.c.l.b16 %v6334
    %v6625 = vunpack.c.l.b16 %v6335
    %v6626 = vunpack.c.l.b16 %v6336
    %v6627 = vunpack.c.l.b16 %v6337
    %v6628 = vunpack.c.l.b16 %v6338
    %v6629 = vunpack.c.l.b16 %v6339
    %v6630 = vunpack.c.l.b16 %v6340
    %v6631 = vunpack.c.l.b16 %v6341
    %v6632 = vunpack.c.l.b16 %v6342
    %v6633 = vunpack.c.l.b16 %v6343
    %v6634 = vunpack.c.l.b16 %v6344
    %v6635 = vunpack.c.l.b16 %v6345
    %v6636 = vunpack.c.l.b16 %v6346
    %v6637 = vunpack.c.l.b16 %v6347
    %v6638 = vunpack.c.l.b16 %v6348
    %v6639 = vunpack.c.l.b16 %v6349
    %v6640 = vunpack.c.l.b16 %v6350
    %v6641 = vunpack.c.l.b16 %v6351
    %v6642 = vunpack.c.l.b16 %v6352
    %v6643 = vunpack.c.l.b16 %v6353
    %v6644 = vunpack.c.l.b16 %v6354
    %v6645 = vunpack.c.l.b16 %v6355
    %v6646 = vunpack.c.l.b16 %v6356
    %v6647 = vunpack.c.l.b16 %v6357
    %v6648 = vunpack.c.l.b16 %v6358
    %v6649 = vunpack.c.l.b16 %v6359
    %v6650 = vunpack.c.l.b16 %v6360
    %v6651 = vunpack.c.l.b16 %v6361
    %v6652 = vunpack.c.l.b16 %v6362
    %v6653 = vunpack.c.l.b16 %v6363
    %v6654 = vunpack.c.l.b16 %v6364
    %v6655 = vunpack.c.l.b16 %v6365
    %v6656 = vunpack.c.l.b16 %v6366
    %v6657 = vunpack.c.l.b16 %v6367
    %v6658 = vunpack.c.l.b16 %v6368
    %v6659 = vunpack.c.l.b16 %v6369
    %v6660 = vunpack.c.l.b16 %v6370
    %v6661 = vunpack.c.l.b16 %v6371
    %v6662 = vunpack.c.l.b16 %v6372
    %v6663 = vunpack.c.l.b16 %v6373
    %v6664 = vunpack.c.l.b16 %v6374
    %v6665 = vunpack.c.l.b16 %v6375
    %v6666 = vunpack.c.l.b16 %v6376
    %v6667 = vunpack.c.l.b16 %v6377
    %v6668 = vunpack.c.l.b16 %v6378
    %v6669 = vunpack.c.l.b16 %v6379
    %v6670 = vunpack.c.l.b16 %v6380
    %v6671 = vunpack.c.l.b16 %v6381
    %v6672 = vunpack.c.l.b16 %v6382
    %v6673 = vunpack.c.l.b16 %v6383
    %v6674 = vunpack.c.l.b16 %v6384
    %v6675 = vunpack.c.l.b16 %v6385
    %v6676 = vunpack.c.l.b16 %v6386
    %v6677 = vunpack.c.l.b16 %v6387
    %v6678 = vunpack.c.l.b16 %v6388
    %v6679 = vunpack.c.l.b16 %v6389
    %v6680 = vunpack.c.l.b16 %v6390
    %v6681 = vunpack.c.l.b16 %v6391
    %v6682 = vunpack.c.l.b16 %v6392
    %v6683 = vunpack.c.l.b16 %v6393
    %v6684 = vunpack.c.l.b16 %v6394
    %v6685 = vunpack.c.l.b16 %v6395
    %v6686 = vunpack.c.l.b16 %v6396
    %v6687 = vunpack.c.l.b16 %v6397
    %v6688 = vunpack.c.l.b16 %v6398
    %v6689 = vunpack.c.l.b16 %v6399
    %v6690 = vunpack.c.l.b16 %v6400
    %v6691 = vunpack.c.l.b16 %v6401
    %v6692 = vunpack.c.l.b16 %v6402
    %v6693 = vunpack.c.l.b16 %v6403
    %v6694 = vunpack.c.l.b16 %v6404
    %v6695 = vunpack.c.l.b16 %v6405
    %v6696 = vunpack.c.l.b16 %v6406
    %v6697 = vunpack.c.l.b16 %v6407
    %v6698 = vunpack.c.l.b16 %v6408
    %v6699 = vunpack.c.l.b16 %v6409
    %v6700 = vunpack.c.l.b16 %v6410
    %v6701 = vunpack.c.l.b16 %v6411
    %v6702 = vunpack.c.l.b16 %v6412
    %v6703 = vunpack.c.l.b16 %v6413
    %v6704 = vunpack.c.l.b16 %v6414
    %v6705 = vunpack.c.l.b16 %v6415
    %v6706 = vunpack.c.l.b16 %v6416
    %v6707 = vunpack.c.l.b16 %v6417
    %v6708 = vunpack.c.l.b16 %v6418
    %v6709 = vunpack.c.l.b16 %v6419
    %v6710 = vunpack.c.l.b16 %v6420
    %v6711 = vunpack.c.l.b16 %v6421
    %v6712 = vunpack.c.l.b16 %v6422
    %v6713 = vunpack.c.l.b16 %v6423
    %v6714 = vunpack.c.l.b16 %v6424
    %v6715 = vunpack.c.l.b16 %v6425
    %v6716 = vunpack.c.l.b16 %v6426
    %v6717 = vunpack.c.l.b16 %v6427
    %v6718 = vunpack.c.l.b16 %v6428
    %v6719 = vunpack.c.l.b16 %v6429
    %v6720 = vpack.c.b16 %v6576, %v6575
    %v6721 = vpack.c.b16 %v6578, %v6577
    %v6722 = vpack.c.b16 %v6580, %v6579
    %v6723 = vpack.c.b16 %v6582, %v6581
    %v6724 = vpack.c.b16 %v6584, %v6583
    %v6725 = vpack.c.b16 %v6586, %v6585
    %v6726 = vpack.c.b16 %v6588, %v6587
    %v6727 = vpack.c.b16 %v6590, %v6589
    %v6728 = vpack.c.b16 %v6592, %v6591
    %v6729 = vpack.c.b16 %v6594, %v6593
    %v6730 = vpack.c.b16 %v6596, %v6595
    %v6731 = vpack.c.b16 %v6598, %v6597
    %v6732 = vpack.c.b16 %v6600, %v6599
    %v6733 = vpack.c.b16 %v6602, %v6601
    %v6734 = vpack.c.b16 %v6604, %v6603
    %v6735 = vpack.c.b16 %v6606, %v6605
    %v6736 = vpack.c.b16 %v6608, %v6607
    %v6737 = vpack.c.b16 %v6610, %v6609
    %v6738 = vpack.c.b16 %v6612, %v6611
    %v6739 = vpack.c.b16 %v6614, %v6613
    %v6740 = vpack.c.b16 %v6616, %v6615
    %v6741 = vpack.c.b16 %v6618, %v6617
    %v6742 = vpack.c.b16 %v6620, %v6619
    %v6743 = vpack.c.b16 %v6622, %v6621
    %v6744 = vpack.c.b16 %v6624, %v6623
    %v6745 = vpack.c.b16 %v6626, %v6625
    %v6746 = vpack.c.b16 %v6628, %v6627
    %v6747 = vpack.c.b16 %v6630, %v6629
    %v6748 = vpack.c.b16 %v6632, %v6631
    %v6749 = vpack.c.b16 %v6634, %v6633
    %v6750 = vpack.c.b16 %v6636, %v6635
    %v6751 = vpack.c.b16 %v6638, %v6637
    %v6752 = vpack.c.b16 %v6640, %v6639
    %v6753 = vpack.c.b16 %v6642, %v6641
    %v6754 = vpack.c.b16 %v6644, %v6643
    %v6755 = vpack.c.b16 %v6646, %v6645
    %v6756 = vpack.c.b16 %v6648, %v6647
    %v6757 = vpack.c.b16 %v6650, %v6649
    %v6758 = vpack.c.b16 %v6652, %v6651
    %v6759 = vpack.c.b16 %v6654, %v6653
    %v6760 = vpack.c.b16 %v6656, %v6655
    %v6761 = vpack.c.b16 %v6658, %v6657
    %v6762 = vpack.c.b16 %v6660, %v6659
    %v6763 = vpack.c.b16 %v6662, %v6661
    %v6764 = vpack.c.b16 %v6664, %v6663
    %v6765 = vpack.c.b16 %v6666, %v6665
    %v6766 = vpack.c.b16 %v6668, %v6667
    %v6767 = vpack.c.b16 %v6670, %v6669
    %v6768 = vpack.c.b16 %v6672, %v6671
    %v6769 = vpack.c.b16 %v6674, %v6673
    %v6770 = vpack.c.b16 %v6676, %v6675
    %v6771 = vpack.c.b16 %v6678, %v6677
    %v6772 = vpack.c.b16 %v6680, %v6679
    %v6773 = vpack.c.b16 %v6682, %v6681
    %v6774 = vpack.c.b16 %v6684, %v6683
    %v6775 = vpack.c.b16 %v6686, %v6685
    %v6776 = vpack.c.b16 %v6688, %v6687
    %v6777 = vpack.c.b16 %v6690, %v6689
    %v6778 = vpack.c.b16 %v6692, %v6691
    %v6779 = vpack.c.b16 %v6694, %v6693
    %v6780 = vpack.c.b16 %v6696, %v6695
    %v6781 = vpack.c.b16 %v6698, %v6697
    %v6782 = vpack.c.b16 %v6700, %v6699
    %v6783 = vpack.c.b16 %v6702, %v6701
    %v6784 = vpack.c.b16 %v6704, %v6703
    %v6785 = vpack.c.b16 %v6706, %v6705
    %v6786 = vpack.c.b16 %v6708, %v6707
    %v6787 = vpack.c.b16 %v6710, %v6709
    %v6788 = vpack.c.b16 %v6712, %v6711
    %v6789 = vpack.c.b16 %v6714, %v6713
    %v6790 = vpack.c.b16 %v6716, %v6715
    %v6791 = vpack.c.b16 %v6718, %v6717
    %v6792 = vpack.c.b16 %v6719, %v6719
    %v6866 = vsel %vm2020, %v6283, 0
    %v6869 = vand.u32 %v6792, %v2027
    %6871 = vmatprep.subr.bf16.mxu0 0
    %6872 = vmatpush1.bf16.msra.mxu0 %v6727
    %6873 = vmatprep.subr.bf16.mxu0 0
    %6874 = vmatpush1.bf16.msra.mxu0 %v6726
    %6875 = vmatprep.subr.bf16.mxu0 0
    %6876 = vmatpush1.bf16.msra.mxu0 %v6725
    %6877 = vmatprep.subr.bf16.mxu0 0
    %6878 = vmatpush1.bf16.msra.mxu0 %v6724
    %6879 = vmatprep.subr.bf16.mxu0 0
    %6880 = vmatpush1.bf16.msra.mxu0 %v6723
    %6881 = vmatprep.subr.bf16.mxu0 0
    %6882 = vmatpush1.bf16.msra.mxu0 %v6722
    %6883 = vmatprep.subr.bf16.mxu0 0
    %6884 = vmatpush1.bf16.msra.mxu0 %v6721
    %6885 = vmatprep.subr.bf16.mxu0 0
    %6886 = vmatpush1.bf16.msra.mxu0 %v6720
    %6887 = vmatprep.subr.bf16.mxu0 0
    %6888 = vmatpush2.bf16.msra.mxu0 %v6735
    %6889 = vmatprep.subr.bf16.mxu0 0
    %6890 = vmatpush2.bf16.msra.mxu0 %v6734
    %6891 = vmatprep.subr.bf16.mxu0 0
    %6892 = vmatpush2.bf16.msra.mxu0 %v6733
    %6893 = vmatprep.subr.bf16.mxu0 0
    %6894 = vmatpush2.bf16.msra.mxu0 %v6732
    %6895 = vmatprep.subr.bf16.mxu0 0
    %6896 = vmatpush2.bf16.msra.mxu0 %v6731
    %6897 = vmatprep.subr.bf16.mxu0 0
    %6898 = vmatpush2.bf16.msra.mxu0 %v6730
    %6899 = vmatprep.subr.bf16.mxu0 0
    %6900 = vmatpush2.bf16.msra.mxu0 %v6729
    %6901 = vmatprep.subr.bf16.mxu0 0
    %6902 = vmatpush2.bf16.msra.mxu0 %v6728
    %6903 = vmatprep.mubr.bf16.mxu0 %v6275
    %6904 = vmatmul.mubr.bf16.gmra.mxu0 %v6274
    %v6905 = vpop.f32.mrf.mxu0
    %v6906 = vadd.f32 0.0, %v6905
    %v6907 = vpop.f32.mrf.mxu0
    %v6908 = vpop.f32.mrf.mxu0
    %v6909 = vpop.f32.mrf.mxu0
    %6910 = vdwg.mxu0
    %6911 = vmatprep.subr.bf16.mxu0 0
    %6912 = vmatpush1.bf16.msra.mxu0 %v6743
    %6913 = vmatprep.subr.bf16.mxu0 0
    %6914 = vmatpush1.bf16.msra.mxu0 %v6742
    %6915 = vmatprep.subr.bf16.mxu0 0
    %6916 = vmatpush1.bf16.msra.mxu0 %v6741
    %6917 = vmatprep.subr.bf16.mxu0 0
    %6918 = vmatpush1.bf16.msra.mxu0 %v6740
    %6919 = vmatprep.subr.bf16.mxu0 0
    %6920 = vmatpush1.bf16.msra.mxu0 %v6739
    %6921 = vmatprep.subr.bf16.mxu0 0
    %6922 = vmatpush1.bf16.msra.mxu0 %v6738
    %6923 = vmatprep.subr.bf16.mxu0 0
    %6924 = vmatpush1.bf16.msra.mxu0 %v6737
    %6925 = vmatprep.subr.bf16.mxu0 0
    %6926 = vmatpush1.bf16.msra.mxu0 %v6736
    %6927 = vmatprep.subr.bf16.mxu0 0
    %6928 = vmatpush2.bf16.msra.mxu0 %v6751
    %6929 = vmatprep.subr.bf16.mxu0 0
    %6930 = vmatpush2.bf16.msra.mxu0 %v6750
    %6931 = vmatprep.subr.bf16.mxu0 0
    %6932 = vmatpush2.bf16.msra.mxu0 %v6749
    %6933 = vmatprep.subr.bf16.mxu0 0
    %6934 = vmatpush2.bf16.msra.mxu0 %v6748
    %6935 = vmatprep.subr.bf16.mxu0 0
    %6936 = vmatpush2.bf16.msra.mxu0 %v6747
    %6937 = vmatprep.subr.bf16.mxu0 0
    %6938 = vmatpush2.bf16.msra.mxu0 %v6746
    %6939 = vmatprep.subr.bf16.mxu0 0
    %6940 = vmatpush2.bf16.msra.mxu0 %v6745
    %6941 = vmatprep.subr.bf16.mxu0 0
    %6942 = vmatpush2.bf16.msra.mxu0 %v6744
    %6943 = vmatprep.mubr.bf16.mxu0 %v6277
    %6944 = vmatmul.mubr.bf16.gmra.mxu0 %v6276
    %v6945 = vpop.f32.mrf.mxu0
    %v6946 = vadd.f32 %v6906, %v6945
    %v6947 = vpop.f32.mrf.mxu0
    %v6948 = vpop.f32.mrf.mxu0
    %v6949 = vpop.f32.mrf.mxu0
    %6950 = vdwg.mxu0
    %6951 = vmatprep.subr.bf16.mxu0 0
    %6952 = vmatpush1.bf16.msra.mxu0 %v6759
    %6953 = vmatprep.subr.bf16.mxu0 0
    %6954 = vmatpush1.bf16.msra.mxu0 %v6758
    %6955 = vmatprep.subr.bf16.mxu0 0
    %6956 = vmatpush1.bf16.msra.mxu0 %v6757
    %6957 = vmatprep.subr.bf16.mxu0 0
    %6958 = vmatpush1.bf16.msra.mxu0 %v6756
    %6959 = vmatprep.subr.bf16.mxu0 0
    %6960 = vmatpush1.bf16.msra.mxu0 %v6755
    %6961 = vmatprep.subr.bf16.mxu0 0
    %6962 = vmatpush1.bf16.msra.mxu0 %v6754
    %6963 = vmatprep.subr.bf16.mxu0 0
    %6964 = vmatpush1.bf16.msra.mxu0 %v6753
    %6965 = vmatprep.subr.bf16.mxu0 0
    %6966 = vmatpush1.bf16.msra.mxu0 %v6752
    %6967 = vmatprep.subr.bf16.mxu0 0
    %6968 = vmatpush2.bf16.msra.mxu0 %v6767
    %6969 = vmatprep.subr.bf16.mxu0 0
    %6970 = vmatpush2.bf16.msra.mxu0 %v6766
    %6971 = vmatprep.subr.bf16.mxu0 0
    %6972 = vmatpush2.bf16.msra.mxu0 %v6765
    %6973 = vmatprep.subr.bf16.mxu0 0
    %6974 = vmatpush2.bf16.msra.mxu0 %v6764
    %6975 = vmatprep.subr.bf16.mxu0 0
    %6976 = vmatpush2.bf16.msra.mxu0 %v6763
    %6977 = vmatprep.subr.bf16.mxu0 0
    %6978 = vmatpush2.bf16.msra.mxu0 %v6762
    %6979 = vmatprep.subr.bf16.mxu0 0
    %6980 = vmatpush2.bf16.msra.mxu0 %v6761
    %6981 = vmatprep.subr.bf16.mxu0 0
    %6982 = vmatpush2.bf16.msra.mxu0 %v6760
    %6983 = vmatprep.mubr.bf16.mxu0 %v6279
    %6984 = vmatmul.mubr.bf16.gmra.mxu0 %v6278
    %v6985 = vpop.f32.mrf.mxu0
    %v6986 = vadd.f32 %v6946, %v6985
    %v6987 = vpop.f32.mrf.mxu0
    %v6988 = vpop.f32.mrf.mxu0
    %v6989 = vpop.f32.mrf.mxu0
    %6990 = vdwg.mxu0
    %6991 = vmatprep.subr.bf16.mxu0 0
    %6992 = vmatpush1.bf16.msra.mxu0 %v6775
    %6993 = vmatprep.subr.bf16.mxu0 0
    %6994 = vmatpush1.bf16.msra.mxu0 %v6774
    %6995 = vmatprep.subr.bf16.mxu0 0
    %6996 = vmatpush1.bf16.msra.mxu0 %v6773
    %6997 = vmatprep.subr.bf16.mxu0 0
    %6998 = vmatpush1.bf16.msra.mxu0 %v6772
    %6999 = vmatprep.subr.bf16.mxu0 0
    %7000 = vmatpush1.bf16.msra.mxu0 %v6771
    %7001 = vmatprep.subr.bf16.mxu0 0
    %7002 = vmatpush1.bf16.msra.mxu0 %v6770
    %7003 = vmatprep.subr.bf16.mxu0 0
    %7004 = vmatpush1.bf16.msra.mxu0 %v6769
    %7005 = vmatprep.subr.bf16.mxu0 0
    %7006 = vmatpush1.bf16.msra.mxu0 %v6768
    %7007 = vmatprep.subr.bf16.mxu0 0
    %7008 = vmatpush2.bf16.msra.mxu0 %v6783
    %7009 = vmatprep.subr.bf16.mxu0 0
    %7010 = vmatpush2.bf16.msra.mxu0 %v6782
    %7011 = vmatprep.subr.bf16.mxu0 0
    %7012 = vmatpush2.bf16.msra.mxu0 %v6781
    %7013 = vmatprep.subr.bf16.mxu0 0
    %7014 = vmatpush2.bf16.msra.mxu0 %v6780
    %7015 = vmatprep.subr.bf16.mxu0 0
    %7016 = vmatpush2.bf16.msra.mxu0 %v6779
    %7017 = vmatprep.subr.bf16.mxu0 0
    %7018 = vmatpush2.bf16.msra.mxu0 %v6778
    %7019 = vmatprep.subr.bf16.mxu0 0
    %7020 = vmatpush2.bf16.msra.mxu0 %v6777
    %7021 = vmatprep.subr.bf16.mxu0 0
    %7022 = vmatpush2.bf16.msra.mxu0 %v6776
    %7023 = vmatprep.mubr.bf16.mxu0 %v6281
    %7024 = vmatmul.mubr.bf16.gmra.mxu0 %v6280
    %v7025 = vpop.f32.mrf.mxu0
    %v7026 = vadd.f32 %v6986, %v7025
    %v7027 = vpop.f32.mrf.mxu0
    %v7028 = vpop.f32.mrf.mxu0
    %v7029 = vpop.f32.mrf.mxu0
    %7030 = vdwg.mxu0
    %7031 = vmatprep.subr.bf16.mxu0 0
    %7032 = vmatpush1.bf16.msra.mxu0 %v6791
    %7033 = vmatprep.subr.bf16.mxu0 0
    %7034 = vmatpush1.bf16.msra.mxu0 %v6790
    %7035 = vmatprep.subr.bf16.mxu0 0
    %7036 = vmatpush1.bf16.msra.mxu0 %v6789
    %7037 = vmatprep.subr.bf16.mxu0 0
    %7038 = vmatpush1.bf16.msra.mxu0 %v6788
    %7039 = vmatprep.subr.bf16.mxu0 0
    %7040 = vmatpush1.bf16.msra.mxu0 %v6787
    %7041 = vmatprep.subr.bf16.mxu0 0
    %7042 = vmatpush1.bf16.msra.mxu0 %v6786
    %7043 = vmatprep.subr.bf16.mxu0 0
    %7044 = vmatpush1.bf16.msra.mxu0 %v6785
    %7045 = vmatprep.subr.bf16.mxu0 0
    %7046 = vmatpush1.bf16.msra.mxu0 %v6784
    %7047 = vmatprep.subr.bf16.mxu0 0
    %7048 = vmatpush2.bf16.msra.mxu0 0
    %7049 = vmatprep.subr.bf16.mxu0 0
    %7050 = vmatpush2.bf16.msra.mxu0 0
    %7051 = vmatprep.subr.bf16.mxu0 0
    %7052 = vmatpush2.bf16.msra.mxu0 0
    %7053 = vmatprep.subr.bf16.mxu0 0
    %7054 = vmatpush2.bf16.msra.mxu0 0
    %7055 = vmatprep.subr.bf16.mxu0 0
    %7056 = vmatpush2.bf16.msra.mxu0 0
    %7057 = vmatprep.subr.bf16.mxu0 0
    %7058 = vmatpush2.bf16.msra.mxu0 0
    %7059 = vmatprep.subr.bf16.mxu0 0
    %7060 = vmatpush2.bf16.msra.mxu0 0
    %7061 = vmatprep.subr.bf16.mxu0 0
    %7062 = vmatpush2.bf16.msra.mxu0 %v6869
    %7063 = vmatprep.mubr.bf16.mxu0 %v6866
    %7064 = vmatmul.mubr.bf16.gmra.mxu0 %v6282
    %v7065 = vpop.f32.mrf.mxu0
    %v7066 = vadd.f32 %v7026, %v7065
    %v7067 = vpop.f32.mrf.mxu0
    %v7068 = vpop.f32.mrf.mxu0
    %v7069 = vpop.f32.mrf.mxu0
    %7070 = vdwg.mxu0
    %v7071 = vadd.f32 %v5671, %v7066
    %s7072 = sld [smem:[#allocation2 + $0x280]]
    %v7073 = vstv %s7072
    %v7074 = vmul.f32 %v52, %v7073
    %v7075 = vmul.f32 %v53, %v7073
    %v7076 = vmul.f32 %v54, %v7073
    %v7077 = vmul.f32 %v55, %v7073
    %v7078 = vmul.f32 %v56, %v7073
    %v7079 = vmul.f32 %v57, %v7073
    %v7080 = vmul.f32 %v58, %v7073
    %v7081 = vmul.f32 %v59, %v7073
    %v7082 = vmul.f32 %v60, %v7073
    %v7083 = vmul.f32 %v61, %v7073
    %s7084 = sld [smem:[#allocation2 + $0x281]]
    %v7085 = vstv %s7084
    %v7086 = vmul.f32 %v52, %v7085
    %v7087 = vmul.f32 %v53, %v7085
    %v7088 = vmul.f32 %v54, %v7085
    %v7089 = vmul.f32 %v55, %v7085
    %v7090 = vmul.f32 %v56, %v7085
    %v7091 = vmul.f32 %v57, %v7085
    %v7092 = vmul.f32 %v58, %v7085
    %v7093 = vmul.f32 %v59, %v7085
    %v7094 = vmul.f32 %v60, %v7085
    %v7095 = vmul.f32 %v61, %v7085
    %7106 = vrot.lane.b32.xlu0 %v7086, 127
    %v7107 = vpop.permute.xlu0 %7106
    %7108 = vrot.lane.b32.xlu0 %v7087, 127
    %v7109 = vpop.permute.xlu0 %7108
    %7110 = vrot.lane.b32.xlu0 %v7088, 127
    %v7111 = vpop.permute.xlu0 %7110
    %7112 = vrot.lane.b32.xlu0 %v7089, 127
    %v7113 = vpop.permute.xlu0 %7112
    %7114 = vrot.lane.b32.xlu0 %v7090, 127
    %v7115 = vpop.permute.xlu0 %7114
    %7116 = vrot.lane.b32.xlu0 %v7091, 127
    %v7117 = vpop.permute.xlu0 %7116
    %7118 = vrot.lane.b32.xlu0 %v7092, 127
    %v7119 = vpop.permute.xlu0 %7118
    %7120 = vrot.lane.b32.xlu0 %v7093, 127
    %v7121 = vpop.permute.xlu0 %7120
    %7122 = vrot.lane.b32.xlu0 %v7094, 127
    %v7123 = vpop.permute.xlu0 %7122
    %7124 = vrot.lane.b32.xlu0 %v7095, 127
    %v7125 = vpop.permute.xlu0 %7124
    %v7126 = vsel %vm116, %v7107, %v7109
    %v7127 = vsel %vm116, %v7109, %v7111
    %v7128 = vsel %vm116, %v7111, %v7113
    %v7129 = vsel %vm116, %v7113, %v7115
    %v7130 = vsel %vm116, %v7115, %v7117
    %v7131 = vsel %vm116, %v7117, %v7119
    %v7132 = vsel %vm116, %v7119, %v7121
    %v7133 = vsel %vm116, %v7121, %v7123
    %v7134 = vsel %vm116, %v7123, %v7125
    %v7145 = vadd.f32 %v7074, %v7126
    %v7146 = vadd.f32 %v7075, %v7127
    %v7147 = vadd.f32 %v7076, %v7128
    %v7148 = vadd.f32 %v7077, %v7129
    %v7149 = vadd.f32 %v7078, %v7130
    %v7150 = vadd.f32 %v7079, %v7131
    %v7151 = vadd.f32 %v7080, %v7132
    %v7152 = vadd.f32 %v7081, %v7133
    %v7153 = vadd.f32 %v7082, %v7134
    %v7154 = vadd.f32 %v7083, %v7125
    %s7155 = sld [smem:[#allocation2 + $0x282]]
    %v7156 = vstv %s7155
    %v7157 = vmul.f32 %v52, %v7156
    %v7158 = vmul.f32 %v53, %v7156
    %v7159 = vmul.f32 %v54, %v7156
    %v7160 = vmul.f32 %v55, %v7156
    %v7161 = vmul.f32 %v56, %v7156
    %v7162 = vmul.f32 %v57, %v7156
    %v7163 = vmul.f32 %v58, %v7156
    %v7164 = vmul.f32 %v59, %v7156
    %v7165 = vmul.f32 %v60, %v7156
    %v7166 = vmul.f32 %v61, %v7156
    %7177 = vrot.lane.b32.xlu0 %v7157, 126
    %v7178 = vpop.permute.xlu0 %7177
    %7179 = vrot.lane.b32.xlu0 %v7158, 126
    %v7180 = vpop.permute.xlu0 %7179
    %7181 = vrot.lane.b32.xlu0 %v7159, 126
    %v7182 = vpop.permute.xlu0 %7181
    %7183 = vrot.lane.b32.xlu0 %v7160, 126
    %v7184 = vpop.permute.xlu0 %7183
    %7185 = vrot.lane.b32.xlu0 %v7161, 126
    %v7186 = vpop.permute.xlu0 %7185
    %7187 = vrot.lane.b32.xlu0 %v7162, 126
    %v7188 = vpop.permute.xlu0 %7187
    %7189 = vrot.lane.b32.xlu0 %v7163, 126
    %v7190 = vpop.permute.xlu0 %7189
    %7191 = vrot.lane.b32.xlu0 %v7164, 126
    %v7192 = vpop.permute.xlu0 %7191
    %7193 = vrot.lane.b32.xlu0 %v7165, 126
    %v7194 = vpop.permute.xlu0 %7193
    %7195 = vrot.lane.b32.xlu0 %v7166, 126
    %v7196 = vpop.permute.xlu0 %7195
    %v7197 = vsel %vm188, %v7178, %v7180
    %v7198 = vsel %vm188, %v7180, %v7182
    %v7199 = vsel %vm188, %v7182, %v7184
    %v7200 = vsel %vm188, %v7184, %v7186
    %v7201 = vsel %vm188, %v7186, %v7188
    %v7202 = vsel %vm188, %v7188, %v7190
    %v7203 = vsel %vm188, %v7190, %v7192
    %v7204 = vsel %vm188, %v7192, %v7194
    %v7205 = vsel %vm188, %v7194, %v7196
    %v7216 = vadd.f32 %v7145, %v7197
    %v7217 = vadd.f32 %v7146, %v7198
    %v7218 = vadd.f32 %v7147, %v7199
    %v7219 = vadd.f32 %v7148, %v7200
    %v7220 = vadd.f32 %v7149, %v7201
    %v7221 = vadd.f32 %v7150, %v7202
    %v7222 = vadd.f32 %v7151, %v7203
    %v7223 = vadd.f32 %v7152, %v7204
    %v7224 = vadd.f32 %v7153, %v7205
    %v7225 = vadd.f32 %v7154, %v7196
    %s7226 = sld [smem:[#allocation2 + $0x283]]
    %v7227 = vstv %s7226
    %v7228 = vmul.f32 %v52, %v7227
    %v7229 = vmul.f32 %v53, %v7227
    %v7230 = vmul.f32 %v54, %v7227
    %v7231 = vmul.f32 %v55, %v7227
    %v7232 = vmul.f32 %v56, %v7227
    %v7233 = vmul.f32 %v57, %v7227
    %v7234 = vmul.f32 %v58, %v7227
    %v7235 = vmul.f32 %v59, %v7227
    %v7236 = vmul.f32 %v60, %v7227
    %v7237 = vmul.f32 %v61, %v7227
    %7248 = vrot.lane.b32.xlu0 %v7228, 93
    %v7249 = vpop.permute.xlu0 %7248
    %7250 = vrot.lane.b32.xlu0 %v7229, 93
    %v7251 = vpop.permute.xlu0 %7250
    %7252 = vrot.lane.b32.xlu0 %v7230, 93
    %v7253 = vpop.permute.xlu0 %7252
    %7254 = vrot.lane.b32.xlu0 %v7231, 93
    %v7255 = vpop.permute.xlu0 %7254
    %7256 = vrot.lane.b32.xlu0 %v7232, 93
    %v7257 = vpop.permute.xlu0 %7256
    %7258 = vrot.lane.b32.xlu0 %v7233, 93
    %v7259 = vpop.permute.xlu0 %7258
    %7260 = vrot.lane.b32.xlu0 %v7234, 93
    %v7261 = vpop.permute.xlu0 %7260
    %7262 = vrot.lane.b32.xlu0 %v7235, 93
    %v7263 = vpop.permute.xlu0 %7262
    %7264 = vrot.lane.b32.xlu0 %v7236, 93
    %v7265 = vpop.permute.xlu0 %7264
    %7266 = vrot.lane.b32.xlu0 %v7237, 93
    %v7267 = vpop.permute.xlu0 %7266
    %v7268 = vsel %vm260, %v7249, %v7251
    %v7269 = vsel %vm260, %v7251, %v7253
    %v7270 = vsel %vm260, %v7253, %v7255
    %v7271 = vsel %vm260, %v7255, %v7257
    %v7272 = vsel %vm260, %v7257, %v7259
    %v7273 = vsel %vm260, %v7259, %v7261
    %v7274 = vsel %vm260, %v7261, %v7263
    %v7275 = vsel %vm260, %v7263, %v7265
    %v7276 = vsel %vm260, %v7265, %v7267
    %v7287 = vadd.f32 %v7216, %v7268
    %v7288 = vadd.f32 %v7217, %v7269
    %v7289 = vadd.f32 %v7218, %v7270
    %v7290 = vadd.f32 %v7219, %v7271
    %v7291 = vadd.f32 %v7220, %v7272
    %v7292 = vadd.f32 %v7221, %v7273
    %v7293 = vadd.f32 %v7222, %v7274
    %v7294 = vadd.f32 %v7223, %v7275
    %v7295 = vadd.f32 %v7224, %v7276
    %v7296 = vadd.f32 %v7225, %v7267
    %s7297 = sld [smem:[#allocation2 + $0x284]]
    %v7298 = vstv %s7297
    %v7299 = vmul.f32 %v52, %v7298
    %v7300 = vmul.f32 %v53, %v7298
    %v7301 = vmul.f32 %v54, %v7298
    %v7302 = vmul.f32 %v55, %v7298
    %v7303 = vmul.f32 %v56, %v7298
    %v7304 = vmul.f32 %v57, %v7298
    %v7305 = vmul.f32 %v58, %v7298
    %v7306 = vmul.f32 %v59, %v7298
    %v7307 = vmul.f32 %v60, %v7298
    %v7308 = vmul.f32 %v61, %v7298
    %7319 = vrot.lane.b32.xlu0 %v7299, 92
    %v7320 = vpop.permute.xlu0 %7319
    %7321 = vrot.lane.b32.xlu0 %v7300, 92
    %v7322 = vpop.permute.xlu0 %7321
    %7323 = vrot.lane.b32.xlu0 %v7301, 92
    %v7324 = vpop.permute.xlu0 %7323
    %7325 = vrot.lane.b32.xlu0 %v7302, 92
    %v7326 = vpop.permute.xlu0 %7325
    %7327 = vrot.lane.b32.xlu0 %v7303, 92
    %v7328 = vpop.permute.xlu0 %7327
    %7329 = vrot.lane.b32.xlu0 %v7304, 92
    %v7330 = vpop.permute.xlu0 %7329
    %7331 = vrot.lane.b32.xlu0 %v7305, 92
    %v7332 = vpop.permute.xlu0 %7331
    %7333 = vrot.lane.b32.xlu0 %v7306, 92
    %v7334 = vpop.permute.xlu0 %7333
    %7335 = vrot.lane.b32.xlu0 %v7307, 92
    %v7336 = vpop.permute.xlu0 %7335
    %7337 = vrot.lane.b32.xlu0 %v7308, 92
    %v7338 = vpop.permute.xlu0 %7337
    %v7339 = vsel %vm332, %v7320, %v7322
    %v7340 = vsel %vm332, %v7322, %v7324
    %v7341 = vsel %vm332, %v7324, %v7326
    %v7342 = vsel %vm332, %v7326, %v7328
    %v7343 = vsel %vm332, %v7328, %v7330
    %v7344 = vsel %vm332, %v7330, %v7332
    %v7345 = vsel %vm332, %v7332, %v7334
    %v7346 = vsel %vm332, %v7334, %v7336
    %v7347 = vsel %vm332, %v7336, %v7338
    %v7358 = vadd.f32 %v7287, %v7339
    %v7359 = vadd.f32 %v7288, %v7340
    %v7360 = vadd.f32 %v7289, %v7341
    %v7361 = vadd.f32 %v7290, %v7342
    %v7362 = vadd.f32 %v7291, %v7343
    %v7363 = vadd.f32 %v7292, %v7344
    %v7364 = vadd.f32 %v7293, %v7345
    %v7365 = vadd.f32 %v7294, %v7346
    %v7366 = vadd.f32 %v7295, %v7347
    %v7367 = vadd.f32 %v7296, %v7338
    %s7368 = sld [smem:[#allocation2 + $0x285]]
    %v7369 = vstv %s7368
    %v7370 = vmul.f32 %v52, %v7369
    %v7371 = vmul.f32 %v53, %v7369
    %v7372 = vmul.f32 %v54, %v7369
    %v7373 = vmul.f32 %v55, %v7369
    %v7374 = vmul.f32 %v56, %v7369
    %v7375 = vmul.f32 %v57, %v7369
    %v7376 = vmul.f32 %v58, %v7369
    %v7377 = vmul.f32 %v59, %v7369
    %v7378 = vmul.f32 %v60, %v7369
    %v7379 = vmul.f32 %v61, %v7369
    %7390 = vrot.lane.b32.xlu0 %v7370, 91
    %v7391 = vpop.permute.xlu0 %7390
    %7392 = vrot.lane.b32.xlu0 %v7371, 91
    %v7393 = vpop.permute.xlu0 %7392
    %7394 = vrot.lane.b32.xlu0 %v7372, 91
    %v7395 = vpop.permute.xlu0 %7394
    %7396 = vrot.lane.b32.xlu0 %v7373, 91
    %v7397 = vpop.permute.xlu0 %7396
    %7398 = vrot.lane.b32.xlu0 %v7374, 91
    %v7399 = vpop.permute.xlu0 %7398
    %7400 = vrot.lane.b32.xlu0 %v7375, 91
    %v7401 = vpop.permute.xlu0 %7400
    %7402 = vrot.lane.b32.xlu0 %v7376, 91
    %v7403 = vpop.permute.xlu0 %7402
    %7404 = vrot.lane.b32.xlu0 %v7377, 91
    %v7405 = vpop.permute.xlu0 %7404
    %7406 = vrot.lane.b32.xlu0 %v7378, 91
    %v7407 = vpop.permute.xlu0 %7406
    %7408 = vrot.lane.b32.xlu0 %v7379, 91
    %v7409 = vpop.permute.xlu0 %7408
    %v7410 = vsel %vm404, %v7391, %v7393
    %v7411 = vsel %vm404, %v7393, %v7395
    %v7412 = vsel %vm404, %v7395, %v7397
    %v7413 = vsel %vm404, %v7397, %v7399
    %v7414 = vsel %vm404, %v7399, %v7401
    %v7415 = vsel %vm404, %v7401, %v7403
    %v7416 = vsel %vm404, %v7403, %v7405
    %v7417 = vsel %vm404, %v7405, %v7407
    %v7418 = vsel %vm404, %v7407, %v7409
    %v7429 = vadd.f32 %v7358, %v7410
    %v7430 = vadd.f32 %v7359, %v7411
    %v7431 = vadd.f32 %v7360, %v7412
    %v7432 = vadd.f32 %v7361, %v7413
    %v7433 = vadd.f32 %v7362, %v7414
    %v7434 = vadd.f32 %v7363, %v7415
    %v7435 = vadd.f32 %v7364, %v7416
    %v7436 = vadd.f32 %v7365, %v7417
    %v7437 = vadd.f32 %v7366, %v7418
    %v7438 = vadd.f32 %v7367, %v7409
    %s7439 = sld [smem:[#allocation2 + $0x286]]
    %v7440 = vstv %s7439
    %v7441 = vmul.f32 %v52, %v7440
    %v7442 = vmul.f32 %v53, %v7440
    %v7443 = vmul.f32 %v54, %v7440
    %v7444 = vmul.f32 %v55, %v7440
    %v7445 = vmul.f32 %v56, %v7440
    %v7446 = vmul.f32 %v57, %v7440
    %v7447 = vmul.f32 %v58, %v7440
    %v7448 = vmul.f32 %v59, %v7440
    %v7449 = vmul.f32 %v60, %v7440
    %v7450 = vmul.f32 %v61, %v7440
    %7461 = vrot.lane.b32.xlu0 %v7441, 58
    %v7462 = vpop.permute.xlu0 %7461
    %7463 = vrot.lane.b32.xlu0 %v7442, 58
    %v7464 = vpop.permute.xlu0 %7463
    %7465 = vrot.lane.b32.xlu0 %v7443, 58
    %v7466 = vpop.permute.xlu0 %7465
    %7467 = vrot.lane.b32.xlu0 %v7444, 58
    %v7468 = vpop.permute.xlu0 %7467
    %7469 = vrot.lane.b32.xlu0 %v7445, 58
    %v7470 = vpop.permute.xlu0 %7469
    %7471 = vrot.lane.b32.xlu0 %v7446, 58
    %v7472 = vpop.permute.xlu0 %7471
    %7473 = vrot.lane.b32.xlu0 %v7447, 58
    %v7474 = vpop.permute.xlu0 %7473
    %7475 = vrot.lane.b32.xlu0 %v7448, 58
    %v7476 = vpop.permute.xlu0 %7475
    %7477 = vrot.lane.b32.xlu0 %v7449, 58
    %v7478 = vpop.permute.xlu0 %7477
    %7479 = vrot.lane.b32.xlu0 %v7450, 58
    %v7480 = vpop.permute.xlu0 %7479
    %v7481 = vsel %vm476, %v7462, %v7464
    %v7482 = vsel %vm476, %v7464, %v7466
    %v7483 = vsel %vm476, %v7466, %v7468
    %v7484 = vsel %vm476, %v7468, %v7470
    %v7485 = vsel %vm476, %v7470, %v7472
    %v7486 = vsel %vm476, %v7472, %v7474
    %v7487 = vsel %vm476, %v7474, %v7476
    %v7488 = vsel %vm476, %v7476, %v7478
    %v7489 = vsel %vm476, %v7478, %v7480
    %v7500 = vadd.f32 %v7429, %v7481
    %v7501 = vadd.f32 %v7430, %v7482
    %v7502 = vadd.f32 %v7431, %v7483
    %v7503 = vadd.f32 %v7432, %v7484
    %v7504 = vadd.f32 %v7433, %v7485
    %v7505 = vadd.f32 %v7434, %v7486
    %v7506 = vadd.f32 %v7435, %v7487
    %v7507 = vadd.f32 %v7436, %v7488
    %v7508 = vadd.f32 %v7437, %v7489
    %v7509 = vadd.f32 %v7438, %v7480
    %s7510 = sld [smem:[#allocation2 + $0x287]]
    %v7511 = vstv %s7510
    %v7512 = vmul.f32 %v52, %v7511
    %v7513 = vmul.f32 %v53, %v7511
    %v7514 = vmul.f32 %v54, %v7511
    %v7515 = vmul.f32 %v55, %v7511
    %v7516 = vmul.f32 %v56, %v7511
    %v7517 = vmul.f32 %v57, %v7511
    %v7518 = vmul.f32 %v58, %v7511
    %v7519 = vmul.f32 %v59, %v7511
    %v7520 = vmul.f32 %v60, %v7511
    %v7521 = vmul.f32 %v61, %v7511
    %7532 = vrot.lane.b32.xlu0 %v7512, 57
    %v7533 = vpop.permute.xlu0 %7532
    %7534 = vrot.lane.b32.xlu0 %v7513, 57
    %v7535 = vpop.permute.xlu0 %7534
    %7536 = vrot.lane.b32.xlu0 %v7514, 57
    %v7537 = vpop.permute.xlu0 %7536
    %7538 = vrot.lane.b32.xlu0 %v7515, 57
    %v7539 = vpop.permute.xlu0 %7538
    %7540 = vrot.lane.b32.xlu0 %v7516, 57
    %v7541 = vpop.permute.xlu0 %7540
    %7542 = vrot.lane.b32.xlu0 %v7517, 57
    %v7543 = vpop.permute.xlu0 %7542
    %7544 = vrot.lane.b32.xlu0 %v7518, 57
    %v7545 = vpop.permute.xlu0 %7544
    %7546 = vrot.lane.b32.xlu0 %v7519, 57
    %v7547 = vpop.permute.xlu0 %7546
    %7548 = vrot.lane.b32.xlu0 %v7520, 57
    %v7549 = vpop.permute.xlu0 %7548
    %7550 = vrot.lane.b32.xlu0 %v7521, 57
    %v7551 = vpop.permute.xlu0 %7550
    %v7552 = vsel %vm548, %v7533, %v7535
    %v7553 = vsel %vm548, %v7535, %v7537
    %v7554 = vsel %vm548, %v7537, %v7539
    %v7555 = vsel %vm548, %v7539, %v7541
    %v7556 = vsel %vm548, %v7541, %v7543
    %v7557 = vsel %vm548, %v7543, %v7545
    %v7558 = vsel %vm548, %v7545, %v7547
    %v7559 = vsel %vm548, %v7547, %v7549
    %v7560 = vsel %vm548, %v7549, %v7551
    %v7571 = vadd.f32 %v7500, %v7552
    %v7572 = vadd.f32 %v7501, %v7553
    %v7573 = vadd.f32 %v7502, %v7554
    %v7574 = vadd.f32 %v7503, %v7555
    %v7575 = vadd.f32 %v7504, %v7556
    %v7576 = vadd.f32 %v7505, %v7557
    %v7577 = vadd.f32 %v7506, %v7558
    %v7578 = vadd.f32 %v7507, %v7559
    %v7579 = vadd.f32 %v7508, %v7560
    %v7580 = vadd.f32 %v7509, %v7551
    %s7581 = sld [smem:[#allocation2 + $0x288]]
    %v7582 = vstv %s7581
    %v7583 = vmul.f32 %v52, %v7582
    %v7584 = vmul.f32 %v53, %v7582
    %v7585 = vmul.f32 %v54, %v7582
    %v7586 = vmul.f32 %v55, %v7582
    %v7587 = vmul.f32 %v56, %v7582
    %v7588 = vmul.f32 %v57, %v7582
    %v7589 = vmul.f32 %v58, %v7582
    %v7590 = vmul.f32 %v59, %v7582
    %v7591 = vmul.f32 %v60, %v7582
    %v7592 = vmul.f32 %v61, %v7582
    %7603 = vrot.lane.b32.xlu0 %v7583, 56
    %v7604 = vpop.permute.xlu0 %7603
    %7605 = vrot.lane.b32.xlu0 %v7584, 56
    %v7606 = vpop.permute.xlu0 %7605
    %7607 = vrot.lane.b32.xlu0 %v7585, 56
    %v7608 = vpop.permute.xlu0 %7607
    %7609 = vrot.lane.b32.xlu0 %v7586, 56
    %v7610 = vpop.permute.xlu0 %7609
    %7611 = vrot.lane.b32.xlu0 %v7587, 56
    %v7612 = vpop.permute.xlu0 %7611
    %7613 = vrot.lane.b32.xlu0 %v7588, 56
    %v7614 = vpop.permute.xlu0 %7613
    %7615 = vrot.lane.b32.xlu0 %v7589, 56
    %v7616 = vpop.permute.xlu0 %7615
    %7617 = vrot.lane.b32.xlu0 %v7590, 56
    %v7618 = vpop.permute.xlu0 %7617
    %7619 = vrot.lane.b32.xlu0 %v7591, 56
    %v7620 = vpop.permute.xlu0 %7619
    %7621 = vrot.lane.b32.xlu0 %v7592, 56
    %v7622 = vpop.permute.xlu0 %7621
    %v7623 = vsel %vm620, %v7604, %v7606
    %v7624 = vsel %vm620, %v7606, %v7608
    %v7625 = vsel %vm620, %v7608, %v7610
    %v7626 = vsel %vm620, %v7610, %v7612
    %v7627 = vsel %vm620, %v7612, %v7614
    %v7628 = vsel %vm620, %v7614, %v7616
    %v7629 = vsel %vm620, %v7616, %v7618
    %v7630 = vsel %vm620, %v7618, %v7620
    %v7631 = vsel %vm620, %v7620, %v7622
    %v7642 = vadd.f32 %v7571, %v7623
    %v7643 = vadd.f32 %v7572, %v7624
    %v7644 = vadd.f32 %v7573, %v7625
    %v7645 = vadd.f32 %v7574, %v7626
    %v7646 = vadd.f32 %v7575, %v7627
    %v7647 = vadd.f32 %v7576, %v7628
    %v7648 = vadd.f32 %v7577, %v7629
    %v7649 = vadd.f32 %v7578, %v7630
    %v7650 = vadd.f32 %v7579, %v7631
    %v7651 = vadd.f32 %v7580, %v7622
    %s7652 = sld [smem:[#allocation4 + $0x5]]
    %v7653 = vstv %s7652
    %v7654 = vadd.f32 %v7642, %v7653
    %v7655 = vadd.f32 %v7643, %v7653
    %v7656 = vadd.f32 %v7644, %v7653
    %v7657 = vadd.f32 %v7645, %v7653
    %v7658 = vadd.f32 %v7646, %v7653
    %v7659 = vadd.f32 %v7647, %v7653
    %v7660 = vadd.f32 %v7648, %v7653
    %v7661 = vadd.f32 %v7649, %v7653
    %v7662 = vadd.f32 %v7650, %v7653
    %v7663 = vadd.f32 %v7651, %v7653
    %v7664 = vmax.f32 %v7654, 0.0
    %v7665 = vmax.f32 %v7655, 0.0
    %v7666 = vmax.f32 %v7656, 0.0
    %v7667 = vmax.f32 %v7657, 0.0
    %v7668 = vmax.f32 %v7658, 0.0
    %v7669 = vmax.f32 %v7659, 0.0
    %v7670 = vmax.f32 %v7660, 0.0
    %v7671 = vmax.f32 %v7661, 0.0
    %v7672 = vmax.f32 %v7662, 0.0
    %v7673 = vmax.f32 %v7663, 0.0
    %v7674 = vpack.c.bf16 %v7664, %v7664
    %v7675 = vpack.c.bf16 %v7665, %v7665
    %v7676 = vpack.c.bf16 %v7666, %v7666
    %v7677 = vpack.c.bf16 %v7667, %v7667
    %v7678 = vpack.c.bf16 %v7668, %v7668
    %v7679 = vpack.c.bf16 %v7669, %v7669
    %v7680 = vpack.c.bf16 %v7670, %v7670
    %v7681 = vpack.c.bf16 %v7671, %v7671
    %v7682 = vpack.c.bf16 %v7672, %v7672
    %v7683 = vpack.c.bf16 %v7673, %v7673
    %s7684 = scalar_lea.vmem %s3, 2900
    %v7685 = vld [vmem:[%s7684] sm:$0xf]
    %v7686 = vld [vmem:[%s7684 + $0x4] sm:$0xf]
    %v7687 = vld [vmem:[%s7684 + $0x8] sm:$0xf]
    %v7688 = vld [vmem:[%s7684 + $0xc] sm:$0xf]
    %v7689 = vld [vmem:[%s7684 + $0x10] sm:$0xf]
    %v7690 = vld [vmem:[%s7684 + $0x14] sm:$0xf]
    %v7691 = vld [vmem:[%s7684 + $0x18] sm:$0xf]
    %v7692 = vld [vmem:[%s7684 + $0x1c] sm:$0xf]
    %v7693 = vld [vmem:[%s7684 + $0x20] sm:$0xf]
    %v7694 = vld [vmem:[%s7684 + $0x24] sm:$0xf]
    %v7695 = vld [vmem:[%s7684 + $0x28] sm:$0xf]
    %v7696 = vld [vmem:[%s7684 + $0x2c] sm:$0xf]
    %v7697 = vld [vmem:[%s7684 + $0x30] sm:$0xf]
    %v7698 = vld [vmem:[%s7684 + $0x34] sm:$0xf]
    %v7699 = vld [vmem:[%s7684 + $0x38] sm:$0xf]
    %v7700 = vld [vmem:[%s7684 + $0x3c] sm:$0xf]
    %v7701 = vld [vmem:[%s7684 + $0x40] sm:$0xf]
    %v7702 = vld [vmem:[%s7684 + $0x44] sm:$0xf]
    %v7703 = vld [vmem:[%s7684 + $0x48] sm:$0xf]
    %v7704 = vld [vmem:[%s7684 + $0x4c] sm:$0xf]
    %v7705 = vld [vmem:[%s7684 + $0x50] sm:$0xf]
    %v7706 = vld [vmem:[%s7684 + $0x54] sm:$0xf]
    %v7707 = vld [vmem:[%s7684 + $0x58] sm:$0xf]
    %v7708 = vld [vmem:[%s7684 + $0x5c] sm:$0xf]
    %v7709 = vld [vmem:[%s7684 + $0x60] sm:$0xf]
    %v7710 = vld [vmem:[%s7684 + $0x64] sm:$0xf]
    %v7711 = vld [vmem:[%s7684 + $0x68] sm:$0xf]
    %v7712 = vld [vmem:[%s7684 + $0x6c] sm:$0xf]
    %v7713 = vld [vmem:[%s7684 + $0x70] sm:$0xf]
    %v7714 = vld [vmem:[%s7684 + $0x74] sm:$0xf]
    %v7715 = vld [vmem:[%s7684 + $0x78] sm:$0xf]
    %v7716 = vld [vmem:[%s7684 + $0x7c] sm:$0xf]
    %v7717 = vld [vmem:[%s7684 + $0x80] sm:$0xf]
    %v7718 = vld [vmem:[%s7684 + $0x84] sm:$0xf]
    %v7719 = vld [vmem:[%s7684 + $0x88] sm:$0xf]
    %v7720 = vld [vmem:[%s7684 + $0x8c] sm:$0xf]
    %v7721 = vld [vmem:[%s7684 + $0x90] sm:$0xf]
    %v7722 = vld [vmem:[%s7684 + $0x94] sm:$0xf]
    %v7723 = vld [vmem:[%s7684 + $0x98] sm:$0xf]
    %v7724 = vld [vmem:[%s7684 + $0x9c] sm:$0xf]
    %v7725 = vld [vmem:[%s7684 + $0xa0] sm:$0xf]
    %v7726 = vld [vmem:[%s7684 + $0xa4] sm:$0xf]
    %v7727 = vld [vmem:[%s7684 + $0xa8] sm:$0xf]
    %v7728 = vld [vmem:[%s7684 + $0xac] sm:$0xf]
    %v7729 = vld [vmem:[%s7684 + $0xb0] sm:$0xf]
    %v7730 = vld [vmem:[%s7684 + $0xb4] sm:$0xf]
    %v7731 = vld [vmem:[%s7684 + $0xb8] sm:$0xf]
    %v7732 = vld [vmem:[%s7684 + $0xbc] sm:$0xf]
    %v7733 = vld [vmem:[%s7684 + $0xc0] sm:$0xf]
    %v7734 = vld [vmem:[%s7684 + $0xc4] sm:$0xf]
    %v7735 = vld [vmem:[%s7684 + $0xc8] sm:$0xf]
    %v7736 = vld [vmem:[%s7684 + $0xcc] sm:$0xf]
    %v7737 = vld [vmem:[%s7684 + $0xd0] sm:$0xf]
    %v7738 = vld [vmem:[%s7684 + $0xd4] sm:$0xf]
    %v7739 = vld [vmem:[%s7684 + $0xd8] sm:$0xf]
    %v7740 = vld [vmem:[%s7684 + $0xdc] sm:$0xf]
    %v7741 = vld [vmem:[%s7684 + $0xe0] sm:$0xf]
    %v7742 = vld [vmem:[%s7684 + $0xe4] sm:$0xf]
    %v7743 = vld [vmem:[%s7684 + $0xe8] sm:$0xf]
    %v7744 = vld [vmem:[%s7684 + $0xec] sm:$0xf]
    %v7745 = vld [vmem:[%s7684 + $0xf0] sm:$0xf]
    %v7746 = vld [vmem:[%s7684 + $0xf4] sm:$0xf]
    %v7747 = vld [vmem:[%s7684 + $0xf8] sm:$0xf]
    %v7748 = vld [vmem:[%s7684 + $0xfc] sm:$0xf]
    %v7749 = vld [vmem:[%s7684 + $0x100] sm:$0xf]
    %v7750 = vld [vmem:[%s7684 + $0x104] sm:$0xf]
    %v7751 = vld [vmem:[%s7684 + $0x108] sm:$0xf]
    %v7752 = vld [vmem:[%s7684 + $0x10c] sm:$0xf]
    %v7753 = vld [vmem:[%s7684 + $0x110] sm:$0xf]
    %v7754 = vld [vmem:[%s7684 + $0x114] sm:$0xf]
    %v7755 = vld [vmem:[%s7684 + $0x118] sm:$0xf]
    %v7756 = vld [vmem:[%s7684 + $0x11c] sm:$0xf]
    %v7757 = vld [vmem:[%s7684 + $0x120] sm:$0xf]
    %v7758 = vld [vmem:[%s7684 + $0x124] sm:$0xf]
    %v7759 = vld [vmem:[%s7684 + $0x128] sm:$0xf]
    %v7760 = vld [vmem:[%s7684 + $0x12c] sm:$0xf]
    %v7761 = vld [vmem:[%s7684 + $0x130] sm:$0xf]
    %v7762 = vld [vmem:[%s7684 + $0x134] sm:$0xf]
    %v7763 = vld [vmem:[%s7684 + $0x138] sm:$0xf]
    %v7764 = vld [vmem:[%s7684 + $0x13c] sm:$0xf]
    %v7765 = vld [vmem:[%s7684 + $0x140] sm:$0xf]
    %v7766 = vld [vmem:[%s7684 + $0x144] sm:$0xf]
    %v7767 = vld [vmem:[%s7684 + $0x148] sm:$0xf]
    %v7768 = vld [vmem:[%s7684 + $0x14c] sm:$0xf]
    %v7769 = vld [vmem:[%s7684 + $0x150] sm:$0xf]
    %v7770 = vld [vmem:[%s7684 + $0x154] sm:$0xf]
    %v7771 = vld [vmem:[%s7684 + $0x158] sm:$0xf]
    %v7772 = vld [vmem:[%s7684 + $0x15c] sm:$0xf]
    %v7773 = vld [vmem:[%s7684 + $0x160] sm:$0xf]
    %v7774 = vld [vmem:[%s7684 + $0x164] sm:$0xf]
    %v7775 = vld [vmem:[%s7684 + $0x168] sm:$0xf]
    %v7776 = vld [vmem:[%s7684 + $0x16c] sm:$0xf]
    %v7777 = vld [vmem:[%s7684 + $0x170] sm:$0xf]
    %v7778 = vld [vmem:[%s7684 + $0x174] sm:$0xf]
    %v7779 = vld [vmem:[%s7684 + $0x178] sm:$0xf]
    %v7780 = vld [vmem:[%s7684 + $0x17c] sm:$0xf]
    %v7781 = vld [vmem:[%s7684 + $0x180] sm:$0xf]
    %v7782 = vld [vmem:[%s7684 + $0x184] sm:$0xf]
    %v7783 = vld [vmem:[%s7684 + $0x188] sm:$0xf]
    %v7784 = vld [vmem:[%s7684 + $0x18c] sm:$0xf]
    %v7785 = vld [vmem:[%s7684 + $0x190] sm:$0xf]
    %v7786 = vld [vmem:[%s7684 + $0x194] sm:$0xf]
    %v7787 = vld [vmem:[%s7684 + $0x198] sm:$0xf]
    %v7788 = vld [vmem:[%s7684 + $0x19c] sm:$0xf]
    %v7789 = vld [vmem:[%s7684 + $0x1a0] sm:$0xf]
    %v7790 = vld [vmem:[%s7684 + $0x1a4] sm:$0xf]
    %v7791 = vld [vmem:[%s7684 + $0x1a8] sm:$0xf]
    %v7792 = vld [vmem:[%s7684 + $0x1ac] sm:$0xf]
    %v7793 = vld [vmem:[%s7684 + $0x1b0] sm:$0xf]
    %v7794 = vld [vmem:[%s7684 + $0x1b4] sm:$0xf]
    %v7795 = vld [vmem:[%s7684 + $0x1b8] sm:$0xf]
    %v7796 = vld [vmem:[%s7684 + $0x1bc] sm:$0xf]
    %v7797 = vld [vmem:[%s7684 + $0x1c0] sm:$0xf]
    %v7798 = vld [vmem:[%s7684 + $0x1c4] sm:$0xf]
    %v7799 = vld [vmem:[%s7684 + $0x1c8] sm:$0xf]
    %v7800 = vld [vmem:[%s7684 + $0x1cc] sm:$0xf]
    %v7801 = vld [vmem:[%s7684 + $0x1d0] sm:$0xf]
    %v7802 = vld [vmem:[%s7684 + $0x1d4] sm:$0xf]
    %v7803 = vld [vmem:[%s7684 + $0x1d8] sm:$0xf]
    %v7804 = vld [vmem:[%s7684 + $0x1dc] sm:$0xf]
    %v7805 = vld [vmem:[%s7684 + $0x1e0] sm:$0xf]
    %v7806 = vld [vmem:[%s7684 + $0x1e4] sm:$0xf]
    %v7807 = vld [vmem:[%s7684 + $0x1e8] sm:$0xf]
    %v7808 = vld [vmem:[%s7684 + $0x1ec] sm:$0xf]
    %v7809 = vld [vmem:[%s7684 + $0x1f0] sm:$0xf]
    %v7810 = vld [vmem:[%s7684 + $0x1f4] sm:$0xf]
    %v7811 = vld [vmem:[%s7684 + $0x1f8] sm:$0xf]
    %v7812 = vld [vmem:[%s7684 + $0x1fc] sm:$0xf]
    %v7813 = vld [vmem:[%s7684 + $0x200] sm:$0xf]
    %v7814 = vld [vmem:[%s7684 + $0x204] sm:$0xf]
    %v7815 = vld [vmem:[%s7684 + $0x208] sm:$0xf]
    %v7816 = vld [vmem:[%s7684 + $0x20c] sm:$0xf]
    %v7817 = vld [vmem:[%s7684 + $0x210] sm:$0xf]
    %v7818 = vld [vmem:[%s7684 + $0x214] sm:$0xf]
    %v7819 = vld [vmem:[%s7684 + $0x218] sm:$0xf]
    %v7820 = vld [vmem:[%s7684 + $0x21c] sm:$0xf]
    %v7821 = vld [vmem:[%s7684 + $0x220] sm:$0xf]
    %v7822 = vld [vmem:[%s7684 + $0x224] sm:$0xf]
    %v7823 = vld [vmem:[%s7684 + $0x228] sm:$0xf]
    %v7824 = vld [vmem:[%s7684 + $0x22c] sm:$0xf]
    %v7825 = vld [vmem:[%s7684 + $0x230] sm:$0xf]
    %v7826 = vld [vmem:[%s7684 + $0x234] sm:$0xf]
    %v7827 = vld [vmem:[%s7684 + $0x238] sm:$0xf]
    %v7828 = vld [vmem:[%s7684 + $0x23c] sm:$0xf]
    %v7829 = vld [vmem:[%s7684 + $0x240] sm:$0x3]
    %v7975 = vunpack.c.l.b16 %v7685
    %v7976 = vunpack.c.l.b16 %v7686
    %v7977 = vunpack.c.l.b16 %v7687
    %v7978 = vunpack.c.l.b16 %v7688
    %v7979 = vunpack.c.l.b16 %v7689
    %v7980 = vunpack.c.l.b16 %v7690
    %v7981 = vunpack.c.l.b16 %v7691
    %v7982 = vunpack.c.l.b16 %v7692
    %v7983 = vunpack.c.l.b16 %v7693
    %v7984 = vunpack.c.l.b16 %v7694
    %v7985 = vunpack.c.l.b16 %v7695
    %v7986 = vunpack.c.l.b16 %v7696
    %v7987 = vunpack.c.l.b16 %v7697
    %v7988 = vunpack.c.l.b16 %v7698
    %v7989 = vunpack.c.l.b16 %v7699
    %v7990 = vunpack.c.l.b16 %v7700
    %v7991 = vunpack.c.l.b16 %v7701
    %v7992 = vunpack.c.l.b16 %v7702
    %v7993 = vunpack.c.l.b16 %v7703
    %v7994 = vunpack.c.l.b16 %v7704
    %v7995 = vunpack.c.l.b16 %v7705
    %v7996 = vunpack.c.l.b16 %v7706
    %v7997 = vunpack.c.l.b16 %v7707
    %v7998 = vunpack.c.l.b16 %v7708
    %v7999 = vunpack.c.l.b16 %v7709
    %v8000 = vunpack.c.l.b16 %v7710
    %v8001 = vunpack.c.l.b16 %v7711
    %v8002 = vunpack.c.l.b16 %v7712
    %v8003 = vunpack.c.l.b16 %v7713
    %v8004 = vunpack.c.l.b16 %v7714
    %v8005 = vunpack.c.l.b16 %v7715
    %v8006 = vunpack.c.l.b16 %v7716
    %v8007 = vunpack.c.l.b16 %v7717
    %v8008 = vunpack.c.l.b16 %v7718
    %v8009 = vunpack.c.l.b16 %v7719
    %v8010 = vunpack.c.l.b16 %v7720
    %v8011 = vunpack.c.l.b16 %v7721
    %v8012 = vunpack.c.l.b16 %v7722
    %v8013 = vunpack.c.l.b16 %v7723
    %v8014 = vunpack.c.l.b16 %v7724
    %v8015 = vunpack.c.l.b16 %v7725
    %v8016 = vunpack.c.l.b16 %v7726
    %v8017 = vunpack.c.l.b16 %v7727
    %v8018 = vunpack.c.l.b16 %v7728
    %v8019 = vunpack.c.l.b16 %v7729
    %v8020 = vunpack.c.l.b16 %v7730
    %v8021 = vunpack.c.l.b16 %v7731
    %v8022 = vunpack.c.l.b16 %v7732
    %v8023 = vunpack.c.l.b16 %v7733
    %v8024 = vunpack.c.l.b16 %v7734
    %v8025 = vunpack.c.l.b16 %v7735
    %v8026 = vunpack.c.l.b16 %v7736
    %v8027 = vunpack.c.l.b16 %v7737
    %v8028 = vunpack.c.l.b16 %v7738
    %v8029 = vunpack.c.l.b16 %v7739
    %v8030 = vunpack.c.l.b16 %v7740
    %v8031 = vunpack.c.l.b16 %v7741
    %v8032 = vunpack.c.l.b16 %v7742
    %v8033 = vunpack.c.l.b16 %v7743
    %v8034 = vunpack.c.l.b16 %v7744
    %v8035 = vunpack.c.l.b16 %v7745
    %v8036 = vunpack.c.l.b16 %v7746
    %v8037 = vunpack.c.l.b16 %v7747
    %v8038 = vunpack.c.l.b16 %v7748
    %v8039 = vunpack.c.l.b16 %v7749
    %v8040 = vunpack.c.l.b16 %v7750
    %v8041 = vunpack.c.l.b16 %v7751
    %v8042 = vunpack.c.l.b16 %v7752
    %v8043 = vunpack.c.l.b16 %v7753
    %v8044 = vunpack.c.l.b16 %v7754
    %v8045 = vunpack.c.l.b16 %v7755
    %v8046 = vunpack.c.l.b16 %v7756
    %v8047 = vunpack.c.l.b16 %v7757
    %v8048 = vunpack.c.l.b16 %v7758
    %v8049 = vunpack.c.l.b16 %v7759
    %v8050 = vunpack.c.l.b16 %v7760
    %v8051 = vunpack.c.l.b16 %v7761
    %v8052 = vunpack.c.l.b16 %v7762
    %v8053 = vunpack.c.l.b16 %v7763
    %v8054 = vunpack.c.l.b16 %v7764
    %v8055 = vunpack.c.l.b16 %v7765
    %v8056 = vunpack.c.l.b16 %v7766
    %v8057 = vunpack.c.l.b16 %v7767
    %v8058 = vunpack.c.l.b16 %v7768
    %v8059 = vunpack.c.l.b16 %v7769
    %v8060 = vunpack.c.l.b16 %v7770
    %v8061 = vunpack.c.l.b16 %v7771
    %v8062 = vunpack.c.l.b16 %v7772
    %v8063 = vunpack.c.l.b16 %v7773
    %v8064 = vunpack.c.l.b16 %v7774
    %v8065 = vunpack.c.l.b16 %v7775
    %v8066 = vunpack.c.l.b16 %v7776
    %v8067 = vunpack.c.l.b16 %v7777
    %v8068 = vunpack.c.l.b16 %v7778
    %v8069 = vunpack.c.l.b16 %v7779
    %v8070 = vunpack.c.l.b16 %v7780
    %v8071 = vunpack.c.l.b16 %v7781
    %v8072 = vunpack.c.l.b16 %v7782
    %v8073 = vunpack.c.l.b16 %v7783
    %v8074 = vunpack.c.l.b16 %v7784
    %v8075 = vunpack.c.l.b16 %v7785
    %v8076 = vunpack.c.l.b16 %v7786
    %v8077 = vunpack.c.l.b16 %v7787
    %v8078 = vunpack.c.l.b16 %v7788
    %v8079 = vunpack.c.l.b16 %v7789
    %v8080 = vunpack.c.l.b16 %v7790
    %v8081 = vunpack.c.l.b16 %v7791
    %v8082 = vunpack.c.l.b16 %v7792
    %v8083 = vunpack.c.l.b16 %v7793
    %v8084 = vunpack.c.l.b16 %v7794
    %v8085 = vunpack.c.l.b16 %v7795
    %v8086 = vunpack.c.l.b16 %v7796
    %v8087 = vunpack.c.l.b16 %v7797
    %v8088 = vunpack.c.l.b16 %v7798
    %v8089 = vunpack.c.l.b16 %v7799
    %v8090 = vunpack.c.l.b16 %v7800
    %v8091 = vunpack.c.l.b16 %v7801
    %v8092 = vunpack.c.l.b16 %v7802
    %v8093 = vunpack.c.l.b16 %v7803
    %v8094 = vunpack.c.l.b16 %v7804
    %v8095 = vunpack.c.l.b16 %v7805
    %v8096 = vunpack.c.l.b16 %v7806
    %v8097 = vunpack.c.l.b16 %v7807
    %v8098 = vunpack.c.l.b16 %v7808
    %v8099 = vunpack.c.l.b16 %v7809
    %v8100 = vunpack.c.l.b16 %v7810
    %v8101 = vunpack.c.l.b16 %v7811
    %v8102 = vunpack.c.l.b16 %v7812
    %v8103 = vunpack.c.l.b16 %v7813
    %v8104 = vunpack.c.l.b16 %v7814
    %v8105 = vunpack.c.l.b16 %v7815
    %v8106 = vunpack.c.l.b16 %v7816
    %v8107 = vunpack.c.l.b16 %v7817
    %v8108 = vunpack.c.l.b16 %v7818
    %v8109 = vunpack.c.l.b16 %v7819
    %v8110 = vunpack.c.l.b16 %v7820
    %v8111 = vunpack.c.l.b16 %v7821
    %v8112 = vunpack.c.l.b16 %v7822
    %v8113 = vunpack.c.l.b16 %v7823
    %v8114 = vunpack.c.l.b16 %v7824
    %v8115 = vunpack.c.l.b16 %v7825
    %v8116 = vunpack.c.l.b16 %v7826
    %v8117 = vunpack.c.l.b16 %v7827
    %v8118 = vunpack.c.l.b16 %v7828
    %v8119 = vunpack.c.l.b16 %v7829
    %v8120 = vpack.c.b16 %v7976, %v7975
    %v8121 = vpack.c.b16 %v7978, %v7977
    %v8122 = vpack.c.b16 %v7980, %v7979
    %v8123 = vpack.c.b16 %v7982, %v7981
    %v8124 = vpack.c.b16 %v7984, %v7983
    %v8125 = vpack.c.b16 %v7986, %v7985
    %v8126 = vpack.c.b16 %v7988, %v7987
    %v8127 = vpack.c.b16 %v7990, %v7989
    %v8128 = vpack.c.b16 %v7992, %v7991
    %v8129 = vpack.c.b16 %v7994, %v7993
    %v8130 = vpack.c.b16 %v7996, %v7995
    %v8131 = vpack.c.b16 %v7998, %v7997
    %v8132 = vpack.c.b16 %v8000, %v7999
    %v8133 = vpack.c.b16 %v8002, %v8001
    %v8134 = vpack.c.b16 %v8004, %v8003
    %v8135 = vpack.c.b16 %v8006, %v8005
    %v8136 = vpack.c.b16 %v8008, %v8007
    %v8137 = vpack.c.b16 %v8010, %v8009
    %v8138 = vpack.c.b16 %v8012, %v8011
    %v8139 = vpack.c.b16 %v8014, %v8013
    %v8140 = vpack.c.b16 %v8016, %v8015
    %v8141 = vpack.c.b16 %v8018, %v8017
    %v8142 = vpack.c.b16 %v8020, %v8019
    %v8143 = vpack.c.b16 %v8022, %v8021
    %v8144 = vpack.c.b16 %v8024, %v8023
    %v8145 = vpack.c.b16 %v8026, %v8025
    %v8146 = vpack.c.b16 %v8028, %v8027
    %v8147 = vpack.c.b16 %v8030, %v8029
    %v8148 = vpack.c.b16 %v8032, %v8031
    %v8149 = vpack.c.b16 %v8034, %v8033
    %v8150 = vpack.c.b16 %v8036, %v8035
    %v8151 = vpack.c.b16 %v8038, %v8037
    %v8152 = vpack.c.b16 %v8040, %v8039
    %v8153 = vpack.c.b16 %v8042, %v8041
    %v8154 = vpack.c.b16 %v8044, %v8043
    %v8155 = vpack.c.b16 %v8046, %v8045
    %v8156 = vpack.c.b16 %v8048, %v8047
    %v8157 = vpack.c.b16 %v8050, %v8049
    %v8158 = vpack.c.b16 %v8052, %v8051
    %v8159 = vpack.c.b16 %v8054, %v8053
    %v8160 = vpack.c.b16 %v8056, %v8055
    %v8161 = vpack.c.b16 %v8058, %v8057
    %v8162 = vpack.c.b16 %v8060, %v8059
    %v8163 = vpack.c.b16 %v8062, %v8061
    %v8164 = vpack.c.b16 %v8064, %v8063
    %v8165 = vpack.c.b16 %v8066, %v8065
    %v8166 = vpack.c.b16 %v8068, %v8067
    %v8167 = vpack.c.b16 %v8070, %v8069
    %v8168 = vpack.c.b16 %v8072, %v8071
    %v8169 = vpack.c.b16 %v8074, %v8073
    %v8170 = vpack.c.b16 %v8076, %v8075
    %v8171 = vpack.c.b16 %v8078, %v8077
    %v8172 = vpack.c.b16 %v8080, %v8079
    %v8173 = vpack.c.b16 %v8082, %v8081
    %v8174 = vpack.c.b16 %v8084, %v8083
    %v8175 = vpack.c.b16 %v8086, %v8085
    %v8176 = vpack.c.b16 %v8088, %v8087
    %v8177 = vpack.c.b16 %v8090, %v8089
    %v8178 = vpack.c.b16 %v8092, %v8091
    %v8179 = vpack.c.b16 %v8094, %v8093
    %v8180 = vpack.c.b16 %v8096, %v8095
    %v8181 = vpack.c.b16 %v8098, %v8097
    %v8182 = vpack.c.b16 %v8100, %v8099
    %v8183 = vpack.c.b16 %v8102, %v8101
    %v8184 = vpack.c.b16 %v8104, %v8103
    %v8185 = vpack.c.b16 %v8106, %v8105
    %v8186 = vpack.c.b16 %v8108, %v8107
    %v8187 = vpack.c.b16 %v8110, %v8109
    %v8188 = vpack.c.b16 %v8112, %v8111
    %v8189 = vpack.c.b16 %v8114, %v8113
    %v8190 = vpack.c.b16 %v8116, %v8115
    %v8191 = vpack.c.b16 %v8118, %v8117
    %v8192 = vpack.c.b16 %v8119, %v8119
    %v8266 = vsel %vm2020, %v7683, 0
    %v8269 = vand.u32 %v8192, %v2027
    %8271 = vmatprep.subr.bf16.mxu0 0
    %8272 = vmatpush1.bf16.msra.mxu0 %v8127
    %8273 = vmatprep.subr.bf16.mxu0 0
    %8274 = vmatpush1.bf16.msra.mxu0 %v8126
    %8275 = vmatprep.subr.bf16.mxu0 0
    %8276 = vmatpush1.bf16.msra.mxu0 %v8125
    %8277 = vmatprep.subr.bf16.mxu0 0
    %8278 = vmatpush1.bf16.msra.mxu0 %v8124
    %8279 = vmatprep.subr.bf16.mxu0 0
    %8280 = vmatpush1.bf16.msra.mxu0 %v8123
    %8281 = vmatprep.subr.bf16.mxu0 0
    %8282 = vmatpush1.bf16.msra.mxu0 %v8122
    %8283 = vmatprep.subr.bf16.mxu0 0
    %8284 = vmatpush1.bf16.msra.mxu0 %v8121
    %8285 = vmatprep.subr.bf16.mxu0 0
    %8286 = vmatpush1.bf16.msra.mxu0 %v8120
    %8287 = vmatprep.subr.bf16.mxu0 0
    %8288 = vmatpush2.bf16.msra.mxu0 %v8135
    %8289 = vmatprep.subr.bf16.mxu0 0
    %8290 = vmatpush2.bf16.msra.mxu0 %v8134
    %8291 = vmatprep.subr.bf16.mxu0 0
    %8292 = vmatpush2.bf16.msra.mxu0 %v8133
    %8293 = vmatprep.subr.bf16.mxu0 0
    %8294 = vmatpush2.bf16.msra.mxu0 %v8132
    %8295 = vmatprep.subr.bf16.mxu0 0
    %8296 = vmatpush2.bf16.msra.mxu0 %v8131
    %8297 = vmatprep.subr.bf16.mxu0 0
    %8298 = vmatpush2.bf16.msra.mxu0 %v8130
    %8299 = vmatprep.subr.bf16.mxu0 0
    %8300 = vmatpush2.bf16.msra.mxu0 %v8129
    %8301 = vmatprep.subr.bf16.mxu0 0
    %8302 = vmatpush2.bf16.msra.mxu0 %v8128
    %8303 = vmatprep.mubr.bf16.mxu0 %v7675
    %8304 = vmatmul.mubr.bf16.gmra.mxu0 %v7674
    %v8305 = vpop.f32.mrf.mxu0
    %v8306 = vadd.f32 0.0, %v8305
    %v8307 = vpop.f32.mrf.mxu0
    %v8308 = vpop.f32.mrf.mxu0
    %v8309 = vpop.f32.mrf.mxu0
    %8310 = vdwg.mxu0
    %8311 = vmatprep.subr.bf16.mxu0 0
    %8312 = vmatpush1.bf16.msra.mxu0 %v8143
    %8313 = vmatprep.subr.bf16.mxu0 0
    %8314 = vmatpush1.bf16.msra.mxu0 %v8142
    %8315 = vmatprep.subr.bf16.mxu0 0
    %8316 = vmatpush1.bf16.msra.mxu0 %v8141
    %8317 = vmatprep.subr.bf16.mxu0 0
    %8318 = vmatpush1.bf16.msra.mxu0 %v8140
    %8319 = vmatprep.subr.bf16.mxu0 0
    %8320 = vmatpush1.bf16.msra.mxu0 %v8139
    %8321 = vmatprep.subr.bf16.mxu0 0
    %8322 = vmatpush1.bf16.msra.mxu0 %v8138
    %8323 = vmatprep.subr.bf16.mxu0 0
    %8324 = vmatpush1.bf16.msra.mxu0 %v8137
    %8325 = vmatprep.subr.bf16.mxu0 0
    %8326 = vmatpush1.bf16.msra.mxu0 %v8136
    %8327 = vmatprep.subr.bf16.mxu0 0
    %8328 = vmatpush2.bf16.msra.mxu0 %v8151
    %8329 = vmatprep.subr.bf16.mxu0 0
    %8330 = vmatpush2.bf16.msra.mxu0 %v8150
    %8331 = vmatprep.subr.bf16.mxu0 0
    %8332 = vmatpush2.bf16.msra.mxu0 %v8149
    %8333 = vmatprep.subr.bf16.mxu0 0
    %8334 = vmatpush2.bf16.msra.mxu0 %v8148
    %8335 = vmatprep.subr.bf16.mxu0 0
    %8336 = vmatpush2.bf16.msra.mxu0 %v8147
    %8337 = vmatprep.subr.bf16.mxu0 0
    %8338 = vmatpush2.bf16.msra.mxu0 %v8146
    %8339 = vmatprep.subr.bf16.mxu0 0
    %8340 = vmatpush2.bf16.msra.mxu0 %v8145
    %8341 = vmatprep.subr.bf16.mxu0 0
    %8342 = vmatpush2.bf16.msra.mxu0 %v8144
    %8343 = vmatprep.mubr.bf16.mxu0 %v7677
    %8344 = vmatmul.mubr.bf16.gmra.mxu0 %v7676
    %v8345 = vpop.f32.mrf.mxu0
    %v8346 = vadd.f32 %v8306, %v8345
    %v8347 = vpop.f32.mrf.mxu0
    %v8348 = vpop.f32.mrf.mxu0
    %v8349 = vpop.f32.mrf.mxu0
    %8350 = vdwg.mxu0
    %8351 = vmatprep.subr.bf16.mxu0 0
    %8352 = vmatpush1.bf16.msra.mxu0 %v8159
    %8353 = vmatprep.subr.bf16.mxu0 0
    %8354 = vmatpush1.bf16.msra.mxu0 %v8158
    %8355 = vmatprep.subr.bf16.mxu0 0
    %8356 = vmatpush1.bf16.msra.mxu0 %v8157
    %8357 = vmatprep.subr.bf16.mxu0 0
    %8358 = vmatpush1.bf16.msra.mxu0 %v8156
    %8359 = vmatprep.subr.bf16.mxu0 0
    %8360 = vmatpush1.bf16.msra.mxu0 %v8155
    %8361 = vmatprep.subr.bf16.mxu0 0
    %8362 = vmatpush1.bf16.msra.mxu0 %v8154
    %8363 = vmatprep.subr.bf16.mxu0 0
    %8364 = vmatpush1.bf16.msra.mxu0 %v8153
    %8365 = vmatprep.subr.bf16.mxu0 0
    %8366 = vmatpush1.bf16.msra.mxu0 %v8152
    %8367 = vmatprep.subr.bf16.mxu0 0
    %8368 = vmatpush2.bf16.msra.mxu0 %v8167
    %8369 = vmatprep.subr.bf16.mxu0 0
    %8370 = vmatpush2.bf16.msra.mxu0 %v8166
    %8371 = vmatprep.subr.bf16.mxu0 0
    %8372 = vmatpush2.bf16.msra.mxu0 %v8165
    %8373 = vmatprep.subr.bf16.mxu0 0
    %8374 = vmatpush2.bf16.msra.mxu0 %v8164
    %8375 = vmatprep.subr.bf16.mxu0 0
    %8376 = vmatpush2.bf16.msra.mxu0 %v8163
    %8377 = vmatprep.subr.bf16.mxu0 0
    %8378 = vmatpush2.bf16.msra.mxu0 %v8162
    %8379 = vmatprep.subr.bf16.mxu0 0
    %8380 = vmatpush2.bf16.msra.mxu0 %v8161
    %8381 = vmatprep.subr.bf16.mxu0 0
    %8382 = vmatpush2.bf16.msra.mxu0 %v8160
    %8383 = vmatprep.mubr.bf16.mxu0 %v7679
    %8384 = vmatmul.mubr.bf16.gmra.mxu0 %v7678
    %v8385 = vpop.f32.mrf.mxu0
    %v8386 = vadd.f32 %v8346, %v8385
    %v8387 = vpop.f32.mrf.mxu0
    %v8388 = vpop.f32.mrf.mxu0
    %v8389 = vpop.f32.mrf.mxu0
    %8390 = vdwg.mxu0
    %8391 = vmatprep.subr.bf16.mxu0 0
    %8392 = vmatpush1.bf16.msra.mxu0 %v8175
    %8393 = vmatprep.subr.bf16.mxu0 0
    %8394 = vmatpush1.bf16.msra.mxu0 %v8174
    %8395 = vmatprep.subr.bf16.mxu0 0
    %8396 = vmatpush1.bf16.msra.mxu0 %v8173
    %8397 = vmatprep.subr.bf16.mxu0 0
    %8398 = vmatpush1.bf16.msra.mxu0 %v8172
    %8399 = vmatprep.subr.bf16.mxu0 0
    %8400 = vmatpush1.bf16.msra.mxu0 %v8171
    %8401 = vmatprep.subr.bf16.mxu0 0
    %8402 = vmatpush1.bf16.msra.mxu0 %v8170
    %8403 = vmatprep.subr.bf16.mxu0 0
    %8404 = vmatpush1.bf16.msra.mxu0 %v8169
    %8405 = vmatprep.subr.bf16.mxu0 0
    %8406 = vmatpush1.bf16.msra.mxu0 %v8168
    %8407 = vmatprep.subr.bf16.mxu0 0
    %8408 = vmatpush2.bf16.msra.mxu0 %v8183
    %8409 = vmatprep.subr.bf16.mxu0 0
    %8410 = vmatpush2.bf16.msra.mxu0 %v8182
    %8411 = vmatprep.subr.bf16.mxu0 0
    %8412 = vmatpush2.bf16.msra.mxu0 %v8181
    %8413 = vmatprep.subr.bf16.mxu0 0
    %8414 = vmatpush2.bf16.msra.mxu0 %v8180
    %8415 = vmatprep.subr.bf16.mxu0 0
    %8416 = vmatpush2.bf16.msra.mxu0 %v8179
    %8417 = vmatprep.subr.bf16.mxu0 0
    %8418 = vmatpush2.bf16.msra.mxu0 %v8178
    %8419 = vmatprep.subr.bf16.mxu0 0
    %8420 = vmatpush2.bf16.msra.mxu0 %v8177
    %8421 = vmatprep.subr.bf16.mxu0 0
    %8422 = vmatpush2.bf16.msra.mxu0 %v8176
    %8423 = vmatprep.mubr.bf16.mxu0 %v7681
    %8424 = vmatmul.mubr.bf16.gmra.mxu0 %v7680
    %v8425 = vpop.f32.mrf.mxu0
    %v8426 = vadd.f32 %v8386, %v8425
    %v8427 = vpop.f32.mrf.mxu0
    %v8428 = vpop.f32.mrf.mxu0
    %v8429 = vpop.f32.mrf.mxu0
    %8430 = vdwg.mxu0
    %8431 = vmatprep.subr.bf16.mxu0 0
    %8432 = vmatpush1.bf16.msra.mxu0 %v8191
    %8433 = vmatprep.subr.bf16.mxu0 0
    %8434 = vmatpush1.bf16.msra.mxu0 %v8190
    %8435 = vmatprep.subr.bf16.mxu0 0
    %8436 = vmatpush1.bf16.msra.mxu0 %v8189
    %8437 = vmatprep.subr.bf16.mxu0 0
    %8438 = vmatpush1.bf16.msra.mxu0 %v8188
    %8439 = vmatprep.subr.bf16.mxu0 0
    %8440 = vmatpush1.bf16.msra.mxu0 %v8187
    %8441 = vmatprep.subr.bf16.mxu0 0
    %8442 = vmatpush1.bf16.msra.mxu0 %v8186
    %8443 = vmatprep.subr.bf16.mxu0 0
    %8444 = vmatpush1.bf16.msra.mxu0 %v8185
    %8445 = vmatprep.subr.bf16.mxu0 0
    %8446 = vmatpush1.bf16.msra.mxu0 %v8184
    %8447 = vmatprep.subr.bf16.mxu0 0
    %8448 = vmatpush2.bf16.msra.mxu0 0
    %8449 = vmatprep.subr.bf16.mxu0 0
    %8450 = vmatpush2.bf16.msra.mxu0 0
    %8451 = vmatprep.subr.bf16.mxu0 0
    %8452 = vmatpush2.bf16.msra.mxu0 0
    %8453 = vmatprep.subr.bf16.mxu0 0
    %8454 = vmatpush2.bf16.msra.mxu0 0
    %8455 = vmatprep.subr.bf16.mxu0 0
    %8456 = vmatpush2.bf16.msra.mxu0 0
    %8457 = vmatprep.subr.bf16.mxu0 0
    %8458 = vmatpush2.bf16.msra.mxu0 0
    %8459 = vmatprep.subr.bf16.mxu0 0
    %8460 = vmatpush2.bf16.msra.mxu0 0
    %8461 = vmatprep.subr.bf16.mxu0 0
    %8462 = vmatpush2.bf16.msra.mxu0 %v8269
    %8463 = vmatprep.mubr.bf16.mxu0 %v8266
    %8464 = vmatmul.mubr.bf16.gmra.mxu0 %v7682
    %v8465 = vpop.f32.mrf.mxu0
    %v8466 = vadd.f32 %v8426, %v8465
    %v8467 = vpop.f32.mrf.mxu0
    %v8468 = vpop.f32.mrf.mxu0
    %v8469 = vpop.f32.mrf.mxu0
    %8470 = vdwg.mxu0
    %v8471 = vadd.f32 %v7071, %v8466
    %s8472 = sld [smem:[#allocation2 + $0x300]]
    %v8473 = vstv %s8472
    %v8474 = vmul.f32 %v52, %v8473
    %v8475 = vmul.f32 %v53, %v8473
    %v8476 = vmul.f32 %v54, %v8473
    %v8477 = vmul.f32 %v55, %v8473
    %v8478 = vmul.f32 %v56, %v8473
    %v8479 = vmul.f32 %v57, %v8473
    %v8480 = vmul.f32 %v58, %v8473
    %v8481 = vmul.f32 %v59, %v8473
    %v8482 = vmul.f32 %v60, %v8473
    %v8483 = vmul.f32 %v61, %v8473
    %s8484 = sld [smem:[#allocation2 + $0x301]]
    %v8485 = vstv %s8484
    %v8486 = vmul.f32 %v52, %v8485
    %v8487 = vmul.f32 %v53, %v8485
    %v8488 = vmul.f32 %v54, %v8485
    %v8489 = vmul.f32 %v55, %v8485
    %v8490 = vmul.f32 %v56, %v8485
    %v8491 = vmul.f32 %v57, %v8485
    %v8492 = vmul.f32 %v58, %v8485
    %v8493 = vmul.f32 %v59, %v8485
    %v8494 = vmul.f32 %v60, %v8485
    %v8495 = vmul.f32 %v61, %v8485
    %8506 = vrot.lane.b32.xlu0 %v8486, 127
    %v8507 = vpop.permute.xlu0 %8506
    %8508 = vrot.lane.b32.xlu0 %v8487, 127
    %v8509 = vpop.permute.xlu0 %8508
    %8510 = vrot.lane.b32.xlu0 %v8488, 127
    %v8511 = vpop.permute.xlu0 %8510
    %8512 = vrot.lane.b32.xlu0 %v8489, 127
    %v8513 = vpop.permute.xlu0 %8512
    %8514 = vrot.lane.b32.xlu0 %v8490, 127
    %v8515 = vpop.permute.xlu0 %8514
    %8516 = vrot.lane.b32.xlu0 %v8491, 127
    %v8517 = vpop.permute.xlu0 %8516
    %8518 = vrot.lane.b32.xlu0 %v8492, 127
    %v8519 = vpop.permute.xlu0 %8518
    %8520 = vrot.lane.b32.xlu0 %v8493, 127
    %v8521 = vpop.permute.xlu0 %8520
    %8522 = vrot.lane.b32.xlu0 %v8494, 127
    %v8523 = vpop.permute.xlu0 %8522
    %8524 = vrot.lane.b32.xlu0 %v8495, 127
    %v8525 = vpop.permute.xlu0 %8524
    %v8526 = vsel %vm116, %v8507, %v8509
    %v8527 = vsel %vm116, %v8509, %v8511
    %v8528 = vsel %vm116, %v8511, %v8513
    %v8529 = vsel %vm116, %v8513, %v8515
    %v8530 = vsel %vm116, %v8515, %v8517
    %v8531 = vsel %vm116, %v8517, %v8519
    %v8532 = vsel %vm116, %v8519, %v8521
    %v8533 = vsel %vm116, %v8521, %v8523
    %v8534 = vsel %vm116, %v8523, %v8525
    %v8545 = vadd.f32 %v8474, %v8526
    %v8546 = vadd.f32 %v8475, %v8527
    %v8547 = vadd.f32 %v8476, %v8528
    %v8548 = vadd.f32 %v8477, %v8529
    %v8549 = vadd.f32 %v8478, %v8530
    %v8550 = vadd.f32 %v8479, %v8531
    %v8551 = vadd.f32 %v8480, %v8532
    %v8552 = vadd.f32 %v8481, %v8533
    %v8553 = vadd.f32 %v8482, %v8534
    %v8554 = vadd.f32 %v8483, %v8525
    %s8555 = sld [smem:[#allocation2 + $0x302]]
    %v8556 = vstv %s8555
    %v8557 = vmul.f32 %v52, %v8556
    %v8558 = vmul.f32 %v53, %v8556
    %v8559 = vmul.f32 %v54, %v8556
    %v8560 = vmul.f32 %v55, %v8556
    %v8561 = vmul.f32 %v56, %v8556
    %v8562 = vmul.f32 %v57, %v8556
    %v8563 = vmul.f32 %v58, %v8556
    %v8564 = vmul.f32 %v59, %v8556
    %v8565 = vmul.f32 %v60, %v8556
    %v8566 = vmul.f32 %v61, %v8556
    %8577 = vrot.lane.b32.xlu0 %v8557, 126
    %v8578 = vpop.permute.xlu0 %8577
    %8579 = vrot.lane.b32.xlu0 %v8558, 126
    %v8580 = vpop.permute.xlu0 %8579
    %8581 = vrot.lane.b32.xlu0 %v8559, 126
    %v8582 = vpop.permute.xlu0 %8581
    %8583 = vrot.lane.b32.xlu0 %v8560, 126
    %v8584 = vpop.permute.xlu0 %8583
    %8585 = vrot.lane.b32.xlu0 %v8561, 126
    %v8586 = vpop.permute.xlu0 %8585
    %8587 = vrot.lane.b32.xlu0 %v8562, 126
    %v8588 = vpop.permute.xlu0 %8587
    %8589 = vrot.lane.b32.xlu0 %v8563, 126
    %v8590 = vpop.permute.xlu0 %8589
    %8591 = vrot.lane.b32.xlu0 %v8564, 126
    %v8592 = vpop.permute.xlu0 %8591
    %8593 = vrot.lane.b32.xlu0 %v8565, 126
    %v8594 = vpop.permute.xlu0 %8593
    %8595 = vrot.lane.b32.xlu0 %v8566, 126
    %v8596 = vpop.permute.xlu0 %8595
    %v8597 = vsel %vm188, %v8578, %v8580
    %v8598 = vsel %vm188, %v8580, %v8582
    %v8599 = vsel %vm188, %v8582, %v8584
    %v8600 = vsel %vm188, %v8584, %v8586
    %v8601 = vsel %vm188, %v8586, %v8588
    %v8602 = vsel %vm188, %v8588, %v8590
    %v8603 = vsel %vm188, %v8590, %v8592
    %v8604 = vsel %vm188, %v8592, %v8594
    %v8605 = vsel %vm188, %v8594, %v8596
    %v8616 = vadd.f32 %v8545, %v8597
    %v8617 = vadd.f32 %v8546, %v8598
    %v8618 = vadd.f32 %v8547, %v8599
    %v8619 = vadd.f32 %v8548, %v8600
    %v8620 = vadd.f32 %v8549, %v8601
    %v8621 = vadd.f32 %v8550, %v8602
    %v8622 = vadd.f32 %v8551, %v8603
    %v8623 = vadd.f32 %v8552, %v8604
    %v8624 = vadd.f32 %v8553, %v8605
    %v8625 = vadd.f32 %v8554, %v8596
    %s8626 = sld [smem:[#allocation2 + $0x303]]
    %v8627 = vstv %s8626
    %v8628 = vmul.f32 %v52, %v8627
    %v8629 = vmul.f32 %v53, %v8627
    %v8630 = vmul.f32 %v54, %v8627
    %v8631 = vmul.f32 %v55, %v8627
    %v8632 = vmul.f32 %v56, %v8627
    %v8633 = vmul.f32 %v57, %v8627
    %v8634 = vmul.f32 %v58, %v8627
    %v8635 = vmul.f32 %v59, %v8627
    %v8636 = vmul.f32 %v60, %v8627
    %v8637 = vmul.f32 %v61, %v8627
    %8648 = vrot.lane.b32.xlu0 %v8628, 93
    %v8649 = vpop.permute.xlu0 %8648
    %8650 = vrot.lane.b32.xlu0 %v8629, 93
    %v8651 = vpop.permute.xlu0 %8650
    %8652 = vrot.lane.b32.xlu0 %v8630, 93
    %v8653 = vpop.permute.xlu0 %8652
    %8654 = vrot.lane.b32.xlu0 %v8631, 93
    %v8655 = vpop.permute.xlu0 %8654
    %8656 = vrot.lane.b32.xlu0 %v8632, 93
    %v8657 = vpop.permute.xlu0 %8656
    %8658 = vrot.lane.b32.xlu0 %v8633, 93
    %v8659 = vpop.permute.xlu0 %8658
    %8660 = vrot.lane.b32.xlu0 %v8634, 93
    %v8661 = vpop.permute.xlu0 %8660
    %8662 = vrot.lane.b32.xlu0 %v8635, 93
    %v8663 = vpop.permute.xlu0 %8662
    %8664 = vrot.lane.b32.xlu0 %v8636, 93
    %v8665 = vpop.permute.xlu0 %8664
    %8666 = vrot.lane.b32.xlu0 %v8637, 93
    %v8667 = vpop.permute.xlu0 %8666
    %v8668 = vsel %vm260, %v8649, %v8651
    %v8669 = vsel %vm260, %v8651, %v8653
    %v8670 = vsel %vm260, %v8653, %v8655
    %v8671 = vsel %vm260, %v8655, %v8657
    %v8672 = vsel %vm260, %v8657, %v8659
    %v8673 = vsel %vm260, %v8659, %v8661
    %v8674 = vsel %vm260, %v8661, %v8663
    %v8675 = vsel %vm260, %v8663, %v8665
    %v8676 = vsel %vm260, %v8665, %v8667
    %v8687 = vadd.f32 %v8616, %v8668
    %v8688 = vadd.f32 %v8617, %v8669
    %v8689 = vadd.f32 %v8618, %v8670
    %v8690 = vadd.f32 %v8619, %v8671
    %v8691 = vadd.f32 %v8620, %v8672
    %v8692 = vadd.f32 %v8621, %v8673
    %v8693 = vadd.f32 %v8622, %v8674
    %v8694 = vadd.f32 %v8623, %v8675
    %v8695 = vadd.f32 %v8624, %v8676
    %v8696 = vadd.f32 %v8625, %v8667
    %s8697 = sld [smem:[#allocation2 + $0x304]]
    %v8698 = vstv %s8697
    %v8699 = vmul.f32 %v52, %v8698
    %v8700 = vmul.f32 %v53, %v8698
    %v8701 = vmul.f32 %v54, %v8698
    %v8702 = vmul.f32 %v55, %v8698
    %v8703 = vmul.f32 %v56, %v8698
    %v8704 = vmul.f32 %v57, %v8698
    %v8705 = vmul.f32 %v58, %v8698
    %v8706 = vmul.f32 %v59, %v8698
    %v8707 = vmul.f32 %v60, %v8698
    %v8708 = vmul.f32 %v61, %v8698
    %8719 = vrot.lane.b32.xlu0 %v8699, 92
    %v8720 = vpop.permute.xlu0 %8719
    %8721 = vrot.lane.b32.xlu0 %v8700, 92
    %v8722 = vpop.permute.xlu0 %8721
    %8723 = vrot.lane.b32.xlu0 %v8701, 92
    %v8724 = vpop.permute.xlu0 %8723
    %8725 = vrot.lane.b32.xlu0 %v8702, 92
    %v8726 = vpop.permute.xlu0 %8725
    %8727 = vrot.lane.b32.xlu0 %v8703, 92
    %v8728 = vpop.permute.xlu0 %8727
    %8729 = vrot.lane.b32.xlu0 %v8704, 92
    %v8730 = vpop.permute.xlu0 %8729
    %8731 = vrot.lane.b32.xlu0 %v8705, 92
    %v8732 = vpop.permute.xlu0 %8731
    %8733 = vrot.lane.b32.xlu0 %v8706, 92
    %v8734 = vpop.permute.xlu0 %8733
    %8735 = vrot.lane.b32.xlu0 %v8707, 92
    %v8736 = vpop.permute.xlu0 %8735
    %8737 = vrot.lane.b32.xlu0 %v8708, 92
    %v8738 = vpop.permute.xlu0 %8737
    %v8739 = vsel %vm332, %v8720, %v8722
    %v8740 = vsel %vm332, %v8722, %v8724
    %v8741 = vsel %vm332, %v8724, %v8726
    %v8742 = vsel %vm332, %v8726, %v8728
    %v8743 = vsel %vm332, %v8728, %v8730
    %v8744 = vsel %vm332, %v8730, %v8732
    %v8745 = vsel %vm332, %v8732, %v8734
    %v8746 = vsel %vm332, %v8734, %v8736
    %v8747 = vsel %vm332, %v8736, %v8738
    %v8758 = vadd.f32 %v8687, %v8739
    %v8759 = vadd.f32 %v8688, %v8740
    %v8760 = vadd.f32 %v8689, %v8741
    %v8761 = vadd.f32 %v8690, %v8742
    %v8762 = vadd.f32 %v8691, %v8743
    %v8763 = vadd.f32 %v8692, %v8744
    %v8764 = vadd.f32 %v8693, %v8745
    %v8765 = vadd.f32 %v8694, %v8746
    %v8766 = vadd.f32 %v8695, %v8747
    %v8767 = vadd.f32 %v8696, %v8738
    %s8768 = sld [smem:[#allocation2 + $0x305]]
    %v8769 = vstv %s8768
    %v8770 = vmul.f32 %v52, %v8769
    %v8771 = vmul.f32 %v53, %v8769
    %v8772 = vmul.f32 %v54, %v8769
    %v8773 = vmul.f32 %v55, %v8769
    %v8774 = vmul.f32 %v56, %v8769
    %v8775 = vmul.f32 %v57, %v8769
    %v8776 = vmul.f32 %v58, %v8769
    %v8777 = vmul.f32 %v59, %v8769
    %v8778 = vmul.f32 %v60, %v8769
    %v8779 = vmul.f32 %v61, %v8769
    %8790 = vrot.lane.b32.xlu0 %v8770, 91
    %v8791 = vpop.permute.xlu0 %8790
    %8792 = vrot.lane.b32.xlu0 %v8771, 91
    %v8793 = vpop.permute.xlu0 %8792
    %8794 = vrot.lane.b32.xlu0 %v8772, 91
    %v8795 = vpop.permute.xlu0 %8794
    %8796 = vrot.lane.b32.xlu0 %v8773, 91
    %v8797 = vpop.permute.xlu0 %8796
    %8798 = vrot.lane.b32.xlu0 %v8774, 91
    %v8799 = vpop.permute.xlu0 %8798
    %8800 = vrot.lane.b32.xlu0 %v8775, 91
    %v8801 = vpop.permute.xlu0 %8800
    %8802 = vrot.lane.b32.xlu0 %v8776, 91
    %v8803 = vpop.permute.xlu0 %8802
    %8804 = vrot.lane.b32.xlu0 %v8777, 91
    %v8805 = vpop.permute.xlu0 %8804
    %8806 = vrot.lane.b32.xlu0 %v8778, 91
    %v8807 = vpop.permute.xlu0 %8806
    %8808 = vrot.lane.b32.xlu0 %v8779, 91
    %v8809 = vpop.permute.xlu0 %8808
    %v8810 = vsel %vm404, %v8791, %v8793
    %v8811 = vsel %vm404, %v8793, %v8795
    %v8812 = vsel %vm404, %v8795, %v8797
    %v8813 = vsel %vm404, %v8797, %v8799
    %v8814 = vsel %vm404, %v8799, %v8801
    %v8815 = vsel %vm404, %v8801, %v8803
    %v8816 = vsel %vm404, %v8803, %v8805
    %v8817 = vsel %vm404, %v8805, %v8807
    %v8818 = vsel %vm404, %v8807, %v8809
    %v8829 = vadd.f32 %v8758, %v8810
    %v8830 = vadd.f32 %v8759, %v8811
    %v8831 = vadd.f32 %v8760, %v8812
    %v8832 = vadd.f32 %v8761, %v8813
    %v8833 = vadd.f32 %v8762, %v8814
    %v8834 = vadd.f32 %v8763, %v8815
    %v8835 = vadd.f32 %v8764, %v8816
    %v8836 = vadd.f32 %v8765, %v8817
    %v8837 = vadd.f32 %v8766, %v8818
    %v8838 = vadd.f32 %v8767, %v8809
    %s8839 = sld [smem:[#allocation2 + $0x306]]
    %v8840 = vstv %s8839
    %v8841 = vmul.f32 %v52, %v8840
    %v8842 = vmul.f32 %v53, %v8840
    %v8843 = vmul.f32 %v54, %v8840
    %v8844 = vmul.f32 %v55, %v8840
    %v8845 = vmul.f32 %v56, %v8840
    %v8846 = vmul.f32 %v57, %v8840
    %v8847 = vmul.f32 %v58, %v8840
    %v8848 = vmul.f32 %v59, %v8840
    %v8849 = vmul.f32 %v60, %v8840
    %v8850 = vmul.f32 %v61, %v8840
    %8861 = vrot.lane.b32.xlu0 %v8841, 58
    %v8862 = vpop.permute.xlu0 %8861
    %8863 = vrot.lane.b32.xlu0 %v8842, 58
    %v8864 = vpop.permute.xlu0 %8863
    %8865 = vrot.lane.b32.xlu0 %v8843, 58
    %v8866 = vpop.permute.xlu0 %8865
    %8867 = vrot.lane.b32.xlu0 %v8844, 58
    %v8868 = vpop.permute.xlu0 %8867
    %8869 = vrot.lane.b32.xlu0 %v8845, 58
    %v8870 = vpop.permute.xlu0 %8869
    %8871 = vrot.lane.b32.xlu0 %v8846, 58
    %v8872 = vpop.permute.xlu0 %8871
    %8873 = vrot.lane.b32.xlu0 %v8847, 58
    %v8874 = vpop.permute.xlu0 %8873
    %8875 = vrot.lane.b32.xlu0 %v8848, 58
    %v8876 = vpop.permute.xlu0 %8875
    %8877 = vrot.lane.b32.xlu0 %v8849, 58
    %v8878 = vpop.permute.xlu0 %8877
    %8879 = vrot.lane.b32.xlu0 %v8850, 58
    %v8880 = vpop.permute.xlu0 %8879
    %v8881 = vsel %vm476, %v8862, %v8864
    %v8882 = vsel %vm476, %v8864, %v8866
    %v8883 = vsel %vm476, %v8866, %v8868
    %v8884 = vsel %vm476, %v8868, %v8870
    %v8885 = vsel %vm476, %v8870, %v8872
    %v8886 = vsel %vm476, %v8872, %v8874
    %v8887 = vsel %vm476, %v8874, %v8876
    %v8888 = vsel %vm476, %v8876, %v8878
    %v8889 = vsel %vm476, %v8878, %v8880
    %v8900 = vadd.f32 %v8829, %v8881
    %v8901 = vadd.f32 %v8830, %v8882
    %v8902 = vadd.f32 %v8831, %v8883
    %v8903 = vadd.f32 %v8832, %v8884
    %v8904 = vadd.f32 %v8833, %v8885
    %v8905 = vadd.f32 %v8834, %v8886
    %v8906 = vadd.f32 %v8835, %v8887
    %v8907 = vadd.f32 %v8836, %v8888
    %v8908 = vadd.f32 %v8837, %v8889
    %v8909 = vadd.f32 %v8838, %v8880
    %s8910 = sld [smem:[#allocation2 + $0x307]]
    %v8911 = vstv %s8910
    %v8912 = vmul.f32 %v52, %v8911
    %v8913 = vmul.f32 %v53, %v8911
    %v8914 = vmul.f32 %v54, %v8911
    %v8915 = vmul.f32 %v55, %v8911
    %v8916 = vmul.f32 %v56, %v8911
    %v8917 = vmul.f32 %v57, %v8911
    %v8918 = vmul.f32 %v58, %v8911
    %v8919 = vmul.f32 %v59, %v8911
    %v8920 = vmul.f32 %v60, %v8911
    %v8921 = vmul.f32 %v61, %v8911
    %8932 = vrot.lane.b32.xlu0 %v8912, 57
    %v8933 = vpop.permute.xlu0 %8932
    %8934 = vrot.lane.b32.xlu0 %v8913, 57
    %v8935 = vpop.permute.xlu0 %8934
    %8936 = vrot.lane.b32.xlu0 %v8914, 57
    %v8937 = vpop.permute.xlu0 %8936
    %8938 = vrot.lane.b32.xlu0 %v8915, 57
    %v8939 = vpop.permute.xlu0 %8938
    %8940 = vrot.lane.b32.xlu0 %v8916, 57
    %v8941 = vpop.permute.xlu0 %8940
    %8942 = vrot.lane.b32.xlu0 %v8917, 57
    %v8943 = vpop.permute.xlu0 %8942
    %8944 = vrot.lane.b32.xlu0 %v8918, 57
    %v8945 = vpop.permute.xlu0 %8944
    %8946 = vrot.lane.b32.xlu0 %v8919, 57
    %v8947 = vpop.permute.xlu0 %8946
    %8948 = vrot.lane.b32.xlu0 %v8920, 57
    %v8949 = vpop.permute.xlu0 %8948
    %8950 = vrot.lane.b32.xlu0 %v8921, 57
    %v8951 = vpop.permute.xlu0 %8950
    %v8952 = vsel %vm548, %v8933, %v8935
    %v8953 = vsel %vm548, %v8935, %v8937
    %v8954 = vsel %vm548, %v8937, %v8939
    %v8955 = vsel %vm548, %v8939, %v8941
    %v8956 = vsel %vm548, %v8941, %v8943
    %v8957 = vsel %vm548, %v8943, %v8945
    %v8958 = vsel %vm548, %v8945, %v8947
    %v8959 = vsel %vm548, %v8947, %v8949
    %v8960 = vsel %vm548, %v8949, %v8951
    %v8971 = vadd.f32 %v8900, %v8952
    %v8972 = vadd.f32 %v8901, %v8953
    %v8973 = vadd.f32 %v8902, %v8954
    %v8974 = vadd.f32 %v8903, %v8955
    %v8975 = vadd.f32 %v8904, %v8956
    %v8976 = vadd.f32 %v8905, %v8957
    %v8977 = vadd.f32 %v8906, %v8958
    %v8978 = vadd.f32 %v8907, %v8959
    %v8979 = vadd.f32 %v8908, %v8960
    %v8980 = vadd.f32 %v8909, %v8951
    %s8981 = sld [smem:[#allocation2 + $0x308]]
    %v8982 = vstv %s8981
    %v8983 = vmul.f32 %v52, %v8982
    %v8984 = vmul.f32 %v53, %v8982
    %v8985 = vmul.f32 %v54, %v8982
    %v8986 = vmul.f32 %v55, %v8982
    %v8987 = vmul.f32 %v56, %v8982
    %v8988 = vmul.f32 %v57, %v8982
    %v8989 = vmul.f32 %v58, %v8982
    %v8990 = vmul.f32 %v59, %v8982
    %v8991 = vmul.f32 %v60, %v8982
    %v8992 = vmul.f32 %v61, %v8982
    %9003 = vrot.lane.b32.xlu0 %v8983, 56
    %v9004 = vpop.permute.xlu0 %9003
    %9005 = vrot.lane.b32.xlu0 %v8984, 56
    %v9006 = vpop.permute.xlu0 %9005
    %9007 = vrot.lane.b32.xlu0 %v8985, 56
    %v9008 = vpop.permute.xlu0 %9007
    %9009 = vrot.lane.b32.xlu0 %v8986, 56
    %v9010 = vpop.permute.xlu0 %9009
    %9011 = vrot.lane.b32.xlu0 %v8987, 56
    %v9012 = vpop.permute.xlu0 %9011
    %9013 = vrot.lane.b32.xlu0 %v8988, 56
    %v9014 = vpop.permute.xlu0 %9013
    %9015 = vrot.lane.b32.xlu0 %v8989, 56
    %v9016 = vpop.permute.xlu0 %9015
    %9017 = vrot.lane.b32.xlu0 %v8990, 56
    %v9018 = vpop.permute.xlu0 %9017
    %9019 = vrot.lane.b32.xlu0 %v8991, 56
    %v9020 = vpop.permute.xlu0 %9019
    %9021 = vrot.lane.b32.xlu0 %v8992, 56
    %v9022 = vpop.permute.xlu0 %9021
    %v9023 = vsel %vm620, %v9004, %v9006
    %v9024 = vsel %vm620, %v9006, %v9008
    %v9025 = vsel %vm620, %v9008, %v9010
    %v9026 = vsel %vm620, %v9010, %v9012
    %v9027 = vsel %vm620, %v9012, %v9014
    %v9028 = vsel %vm620, %v9014, %v9016
    %v9029 = vsel %vm620, %v9016, %v9018
    %v9030 = vsel %vm620, %v9018, %v9020
    %v9031 = vsel %vm620, %v9020, %v9022
    %v9042 = vadd.f32 %v8971, %v9023
    %v9043 = vadd.f32 %v8972, %v9024
    %v9044 = vadd.f32 %v8973, %v9025
    %v9045 = vadd.f32 %v8974, %v9026
    %v9046 = vadd.f32 %v8975, %v9027
    %v9047 = vadd.f32 %v8976, %v9028
    %v9048 = vadd.f32 %v8977, %v9029
    %v9049 = vadd.f32 %v8978, %v9030
    %v9050 = vadd.f32 %v8979, %v9031
    %v9051 = vadd.f32 %v8980, %v9022
    %s9052 = sld [smem:[#allocation4 + $0x6]]
    %v9053 = vstv %s9052
    %v9054 = vadd.f32 %v9042, %v9053
    %v9055 = vadd.f32 %v9043, %v9053
    %v9056 = vadd.f32 %v9044, %v9053
    %v9057 = vadd.f32 %v9045, %v9053
    %v9058 = vadd.f32 %v9046, %v9053
    %v9059 = vadd.f32 %v9047, %v9053
    %v9060 = vadd.f32 %v9048, %v9053
    %v9061 = vadd.f32 %v9049, %v9053
    %v9062 = vadd.f32 %v9050, %v9053
    %v9063 = vadd.f32 %v9051, %v9053
    %v9064 = vmax.f32 %v9054, 0.0
    %v9065 = vmax.f32 %v9055, 0.0
    %v9066 = vmax.f32 %v9056, 0.0
    %v9067 = vmax.f32 %v9057, 0.0
    %v9068 = vmax.f32 %v9058, 0.0
    %v9069 = vmax.f32 %v9059, 0.0
    %v9070 = vmax.f32 %v9060, 0.0
    %v9071 = vmax.f32 %v9061, 0.0
    %v9072 = vmax.f32 %v9062, 0.0
    %v9073 = vmax.f32 %v9063, 0.0
    %v9074 = vpack.c.bf16 %v9064, %v9064
    %v9075 = vpack.c.bf16 %v9065, %v9065
    %v9076 = vpack.c.bf16 %v9066, %v9066
    %v9077 = vpack.c.bf16 %v9067, %v9067
    %v9078 = vpack.c.bf16 %v9068, %v9068
    %v9079 = vpack.c.bf16 %v9069, %v9069
    %v9080 = vpack.c.bf16 %v9070, %v9070
    %v9081 = vpack.c.bf16 %v9071, %v9071
    %v9082 = vpack.c.bf16 %v9072, %v9072
    %v9083 = vpack.c.bf16 %v9073, %v9073
    %s9084 = scalar_lea.vmem %s3, 3480
    %v9085 = vld [vmem:[%s9084] sm:$0xf]
    %v9086 = vld [vmem:[%s9084 + $0x4] sm:$0xf]
    %v9087 = vld [vmem:[%s9084 + $0x8] sm:$0xf]
    %v9088 = vld [vmem:[%s9084 + $0xc] sm:$0xf]
    %v9089 = vld [vmem:[%s9084 + $0x10] sm:$0xf]
    %v9090 = vld [vmem:[%s9084 + $0x14] sm:$0xf]
    %v9091 = vld [vmem:[%s9084 + $0x18] sm:$0xf]
    %v9092 = vld [vmem:[%s9084 + $0x1c] sm:$0xf]
    %v9093 = vld [vmem:[%s9084 + $0x20] sm:$0xf]
    %v9094 = vld [vmem:[%s9084 + $0x24] sm:$0xf]
    %v9095 = vld [vmem:[%s9084 + $0x28] sm:$0xf]
    %v9096 = vld [vmem:[%s9084 + $0x2c] sm:$0xf]
    %v9097 = vld [vmem:[%s9084 + $0x30] sm:$0xf]
    %v9098 = vld [vmem:[%s9084 + $0x34] sm:$0xf]
    %v9099 = vld [vmem:[%s9084 + $0x38] sm:$0xf]
    %v9100 = vld [vmem:[%s9084 + $0x3c] sm:$0xf]
    %v9101 = vld [vmem:[%s9084 + $0x40] sm:$0xf]
    %v9102 = vld [vmem:[%s9084 + $0x44] sm:$0xf]
    %v9103 = vld [vmem:[%s9084 + $0x48] sm:$0xf]
    %v9104 = vld [vmem:[%s9084 + $0x4c] sm:$0xf]
    %v9105 = vld [vmem:[%s9084 + $0x50] sm:$0xf]
    %v9106 = vld [vmem:[%s9084 + $0x54] sm:$0xf]
    %v9107 = vld [vmem:[%s9084 + $0x58] sm:$0xf]
    %v9108 = vld [vmem:[%s9084 + $0x5c] sm:$0xf]
    %v9109 = vld [vmem:[%s9084 + $0x60] sm:$0xf]
    %v9110 = vld [vmem:[%s9084 + $0x64] sm:$0xf]
    %v9111 = vld [vmem:[%s9084 + $0x68] sm:$0xf]
    %v9112 = vld [vmem:[%s9084 + $0x6c] sm:$0xf]
    %v9113 = vld [vmem:[%s9084 + $0x70] sm:$0xf]
    %v9114 = vld [vmem:[%s9084 + $0x74] sm:$0xf]
    %v9115 = vld [vmem:[%s9084 + $0x78] sm:$0xf]
    %v9116 = vld [vmem:[%s9084 + $0x7c] sm:$0xf]
    %v9117 = vld [vmem:[%s9084 + $0x80] sm:$0xf]
    %v9118 = vld [vmem:[%s9084 + $0x84] sm:$0xf]
    %v9119 = vld [vmem:[%s9084 + $0x88] sm:$0xf]
    %v9120 = vld [vmem:[%s9084 + $0x8c] sm:$0xf]
    %v9121 = vld [vmem:[%s9084 + $0x90] sm:$0xf]
    %v9122 = vld [vmem:[%s9084 + $0x94] sm:$0xf]
    %v9123 = vld [vmem:[%s9084 + $0x98] sm:$0xf]
    %v9124 = vld [vmem:[%s9084 + $0x9c] sm:$0xf]
    %v9125 = vld [vmem:[%s9084 + $0xa0] sm:$0xf]
    %v9126 = vld [vmem:[%s9084 + $0xa4] sm:$0xf]
    %v9127 = vld [vmem:[%s9084 + $0xa8] sm:$0xf]
    %v9128 = vld [vmem:[%s9084 + $0xac] sm:$0xf]
    %v9129 = vld [vmem:[%s9084 + $0xb0] sm:$0xf]
    %v9130 = vld [vmem:[%s9084 + $0xb4] sm:$0xf]
    %v9131 = vld [vmem:[%s9084 + $0xb8] sm:$0xf]
    %v9132 = vld [vmem:[%s9084 + $0xbc] sm:$0xf]
    %v9133 = vld [vmem:[%s9084 + $0xc0] sm:$0xf]
    %v9134 = vld [vmem:[%s9084 + $0xc4] sm:$0xf]
    %v9135 = vld [vmem:[%s9084 + $0xc8] sm:$0xf]
    %v9136 = vld [vmem:[%s9084 + $0xcc] sm:$0xf]
    %v9137 = vld [vmem:[%s9084 + $0xd0] sm:$0xf]
    %v9138 = vld [vmem:[%s9084 + $0xd4] sm:$0xf]
    %v9139 = vld [vmem:[%s9084 + $0xd8] sm:$0xf]
    %v9140 = vld [vmem:[%s9084 + $0xdc] sm:$0xf]
    %v9141 = vld [vmem:[%s9084 + $0xe0] sm:$0xf]
    %v9142 = vld [vmem:[%s9084 + $0xe4] sm:$0xf]
    %v9143 = vld [vmem:[%s9084 + $0xe8] sm:$0xf]
    %v9144 = vld [vmem:[%s9084 + $0xec] sm:$0xf]
    %v9145 = vld [vmem:[%s9084 + $0xf0] sm:$0xf]
    %v9146 = vld [vmem:[%s9084 + $0xf4] sm:$0xf]
    %v9147 = vld [vmem:[%s9084 + $0xf8] sm:$0xf]
    %v9148 = vld [vmem:[%s9084 + $0xfc] sm:$0xf]
    %v9149 = vld [vmem:[%s9084 + $0x100] sm:$0xf]
    %v9150 = vld [vmem:[%s9084 + $0x104] sm:$0xf]
    %v9151 = vld [vmem:[%s9084 + $0x108] sm:$0xf]
    %v9152 = vld [vmem:[%s9084 + $0x10c] sm:$0xf]
    %v9153 = vld [vmem:[%s9084 + $0x110] sm:$0xf]
    %v9154 = vld [vmem:[%s9084 + $0x114] sm:$0xf]
    %v9155 = vld [vmem:[%s9084 + $0x118] sm:$0xf]
    %v9156 = vld [vmem:[%s9084 + $0x11c] sm:$0xf]
    %v9157 = vld [vmem:[%s9084 + $0x120] sm:$0xf]
    %v9158 = vld [vmem:[%s9084 + $0x124] sm:$0xf]
    %v9159 = vld [vmem:[%s9084 + $0x128] sm:$0xf]
    %v9160 = vld [vmem:[%s9084 + $0x12c] sm:$0xf]
    %v9161 = vld [vmem:[%s9084 + $0x130] sm:$0xf]
    %v9162 = vld [vmem:[%s9084 + $0x134] sm:$0xf]
    %v9163 = vld [vmem:[%s9084 + $0x138] sm:$0xf]
    %v9164 = vld [vmem:[%s9084 + $0x13c] sm:$0xf]
    %v9165 = vld [vmem:[%s9084 + $0x140] sm:$0xf]
    %v9166 = vld [vmem:[%s9084 + $0x144] sm:$0xf]
    %v9167 = vld [vmem:[%s9084 + $0x148] sm:$0xf]
    %v9168 = vld [vmem:[%s9084 + $0x14c] sm:$0xf]
    %v9169 = vld [vmem:[%s9084 + $0x150] sm:$0xf]
    %v9170 = vld [vmem:[%s9084 + $0x154] sm:$0xf]
    %v9171 = vld [vmem:[%s9084 + $0x158] sm:$0xf]
    %v9172 = vld [vmem:[%s9084 + $0x15c] sm:$0xf]
    %v9173 = vld [vmem:[%s9084 + $0x160] sm:$0xf]
    %v9174 = vld [vmem:[%s9084 + $0x164] sm:$0xf]
    %v9175 = vld [vmem:[%s9084 + $0x168] sm:$0xf]
    %v9176 = vld [vmem:[%s9084 + $0x16c] sm:$0xf]
    %v9177 = vld [vmem:[%s9084 + $0x170] sm:$0xf]
    %v9178 = vld [vmem:[%s9084 + $0x174] sm:$0xf]
    %v9179 = vld [vmem:[%s9084 + $0x178] sm:$0xf]
    %v9180 = vld [vmem:[%s9084 + $0x17c] sm:$0xf]
    %v9181 = vld [vmem:[%s9084 + $0x180] sm:$0xf]
    %v9182 = vld [vmem:[%s9084 + $0x184] sm:$0xf]
    %v9183 = vld [vmem:[%s9084 + $0x188] sm:$0xf]
    %v9184 = vld [vmem:[%s9084 + $0x18c] sm:$0xf]
    %v9185 = vld [vmem:[%s9084 + $0x190] sm:$0xf]
    %v9186 = vld [vmem:[%s9084 + $0x194] sm:$0xf]
    %v9187 = vld [vmem:[%s9084 + $0x198] sm:$0xf]
    %v9188 = vld [vmem:[%s9084 + $0x19c] sm:$0xf]
    %v9189 = vld [vmem:[%s9084 + $0x1a0] sm:$0xf]
    %v9190 = vld [vmem:[%s9084 + $0x1a4] sm:$0xf]
    %v9191 = vld [vmem:[%s9084 + $0x1a8] sm:$0xf]
    %v9192 = vld [vmem:[%s9084 + $0x1ac] sm:$0xf]
    %v9193 = vld [vmem:[%s9084 + $0x1b0] sm:$0xf]
    %v9194 = vld [vmem:[%s9084 + $0x1b4] sm:$0xf]
    %v9195 = vld [vmem:[%s9084 + $0x1b8] sm:$0xf]
    %v9196 = vld [vmem:[%s9084 + $0x1bc] sm:$0xf]
    %v9197 = vld [vmem:[%s9084 + $0x1c0] sm:$0xf]
    %v9198 = vld [vmem:[%s9084 + $0x1c4] sm:$0xf]
    %v9199 = vld [vmem:[%s9084 + $0x1c8] sm:$0xf]
    %v9200 = vld [vmem:[%s9084 + $0x1cc] sm:$0xf]
    %v9201 = vld [vmem:[%s9084 + $0x1d0] sm:$0xf]
    %v9202 = vld [vmem:[%s9084 + $0x1d4] sm:$0xf]
    %v9203 = vld [vmem:[%s9084 + $0x1d8] sm:$0xf]
    %v9204 = vld [vmem:[%s9084 + $0x1dc] sm:$0xf]
    %v9205 = vld [vmem:[%s9084 + $0x1e0] sm:$0xf]
    %v9206 = vld [vmem:[%s9084 + $0x1e4] sm:$0xf]
    %v9207 = vld [vmem:[%s9084 + $0x1e8] sm:$0xf]
    %v9208 = vld [vmem:[%s9084 + $0x1ec] sm:$0xf]
    %v9209 = vld [vmem:[%s9084 + $0x1f0] sm:$0xf]
    %v9210 = vld [vmem:[%s9084 + $0x1f4] sm:$0xf]
    %v9211 = vld [vmem:[%s9084 + $0x1f8] sm:$0xf]
    %v9212 = vld [vmem:[%s9084 + $0x1fc] sm:$0xf]
    %v9213 = vld [vmem:[%s9084 + $0x200] sm:$0xf]
    %v9214 = vld [vmem:[%s9084 + $0x204] sm:$0xf]
    %v9215 = vld [vmem:[%s9084 + $0x208] sm:$0xf]
    %v9216 = vld [vmem:[%s9084 + $0x20c] sm:$0xf]
    %v9217 = vld [vmem:[%s9084 + $0x210] sm:$0xf]
    %v9218 = vld [vmem:[%s9084 + $0x214] sm:$0xf]
    %v9219 = vld [vmem:[%s9084 + $0x218] sm:$0xf]
    %v9220 = vld [vmem:[%s9084 + $0x21c] sm:$0xf]
    %v9221 = vld [vmem:[%s9084 + $0x220] sm:$0xf]
    %v9222 = vld [vmem:[%s9084 + $0x224] sm:$0xf]
    %v9223 = vld [vmem:[%s9084 + $0x228] sm:$0xf]
    %v9224 = vld [vmem:[%s9084 + $0x22c] sm:$0xf]
    %v9225 = vld [vmem:[%s9084 + $0x230] sm:$0xf]
    %v9226 = vld [vmem:[%s9084 + $0x234] sm:$0xf]
    %v9227 = vld [vmem:[%s9084 + $0x238] sm:$0xf]
    %v9228 = vld [vmem:[%s9084 + $0x23c] sm:$0xf]
    %v9229 = vld [vmem:[%s9084 + $0x240] sm:$0x3]
    %v9375 = vunpack.c.l.b16 %v9085
    %v9376 = vunpack.c.l.b16 %v9086
    %v9377 = vunpack.c.l.b16 %v9087
    %v9378 = vunpack.c.l.b16 %v9088
    %v9379 = vunpack.c.l.b16 %v9089
    %v9380 = vunpack.c.l.b16 %v9090
    %v9381 = vunpack.c.l.b16 %v9091
    %v9382 = vunpack.c.l.b16 %v9092
    %v9383 = vunpack.c.l.b16 %v9093
    %v9384 = vunpack.c.l.b16 %v9094
    %v9385 = vunpack.c.l.b16 %v9095
    %v9386 = vunpack.c.l.b16 %v9096
    %v9387 = vunpack.c.l.b16 %v9097
    %v9388 = vunpack.c.l.b16 %v9098
    %v9389 = vunpack.c.l.b16 %v9099
    %v9390 = vunpack.c.l.b16 %v9100
    %v9391 = vunpack.c.l.b16 %v9101
    %v9392 = vunpack.c.l.b16 %v9102
    %v9393 = vunpack.c.l.b16 %v9103
    %v9394 = vunpack.c.l.b16 %v9104
    %v9395 = vunpack.c.l.b16 %v9105
    %v9396 = vunpack.c.l.b16 %v9106
    %v9397 = vunpack.c.l.b16 %v9107
    %v9398 = vunpack.c.l.b16 %v9108
    %v9399 = vunpack.c.l.b16 %v9109
    %v9400 = vunpack.c.l.b16 %v9110
    %v9401 = vunpack.c.l.b16 %v9111
    %v9402 = vunpack.c.l.b16 %v9112
    %v9403 = vunpack.c.l.b16 %v9113
    %v9404 = vunpack.c.l.b16 %v9114
    %v9405 = vunpack.c.l.b16 %v9115
    %v9406 = vunpack.c.l.b16 %v9116
    %v9407 = vunpack.c.l.b16 %v9117
    %v9408 = vunpack.c.l.b16 %v9118
    %v9409 = vunpack.c.l.b16 %v9119
    %v9410 = vunpack.c.l.b16 %v9120
    %v9411 = vunpack.c.l.b16 %v9121
    %v9412 = vunpack.c.l.b16 %v9122
    %v9413 = vunpack.c.l.b16 %v9123
    %v9414 = vunpack.c.l.b16 %v9124
    %v9415 = vunpack.c.l.b16 %v9125
    %v9416 = vunpack.c.l.b16 %v9126
    %v9417 = vunpack.c.l.b16 %v9127
    %v9418 = vunpack.c.l.b16 %v9128
    %v9419 = vunpack.c.l.b16 %v9129
    %v9420 = vunpack.c.l.b16 %v9130
    %v9421 = vunpack.c.l.b16 %v9131
    %v9422 = vunpack.c.l.b16 %v9132
    %v9423 = vunpack.c.l.b16 %v9133
    %v9424 = vunpack.c.l.b16 %v9134
    %v9425 = vunpack.c.l.b16 %v9135
    %v9426 = vunpack.c.l.b16 %v9136
    %v9427 = vunpack.c.l.b16 %v9137
    %v9428 = vunpack.c.l.b16 %v9138
    %v9429 = vunpack.c.l.b16 %v9139
    %v9430 = vunpack.c.l.b16 %v9140
    %v9431 = vunpack.c.l.b16 %v9141
    %v9432 = vunpack.c.l.b16 %v9142
    %v9433 = vunpack.c.l.b16 %v9143
    %v9434 = vunpack.c.l.b16 %v9144
    %v9435 = vunpack.c.l.b16 %v9145
    %v9436 = vunpack.c.l.b16 %v9146
    %v9437 = vunpack.c.l.b16 %v9147
    %v9438 = vunpack.c.l.b16 %v9148
    %v9439 = vunpack.c.l.b16 %v9149
    %v9440 = vunpack.c.l.b16 %v9150
    %v9441 = vunpack.c.l.b16 %v9151
    %v9442 = vunpack.c.l.b16 %v9152
    %v9443 = vunpack.c.l.b16 %v9153
    %v9444 = vunpack.c.l.b16 %v9154
    %v9445 = vunpack.c.l.b16 %v9155
    %v9446 = vunpack.c.l.b16 %v9156
    %v9447 = vunpack.c.l.b16 %v9157
    %v9448 = vunpack.c.l.b16 %v9158
    %v9449 = vunpack.c.l.b16 %v9159
    %v9450 = vunpack.c.l.b16 %v9160
    %v9451 = vunpack.c.l.b16 %v9161
    %v9452 = vunpack.c.l.b16 %v9162
    %v9453 = vunpack.c.l.b16 %v9163
    %v9454 = vunpack.c.l.b16 %v9164
    %v9455 = vunpack.c.l.b16 %v9165
    %v9456 = vunpack.c.l.b16 %v9166
    %v9457 = vunpack.c.l.b16 %v9167
    %v9458 = vunpack.c.l.b16 %v9168
    %v9459 = vunpack.c.l.b16 %v9169
    %v9460 = vunpack.c.l.b16 %v9170
    %v9461 = vunpack.c.l.b16 %v9171
    %v9462 = vunpack.c.l.b16 %v9172
    %v9463 = vunpack.c.l.b16 %v9173
    %v9464 = vunpack.c.l.b16 %v9174
    %v9465 = vunpack.c.l.b16 %v9175
    %v9466 = vunpack.c.l.b16 %v9176
    %v9467 = vunpack.c.l.b16 %v9177
    %v9468 = vunpack.c.l.b16 %v9178
    %v9469 = vunpack.c.l.b16 %v9179
    %v9470 = vunpack.c.l.b16 %v9180
    %v9471 = vunpack.c.l.b16 %v9181
    %v9472 = vunpack.c.l.b16 %v9182
    %v9473 = vunpack.c.l.b16 %v9183
    %v9474 = vunpack.c.l.b16 %v9184
    %v9475 = vunpack.c.l.b16 %v9185
    %v9476 = vunpack.c.l.b16 %v9186
    %v9477 = vunpack.c.l.b16 %v9187
    %v9478 = vunpack.c.l.b16 %v9188
    %v9479 = vunpack.c.l.b16 %v9189
    %v9480 = vunpack.c.l.b16 %v9190
    %v9481 = vunpack.c.l.b16 %v9191
    %v9482 = vunpack.c.l.b16 %v9192
    %v9483 = vunpack.c.l.b16 %v9193
    %v9484 = vunpack.c.l.b16 %v9194
    %v9485 = vunpack.c.l.b16 %v9195
    %v9486 = vunpack.c.l.b16 %v9196
    %v9487 = vunpack.c.l.b16 %v9197
    %v9488 = vunpack.c.l.b16 %v9198
    %v9489 = vunpack.c.l.b16 %v9199
    %v9490 = vunpack.c.l.b16 %v9200
    %v9491 = vunpack.c.l.b16 %v9201
    %v9492 = vunpack.c.l.b16 %v9202
    %v9493 = vunpack.c.l.b16 %v9203
    %v9494 = vunpack.c.l.b16 %v9204
    %v9495 = vunpack.c.l.b16 %v9205
    %v9496 = vunpack.c.l.b16 %v9206
    %v9497 = vunpack.c.l.b16 %v9207
    %v9498 = vunpack.c.l.b16 %v9208
    %v9499 = vunpack.c.l.b16 %v9209
    %v9500 = vunpack.c.l.b16 %v9210
    %v9501 = vunpack.c.l.b16 %v9211
    %v9502 = vunpack.c.l.b16 %v9212
    %v9503 = vunpack.c.l.b16 %v9213
    %v9504 = vunpack.c.l.b16 %v9214
    %v9505 = vunpack.c.l.b16 %v9215
    %v9506 = vunpack.c.l.b16 %v9216
    %v9507 = vunpack.c.l.b16 %v9217
    %v9508 = vunpack.c.l.b16 %v9218
    %v9509 = vunpack.c.l.b16 %v9219
    %v9510 = vunpack.c.l.b16 %v9220
    %v9511 = vunpack.c.l.b16 %v9221
    %v9512 = vunpack.c.l.b16 %v9222
    %v9513 = vunpack.c.l.b16 %v9223
    %v9514 = vunpack.c.l.b16 %v9224
    %v9515 = vunpack.c.l.b16 %v9225
    %v9516 = vunpack.c.l.b16 %v9226
    %v9517 = vunpack.c.l.b16 %v9227
    %v9518 = vunpack.c.l.b16 %v9228
    %v9519 = vunpack.c.l.b16 %v9229
    %v9520 = vpack.c.b16 %v9376, %v9375
    %v9521 = vpack.c.b16 %v9378, %v9377
    %v9522 = vpack.c.b16 %v9380, %v9379
    %v9523 = vpack.c.b16 %v9382, %v9381
    %v9524 = vpack.c.b16 %v9384, %v9383
    %v9525 = vpack.c.b16 %v9386, %v9385
    %v9526 = vpack.c.b16 %v9388, %v9387
    %v9527 = vpack.c.b16 %v9390, %v9389
    %v9528 = vpack.c.b16 %v9392, %v9391
    %v9529 = vpack.c.b16 %v9394, %v9393
    %v9530 = vpack.c.b16 %v9396, %v9395
    %v9531 = vpack.c.b16 %v9398, %v9397
    %v9532 = vpack.c.b16 %v9400, %v9399
    %v9533 = vpack.c.b16 %v9402, %v9401
    %v9534 = vpack.c.b16 %v9404, %v9403
    %v9535 = vpack.c.b16 %v9406, %v9405
    %v9536 = vpack.c.b16 %v9408, %v9407
    %v9537 = vpack.c.b16 %v9410, %v9409
    %v9538 = vpack.c.b16 %v9412, %v9411
    %v9539 = vpack.c.b16 %v9414, %v9413
    %v9540 = vpack.c.b16 %v9416, %v9415
    %v9541 = vpack.c.b16 %v9418, %v9417
    %v9542 = vpack.c.b16 %v9420, %v9419
    %v9543 = vpack.c.b16 %v9422, %v9421
    %v9544 = vpack.c.b16 %v9424, %v9423
    %v9545 = vpack.c.b16 %v9426, %v9425
    %v9546 = vpack.c.b16 %v9428, %v9427
    %v9547 = vpack.c.b16 %v9430, %v9429
    %v9548 = vpack.c.b16 %v9432, %v9431
    %v9549 = vpack.c.b16 %v9434, %v9433
    %v9550 = vpack.c.b16 %v9436, %v9435
    %v9551 = vpack.c.b16 %v9438, %v9437
    %v9552 = vpack.c.b16 %v9440, %v9439
    %v9553 = vpack.c.b16 %v9442, %v9441
    %v9554 = vpack.c.b16 %v9444, %v9443
    %v9555 = vpack.c.b16 %v9446, %v9445
    %v9556 = vpack.c.b16 %v9448, %v9447
    %v9557 = vpack.c.b16 %v9450, %v9449
    %v9558 = vpack.c.b16 %v9452, %v9451
    %v9559 = vpack.c.b16 %v9454, %v9453
    %v9560 = vpack.c.b16 %v9456, %v9455
    %v9561 = vpack.c.b16 %v9458, %v9457
    %v9562 = vpack.c.b16 %v9460, %v9459
    %v9563 = vpack.c.b16 %v9462, %v9461
    %v9564 = vpack.c.b16 %v9464, %v9463
    %v9565 = vpack.c.b16 %v9466, %v9465
    %v9566 = vpack.c.b16 %v9468, %v9467
    %v9567 = vpack.c.b16 %v9470, %v9469
    %v9568 = vpack.c.b16 %v9472, %v9471
    %v9569 = vpack.c.b16 %v9474, %v9473
    %v9570 = vpack.c.b16 %v9476, %v9475
    %v9571 = vpack.c.b16 %v9478, %v9477
    %v9572 = vpack.c.b16 %v9480, %v9479
    %v9573 = vpack.c.b16 %v9482, %v9481
    %v9574 = vpack.c.b16 %v9484, %v9483
    %v9575 = vpack.c.b16 %v9486, %v9485
    %v9576 = vpack.c.b16 %v9488, %v9487
    %v9577 = vpack.c.b16 %v9490, %v9489
    %v9578 = vpack.c.b16 %v9492, %v9491
    %v9579 = vpack.c.b16 %v9494, %v9493
    %v9580 = vpack.c.b16 %v9496, %v9495
    %v9581 = vpack.c.b16 %v9498, %v9497
    %v9582 = vpack.c.b16 %v9500, %v9499
    %v9583 = vpack.c.b16 %v9502, %v9501
    %v9584 = vpack.c.b16 %v9504, %v9503
    %v9585 = vpack.c.b16 %v9506, %v9505
    %v9586 = vpack.c.b16 %v9508, %v9507
    %v9587 = vpack.c.b16 %v9510, %v9509
    %v9588 = vpack.c.b16 %v9512, %v9511
    %v9589 = vpack.c.b16 %v9514, %v9513
    %v9590 = vpack.c.b16 %v9516, %v9515
    %v9591 = vpack.c.b16 %v9518, %v9517
    %v9592 = vpack.c.b16 %v9519, %v9519
    %v9666 = vsel %vm2020, %v9083, 0
    %v9669 = vand.u32 %v9592, %v2027
    %9671 = vmatprep.subr.bf16.mxu0 0
    %9672 = vmatpush1.bf16.msra.mxu0 %v9527
    %9673 = vmatprep.subr.bf16.mxu0 0
    %9674 = vmatpush1.bf16.msra.mxu0 %v9526
    %9675 = vmatprep.subr.bf16.mxu0 0
    %9676 = vmatpush1.bf16.msra.mxu0 %v9525
    %9677 = vmatprep.subr.bf16.mxu0 0
    %9678 = vmatpush1.bf16.msra.mxu0 %v9524
    %9679 = vmatprep.subr.bf16.mxu0 0
    %9680 = vmatpush1.bf16.msra.mxu0 %v9523
    %9681 = vmatprep.subr.bf16.mxu0 0
    %9682 = vmatpush1.bf16.msra.mxu0 %v9522
    %9683 = vmatprep.subr.bf16.mxu0 0
    %9684 = vmatpush1.bf16.msra.mxu0 %v9521
    %9685 = vmatprep.subr.bf16.mxu0 0
    %9686 = vmatpush1.bf16.msra.mxu0 %v9520
    %9687 = vmatprep.subr.bf16.mxu0 0
    %9688 = vmatpush2.bf16.msra.mxu0 %v9535
    %9689 = vmatprep.subr.bf16.mxu0 0
    %9690 = vmatpush2.bf16.msra.mxu0 %v9534
    %9691 = vmatprep.subr.bf16.mxu0 0
    %9692 = vmatpush2.bf16.msra.mxu0 %v9533
    %9693 = vmatprep.subr.bf16.mxu0 0
    %9694 = vmatpush2.bf16.msra.mxu0 %v9532
    %9695 = vmatprep.subr.bf16.mxu0 0
    %9696 = vmatpush2.bf16.msra.mxu0 %v9531
    %9697 = vmatprep.subr.bf16.mxu0 0
    %9698 = vmatpush2.bf16.msra.mxu0 %v9530
    %9699 = vmatprep.subr.bf16.mxu0 0
    %9700 = vmatpush2.bf16.msra.mxu0 %v9529
    %9701 = vmatprep.subr.bf16.mxu0 0
    %9702 = vmatpush2.bf16.msra.mxu0 %v9528
    %9703 = vmatprep.mubr.bf16.mxu0 %v9075
    %9704 = vmatmul.mubr.bf16.gmra.mxu0 %v9074
    %v9705 = vpop.f32.mrf.mxu0
    %v9706 = vadd.f32 0.0, %v9705
    %v9707 = vpop.f32.mrf.mxu0
    %v9708 = vpop.f32.mrf.mxu0
    %v9709 = vpop.f32.mrf.mxu0
    %9710 = vdwg.mxu0
    %9711 = vmatprep.subr.bf16.mxu0 0
    %9712 = vmatpush1.bf16.msra.mxu0 %v9543
    %9713 = vmatprep.subr.bf16.mxu0 0
    %9714 = vmatpush1.bf16.msra.mxu0 %v9542
    %9715 = vmatprep.subr.bf16.mxu0 0
    %9716 = vmatpush1.bf16.msra.mxu0 %v9541
    %9717 = vmatprep.subr.bf16.mxu0 0
    %9718 = vmatpush1.bf16.msra.mxu0 %v9540
    %9719 = vmatprep.subr.bf16.mxu0 0
    %9720 = vmatpush1.bf16.msra.mxu0 %v9539
    %9721 = vmatprep.subr.bf16.mxu0 0
    %9722 = vmatpush1.bf16.msra.mxu0 %v9538
    %9723 = vmatprep.subr.bf16.mxu0 0
    %9724 = vmatpush1.bf16.msra.mxu0 %v9537
    %9725 = vmatprep.subr.bf16.mxu0 0
    %9726 = vmatpush1.bf16.msra.mxu0 %v9536
    %9727 = vmatprep.subr.bf16.mxu0 0
    %9728 = vmatpush2.bf16.msra.mxu0 %v9551
    %9729 = vmatprep.subr.bf16.mxu0 0
    %9730 = vmatpush2.bf16.msra.mxu0 %v9550
    %9731 = vmatprep.subr.bf16.mxu0 0
    %9732 = vmatpush2.bf16.msra.mxu0 %v9549
    %9733 = vmatprep.subr.bf16.mxu0 0
    %9734 = vmatpush2.bf16.msra.mxu0 %v9548
    %9735 = vmatprep.subr.bf16.mxu0 0
    %9736 = vmatpush2.bf16.msra.mxu0 %v9547
    %9737 = vmatprep.subr.bf16.mxu0 0
    %9738 = vmatpush2.bf16.msra.mxu0 %v9546
    %9739 = vmatprep.subr.bf16.mxu0 0
    %9740 = vmatpush2.bf16.msra.mxu0 %v9545
    %9741 = vmatprep.subr.bf16.mxu0 0
    %9742 = vmatpush2.bf16.msra.mxu0 %v9544
    %9743 = vmatprep.mubr.bf16.mxu0 %v9077
    %9744 = vmatmul.mubr.bf16.gmra.mxu0 %v9076
    %v9745 = vpop.f32.mrf.mxu0
    %v9746 = vadd.f32 %v9706, %v9745
    %v9747 = vpop.f32.mrf.mxu0
    %v9748 = vpop.f32.mrf.mxu0
    %v9749 = vpop.f32.mrf.mxu0
    %9750 = vdwg.mxu0
    %9751 = vmatprep.subr.bf16.mxu0 0
    %9752 = vmatpush1.bf16.msra.mxu0 %v9559
    %9753 = vmatprep.subr.bf16.mxu0 0
    %9754 = vmatpush1.bf16.msra.mxu0 %v9558
    %9755 = vmatprep.subr.bf16.mxu0 0
    %9756 = vmatpush1.bf16.msra.mxu0 %v9557
    %9757 = vmatprep.subr.bf16.mxu0 0
    %9758 = vmatpush1.bf16.msra.mxu0 %v9556
    %9759 = vmatprep.subr.bf16.mxu0 0
    %9760 = vmatpush1.bf16.msra.mxu0 %v9555
    %9761 = vmatprep.subr.bf16.mxu0 0
    %9762 = vmatpush1.bf16.msra.mxu0 %v9554
    %9763 = vmatprep.subr.bf16.mxu0 0
    %9764 = vmatpush1.bf16.msra.mxu0 %v9553
    %9765 = vmatprep.subr.bf16.mxu0 0
    %9766 = vmatpush1.bf16.msra.mxu0 %v9552
    %9767 = vmatprep.subr.bf16.mxu0 0
    %9768 = vmatpush2.bf16.msra.mxu0 %v9567
    %9769 = vmatprep.subr.bf16.mxu0 0
    %9770 = vmatpush2.bf16.msra.mxu0 %v9566
    %9771 = vmatprep.subr.bf16.mxu0 0
    %9772 = vmatpush2.bf16.msra.mxu0 %v9565
    %9773 = vmatprep.subr.bf16.mxu0 0
    %9774 = vmatpush2.bf16.msra.mxu0 %v9564
    %9775 = vmatprep.subr.bf16.mxu0 0
    %9776 = vmatpush2.bf16.msra.mxu0 %v9563
    %9777 = vmatprep.subr.bf16.mxu0 0
    %9778 = vmatpush2.bf16.msra.mxu0 %v9562
    %9779 = vmatprep.subr.bf16.mxu0 0
    %9780 = vmatpush2.bf16.msra.mxu0 %v9561
    %9781 = vmatprep.subr.bf16.mxu0 0
    %9782 = vmatpush2.bf16.msra.mxu0 %v9560
    %9783 = vmatprep.mubr.bf16.mxu0 %v9079
    %9784 = vmatmul.mubr.bf16.gmra.mxu0 %v9078
    %v9785 = vpop.f32.mrf.mxu0
    %v9786 = vadd.f32 %v9746, %v9785
    %v9787 = vpop.f32.mrf.mxu0
    %v9788 = vpop.f32.mrf.mxu0
    %v9789 = vpop.f32.mrf.mxu0
    %9790 = vdwg.mxu0
    %9791 = vmatprep.subr.bf16.mxu0 0
    %9792 = vmatpush1.bf16.msra.mxu0 %v9575
    %9793 = vmatprep.subr.bf16.mxu0 0
    %9794 = vmatpush1.bf16.msra.mxu0 %v9574
    %9795 = vmatprep.subr.bf16.mxu0 0
    %9796 = vmatpush1.bf16.msra.mxu0 %v9573
    %9797 = vmatprep.subr.bf16.mxu0 0
    %9798 = vmatpush1.bf16.msra.mxu0 %v9572
    %9799 = vmatprep.subr.bf16.mxu0 0
    %9800 = vmatpush1.bf16.msra.mxu0 %v9571
    %9801 = vmatprep.subr.bf16.mxu0 0
    %9802 = vmatpush1.bf16.msra.mxu0 %v9570
    %9803 = vmatprep.subr.bf16.mxu0 0
    %9804 = vmatpush1.bf16.msra.mxu0 %v9569
    %9805 = vmatprep.subr.bf16.mxu0 0
    %9806 = vmatpush1.bf16.msra.mxu0 %v9568
    %9807 = vmatprep.subr.bf16.mxu0 0
    %9808 = vmatpush2.bf16.msra.mxu0 %v9583
    %9809 = vmatprep.subr.bf16.mxu0 0
    %9810 = vmatpush2.bf16.msra.mxu0 %v9582
    %9811 = vmatprep.subr.bf16.mxu0 0
    %9812 = vmatpush2.bf16.msra.mxu0 %v9581
    %9813 = vmatprep.subr.bf16.mxu0 0
    %9814 = vmatpush2.bf16.msra.mxu0 %v9580
    %9815 = vmatprep.subr.bf16.mxu0 0
    %9816 = vmatpush2.bf16.msra.mxu0 %v9579
    %9817 = vmatprep.subr.bf16.mxu0 0
    %9818 = vmatpush2.bf16.msra.mxu0 %v9578
    %9819 = vmatprep.subr.bf16.mxu0 0
    %9820 = vmatpush2.bf16.msra.mxu0 %v9577
    %9821 = vmatprep.subr.bf16.mxu0 0
    %9822 = vmatpush2.bf16.msra.mxu0 %v9576
    %9823 = vmatprep.mubr.bf16.mxu0 %v9081
    %9824 = vmatmul.mubr.bf16.gmra.mxu0 %v9080
    %v9825 = vpop.f32.mrf.mxu0
    %v9826 = vadd.f32 %v9786, %v9825
    %v9827 = vpop.f32.mrf.mxu0
    %v9828 = vpop.f32.mrf.mxu0
    %v9829 = vpop.f32.mrf.mxu0
    %9830 = vdwg.mxu0
    %9831 = vmatprep.subr.bf16.mxu0 0
    %9832 = vmatpush1.bf16.msra.mxu0 %v9591
    %9833 = vmatprep.subr.bf16.mxu0 0
    %9834 = vmatpush1.bf16.msra.mxu0 %v9590
    %9835 = vmatprep.subr.bf16.mxu0 0
    %9836 = vmatpush1.bf16.msra.mxu0 %v9589
    %9837 = vmatprep.subr.bf16.mxu0 0
    %9838 = vmatpush1.bf16.msra.mxu0 %v9588
    %9839 = vmatprep.subr.bf16.mxu0 0
    %9840 = vmatpush1.bf16.msra.mxu0 %v9587
    %9841 = vmatprep.subr.bf16.mxu0 0
    %9842 = vmatpush1.bf16.msra.mxu0 %v9586
    %9843 = vmatprep.subr.bf16.mxu0 0
    %9844 = vmatpush1.bf16.msra.mxu0 %v9585
    %9845 = vmatprep.subr.bf16.mxu0 0
    %9846 = vmatpush1.bf16.msra.mxu0 %v9584
    %9847 = vmatprep.subr.bf16.mxu0 0
    %9848 = vmatpush2.bf16.msra.mxu0 0
    %9849 = vmatprep.subr.bf16.mxu0 0
    %9850 = vmatpush2.bf16.msra.mxu0 0
    %9851 = vmatprep.subr.bf16.mxu0 0
    %9852 = vmatpush2.bf16.msra.mxu0 0
    %9853 = vmatprep.subr.bf16.mxu0 0
    %9854 = vmatpush2.bf16.msra.mxu0 0
    %9855 = vmatprep.subr.bf16.mxu0 0
    %9856 = vmatpush2.bf16.msra.mxu0 0
    %9857 = vmatprep.subr.bf16.mxu0 0
    %9858 = vmatpush2.bf16.msra.mxu0 0
    %9859 = vmatprep.subr.bf16.mxu0 0
    %9860 = vmatpush2.bf16.msra.mxu0 0
    %9861 = vmatprep.subr.bf16.mxu0 0
    %9862 = vmatpush2.bf16.msra.mxu0 %v9669
    %9863 = vmatprep.mubr.bf16.mxu0 %v9666
    %9864 = vmatmul.mubr.bf16.gmra.mxu0 %v9082
    %v9865 = vpop.f32.mrf.mxu0
    %v9866 = vadd.f32 %v9826, %v9865
    %v9867 = vpop.f32.mrf.mxu0
    %v9868 = vpop.f32.mrf.mxu0
    %v9869 = vpop.f32.mrf.mxu0
    %9870 = vdwg.mxu0
    %v9871 = vadd.f32 %v8471, %v9866
    %s9872 = sld [smem:[#allocation2 + $0x380]]
    %v9873 = vstv %s9872
    %v9874 = vmul.f32 %v52, %v9873
    %v9875 = vmul.f32 %v53, %v9873
    %v9876 = vmul.f32 %v54, %v9873
    %v9877 = vmul.f32 %v55, %v9873
    %v9878 = vmul.f32 %v56, %v9873
    %v9879 = vmul.f32 %v57, %v9873
    %v9880 = vmul.f32 %v58, %v9873
    %v9881 = vmul.f32 %v59, %v9873
    %v9882 = vmul.f32 %v60, %v9873
    %v9883 = vmul.f32 %v61, %v9873
    %s9884 = sld [smem:[#allocation2 + $0x381]]
    %v9885 = vstv %s9884
    %v9886 = vmul.f32 %v52, %v9885
    %v9887 = vmul.f32 %v53, %v9885
    %v9888 = vmul.f32 %v54, %v9885
    %v9889 = vmul.f32 %v55, %v9885
    %v9890 = vmul.f32 %v56, %v9885
    %v9891 = vmul.f32 %v57, %v9885
    %v9892 = vmul.f32 %v58, %v9885
    %v9893 = vmul.f32 %v59, %v9885
    %v9894 = vmul.f32 %v60, %v9885
    %v9895 = vmul.f32 %v61, %v9885
    %9906 = vrot.lane.b32.xlu0 %v9886, 127
    %v9907 = vpop.permute.xlu0 %9906
    %9908 = vrot.lane.b32.xlu0 %v9887, 127
    %v9909 = vpop.permute.xlu0 %9908
    %9910 = vrot.lane.b32.xlu0 %v9888, 127
    %v9911 = vpop.permute.xlu0 %9910
    %9912 = vrot.lane.b32.xlu0 %v9889, 127
    %v9913 = vpop.permute.xlu0 %9912
    %9914 = vrot.lane.b32.xlu0 %v9890, 127
    %v9915 = vpop.permute.xlu0 %9914
    %9916 = vrot.lane.b32.xlu0 %v9891, 127
    %v9917 = vpop.permute.xlu0 %9916
    %9918 = vrot.lane.b32.xlu0 %v9892, 127
    %v9919 = vpop.permute.xlu0 %9918
    %9920 = vrot.lane.b32.xlu0 %v9893, 127
    %v9921 = vpop.permute.xlu0 %9920
    %9922 = vrot.lane.b32.xlu0 %v9894, 127
    %v9923 = vpop.permute.xlu0 %9922
    %9924 = vrot.lane.b32.xlu0 %v9895, 127
    %v9925 = vpop.permute.xlu0 %9924
    %v9926 = vsel %vm116, %v9907, %v9909
    %v9927 = vsel %vm116, %v9909, %v9911
    %v9928 = vsel %vm116, %v9911, %v9913
    %v9929 = vsel %vm116, %v9913, %v9915
    %v9930 = vsel %vm116, %v9915, %v9917
    %v9931 = vsel %vm116, %v9917, %v9919
    %v9932 = vsel %vm116, %v9919, %v9921
    %v9933 = vsel %vm116, %v9921, %v9923
    %v9934 = vsel %vm116, %v9923, %v9925
    %v9945 = vadd.f32 %v9874, %v9926
    %v9946 = vadd.f32 %v9875, %v9927
    %v9947 = vadd.f32 %v9876, %v9928
    %v9948 = vadd.f32 %v9877, %v9929
    %v9949 = vadd.f32 %v9878, %v9930
    %v9950 = vadd.f32 %v9879, %v9931
    %v9951 = vadd.f32 %v9880, %v9932
    %v9952 = vadd.f32 %v9881, %v9933
    %v9953 = vadd.f32 %v9882, %v9934
    %v9954 = vadd.f32 %v9883, %v9925
    %s9955 = sld [smem:[#allocation2 + $0x382]]
    %v9956 = vstv %s9955
    %v9957 = vmul.f32 %v52, %v9956
    %v9958 = vmul.f32 %v53, %v9956
    %v9959 = vmul.f32 %v54, %v9956
    %v9960 = vmul.f32 %v55, %v9956
    %v9961 = vmul.f32 %v56, %v9956
    %v9962 = vmul.f32 %v57, %v9956
    %v9963 = vmul.f32 %v58, %v9956
    %v9964 = vmul.f32 %v59, %v9956
    %v9965 = vmul.f32 %v60, %v9956
    %v9966 = vmul.f32 %v61, %v9956
    %9977 = vrot.lane.b32.xlu0 %v9957, 126
    %v9978 = vpop.permute.xlu0 %9977
    %9979 = vrot.lane.b32.xlu0 %v9958, 126
    %v9980 = vpop.permute.xlu0 %9979
    %9981 = vrot.lane.b32.xlu0 %v9959, 126
    %v9982 = vpop.permute.xlu0 %9981
    %9983 = vrot.lane.b32.xlu0 %v9960, 126
    %v9984 = vpop.permute.xlu0 %9983
    %9985 = vrot.lane.b32.xlu0 %v9961, 126
    %v9986 = vpop.permute.xlu0 %9985
    %9987 = vrot.lane.b32.xlu0 %v9962, 126
    %v9988 = vpop.permute.xlu0 %9987
    %9989 = vrot.lane.b32.xlu0 %v9963, 126
    %v9990 = vpop.permute.xlu0 %9989
    %9991 = vrot.lane.b32.xlu0 %v9964, 126
    %v9992 = vpop.permute.xlu0 %9991
    %9993 = vrot.lane.b32.xlu0 %v9965, 126
    %v9994 = vpop.permute.xlu0 %9993
    %9995 = vrot.lane.b32.xlu0 %v9966, 126
    %v9996 = vpop.permute.xlu0 %9995
    %v9997 = vsel %vm188, %v9978, %v9980
    %v9998 = vsel %vm188, %v9980, %v9982
    %v9999 = vsel %vm188, %v9982, %v9984
    %v10000 = vsel %vm188, %v9984, %v9986
    %v10001 = vsel %vm188, %v9986, %v9988
    %v10002 = vsel %vm188, %v9988, %v9990
    %v10003 = vsel %vm188, %v9990, %v9992
    %v10004 = vsel %vm188, %v9992, %v9994
    %v10005 = vsel %vm188, %v9994, %v9996
    %v10016 = vadd.f32 %v9945, %v9997
    %v10017 = vadd.f32 %v9946, %v9998
    %v10018 = vadd.f32 %v9947, %v9999
    %v10019 = vadd.f32 %v9948, %v10000
    %v10020 = vadd.f32 %v9949, %v10001
    %v10021 = vadd.f32 %v9950, %v10002
    %v10022 = vadd.f32 %v9951, %v10003
    %v10023 = vadd.f32 %v9952, %v10004
    %v10024 = vadd.f32 %v9953, %v10005
    %v10025 = vadd.f32 %v9954, %v9996
    %s10026 = sld [smem:[#allocation2 + $0x383]]
    %v10027 = vstv %s10026
    %v10028 = vmul.f32 %v52, %v10027
    %v10029 = vmul.f32 %v53, %v10027
    %v10030 = vmul.f32 %v54, %v10027
    %v10031 = vmul.f32 %v55, %v10027
    %v10032 = vmul.f32 %v56, %v10027
    %v10033 = vmul.f32 %v57, %v10027
    %v10034 = vmul.f32 %v58, %v10027
    %v10035 = vmul.f32 %v59, %v10027
    %v10036 = vmul.f32 %v60, %v10027
    %v10037 = vmul.f32 %v61, %v10027
    %10048 = vrot.lane.b32.xlu0 %v10028, 93
    %v10049 = vpop.permute.xlu0 %10048
    %10050 = vrot.lane.b32.xlu0 %v10029, 93
    %v10051 = vpop.permute.xlu0 %10050
    %10052 = vrot.lane.b32.xlu0 %v10030, 93
    %v10053 = vpop.permute.xlu0 %10052
    %10054 = vrot.lane.b32.xlu0 %v10031, 93
    %v10055 = vpop.permute.xlu0 %10054
    %10056 = vrot.lane.b32.xlu0 %v10032, 93
    %v10057 = vpop.permute.xlu0 %10056
    %10058 = vrot.lane.b32.xlu0 %v10033, 93
    %v10059 = vpop.permute.xlu0 %10058
    %10060 = vrot.lane.b32.xlu0 %v10034, 93
    %v10061 = vpop.permute.xlu0 %10060
    %10062 = vrot.lane.b32.xlu0 %v10035, 93
    %v10063 = vpop.permute.xlu0 %10062
    %10064 = vrot.lane.b32.xlu0 %v10036, 93
    %v10065 = vpop.permute.xlu0 %10064
    %10066 = vrot.lane.b32.xlu0 %v10037, 93
    %v10067 = vpop.permute.xlu0 %10066
    %v10068 = vsel %vm260, %v10049, %v10051
    %v10069 = vsel %vm260, %v10051, %v10053
    %v10070 = vsel %vm260, %v10053, %v10055
    %v10071 = vsel %vm260, %v10055, %v10057
    %v10072 = vsel %vm260, %v10057, %v10059
    %v10073 = vsel %vm260, %v10059, %v10061
    %v10074 = vsel %vm260, %v10061, %v10063
    %v10075 = vsel %vm260, %v10063, %v10065
    %v10076 = vsel %vm260, %v10065, %v10067
    %v10087 = vadd.f32 %v10016, %v10068
    %v10088 = vadd.f32 %v10017, %v10069
    %v10089 = vadd.f32 %v10018, %v10070
    %v10090 = vadd.f32 %v10019, %v10071
    %v10091 = vadd.f32 %v10020, %v10072
    %v10092 = vadd.f32 %v10021, %v10073
    %v10093 = vadd.f32 %v10022, %v10074
    %v10094 = vadd.f32 %v10023, %v10075
    %v10095 = vadd.f32 %v10024, %v10076
    %v10096 = vadd.f32 %v10025, %v10067
    %s10097 = sld [smem:[#allocation2 + $0x384]]
    %v10098 = vstv %s10097
    %v10099 = vmul.f32 %v52, %v10098
    %v10100 = vmul.f32 %v53, %v10098
    %v10101 = vmul.f32 %v54, %v10098
    %v10102 = vmul.f32 %v55, %v10098
    %v10103 = vmul.f32 %v56, %v10098
    %v10104 = vmul.f32 %v57, %v10098
    %v10105 = vmul.f32 %v58, %v10098
    %v10106 = vmul.f32 %v59, %v10098
    %v10107 = vmul.f32 %v60, %v10098
    %v10108 = vmul.f32 %v61, %v10098
    %10119 = vrot.lane.b32.xlu0 %v10099, 92
    %v10120 = vpop.permute.xlu0 %10119
    %10121 = vrot.lane.b32.xlu0 %v10100, 92
    %v10122 = vpop.permute.xlu0 %10121
    %10123 = vrot.lane.b32.xlu0 %v10101, 92
    %v10124 = vpop.permute.xlu0 %10123
    %10125 = vrot.lane.b32.xlu0 %v10102, 92
    %v10126 = vpop.permute.xlu0 %10125
    %10127 = vrot.lane.b32.xlu0 %v10103, 92
    %v10128 = vpop.permute.xlu0 %10127
    %10129 = vrot.lane.b32.xlu0 %v10104, 92
    %v10130 = vpop.permute.xlu0 %10129
    %10131 = vrot.lane.b32.xlu0 %v10105, 92
    %v10132 = vpop.permute.xlu0 %10131
    %10133 = vrot.lane.b32.xlu0 %v10106, 92
    %v10134 = vpop.permute.xlu0 %10133
    %10135 = vrot.lane.b32.xlu0 %v10107, 92
    %v10136 = vpop.permute.xlu0 %10135
    %10137 = vrot.lane.b32.xlu0 %v10108, 92
    %v10138 = vpop.permute.xlu0 %10137
    %v10139 = vsel %vm332, %v10120, %v10122
    %v10140 = vsel %vm332, %v10122, %v10124
    %v10141 = vsel %vm332, %v10124, %v10126
    %v10142 = vsel %vm332, %v10126, %v10128
    %v10143 = vsel %vm332, %v10128, %v10130
    %v10144 = vsel %vm332, %v10130, %v10132
    %v10145 = vsel %vm332, %v10132, %v10134
    %v10146 = vsel %vm332, %v10134, %v10136
    %v10147 = vsel %vm332, %v10136, %v10138
    %v10158 = vadd.f32 %v10087, %v10139
    %v10159 = vadd.f32 %v10088, %v10140
    %v10160 = vadd.f32 %v10089, %v10141
    %v10161 = vadd.f32 %v10090, %v10142
    %v10162 = vadd.f32 %v10091, %v10143
    %v10163 = vadd.f32 %v10092, %v10144
    %v10164 = vadd.f32 %v10093, %v10145
    %v10165 = vadd.f32 %v10094, %v10146
    %v10166 = vadd.f32 %v10095, %v10147
    %v10167 = vadd.f32 %v10096, %v10138
    %s10168 = sld [smem:[#allocation2 + $0x385]]
    %v10169 = vstv %s10168
    %v10170 = vmul.f32 %v52, %v10169
    %v10171 = vmul.f32 %v53, %v10169
    %v10172 = vmul.f32 %v54, %v10169
    %v10173 = vmul.f32 %v55, %v10169
    %v10174 = vmul.f32 %v56, %v10169
    %v10175 = vmul.f32 %v57, %v10169
    %v10176 = vmul.f32 %v58, %v10169
    %v10177 = vmul.f32 %v59, %v10169
    %v10178 = vmul.f32 %v60, %v10169
    %v10179 = vmul.f32 %v61, %v10169
    %10190 = vrot.lane.b32.xlu0 %v10170, 91
    %v10191 = vpop.permute.xlu0 %10190
    %10192 = vrot.lane.b32.xlu0 %v10171, 91
    %v10193 = vpop.permute.xlu0 %10192
    %10194 = vrot.lane.b32.xlu0 %v10172, 91
    %v10195 = vpop.permute.xlu0 %10194
    %10196 = vrot.lane.b32.xlu0 %v10173, 91
    %v10197 = vpop.permute.xlu0 %10196
    %10198 = vrot.lane.b32.xlu0 %v10174, 91
    %v10199 = vpop.permute.xlu0 %10198
    %10200 = vrot.lane.b32.xlu0 %v10175, 91
    %v10201 = vpop.permute.xlu0 %10200
    %10202 = vrot.lane.b32.xlu0 %v10176, 91
    %v10203 = vpop.permute.xlu0 %10202
    %10204 = vrot.lane.b32.xlu0 %v10177, 91
    %v10205 = vpop.permute.xlu0 %10204
    %10206 = vrot.lane.b32.xlu0 %v10178, 91
    %v10207 = vpop.permute.xlu0 %10206
    %10208 = vrot.lane.b32.xlu0 %v10179, 91
    %v10209 = vpop.permute.xlu0 %10208
    %v10210 = vsel %vm404, %v10191, %v10193
    %v10211 = vsel %vm404, %v10193, %v10195
    %v10212 = vsel %vm404, %v10195, %v10197
    %v10213 = vsel %vm404, %v10197, %v10199
    %v10214 = vsel %vm404, %v10199, %v10201
    %v10215 = vsel %vm404, %v10201, %v10203
    %v10216 = vsel %vm404, %v10203, %v10205
    %v10217 = vsel %vm404, %v10205, %v10207
    %v10218 = vsel %vm404, %v10207, %v10209
    %v10229 = vadd.f32 %v10158, %v10210
    %v10230 = vadd.f32 %v10159, %v10211
    %v10231 = vadd.f32 %v10160, %v10212
    %v10232 = vadd.f32 %v10161, %v10213
    %v10233 = vadd.f32 %v10162, %v10214
    %v10234 = vadd.f32 %v10163, %v10215
    %v10235 = vadd.f32 %v10164, %v10216
    %v10236 = vadd.f32 %v10165, %v10217
    %v10237 = vadd.f32 %v10166, %v10218
    %v10238 = vadd.f32 %v10167, %v10209
    %s10239 = sld [smem:[#allocation2 + $0x386]]
    %v10240 = vstv %s10239
    %v10241 = vmul.f32 %v52, %v10240
    %v10242 = vmul.f32 %v53, %v10240
    %v10243 = vmul.f32 %v54, %v10240
    %v10244 = vmul.f32 %v55, %v10240
    %v10245 = vmul.f32 %v56, %v10240
    %v10246 = vmul.f32 %v57, %v10240
    %v10247 = vmul.f32 %v58, %v10240
    %v10248 = vmul.f32 %v59, %v10240
    %v10249 = vmul.f32 %v60, %v10240
    %v10250 = vmul.f32 %v61, %v10240
    %10261 = vrot.lane.b32.xlu0 %v10241, 58
    %v10262 = vpop.permute.xlu0 %10261
    %10263 = vrot.lane.b32.xlu0 %v10242, 58
    %v10264 = vpop.permute.xlu0 %10263
    %10265 = vrot.lane.b32.xlu0 %v10243, 58
    %v10266 = vpop.permute.xlu0 %10265
    %10267 = vrot.lane.b32.xlu0 %v10244, 58
    %v10268 = vpop.permute.xlu0 %10267
    %10269 = vrot.lane.b32.xlu0 %v10245, 58
    %v10270 = vpop.permute.xlu0 %10269
    %10271 = vrot.lane.b32.xlu0 %v10246, 58
    %v10272 = vpop.permute.xlu0 %10271
    %10273 = vrot.lane.b32.xlu0 %v10247, 58
    %v10274 = vpop.permute.xlu0 %10273
    %10275 = vrot.lane.b32.xlu0 %v10248, 58
    %v10276 = vpop.permute.xlu0 %10275
    %10277 = vrot.lane.b32.xlu0 %v10249, 58
    %v10278 = vpop.permute.xlu0 %10277
    %10279 = vrot.lane.b32.xlu0 %v10250, 58
    %v10280 = vpop.permute.xlu0 %10279
    %v10281 = vsel %vm476, %v10262, %v10264
    %v10282 = vsel %vm476, %v10264, %v10266
    %v10283 = vsel %vm476, %v10266, %v10268
    %v10284 = vsel %vm476, %v10268, %v10270
    %v10285 = vsel %vm476, %v10270, %v10272
    %v10286 = vsel %vm476, %v10272, %v10274
    %v10287 = vsel %vm476, %v10274, %v10276
    %v10288 = vsel %vm476, %v10276, %v10278
    %v10289 = vsel %vm476, %v10278, %v10280
    %v10300 = vadd.f32 %v10229, %v10281
    %v10301 = vadd.f32 %v10230, %v10282
    %v10302 = vadd.f32 %v10231, %v10283
    %v10303 = vadd.f32 %v10232, %v10284
    %v10304 = vadd.f32 %v10233, %v10285
    %v10305 = vadd.f32 %v10234, %v10286
    %v10306 = vadd.f32 %v10235, %v10287
    %v10307 = vadd.f32 %v10236, %v10288
    %v10308 = vadd.f32 %v10237, %v10289
    %v10309 = vadd.f32 %v10238, %v10280
    %s10310 = sld [smem:[#allocation2 + $0x387]]
    %v10311 = vstv %s10310
    %v10312 = vmul.f32 %v52, %v10311
    %v10313 = vmul.f32 %v53, %v10311
    %v10314 = vmul.f32 %v54, %v10311
    %v10315 = vmul.f32 %v55, %v10311
    %v10316 = vmul.f32 %v56, %v10311
    %v10317 = vmul.f32 %v57, %v10311
    %v10318 = vmul.f32 %v58, %v10311
    %v10319 = vmul.f32 %v59, %v10311
    %v10320 = vmul.f32 %v60, %v10311
    %v10321 = vmul.f32 %v61, %v10311
    %10332 = vrot.lane.b32.xlu0 %v10312, 57
    %v10333 = vpop.permute.xlu0 %10332
    %10334 = vrot.lane.b32.xlu0 %v10313, 57
    %v10335 = vpop.permute.xlu0 %10334
    %10336 = vrot.lane.b32.xlu0 %v10314, 57
    %v10337 = vpop.permute.xlu0 %10336
    %10338 = vrot.lane.b32.xlu0 %v10315, 57
    %v10339 = vpop.permute.xlu0 %10338
    %10340 = vrot.lane.b32.xlu0 %v10316, 57
    %v10341 = vpop.permute.xlu0 %10340
    %10342 = vrot.lane.b32.xlu0 %v10317, 57
    %v10343 = vpop.permute.xlu0 %10342
    %10344 = vrot.lane.b32.xlu0 %v10318, 57
    %v10345 = vpop.permute.xlu0 %10344
    %10346 = vrot.lane.b32.xlu0 %v10319, 57
    %v10347 = vpop.permute.xlu0 %10346
    %10348 = vrot.lane.b32.xlu0 %v10320, 57
    %v10349 = vpop.permute.xlu0 %10348
    %10350 = vrot.lane.b32.xlu0 %v10321, 57
    %v10351 = vpop.permute.xlu0 %10350
    %v10352 = vsel %vm548, %v10333, %v10335
    %v10353 = vsel %vm548, %v10335, %v10337
    %v10354 = vsel %vm548, %v10337, %v10339
    %v10355 = vsel %vm548, %v10339, %v10341
    %v10356 = vsel %vm548, %v10341, %v10343
    %v10357 = vsel %vm548, %v10343, %v10345
    %v10358 = vsel %vm548, %v10345, %v10347
    %v10359 = vsel %vm548, %v10347, %v10349
    %v10360 = vsel %vm548, %v10349, %v10351
    %v10371 = vadd.f32 %v10300, %v10352
    %v10372 = vadd.f32 %v10301, %v10353
    %v10373 = vadd.f32 %v10302, %v10354
    %v10374 = vadd.f32 %v10303, %v10355
    %v10375 = vadd.f32 %v10304, %v10356
    %v10376 = vadd.f32 %v10305, %v10357
    %v10377 = vadd.f32 %v10306, %v10358
    %v10378 = vadd.f32 %v10307, %v10359
    %v10379 = vadd.f32 %v10308, %v10360
    %v10380 = vadd.f32 %v10309, %v10351
    %s10381 = sld [smem:[#allocation2 + $0x388]]
    %v10382 = vstv %s10381
    %v10383 = vmul.f32 %v52, %v10382
    %v10384 = vmul.f32 %v53, %v10382
    %v10385 = vmul.f32 %v54, %v10382
    %v10386 = vmul.f32 %v55, %v10382
    %v10387 = vmul.f32 %v56, %v10382
    %v10388 = vmul.f32 %v57, %v10382
    %v10389 = vmul.f32 %v58, %v10382
    %v10390 = vmul.f32 %v59, %v10382
    %v10391 = vmul.f32 %v60, %v10382
    %v10392 = vmul.f32 %v61, %v10382
    %10403 = vrot.lane.b32.xlu0 %v10383, 56
    %v10404 = vpop.permute.xlu0 %10403
    %10405 = vrot.lane.b32.xlu0 %v10384, 56
    %v10406 = vpop.permute.xlu0 %10405
    %10407 = vrot.lane.b32.xlu0 %v10385, 56
    %v10408 = vpop.permute.xlu0 %10407
    %10409 = vrot.lane.b32.xlu0 %v10386, 56
    %v10410 = vpop.permute.xlu0 %10409
    %10411 = vrot.lane.b32.xlu0 %v10387, 56
    %v10412 = vpop.permute.xlu0 %10411
    %10413 = vrot.lane.b32.xlu0 %v10388, 56
    %v10414 = vpop.permute.xlu0 %10413
    %10415 = vrot.lane.b32.xlu0 %v10389, 56
    %v10416 = vpop.permute.xlu0 %10415
    %10417 = vrot.lane.b32.xlu0 %v10390, 56
    %v10418 = vpop.permute.xlu0 %10417
    %10419 = vrot.lane.b32.xlu0 %v10391, 56
    %v10420 = vpop.permute.xlu0 %10419
    %10421 = vrot.lane.b32.xlu0 %v10392, 56
    %v10422 = vpop.permute.xlu0 %10421
    %v10423 = vsel %vm620, %v10404, %v10406
    %v10424 = vsel %vm620, %v10406, %v10408
    %v10425 = vsel %vm620, %v10408, %v10410
    %v10426 = vsel %vm620, %v10410, %v10412
    %v10427 = vsel %vm620, %v10412, %v10414
    %v10428 = vsel %vm620, %v10414, %v10416
    %v10429 = vsel %vm620, %v10416, %v10418
    %v10430 = vsel %vm620, %v10418, %v10420
    %v10431 = vsel %vm620, %v10420, %v10422
    %v10442 = vadd.f32 %v10371, %v10423
    %v10443 = vadd.f32 %v10372, %v10424
    %v10444 = vadd.f32 %v10373, %v10425
    %v10445 = vadd.f32 %v10374, %v10426
    %v10446 = vadd.f32 %v10375, %v10427
    %v10447 = vadd.f32 %v10376, %v10428
    %v10448 = vadd.f32 %v10377, %v10429
    %v10449 = vadd.f32 %v10378, %v10430
    %v10450 = vadd.f32 %v10379, %v10431
    %v10451 = vadd.f32 %v10380, %v10422
    %s10452 = sld [smem:[#allocation4 + $0x7]]
    %v10453 = vstv %s10452
    %v10454 = vadd.f32 %v10442, %v10453
    %v10455 = vadd.f32 %v10443, %v10453
    %v10456 = vadd.f32 %v10444, %v10453
    %v10457 = vadd.f32 %v10445, %v10453
    %v10458 = vadd.f32 %v10446, %v10453
    %v10459 = vadd.f32 %v10447, %v10453
    %v10460 = vadd.f32 %v10448, %v10453
    %v10461 = vadd.f32 %v10449, %v10453
    %v10462 = vadd.f32 %v10450, %v10453
    %v10463 = vadd.f32 %v10451, %v10453
    %v10464 = vmax.f32 %v10454, 0.0
    %v10465 = vmax.f32 %v10455, 0.0
    %v10466 = vmax.f32 %v10456, 0.0
    %v10467 = vmax.f32 %v10457, 0.0
    %v10468 = vmax.f32 %v10458, 0.0
    %v10469 = vmax.f32 %v10459, 0.0
    %v10470 = vmax.f32 %v10460, 0.0
    %v10471 = vmax.f32 %v10461, 0.0
    %v10472 = vmax.f32 %v10462, 0.0
    %v10473 = vmax.f32 %v10463, 0.0
    %v10474 = vpack.c.bf16 %v10464, %v10464
    %v10475 = vpack.c.bf16 %v10465, %v10465
    %v10476 = vpack.c.bf16 %v10466, %v10466
    %v10477 = vpack.c.bf16 %v10467, %v10467
    %v10478 = vpack.c.bf16 %v10468, %v10468
    %v10479 = vpack.c.bf16 %v10469, %v10469
    %v10480 = vpack.c.bf16 %v10470, %v10470
    %v10481 = vpack.c.bf16 %v10471, %v10471
    %v10482 = vpack.c.bf16 %v10472, %v10472
    %v10483 = vpack.c.bf16 %v10473, %v10473
    %s10484 = scalar_lea.vmem %s3, 4060
    %v10485 = vld [vmem:[%s10484] sm:$0xf]
    %v10486 = vld [vmem:[%s10484 + $0x4] sm:$0xf]
    %v10487 = vld [vmem:[%s10484 + $0x8] sm:$0xf]
    %v10488 = vld [vmem:[%s10484 + $0xc] sm:$0xf]
    %v10489 = vld [vmem:[%s10484 + $0x10] sm:$0xf]
    %v10490 = vld [vmem:[%s10484 + $0x14] sm:$0xf]
    %v10491 = vld [vmem:[%s10484 + $0x18] sm:$0xf]
    %v10492 = vld [vmem:[%s10484 + $0x1c] sm:$0xf]
    %v10493 = vld [vmem:[%s10484 + $0x20] sm:$0xf]
    %v10494 = vld [vmem:[%s10484 + $0x24] sm:$0xf]
    %v10495 = vld [vmem:[%s10484 + $0x28] sm:$0xf]
    %v10496 = vld [vmem:[%s10484 + $0x2c] sm:$0xf]
    %v10497 = vld [vmem:[%s10484 + $0x30] sm:$0xf]
    %v10498 = vld [vmem:[%s10484 + $0x34] sm:$0xf]
    %v10499 = vld [vmem:[%s10484 + $0x38] sm:$0xf]
    %v10500 = vld [vmem:[%s10484 + $0x3c] sm:$0xf]
    %v10501 = vld [vmem:[%s10484 + $0x40] sm:$0xf]
    %v10502 = vld [vmem:[%s10484 + $0x44] sm:$0xf]
    %v10503 = vld [vmem:[%s10484 + $0x48] sm:$0xf]
    %v10504 = vld [vmem:[%s10484 + $0x4c] sm:$0xf]
    %v10505 = vld [vmem:[%s10484 + $0x50] sm:$0xf]
    %v10506 = vld [vmem:[%s10484 + $0x54] sm:$0xf]
    %v10507 = vld [vmem:[%s10484 + $0x58] sm:$0xf]
    %v10508 = vld [vmem:[%s10484 + $0x5c] sm:$0xf]
    %v10509 = vld [vmem:[%s10484 + $0x60] sm:$0xf]
    %v10510 = vld [vmem:[%s10484 + $0x64] sm:$0xf]
    %v10511 = vld [vmem:[%s10484 + $0x68] sm:$0xf]
    %v10512 = vld [vmem:[%s10484 + $0x6c] sm:$0xf]
    %v10513 = vld [vmem:[%s10484 + $0x70] sm:$0xf]
    %v10514 = vld [vmem:[%s10484 + $0x74] sm:$0xf]
    %v10515 = vld [vmem:[%s10484 + $0x78] sm:$0xf]
    %v10516 = vld [vmem:[%s10484 + $0x7c] sm:$0xf]
    %v10517 = vld [vmem:[%s10484 + $0x80] sm:$0xf]
    %v10518 = vld [vmem:[%s10484 + $0x84] sm:$0xf]
    %v10519 = vld [vmem:[%s10484 + $0x88] sm:$0xf]
    %v10520 = vld [vmem:[%s10484 + $0x8c] sm:$0xf]
    %v10521 = vld [vmem:[%s10484 + $0x90] sm:$0xf]
    %v10522 = vld [vmem:[%s10484 + $0x94] sm:$0xf]
    %v10523 = vld [vmem:[%s10484 + $0x98] sm:$0xf]
    %v10524 = vld [vmem:[%s10484 + $0x9c] sm:$0xf]
    %v10525 = vld [vmem:[%s10484 + $0xa0] sm:$0xf]
    %v10526 = vld [vmem:[%s10484 + $0xa4] sm:$0xf]
    %v10527 = vld [vmem:[%s10484 + $0xa8] sm:$0xf]
    %v10528 = vld [vmem:[%s10484 + $0xac] sm:$0xf]
    %v10529 = vld [vmem:[%s10484 + $0xb0] sm:$0xf]
    %v10530 = vld [vmem:[%s10484 + $0xb4] sm:$0xf]
    %v10531 = vld [vmem:[%s10484 + $0xb8] sm:$0xf]
    %v10532 = vld [vmem:[%s10484 + $0xbc] sm:$0xf]
    %v10533 = vld [vmem:[%s10484 + $0xc0] sm:$0xf]
    %v10534 = vld [vmem:[%s10484 + $0xc4] sm:$0xf]
    %v10535 = vld [vmem:[%s10484 + $0xc8] sm:$0xf]
    %v10536 = vld [vmem:[%s10484 + $0xcc] sm:$0xf]
    %v10537 = vld [vmem:[%s10484 + $0xd0] sm:$0xf]
    %v10538 = vld [vmem:[%s10484 + $0xd4] sm:$0xf]
    %v10539 = vld [vmem:[%s10484 + $0xd8] sm:$0xf]
    %v10540 = vld [vmem:[%s10484 + $0xdc] sm:$0xf]
    %v10541 = vld [vmem:[%s10484 + $0xe0] sm:$0xf]
    %v10542 = vld [vmem:[%s10484 + $0xe4] sm:$0xf]
    %v10543 = vld [vmem:[%s10484 + $0xe8] sm:$0xf]
    %v10544 = vld [vmem:[%s10484 + $0xec] sm:$0xf]
    %v10545 = vld [vmem:[%s10484 + $0xf0] sm:$0xf]
    %v10546 = vld [vmem:[%s10484 + $0xf4] sm:$0xf]
    %v10547 = vld [vmem:[%s10484 + $0xf8] sm:$0xf]
    %v10548 = vld [vmem:[%s10484 + $0xfc] sm:$0xf]
    %v10549 = vld [vmem:[%s10484 + $0x100] sm:$0xf]
    %v10550 = vld [vmem:[%s10484 + $0x104] sm:$0xf]
    %v10551 = vld [vmem:[%s10484 + $0x108] sm:$0xf]
    %v10552 = vld [vmem:[%s10484 + $0x10c] sm:$0xf]
    %v10553 = vld [vmem:[%s10484 + $0x110] sm:$0xf]
    %v10554 = vld [vmem:[%s10484 + $0x114] sm:$0xf]
    %v10555 = vld [vmem:[%s10484 + $0x118] sm:$0xf]
    %v10556 = vld [vmem:[%s10484 + $0x11c] sm:$0xf]
    %v10557 = vld [vmem:[%s10484 + $0x120] sm:$0xf]
    %v10558 = vld [vmem:[%s10484 + $0x124] sm:$0xf]
    %v10559 = vld [vmem:[%s10484 + $0x128] sm:$0xf]
    %v10560 = vld [vmem:[%s10484 + $0x12c] sm:$0xf]
    %v10561 = vld [vmem:[%s10484 + $0x130] sm:$0xf]
    %v10562 = vld [vmem:[%s10484 + $0x134] sm:$0xf]
    %v10563 = vld [vmem:[%s10484 + $0x138] sm:$0xf]
    %v10564 = vld [vmem:[%s10484 + $0x13c] sm:$0xf]
    %v10565 = vld [vmem:[%s10484 + $0x140] sm:$0xf]
    %v10566 = vld [vmem:[%s10484 + $0x144] sm:$0xf]
    %v10567 = vld [vmem:[%s10484 + $0x148] sm:$0xf]
    %v10568 = vld [vmem:[%s10484 + $0x14c] sm:$0xf]
    %v10569 = vld [vmem:[%s10484 + $0x150] sm:$0xf]
    %v10570 = vld [vmem:[%s10484 + $0x154] sm:$0xf]
    %v10571 = vld [vmem:[%s10484 + $0x158] sm:$0xf]
    %v10572 = vld [vmem:[%s10484 + $0x15c] sm:$0xf]
    %v10573 = vld [vmem:[%s10484 + $0x160] sm:$0xf]
    %v10574 = vld [vmem:[%s10484 + $0x164] sm:$0xf]
    %v10575 = vld [vmem:[%s10484 + $0x168] sm:$0xf]
    %v10576 = vld [vmem:[%s10484 + $0x16c] sm:$0xf]
    %v10577 = vld [vmem:[%s10484 + $0x170] sm:$0xf]
    %v10578 = vld [vmem:[%s10484 + $0x174] sm:$0xf]
    %v10579 = vld [vmem:[%s10484 + $0x178] sm:$0xf]
    %v10580 = vld [vmem:[%s10484 + $0x17c] sm:$0xf]
    %v10581 = vld [vmem:[%s10484 + $0x180] sm:$0xf]
    %v10582 = vld [vmem:[%s10484 + $0x184] sm:$0xf]
    %v10583 = vld [vmem:[%s10484 + $0x188] sm:$0xf]
    %v10584 = vld [vmem:[%s10484 + $0x18c] sm:$0xf]
    %v10585 = vld [vmem:[%s10484 + $0x190] sm:$0xf]
    %v10586 = vld [vmem:[%s10484 + $0x194] sm:$0xf]
    %v10587 = vld [vmem:[%s10484 + $0x198] sm:$0xf]
    %v10588 = vld [vmem:[%s10484 + $0x19c] sm:$0xf]
    %v10589 = vld [vmem:[%s10484 + $0x1a0] sm:$0xf]
    %v10590 = vld [vmem:[%s10484 + $0x1a4] sm:$0xf]
    %v10591 = vld [vmem:[%s10484 + $0x1a8] sm:$0xf]
    %v10592 = vld [vmem:[%s10484 + $0x1ac] sm:$0xf]
    %v10593 = vld [vmem:[%s10484 + $0x1b0] sm:$0xf]
    %v10594 = vld [vmem:[%s10484 + $0x1b4] sm:$0xf]
    %v10595 = vld [vmem:[%s10484 + $0x1b8] sm:$0xf]
    %v10596 = vld [vmem:[%s10484 + $0x1bc] sm:$0xf]
    %v10597 = vld [vmem:[%s10484 + $0x1c0] sm:$0xf]
    %v10598 = vld [vmem:[%s10484 + $0x1c4] sm:$0xf]
    %v10599 = vld [vmem:[%s10484 + $0x1c8] sm:$0xf]
    %v10600 = vld [vmem:[%s10484 + $0x1cc] sm:$0xf]
    %v10601 = vld [vmem:[%s10484 + $0x1d0] sm:$0xf]
    %v10602 = vld [vmem:[%s10484 + $0x1d4] sm:$0xf]
    %v10603 = vld [vmem:[%s10484 + $0x1d8] sm:$0xf]
    %v10604 = vld [vmem:[%s10484 + $0x1dc] sm:$0xf]
    %v10605 = vld [vmem:[%s10484 + $0x1e0] sm:$0xf]
    %v10606 = vld [vmem:[%s10484 + $0x1e4] sm:$0xf]
    %v10607 = vld [vmem:[%s10484 + $0x1e8] sm:$0xf]
    %v10608 = vld [vmem:[%s10484 + $0x1ec] sm:$0xf]
    %v10609 = vld [vmem:[%s10484 + $0x1f0] sm:$0xf]
    %v10610 = vld [vmem:[%s10484 + $0x1f4] sm:$0xf]
    %v10611 = vld [vmem:[%s10484 + $0x1f8] sm:$0xf]
    %v10612 = vld [vmem:[%s10484 + $0x1fc] sm:$0xf]
    %v10613 = vld [vmem:[%s10484 + $0x200] sm:$0xf]
    %v10614 = vld [vmem:[%s10484 + $0x204] sm:$0xf]
    %v10615 = vld [vmem:[%s10484 + $0x208] sm:$0xf]
    %v10616 = vld [vmem:[%s10484 + $0x20c] sm:$0xf]
    %v10617 = vld [vmem:[%s10484 + $0x210] sm:$0xf]
    %v10618 = vld [vmem:[%s10484 + $0x214] sm:$0xf]
    %v10619 = vld [vmem:[%s10484 + $0x218] sm:$0xf]
    %v10620 = vld [vmem:[%s10484 + $0x21c] sm:$0xf]
    %v10621 = vld [vmem:[%s10484 + $0x220] sm:$0xf]
    %v10622 = vld [vmem:[%s10484 + $0x224] sm:$0xf]
    %v10623 = vld [vmem:[%s10484 + $0x228] sm:$0xf]
    %v10624 = vld [vmem:[%s10484 + $0x22c] sm:$0xf]
    %v10625 = vld [vmem:[%s10484 + $0x230] sm:$0xf]
    %v10626 = vld [vmem:[%s10484 + $0x234] sm:$0xf]
    %v10627 = vld [vmem:[%s10484 + $0x238] sm:$0xf]
    %v10628 = vld [vmem:[%s10484 + $0x23c] sm:$0xf]
    %v10629 = vld [vmem:[%s10484 + $0x240] sm:$0x3]
    %v10775 = vunpack.c.l.b16 %v10485
    %v10776 = vunpack.c.l.b16 %v10486
    %v10777 = vunpack.c.l.b16 %v10487
    %v10778 = vunpack.c.l.b16 %v10488
    %v10779 = vunpack.c.l.b16 %v10489
    %v10780 = vunpack.c.l.b16 %v10490
    %v10781 = vunpack.c.l.b16 %v10491
    %v10782 = vunpack.c.l.b16 %v10492
    %v10783 = vunpack.c.l.b16 %v10493
    %v10784 = vunpack.c.l.b16 %v10494
    %v10785 = vunpack.c.l.b16 %v10495
    %v10786 = vunpack.c.l.b16 %v10496
    %v10787 = vunpack.c.l.b16 %v10497
    %v10788 = vunpack.c.l.b16 %v10498
    %v10789 = vunpack.c.l.b16 %v10499
    %v10790 = vunpack.c.l.b16 %v10500
    %v10791 = vunpack.c.l.b16 %v10501
    %v10792 = vunpack.c.l.b16 %v10502
    %v10793 = vunpack.c.l.b16 %v10503
    %v10794 = vunpack.c.l.b16 %v10504
    %v10795 = vunpack.c.l.b16 %v10505
    %v10796 = vunpack.c.l.b16 %v10506
    %v10797 = vunpack.c.l.b16 %v10507
    %v10798 = vunpack.c.l.b16 %v10508
    %v10799 = vunpack.c.l.b16 %v10509
    %v10800 = vunpack.c.l.b16 %v10510
    %v10801 = vunpack.c.l.b16 %v10511
    %v10802 = vunpack.c.l.b16 %v10512
    %v10803 = vunpack.c.l.b16 %v10513
    %v10804 = vunpack.c.l.b16 %v10514
    %v10805 = vunpack.c.l.b16 %v10515
    %v10806 = vunpack.c.l.b16 %v10516
    %v10807 = vunpack.c.l.b16 %v10517
    %v10808 = vunpack.c.l.b16 %v10518
    %v10809 = vunpack.c.l.b16 %v10519
    %v10810 = vunpack.c.l.b16 %v10520
    %v10811 = vunpack.c.l.b16 %v10521
    %v10812 = vunpack.c.l.b16 %v10522
    %v10813 = vunpack.c.l.b16 %v10523
    %v10814 = vunpack.c.l.b16 %v10524
    %v10815 = vunpack.c.l.b16 %v10525
    %v10816 = vunpack.c.l.b16 %v10526
    %v10817 = vunpack.c.l.b16 %v10527
    %v10818 = vunpack.c.l.b16 %v10528
    %v10819 = vunpack.c.l.b16 %v10529
    %v10820 = vunpack.c.l.b16 %v10530
    %v10821 = vunpack.c.l.b16 %v10531
    %v10822 = vunpack.c.l.b16 %v10532
    %v10823 = vunpack.c.l.b16 %v10533
    %v10824 = vunpack.c.l.b16 %v10534
    %v10825 = vunpack.c.l.b16 %v10535
    %v10826 = vunpack.c.l.b16 %v10536
    %v10827 = vunpack.c.l.b16 %v10537
    %v10828 = vunpack.c.l.b16 %v10538
    %v10829 = vunpack.c.l.b16 %v10539
    %v10830 = vunpack.c.l.b16 %v10540
    %v10831 = vunpack.c.l.b16 %v10541
    %v10832 = vunpack.c.l.b16 %v10542
    %v10833 = vunpack.c.l.b16 %v10543
    %v10834 = vunpack.c.l.b16 %v10544
    %v10835 = vunpack.c.l.b16 %v10545
    %v10836 = vunpack.c.l.b16 %v10546
    %v10837 = vunpack.c.l.b16 %v10547
    %v10838 = vunpack.c.l.b16 %v10548
    %v10839 = vunpack.c.l.b16 %v10549
    %v10840 = vunpack.c.l.b16 %v10550
    %v10841 = vunpack.c.l.b16 %v10551
    %v10842 = vunpack.c.l.b16 %v10552
    %v10843 = vunpack.c.l.b16 %v10553
    %v10844 = vunpack.c.l.b16 %v10554
    %v10845 = vunpack.c.l.b16 %v10555
    %v10846 = vunpack.c.l.b16 %v10556
    %v10847 = vunpack.c.l.b16 %v10557
    %v10848 = vunpack.c.l.b16 %v10558
    %v10849 = vunpack.c.l.b16 %v10559
    %v10850 = vunpack.c.l.b16 %v10560
    %v10851 = vunpack.c.l.b16 %v10561
    %v10852 = vunpack.c.l.b16 %v10562
    %v10853 = vunpack.c.l.b16 %v10563
    %v10854 = vunpack.c.l.b16 %v10564
    %v10855 = vunpack.c.l.b16 %v10565
    %v10856 = vunpack.c.l.b16 %v10566
    %v10857 = vunpack.c.l.b16 %v10567
    %v10858 = vunpack.c.l.b16 %v10568
    %v10859 = vunpack.c.l.b16 %v10569
    %v10860 = vunpack.c.l.b16 %v10570
    %v10861 = vunpack.c.l.b16 %v10571
    %v10862 = vunpack.c.l.b16 %v10572
    %v10863 = vunpack.c.l.b16 %v10573
    %v10864 = vunpack.c.l.b16 %v10574
    %v10865 = vunpack.c.l.b16 %v10575
    %v10866 = vunpack.c.l.b16 %v10576
    %v10867 = vunpack.c.l.b16 %v10577
    %v10868 = vunpack.c.l.b16 %v10578
    %v10869 = vunpack.c.l.b16 %v10579
    %v10870 = vunpack.c.l.b16 %v10580
    %v10871 = vunpack.c.l.b16 %v10581
    %v10872 = vunpack.c.l.b16 %v10582
    %v10873 = vunpack.c.l.b16 %v10583
    %v10874 = vunpack.c.l.b16 %v10584
    %v10875 = vunpack.c.l.b16 %v10585
    %v10876 = vunpack.c.l.b16 %v10586
    %v10877 = vunpack.c.l.b16 %v10587
    %v10878 = vunpack.c.l.b16 %v10588
    %v10879 = vunpack.c.l.b16 %v10589
    %v10880 = vunpack.c.l.b16 %v10590
    %v10881 = vunpack.c.l.b16 %v10591
    %v10882 = vunpack.c.l.b16 %v10592
    %v10883 = vunpack.c.l.b16 %v10593
    %v10884 = vunpack.c.l.b16 %v10594
    %v10885 = vunpack.c.l.b16 %v10595
    %v10886 = vunpack.c.l.b16 %v10596
    %v10887 = vunpack.c.l.b16 %v10597
    %v10888 = vunpack.c.l.b16 %v10598
    %v10889 = vunpack.c.l.b16 %v10599
    %v10890 = vunpack.c.l.b16 %v10600
    %v10891 = vunpack.c.l.b16 %v10601
    %v10892 = vunpack.c.l.b16 %v10602
    %v10893 = vunpack.c.l.b16 %v10603
    %v10894 = vunpack.c.l.b16 %v10604
    %v10895 = vunpack.c.l.b16 %v10605
    %v10896 = vunpack.c.l.b16 %v10606
    %v10897 = vunpack.c.l.b16 %v10607
    %v10898 = vunpack.c.l.b16 %v10608
    %v10899 = vunpack.c.l.b16 %v10609
    %v10900 = vunpack.c.l.b16 %v10610
    %v10901 = vunpack.c.l.b16 %v10611
    %v10902 = vunpack.c.l.b16 %v10612
    %v10903 = vunpack.c.l.b16 %v10613
    %v10904 = vunpack.c.l.b16 %v10614
    %v10905 = vunpack.c.l.b16 %v10615
    %v10906 = vunpack.c.l.b16 %v10616
    %v10907 = vunpack.c.l.b16 %v10617
    %v10908 = vunpack.c.l.b16 %v10618
    %v10909 = vunpack.c.l.b16 %v10619
    %v10910 = vunpack.c.l.b16 %v10620
    %v10911 = vunpack.c.l.b16 %v10621
    %v10912 = vunpack.c.l.b16 %v10622
    %v10913 = vunpack.c.l.b16 %v10623
    %v10914 = vunpack.c.l.b16 %v10624
    %v10915 = vunpack.c.l.b16 %v10625
    %v10916 = vunpack.c.l.b16 %v10626
    %v10917 = vunpack.c.l.b16 %v10627
    %v10918 = vunpack.c.l.b16 %v10628
    %v10919 = vunpack.c.l.b16 %v10629
    %v10920 = vpack.c.b16 %v10776, %v10775
    %v10921 = vpack.c.b16 %v10778, %v10777
    %v10922 = vpack.c.b16 %v10780, %v10779
    %v10923 = vpack.c.b16 %v10782, %v10781
    %v10924 = vpack.c.b16 %v10784, %v10783
    %v10925 = vpack.c.b16 %v10786, %v10785
    %v10926 = vpack.c.b16 %v10788, %v10787
    %v10927 = vpack.c.b16 %v10790, %v10789
    %v10928 = vpack.c.b16 %v10792, %v10791
    %v10929 = vpack.c.b16 %v10794, %v10793
    %v10930 = vpack.c.b16 %v10796, %v10795
    %v10931 = vpack.c.b16 %v10798, %v10797
    %v10932 = vpack.c.b16 %v10800, %v10799
    %v10933 = vpack.c.b16 %v10802, %v10801
    %v10934 = vpack.c.b16 %v10804, %v10803
    %v10935 = vpack.c.b16 %v10806, %v10805
    %v10936 = vpack.c.b16 %v10808, %v10807
    %v10937 = vpack.c.b16 %v10810, %v10809
    %v10938 = vpack.c.b16 %v10812, %v10811
    %v10939 = vpack.c.b16 %v10814, %v10813
    %v10940 = vpack.c.b16 %v10816, %v10815
    %v10941 = vpack.c.b16 %v10818, %v10817
    %v10942 = vpack.c.b16 %v10820, %v10819
    %v10943 = vpack.c.b16 %v10822, %v10821
    %v10944 = vpack.c.b16 %v10824, %v10823
    %v10945 = vpack.c.b16 %v10826, %v10825
    %v10946 = vpack.c.b16 %v10828, %v10827
    %v10947 = vpack.c.b16 %v10830, %v10829
    %v10948 = vpack.c.b16 %v10832, %v10831
    %v10949 = vpack.c.b16 %v10834, %v10833
    %v10950 = vpack.c.b16 %v10836, %v10835
    %v10951 = vpack.c.b16 %v10838, %v10837
    %v10952 = vpack.c.b16 %v10840, %v10839
    %v10953 = vpack.c.b16 %v10842, %v10841
    %v10954 = vpack.c.b16 %v10844, %v10843
    %v10955 = vpack.c.b16 %v10846, %v10845
    %v10956 = vpack.c.b16 %v10848, %v10847
    %v10957 = vpack.c.b16 %v10850, %v10849
    %v10958 = vpack.c.b16 %v10852, %v10851
    %v10959 = vpack.c.b16 %v10854, %v10853
    %v10960 = vpack.c.b16 %v10856, %v10855
    %v10961 = vpack.c.b16 %v10858, %v10857
    %v10962 = vpack.c.b16 %v10860, %v10859
    %v10963 = vpack.c.b16 %v10862, %v10861
    %v10964 = vpack.c.b16 %v10864, %v10863
    %v10965 = vpack.c.b16 %v10866, %v10865
    %v10966 = vpack.c.b16 %v10868, %v10867
    %v10967 = vpack.c.b16 %v10870, %v10869
    %v10968 = vpack.c.b16 %v10872, %v10871
    %v10969 = vpack.c.b16 %v10874, %v10873
    %v10970 = vpack.c.b16 %v10876, %v10875
    %v10971 = vpack.c.b16 %v10878, %v10877
    %v10972 = vpack.c.b16 %v10880, %v10879
    %v10973 = vpack.c.b16 %v10882, %v10881
    %v10974 = vpack.c.b16 %v10884, %v10883
    %v10975 = vpack.c.b16 %v10886, %v10885
    %v10976 = vpack.c.b16 %v10888, %v10887
    %v10977 = vpack.c.b16 %v10890, %v10889
    %v10978 = vpack.c.b16 %v10892, %v10891
    %v10979 = vpack.c.b16 %v10894, %v10893
    %v10980 = vpack.c.b16 %v10896, %v10895
    %v10981 = vpack.c.b16 %v10898, %v10897
    %v10982 = vpack.c.b16 %v10900, %v10899
    %v10983 = vpack.c.b16 %v10902, %v10901
    %v10984 = vpack.c.b16 %v10904, %v10903
    %v10985 = vpack.c.b16 %v10906, %v10905
    %v10986 = vpack.c.b16 %v10908, %v10907
    %v10987 = vpack.c.b16 %v10910, %v10909
    %v10988 = vpack.c.b16 %v10912, %v10911
    %v10989 = vpack.c.b16 %v10914, %v10913
    %v10990 = vpack.c.b16 %v10916, %v10915
    %v10991 = vpack.c.b16 %v10918, %v10917
    %v10992 = vpack.c.b16 %v10919, %v10919
    %v11066 = vsel %vm2020, %v10483, 0
    %v11069 = vand.u32 %v10992, %v2027
    %11071 = vmatprep.subr.bf16.mxu0 0
    %11072 = vmatpush1.bf16.msra.mxu0 %v10927
    %11073 = vmatprep.subr.bf16.mxu0 0
    %11074 = vmatpush1.bf16.msra.mxu0 %v10926
    %11075 = vmatprep.subr.bf16.mxu0 0
    %11076 = vmatpush1.bf16.msra.mxu0 %v10925
    %11077 = vmatprep.subr.bf16.mxu0 0
    %11078 = vmatpush1.bf16.msra.mxu0 %v10924
    %11079 = vmatprep.subr.bf16.mxu0 0
    %11080 = vmatpush1.bf16.msra.mxu0 %v10923
    %11081 = vmatprep.subr.bf16.mxu0 0
    %11082 = vmatpush1.bf16.msra.mxu0 %v10922
    %11083 = vmatprep.subr.bf16.mxu0 0
    %11084 = vmatpush1.bf16.msra.mxu0 %v10921
    %11085 = vmatprep.subr.bf16.mxu0 0
    %11086 = vmatpush1.bf16.msra.mxu0 %v10920
    %11087 = vmatprep.subr.bf16.mxu0 0
    %11088 = vmatpush2.bf16.msra.mxu0 %v10935
    %11089 = vmatprep.subr.bf16.mxu0 0
    %11090 = vmatpush2.bf16.msra.mxu0 %v10934
    %11091 = vmatprep.subr.bf16.mxu0 0
    %11092 = vmatpush2.bf16.msra.mxu0 %v10933
    %11093 = vmatprep.subr.bf16.mxu0 0
    %11094 = vmatpush2.bf16.msra.mxu0 %v10932
    %11095 = vmatprep.subr.bf16.mxu0 0
    %11096 = vmatpush2.bf16.msra.mxu0 %v10931
    %11097 = vmatprep.subr.bf16.mxu0 0
    %11098 = vmatpush2.bf16.msra.mxu0 %v10930
    %11099 = vmatprep.subr.bf16.mxu0 0
    %11100 = vmatpush2.bf16.msra.mxu0 %v10929
    %11101 = vmatprep.subr.bf16.mxu0 0
    %11102 = vmatpush2.bf16.msra.mxu0 %v10928
    %11103 = vmatprep.mubr.bf16.mxu0 %v10475
    %11104 = vmatmul.mubr.bf16.gmra.mxu0 %v10474
    %v11105 = vpop.f32.mrf.mxu0
    %v11106 = vadd.f32 0.0, %v11105
    %v11107 = vpop.f32.mrf.mxu0
    %v11108 = vpop.f32.mrf.mxu0
    %v11109 = vpop.f32.mrf.mxu0
    %11110 = vdwg.mxu0
    %11111 = vmatprep.subr.bf16.mxu0 0
    %11112 = vmatpush1.bf16.msra.mxu0 %v10943
    %11113 = vmatprep.subr.bf16.mxu0 0
    %11114 = vmatpush1.bf16.msra.mxu0 %v10942
    %11115 = vmatprep.subr.bf16.mxu0 0
    %11116 = vmatpush1.bf16.msra.mxu0 %v10941
    %11117 = vmatprep.subr.bf16.mxu0 0
    %11118 = vmatpush1.bf16.msra.mxu0 %v10940
    %11119 = vmatprep.subr.bf16.mxu0 0
    %11120 = vmatpush1.bf16.msra.mxu0 %v10939
    %11121 = vmatprep.subr.bf16.mxu0 0
    %11122 = vmatpush1.bf16.msra.mxu0 %v10938
    %11123 = vmatprep.subr.bf16.mxu0 0
    %11124 = vmatpush1.bf16.msra.mxu0 %v10937
    %11125 = vmatprep.subr.bf16.mxu0 0
    %11126 = vmatpush1.bf16.msra.mxu0 %v10936
    %11127 = vmatprep.subr.bf16.mxu0 0
    %11128 = vmatpush2.bf16.msra.mxu0 %v10951
    %11129 = vmatprep.subr.bf16.mxu0 0
    %11130 = vmatpush2.bf16.msra.mxu0 %v10950
    %11131 = vmatprep.subr.bf16.mxu0 0
    %11132 = vmatpush2.bf16.msra.mxu0 %v10949
    %11133 = vmatprep.subr.bf16.mxu0 0
    %11134 = vmatpush2.bf16.msra.mxu0 %v10948
    %11135 = vmatprep.subr.bf16.mxu0 0
    %11136 = vmatpush2.bf16.msra.mxu0 %v10947
    %11137 = vmatprep.subr.bf16.mxu0 0
    %11138 = vmatpush2.bf16.msra.mxu0 %v10946
    %11139 = vmatprep.subr.bf16.mxu0 0
    %11140 = vmatpush2.bf16.msra.mxu0 %v10945
    %11141 = vmatprep.subr.bf16.mxu0 0
    %11142 = vmatpush2.bf16.msra.mxu0 %v10944
    %11143 = vmatprep.mubr.bf16.mxu0 %v10477
    %11144 = vmatmul.mubr.bf16.gmra.mxu0 %v10476
    %v11145 = vpop.f32.mrf.mxu0
    %v11146 = vadd.f32 %v11106, %v11145
    %v11147 = vpop.f32.mrf.mxu0
    %v11148 = vpop.f32.mrf.mxu0
    %v11149 = vpop.f32.mrf.mxu0
    %11150 = vdwg.mxu0
    %11151 = vmatprep.subr.bf16.mxu0 0
    %11152 = vmatpush1.bf16.msra.mxu0 %v10959
    %11153 = vmatprep.subr.bf16.mxu0 0
    %11154 = vmatpush1.bf16.msra.mxu0 %v10958
    %11155 = vmatprep.subr.bf16.mxu0 0
    %11156 = vmatpush1.bf16.msra.mxu0 %v10957
    %11157 = vmatprep.subr.bf16.mxu0 0
    %11158 = vmatpush1.bf16.msra.mxu0 %v10956
    %11159 = vmatprep.subr.bf16.mxu0 0
    %11160 = vmatpush1.bf16.msra.mxu0 %v10955
    %11161 = vmatprep.subr.bf16.mxu0 0
    %11162 = vmatpush1.bf16.msra.mxu0 %v10954
    %11163 = vmatprep.subr.bf16.mxu0 0
    %11164 = vmatpush1.bf16.msra.mxu0 %v10953
    %11165 = vmatprep.subr.bf16.mxu0 0
    %11166 = vmatpush1.bf16.msra.mxu0 %v10952
    %11167 = vmatprep.subr.bf16.mxu0 0
    %11168 = vmatpush2.bf16.msra.mxu0 %v10967
    %11169 = vmatprep.subr.bf16.mxu0 0
    %11170 = vmatpush2.bf16.msra.mxu0 %v10966
    %11171 = vmatprep.subr.bf16.mxu0 0
    %11172 = vmatpush2.bf16.msra.mxu0 %v10965
    %11173 = vmatprep.subr.bf16.mxu0 0
    %11174 = vmatpush2.bf16.msra.mxu0 %v10964
    %11175 = vmatprep.subr.bf16.mxu0 0
    %11176 = vmatpush2.bf16.msra.mxu0 %v10963
    %11177 = vmatprep.subr.bf16.mxu0 0
    %11178 = vmatpush2.bf16.msra.mxu0 %v10962
    %11179 = vmatprep.subr.bf16.mxu0 0
    %11180 = vmatpush2.bf16.msra.mxu0 %v10961
    %11181 = vmatprep.subr.bf16.mxu0 0
    %11182 = vmatpush2.bf16.msra.mxu0 %v10960
    %11183 = vmatprep.mubr.bf16.mxu0 %v10479
    %11184 = vmatmul.mubr.bf16.gmra.mxu0 %v10478
    %v11185 = vpop.f32.mrf.mxu0
    %v11186 = vadd.f32 %v11146, %v11185
    %v11187 = vpop.f32.mrf.mxu0
    %v11188 = vpop.f32.mrf.mxu0
    %v11189 = vpop.f32.mrf.mxu0
    %11190 = vdwg.mxu0
    %11191 = vmatprep.subr.bf16.mxu0 0
    %11192 = vmatpush1.bf16.msra.mxu0 %v10975
    %11193 = vmatprep.subr.bf16.mxu0 0
    %11194 = vmatpush1.bf16.msra.mxu0 %v10974
    %11195 = vmatprep.subr.bf16.mxu0 0
    %11196 = vmatpush1.bf16.msra.mxu0 %v10973
    %11197 = vmatprep.subr.bf16.mxu0 0
    %11198 = vmatpush1.bf16.msra.mxu0 %v10972
    %11199 = vmatprep.subr.bf16.mxu0 0
    %11200 = vmatpush1.bf16.msra.mxu0 %v10971
    %11201 = vmatprep.subr.bf16.mxu0 0
    %11202 = vmatpush1.bf16.msra.mxu0 %v10970
    %11203 = vmatprep.subr.bf16.mxu0 0
    %11204 = vmatpush1.bf16.msra.mxu0 %v10969
    %11205 = vmatprep.subr.bf16.mxu0 0
    %11206 = vmatpush1.bf16.msra.mxu0 %v10968
    %11207 = vmatprep.subr.bf16.mxu0 0
    %11208 = vmatpush2.bf16.msra.mxu0 %v10983
    %11209 = vmatprep.subr.bf16.mxu0 0
    %11210 = vmatpush2.bf16.msra.mxu0 %v10982
    %11211 = vmatprep.subr.bf16.mxu0 0
    %11212 = vmatpush2.bf16.msra.mxu0 %v10981
    %11213 = vmatprep.subr.bf16.mxu0 0
    %11214 = vmatpush2.bf16.msra.mxu0 %v10980
    %11215 = vmatprep.subr.bf16.mxu0 0
    %11216 = vmatpush2.bf16.msra.mxu0 %v10979
    %11217 = vmatprep.subr.bf16.mxu0 0
    %11218 = vmatpush2.bf16.msra.mxu0 %v10978
    %11219 = vmatprep.subr.bf16.mxu0 0
    %11220 = vmatpush2.bf16.msra.mxu0 %v10977
    %11221 = vmatprep.subr.bf16.mxu0 0
    %11222 = vmatpush2.bf16.msra.mxu0 %v10976
    %11223 = vmatprep.mubr.bf16.mxu0 %v10481
    %11224 = vmatmul.mubr.bf16.gmra.mxu0 %v10480
    %v11225 = vpop.f32.mrf.mxu0
    %v11226 = vadd.f32 %v11186, %v11225
    %v11227 = vpop.f32.mrf.mxu0
    %v11228 = vpop.f32.mrf.mxu0
    %v11229 = vpop.f32.mrf.mxu0
    %11230 = vdwg.mxu0
    %11231 = vmatprep.subr.bf16.mxu0 0
    %11232 = vmatpush1.bf16.msra.mxu0 %v10991
    %11233 = vmatprep.subr.bf16.mxu0 0
    %11234 = vmatpush1.bf16.msra.mxu0 %v10990
    %11235 = vmatprep.subr.bf16.mxu0 0
    %11236 = vmatpush1.bf16.msra.mxu0 %v10989
    %11237 = vmatprep.subr.bf16.mxu0 0
    %11238 = vmatpush1.bf16.msra.mxu0 %v10988
    %11239 = vmatprep.subr.bf16.mxu0 0
    %11240 = vmatpush1.bf16.msra.mxu0 %v10987
    %11241 = vmatprep.subr.bf16.mxu0 0
    %11242 = vmatpush1.bf16.msra.mxu0 %v10986
    %11243 = vmatprep.subr.bf16.mxu0 0
    %11244 = vmatpush1.bf16.msra.mxu0 %v10985
    %11245 = vmatprep.subr.bf16.mxu0 0
    %11246 = vmatpush1.bf16.msra.mxu0 %v10984
    %11247 = vmatprep.subr.bf16.mxu0 0
    %11248 = vmatpush2.bf16.msra.mxu0 0
    %11249 = vmatprep.subr.bf16.mxu0 0
    %11250 = vmatpush2.bf16.msra.mxu0 0
    %11251 = vmatprep.subr.bf16.mxu0 0
    %11252 = vmatpush2.bf16.msra.mxu0 0
    %11253 = vmatprep.subr.bf16.mxu0 0
    %11254 = vmatpush2.bf16.msra.mxu0 0
    %11255 = vmatprep.subr.bf16.mxu0 0
    %11256 = vmatpush2.bf16.msra.mxu0 0
    %11257 = vmatprep.subr.bf16.mxu0 0
    %11258 = vmatpush2.bf16.msra.mxu0 0
    %11259 = vmatprep.subr.bf16.mxu0 0
    %11260 = vmatpush2.bf16.msra.mxu0 0
    %11261 = vmatprep.subr.bf16.mxu0 0
    %11262 = vmatpush2.bf16.msra.mxu0 %v11069
    %11263 = vmatprep.mubr.bf16.mxu0 %v11066
    %11264 = vmatmul.mubr.bf16.gmra.mxu0 %v10482
    %v11265 = vpop.f32.mrf.mxu0
    %v11266 = vadd.f32 %v11226, %v11265
    %v11267 = vpop.f32.mrf.mxu0
    %v11268 = vpop.f32.mrf.mxu0
    %v11269 = vpop.f32.mrf.mxu0
    %11270 = vdwg.mxu0
    %v11271 = vadd.f32 %v9871, %v11266
    %v11272 = vld [vmem:[%s4] sm:$0x1]
    %v11274 = vlaneseq
    %v11275 = vshrl.u32 %v11274, 7
    %v11276 = vsub.s32 0, %v11275
    %v11277 = vrot.slane %v11272, %v11276
    %v11279 = vadd.f32 %v11271, %v11277
    %v11280 = vmax.f32 %v11279, 0.0
    %v11281 = vld [vmem:[%s5] sm:$0xff]
    %v11282 = vld [vmem:[%s5 + $0x8] sm:$0xff]
    %v11283 = vld [vmem:[%s5 + $0x10] sm:$0xff]
    %v11284 = vld [vmem:[%s5 + $0x18] sm:$0xff]
    %v11285 = vld [vmem:[%s5 + $0x20] sm:$0xff]
    %v11286 = vld [vmem:[%s5 + $0x28] sm:$0xff]
    %v11287 = vld [vmem:[%s5 + $0x30] sm:$0xff]
    %v11288 = vld [vmem:[%s5 + $0x38] sm:$0xff]
    %v11289 = vld [vmem:[%s5 + $0x40] sm:$0xff]
    %v11290 = vld [vmem:[%s5 + $0x48] sm:$0xff]
    %v11291 = vld [vmem:[%s5 + $0x50] sm:$0xff]
    %v11292 = vld [vmem:[%s5 + $0x58] sm:$0xff]
    %v11293 = vld [vmem:[%s5 + $0x60] sm:$0xf]
    %v11294 = vld [vmem:[%s6] sm:$0x1]
    %v11296 = vlaneseq
    %v11297 = vshrl.u32 %v11296, 7
    %v11298 = vsub.s32 0, %v11297
    %v11299 = vrot.slane %v11294, %v11298
    %vm11301 = vcmask 818176
    %v11303 = vsel %vm11301, %v11280, 0
    %vm11305 = vcmask 1043456
    %v11307 = vsel %vm11305, %v11293, 0
    %11309 = vmatprep.subr.mxu0 0.0
    %11310 = vmatpush1.msra.mxu0 0.0
    %11311 = vmatprep.subr.mxu0 0.0
    %11312 = vmatpush1.msra.mxu0 0.0
    %11313 = vmatprep.subr.mxu0 0.0
    %11314 = vmatpush1.msra.mxu0 0.0
    %11315 = vmatprep.subr.mxu0 0.0
    %11316 = vmatpush1.msra.mxu0 %v11307
    %11317 = vmatprep.subr.mxu0 0.0
    %11318 = vmatpush1.msra.mxu0 %v11292
    %11319 = vmatprep.subr.mxu0 0.0
    %11320 = vmatpush1.msra.mxu0 %v11291
    %11321 = vmatprep.subr.mxu0 0.0
    %11322 = vmatpush1.msra.mxu0 %v11290
    %11323 = vmatprep.subr.mxu0 0.0
    %11324 = vmatpush1.msra.mxu0 %v11289
    %11325 = vmatprep.subr.mxu0 0.0
    %11326 = vmatpush1.msra.mxu0 %v11288
    %11327 = vmatprep.subr.mxu0 0.0
    %11328 = vmatpush1.msra.mxu0 %v11287
    %11329 = vmatprep.subr.mxu0 0.0
    %11330 = vmatpush1.msra.mxu0 %v11286
    %11331 = vmatprep.subr.mxu0 0.0
    %11332 = vmatpush1.msra.mxu0 %v11285
    %11333 = vmatprep.subr.mxu0 0.0
    %11334 = vmatpush1.msra.mxu0 %v11284
    %11335 = vmatprep.subr.mxu0 0.0
    %11336 = vmatpush1.msra.mxu0 %v11283
    %11337 = vmatprep.subr.mxu0 0.0
    %11338 = vmatpush1.msra.mxu0 %v11282
    %11339 = vmatprep.subr.mxu0 0.0
    %11340 = vmatpush1.msra.mxu0 %v11281
    %11341 = vmatprep.subr.mxu0 0.0
    %11342 = vmatpush2.msra.mxu0 0.0
    %11343 = vmatprep.subr.mxu0 0.0
    %11344 = vmatpush2.msra.mxu0 0.0
    %11345 = vmatprep.subr.mxu0 0.0
    %11346 = vmatpush2.msra.mxu0 0.0
    %11347 = vmatprep.subr.mxu0 0.0
    %11348 = vmatpush2.msra.mxu0 0.0
    %11349 = vmatprep.subr.mxu0 0.0
    %11350 = vmatpush2.msra.mxu0 0.0
    %11351 = vmatprep.subr.mxu0 0.0
    %11352 = vmatpush2.msra.mxu0 0.0
    %11353 = vmatprep.subr.mxu0 0.0
    %11354 = vmatpush2.msra.mxu0 0.0
    %11355 = vmatprep.subr.mxu0 0.0
    %11356 = vmatpush2.msra.mxu0 0.0
    %11357 = vmatprep.subr.mxu0 0.0
    %11358 = vmatpush2.msra.mxu0 0.0
    %11359 = vmatprep.subr.mxu0 0.0
    %11360 = vmatpush2.msra.mxu0 0.0
    %11361 = vmatprep.subr.mxu0 0.0
    %11362 = vmatpush2.msra.mxu0 0.0
    %11363 = vmatprep.subr.mxu0 0.0
    %11364 = vmatpush2.msra.mxu0 0.0
    %11365 = vmatprep.subr.mxu0 0.0
    %11366 = vmatpush2.msra.mxu0 0.0
    %11367 = vmatprep.subr.mxu0 0.0
    %11368 = vmatpush2.msra.mxu0 0.0
    %11369 = vmatprep.subr.mxu0 0.0
    %11370 = vmatpush2.msra.mxu0 0.0
    %11371 = vmatprep.subr.mxu0 0.0
    %11372 = vmatpush2.msra.mxu0 0.0
    %11373 = vmatprep.mubr.f32.mxu0 0.0
    %11374 = vmatmul.mubr.f32.gmra.mxu0 %v11303
    %v11375 = vpop.f32.mrf.mxu0
    %v11376 = vadd.f32 %v11299, %v11375
    %v11377 = vpop.f32.mrf.mxu0
    %11378 = vdwg.mxu0
    %11379 = vmax.xlane.f32.xlu0 %v11376
    %v11380 = vpop.xlane.xlu0 %11379
    %v11381 = vsub.f32 %v11376, %v11380
    %v11382 = vmul.f32 %v11381, 1.442695
    %v11383 = vpow.pop %v11382
    %11384 = vadd.xlane.f32.xlu0 %v11383
    %v11385 = vpop.xlane.xlu0 %11384
    %v11386 = vlog2.pop %v11385
    %v11387 = vmul.f32 %v11386, 0.6931472
    %v11388 = vsub.f32 %v11381, %v11387
    %11389 = vst.msk [vmem:[%s7] sm:$0xff] %vm2020, %v11388
    // Predicated region
    $region38: #{geno_net_forward.1} parent=1 // pred_check
      _
    $region39: #{geno_net_forward.1} parent=1 // pred_check_branch
      %11391 = sbr.rel (0) target = $region41
    $region40: #{geno_net_forward.1} parent=1 // pred_region
      _
    $region41: #{geno_net_forward.1} parent=1 // pred_fallthru
      _
    // Predicated region
    $region42: #{geno_net_forward.1} parent=1 // pred_check
      _
    $region43: #{geno_net_forward.1} parent=1 // pred_check_branch
      %11393 = sbr.rel (0) target = $region45
    $region44: #{geno_net_forward.1} parent=1 // pred_region
      _
    $region45: #{geno_net_forward.1} parent=1 // pred_fallthru
      _
    %11394 = vsyncpa [#allocation3], 1
    %11395 = vsyncpa [#allocation5], 1

</llo_original>
